<compile_context>
chip_gen: v7x
topology: tpu7x:2x2x1
jax: 0.10.0
libtpu: 0.0.40
codegen_flags: <defaults>
</compile_context>

<pallas_src>
import functools
import math

import jax
import jax.numpy as jnp
from jax.experimental import pallas as pl
from jax.experimental.pallas import tpu as pltpu

META_K = 8      # metadata features zero-padded to 8 for a clean sublane layout
NCPAD = 128     # output classes zero-padded to 128 lanes (lane-dense output store)
C1, C2, C3 = 32, 64, 128


# ----------------------------------------------------------------------------------------
# In-kernel helpers
# ----------------------------------------------------------------------------------------
def _zero_pad_border(pad_ref):
    """Zero the 1-pixel halo of a (B, H+2, W+2, C) scratch.  Done every step (4 thin
    slab stores) instead of once under program_id==0, because with "parallel" grid
    semantics the second TensorCore never runs step 0."""
    b, hp, wp, c = pad_ref.shape
    z_row = jnp.zeros((b, wp, c), pad_ref.dtype)
    z_col = jnp.zeros((b, hp, c), pad_ref.dtype)
    pad_ref[:, 0, :, :] = z_row
    pad_ref[:, hp - 1, :, :] = z_row
    pad_ref[:, :, 0, :] = z_col
    pad_ref[:, :, wp - 1, :] = z_col


def _maxpool2x2_rows(cy_ref, h_dim, w_dim, emit):
    """2x2 stride-2 max pool of cy_ref (B, h_dim*w_dim, C).

    For each pooled row i, reads 4 batch-wide stride-2 slices and calls
    emit(i, pooled_row) with pooled_row of shape (B, w_dim//2, C)."""
    wo = w_dim // 2
    for i in range(h_dim // 2):
        r0 = 2 * i * w_dim          # conv row 2i   (static start)
        r1 = r0 + w_dim             # conv row 2i+1
        p = jnp.maximum(
            jnp.maximum(cy_ref[:, pl.ds(r0, wo, 2), :],
                        cy_ref[:, pl.ds(r0 + 1, wo, 2), :]),
            jnp.maximum(cy_ref[:, pl.ds(r1, wo, 2), :],
                        cy_ref[:, pl.ds(r1 + 1, wo, 2), :]))
        emit(i, p)


def _im2col_3x3(pad_ref, patch_ref, h_dim, w_dim):
    """9 whole-window tap copies: pad (B, H+2, W+2, Cin) f32 -> patch (B*H*W, 9*Cin) bf16."""
    cin = pad_ref.shape[3]
    for t in range(9):
        dy, dx = t // 3, t % 3
        v = pad_ref[:, dy:dy + h_dim, dx:dx + w_dim, :]          # (B, H, W, Cin)
        patch_ref[:, t * cin:(t + 1) * cin] = (
            v.reshape(-1, cin).astype(patch_ref.dtype))


def _conv_relu(patch_ref, w_ref, b_ref, cy_ref):
    """One im2col matmul (bf16 x bf16 -> f32) + bias + ReLU into cy (B, H*W, Cout)."""
    y = jnp.dot(patch_ref[...], w_ref[...], preferred_element_type=jnp.float32)
    cy_ref[...] = jnp.maximum(y + b_ref[...], 0.0).reshape(cy_ref.shape)


# ----------------------------------------------------------------------------------------
# Fused forward kernel: conv/pool x3 + flatten + fc1 + fc_meta + fc_output, B images/step
# ----------------------------------------------------------------------------------------
def fused_forward_kernel(patch1_ref, meta_ref,
                         w1_ref, b1_ref, w2_ref, b2_ref, w3_ref, b3_ref,
                         wf1_ref, bf1_ref, wm_ref, bm_ref,
                         wox_ref, wom_ref, bo_ref,
                         o_ref,
                         pad2, pad3, patch2, patch3, cy1, cy2, cy3, xflat):
    bsz = cy1.shape[0]
    H2, W2 = pad2.shape[1] - 2, pad2.shape[2] - 2
    H, W = 2 * H2, 2 * W2
    H3, W3 = pad3.shape[1] - 2, pad3.shape[2] - 2
    Wf = W3 // 2
    C3v = cy3.shape[2]

    # ---- stage 1: conv1 (im2col precomputed outside the kernel) + ReLU ; pool -> pad2 ----
    x1 = patch1_ref[...].reshape(bsz * H * W, -1)                       # bf16 (B*H*W, 9*Cin)
    y1 = jnp.dot(x1, w1_ref[...], preferred_element_type=jnp.float32)
    cy1[...] = jnp.maximum(y1 + b1_ref[...], 0.0).reshape(cy1.shape)

    _zero_pad_border(pad2)

    def to_pad2(i, p):
        pad2[:, 1 + i, 1:1 + W2, :] = p
    _maxpool2x2_rows(cy1, H, W, to_pad2)

    # ---- stage 2: conv2 + ReLU ; pool -> pad3 ----
    _im2col_3x3(pad2, patch2, H2, W2)
    _conv_relu(patch2, w2_ref, b2_ref, cy2)

    _zero_pad_border(pad3)

    def to_pad3(i, p):
        pad3[:, 1 + i, 1:1 + W3, :] = p
    _maxpool2x2_rows(cy2, H2, W2, to_pad3)

    # ---- stage 3: conv3 + ReLU ; pool -> lane-dense flat activation slab ----
    _im2col_3x3(pad3, patch3, H3, W3)
    _conv_relu(patch3, w3_ref, b3_ref, cy3)

    def to_flat(i, p):
        # Row i of the final pooled map, flattened (w, c)-major into a 128-aligned lane slab.
        xflat[:, pl.ds(i * Wf * C3v, Wf * C3v)] = p.reshape(bsz, Wf * C3v)
    _maxpool2x2_rows(cy3, H3, W3, to_flat)

    # ---- head: fc1+ReLU, dropout(identity), fc_meta+ReLU, concat-split fc_output ----
    h1 = jnp.maximum(
        jnp.dot(xflat[...].astype(jnp.bfloat16), wf1_ref[...],
                preferred_element_type=jnp.float32) + bf1_ref[...], 0.0)     # (B, 128)
    # TODO(synk): nn.Dropout(0.5) is the identity at inference; training-mode masking not modeled.
    m = jnp.maximum(
        jnp.dot(meta_ref[:, 0, :], wm_ref[...],
                preferred_element_type=jnp.float32) + bm_ref[...], 0.0)      # (B, 64)
    # cat([h1, m]) @ W_out  ==  h1 @ W_out[:128] + m @ W_out[128:]
    o_ref[:, 0, :] = (jnp.dot(h1, wox_ref[...], preferred_element_type=jnp.float32)
                      + jnp.dot(m, wom_ref[...], preferred_element_type=jnp.float32)
                      + bo_ref[...])


# ----------------------------------------------------------------------------------------
# Wrapper (one pallas_call for the whole model), parameter prep, reference
# ----------------------------------------------------------------------------------------
@functools.partial(jax.jit, static_argnames=("num_classes", "block_b"))
def model_forward(img_nchw, meta, kp, *, num_classes, block_b=4):
    img = jnp.transpose(img_nchw, (0, 2, 3, 1))             # NCHW -> NHWC (channels on lanes)
    n, H, W, C = img.shape
    assert H % 8 == 0 and W % 8 == 0, "three 2x2 pools + flatten need H, W divisible by 8"
    B = block_b
    nb = ((n + B - 1) // B) * B
    if nb != n:                                             # pad batch to a multiple of B
        img = jnp.pad(img, ((0, nb - n), (0, 0), (0, 0), (0, 0)))
        meta = jnp.pad(meta, ((0, nb - n), (0, 0)))

    # conv1 im2col hoisted out of the kernel (plain XLA ops; bf16 halves the DMA bytes).
    padded = jnp.pad(img, ((0, 0), (1, 1), (1, 1), (0, 0)))
    patch1 = jnp.concatenate(
        [padded[:, dy:dy + H, dx:dx + W, :] for dy in range(3) for dx in range(3)],
        axis=-1).reshape(nb, H * W, 9 * C).astype(jnp.bfloat16)
    meta_p = jnp.pad(meta, ((0, 0), (0, META_K - meta.shape[1]))).reshape(nb, 1, META_K)

    H2, W2, H3, W3 = H // 2, W // 2, H // 4, W // 4
    fc1_in = kp["wf1p"].shape[0]                            # = C3 * (H//8) * (W//8)

    def full(shape):
        return pl.BlockSpec(shape, lambda i: (0,) * len(shape))

    out = pl.pallas_call(
        fused_forward_kernel,
        out_shape=jax.ShapeDtypeStruct((nb, 1, NCPAD), jnp.float32),
        grid=(nb // B,),
        in_specs=[
            pl.BlockSpec((B, H * W, 9 * C), lambda i: (i, 0, 0)),     # conv1 im2col patches
            pl.BlockSpec((B, 1, META_K), lambda i: (i, 0, 0)),        # metadata rows
            full((9 * C, C1)), full((1, C1)),                         # conv1 (bf16 / f32 bias)
            full((9 * C1, C2)), full((1, C2)),                        # conv2
            full((9 * C2, C3)), full((1, C3)),                        # conv3
            full((fc1_in, 128)), full((1, 128)),                      # fc1 (pre-permuted, bf16)
            full((META_K, 64)), full((1, 64)),                        # fc_meta (row-padded)
            full((128, NCPAD)), full((64, NCPAD)), full((1, NCPAD)),  # fc_output (padded)
        ],
        out_specs=pl.BlockSpec((B, 1, NCPAD), lambda i: (i, 0, 0)),
        scratch_shapes=[
            pltpu.VMEM((B, H2 + 2, W2 + 2, C1), jnp.float32),         # pad2 (halo'd pool-1)
            pltpu.VMEM((B, H3 + 2, W3 + 2, C2), jnp.float32),         # pad3 (halo'd pool-2)
            pltpu.VMEM((B * H2 * W2, 9 * C1), jnp.bfloat16),          # patch2 (im2col)
            pltpu.VMEM((B * H3 * W3, 9 * C2), jnp.bfloat16),          # patch3 (im2col)
            pltpu.VMEM((B, H * W, C1), jnp.float32),                  # cy1 (conv1+ReLU)
            pltpu.VMEM((B, H2 * W2, C2), jnp.float32),                # cy2
            pltpu.VMEM((B, H3 * W3, C3), jnp.float32),                # cy3
            pltpu.VMEM((B, fc1_in), jnp.float32),                     # xflat (fc1 input slab)
        ],
        compiler_params=pltpu.CompilerParams(dimension_semantics=("parallel",)),
    )(patch1, meta_p, kp["w1f"], kp["b1r"], kp["w2f"], kp["b2r"], kp["w3f"], kp["b3r"],
      kp["wf1p"], kp["bf1r"], kp["wm_p"], kp["bm_r"], kp["wox_p"], kp["wom_p"], kp["bo_p"])
    return out[:n, 0, :num_classes]


def init_params(key, channels, num_meta, num_classes, img_h, img_w):
    ks = jax.random.split(key, 12)

    def u(k, shape, fan_in):
        b = 1.0 / math.sqrt(fan_in)
        return jax.random.uniform(k, shape, jnp.float32, -b, b)

    fc1_in = C3 * (img_h // 8) * (img_w // 8)
    return dict(
        w1=u(ks[0], (3, 3, channels, C1), 9 * channels), b1=u(ks[1], (C1,), 9 * channels),
        w2=u(ks[2], (3, 3, C1, C2), 9 * C1),             b2=u(ks[3], (C2,), 9 * C1),
        w3=u(ks[4], (3, 3, C2, C3), 9 * C2),             b3=u(ks[5], (C3,), 9 * C2),
        wf1=u(ks[6], (fc1_in, 128), fc1_in),             bf1=u(ks[7], (128,), fc1_in),
        wm=u(ks[8], (num_meta, 64), num_meta),           bm=u(ks[9], (64,), num_meta),
        wox=u(ks[10], (128, num_classes), 128 + 64),
        wom=u(ks[11], (64, num_classes), 128 + 64),
        bo=jnp.zeros((num_classes,), jnp.float32),
    )


def prepare_params(p, num_meta, num_classes, img_h, img_w):
    """One-time host-side weight repacking for the fused kernel (outside the jitted path)."""
    P = (img_h // 8) * (img_w // 8)            # spatial positions after three 2x2 pools
    cin = p["w1"].shape[2]
    # wf1 rows are stored in torch NCHW-flatten order (c*P + pos); the kernel emits features
    # in (pos, c) order, so permute rows once offline: new_row pos*128 + c <- old_row c*P + pos.
    perm = (jnp.arange(P)[:, None] + P * jnp.arange(C3)[None, :]).reshape(-1)
    bf = jnp.bfloat16
    return dict(
        w1f=p["w1"].reshape(9 * cin, C1).astype(bf), b1r=p["b1"].reshape(1, C1),
        w2f=p["w2"].reshape(9 * C1, C2).astype(bf), b2r=p["b2"].reshape(1, C2),
        w3f=p["w3"].reshape(9 * C2, C3).astype(bf), b3r=p["b3"].reshape(1, C3),
        wf1p=p["wf1"][perm, :].astype(bf), bf1r=p["bf1"].reshape(1, 128),
        wm_p=jnp.pad(p["wm"], ((0, META_K - num_meta), (0, 0))),
        bm_r=p["bm"].reshape(1, 64),
        wox_p=jnp.pad(p["wox"], ((0, 0), (0, NCPAD - num_classes))),
        wom_p=jnp.pad(p["wom"], ((0, 0), (0, NCPAD - num_classes))),
        bo_p=jnp.pad(p["bo"].reshape(1, -1), ((0, 0), (0, NCPAD - num_classes))),
    )


def ref_forward(img_nchw, meta, p):
    x = jnp.transpose(img_nchw, (0, 2, 3, 1))
    for w, b in [(p["w1"], p["b1"]), (p["w2"], p["b2"]), (p["w3"], p["b3"])]:
        x = jax.lax.conv_general_dilated(
            x, w, window_strides=(1, 1), padding="SAME",
            dimension_numbers=("NHWC", "HWIO", "NHWC"),
            precision=jax.lax.Precision.HIGHEST)
        x = jax.nn.relu(x + b)
        x = jax.lax.reduce_window(x, -jnp.inf, jax.lax.max,
                                  (1, 2, 2, 1), (1, 2, 2, 1), "VALID")
    n = x.shape[0]
    x = jnp.transpose(x, (0, 3, 1, 2)).reshape(n, -1)       # torch x.view(N, -1) on NCHW
    hp = jax.lax.Precision.HIGHEST
    h = jax.nn.relu(jnp.dot(x, p["wf1"], precision=hp) + p["bf1"])
    m = jax.nn.relu(jnp.dot(meta, p["wm"], precision=hp) + p["bm"])
    return jnp.dot(h, p["wox"], precision=hp) + jnp.dot(m, p["wom"], precision=hp) + p["bo"]


if __name__ == "__main__":
    key = jax.random.PRNGKey(0)
    k_img, k_meta, k_par = jax.random.split(key, 3)

    N, C, H, W = 8, 4, 16, 16           # batch, channels, image_height, image_width
    NUM_META, NUM_CLASSES = 3, 3        # age + 2 one-hot sex features; 3 classes
    BLOCK_B = 4                         # images per grid step -> grid=(2,): both v7x TCs busy

    img_nchw = jax.random.normal(k_img, (N, C, H, W), jnp.float32)   # PyTorch-style NCHW
    meta = jax.random.normal(k_meta, (N, NUM_META), jnp.float32)
    params = init_params(k_par, C, NUM_META, NUM_CLASSES, H, W)
    kparams = prepare_params(params, NUM_META, NUM_CLASSES, H, W)    # one-time repack

    out = jax.block_until_ready(
        model_forward(img_nchw, meta, kparams, num_classes=NUM_CLASSES, block_b=BLOCK_B))
    ref = ref_forward(img_nchw, meta, params)

    assert out.shape == (N, NUM_CLASSES), out.shape
    err = float(jnp.max(jnp.abs(out - ref)))
    assert err < 5e-2, f"kernel/reference mismatch: max abs err = {err}"
    print("KERNEL_OK")
</pallas_src>

<mosaic_0001>
module attributes {stable_mosaic.version = 11 : i64} {
  func.func @fused_forward_kernel(%arg0: i32, %arg1: memref<4x256x36xbf16, #tpu.memory_space<vmem>>, %arg2: memref<4x1x8xf32, #tpu.memory_space<vmem>>, %arg3: memref<36x32xbf16, #tpu.memory_space<vmem>>, %arg4: memref<1x32xf32, #tpu.memory_space<vmem>>, %arg5: memref<288x64xbf16, #tpu.memory_space<vmem>>, %arg6: memref<1x64xf32, #tpu.memory_space<vmem>>, %arg7: memref<576x128xbf16, #tpu.memory_space<vmem>>, %arg8: memref<1x128xf32, #tpu.memory_space<vmem>>, %arg9: memref<512x128xbf16, #tpu.memory_space<vmem>>, %arg10: memref<1x128xf32, #tpu.memory_space<vmem>>, %arg11: memref<8x64xf32, #tpu.memory_space<vmem>>, %arg12: memref<1x64xf32, #tpu.memory_space<vmem>>, %arg13: memref<128x128xf32, #tpu.memory_space<vmem>>, %arg14: memref<64x128xf32, #tpu.memory_space<vmem>>, %arg15: memref<1x128xf32, #tpu.memory_space<vmem>>, %arg16: memref<4x1x128xf32, #tpu.memory_space<vmem>>, %arg17: memref<4x10x10x32xf32, #tpu.memory_space<vmem>>, %arg18: memref<4x6x6x64xf32, #tpu.memory_space<vmem>>, %arg19: memref<256x288xbf16, #tpu.memory_space<vmem>>, %arg20: memref<64x576xbf16, #tpu.memory_space<vmem>>, %arg21: memref<4x256x32xf32, #tpu.memory_space<vmem>>, %arg22: memref<4x64x64xf32, #tpu.memory_space<vmem>>, %arg23: memref<4x16x128xf32, #tpu.memory_space<vmem>>, %arg24: memref<4x512xf32, #tpu.memory_space<vmem>>) attributes {dimension_semantics = [#tpu.dimension_semantics<parallel>], iteration_bounds = array<i64: 2>, scalar_prefetch = 0 : i64, scratch_operands = 8 : i64, tpu.core_type = #tpu.core_type<tc>, window_params = [{transform_indices = @transform_0, window_bounds = array<i64: 4, 256, 36>}, {transform_indices = @transform_1, window_bounds = array<i64: 4, 1, 8>}, {pipeline_mode = #tpu.pipeline_mode<synchronous>, transform_indices = @transform_2, window_bounds = array<i64: 36, 32>}, {pipeline_mode = #tpu.pipeline_mode<synchronous>, transform_indices = @transform_3, window_bounds = array<i64: 1, 32>}, {pipeline_mode = #tpu.pipeline_mode<synchronous>, transform_indices = @transform_4, window_bounds = array<i64: 288, 64>}, {pipeline_mode = #tpu.pipeline_mode<synchronous>, transform_indices = @transform_5, window_bounds = array<i64: 1, 64>}, {pipeline_mode = #tpu.pipeline_mode<synchronous>, transform_indices = @transform_6, window_bounds = array<i64: 576, 128>}, {pipeline_mode = #tpu.pipeline_mode<synchronous>, transform_indices = @transform_7, window_bounds = array<i64: 1, 128>}, {pipeline_mode = #tpu.pipeline_mode<synchronous>, transform_indices = @transform_8, window_bounds = array<i64: 512, 128>}, {pipeline_mode = #tpu.pipeline_mode<synchronous>, transform_indices = @transform_9, window_bounds = array<i64: 1, 128>}, {pipeline_mode = #tpu.pipeline_mode<synchronous>, transform_indices = @transform_10, window_bounds = array<i64: 8, 64>}, {pipeline_mode = #tpu.pipeline_mode<synchronous>, transform_indices = @transform_11, window_bounds = array<i64: 1, 64>}, {pipeline_mode = #tpu.pipeline_mode<synchronous>, transform_indices = @transform_12, window_bounds = array<i64: 128, 128>}, {pipeline_mode = #tpu.pipeline_mode<synchronous>, transform_indices = @transform_13, window_bounds = array<i64: 64, 128>}, {pipeline_mode = #tpu.pipeline_mode<synchronous>, transform_indices = @transform_14, window_bounds = array<i64: 1, 128>}, {transform_indices = @transform_15, window_bounds = array<i64: 4, 1, 128>}]} {
    %c0 = arith.constant 0 : index
    %c0_0 = arith.constant 0 : index
    %c0_1 = arith.constant 0 : index
    %0 = vector.load %arg1[%c0, %c0_0, %c0_1] : memref<4x256x36xbf16, #tpu.memory_space<vmem>>, vector<4x256x36xbf16>
    %1 = vector.shape_cast %0 : vector<4x256x36xbf16> to vector<1024x36xbf16>
    %c0_2 = arith.constant 0 : index
    %c0_3 = arith.constant 0 : index
    %2 = vector.load %arg3[%c0_2, %c0_3] : memref<36x32xbf16, #tpu.memory_space<vmem>>, vector<36x32xbf16>
    %cst = arith.constant dense<0.000000e+00> : vector<1024x32xf32>
    %3 = tpu.matmul %1, %2, %cst {dimension_numbers = #tpu.dot_dimension_numbers<[1], [0], [0], [1], [0, 0, 1, 1], [], []>} : vector<1024x36xbf16>, vector<36x32xbf16>, vector<1024x32xf32> -> vector<1024x32xf32>
    %c0_4 = arith.constant 0 : index
    %c0_5 = arith.constant 0 : index
    %4 = vector.load %arg4[%c0_4, %c0_5] : memref<1x32xf32, #tpu.memory_space<vmem>>, vector<1x32xf32>
    %5 = vector.broadcast %4 : vector<1x32xf32> to vector<1024x32xf32>
    %6 = arith.addf %3, %5 : vector<1024x32xf32>
    %cst_6 = arith.constant 0.000000e+00 : f32
    %7 = vector.broadcast %cst_6 : f32 to vector<1024x32xf32>
    %8 = arith.maximumf %6, %7 : vector<1024x32xf32>
    %9 = vector.shape_cast %8 : vector<1024x32xf32> to vector<4x256x32xf32>
    %c0_7 = arith.constant 0 : index
    %c0_8 = arith.constant 0 : index
    %c0_9 = arith.constant 0 : index
    %10 = vector.load %arg21[%c0_7, %c0_8, %c0_9] : memref<4x256x32xf32, #tpu.memory_space<vmem>>, vector<4x256x32xf32>
    tpu.vector_store %arg21[%c0_7, %c0_8, %c0_9], %9 {strides = array<i32>} : memref<4x256x32xf32, #tpu.memory_space<vmem>>, vector<4x256x32xf32>,
    %cst_10 = arith.constant 0.000000e+00 : f32
    %11 = vector.broadcast %cst_10 : f32 to vector<4x10x32xf32>
    %cst_11 = arith.constant 0.000000e+00 : f32
    %12 = vector.broadcast %cst_11 : f32 to vector<4x10x32xf32>
    %c0_12 = arith.constant 0 : index
    %c0_13 = arith.constant 0 : index
    %c0_14 = arith.constant 0 : index
    %c0_15 = arith.constant 0 : index
    %13 = vector.load %arg17[%c0_12, %c0_13, %c0_14, %c0_15] : memref<4x10x10x32xf32, #tpu.memory_space<vmem>>, vector<4x1x10x32xf32>
    %14 = vector.shape_cast %13 : vector<4x1x10x32xf32> to vector<4x10x32xf32>
    %15 = vector.shape_cast %11 : vector<4x10x32xf32> to vector<4x1x10x32xf32>
    tpu.vector_store %arg17[%c0_12, %c0_13, %c0_14, %c0_15], %15 {strides = array<i32>} : memref<4x10x10x32xf32, #tpu.memory_space<vmem>>, vector<4x1x10x32xf32>,
    %c0_16 = arith.constant 0 : index
    %c9 = arith.constant 9 : index
    %c0_17 = arith.constant 0 : index
    %c0_18 = arith.constant 0 : index
    %16 = vector.load %arg17[%c0_16, %c9, %c0_17, %c0_18] : memref<4x10x10x32xf32, #tpu.memory_space<vmem>>, vector<4x1x10x32xf32>
    %17 = vector.shape_cast %16 : vector<4x1x10x32xf32> to vector<4x10x32xf32>
    %18 = vector.shape_cast %11 : vector<4x10x32xf32> to vector<4x1x10x32xf32>
    tpu.vector_store %arg17[%c0_16, %c9, %c0_17, %c0_18], %18 {strides = array<i32>} : memref<4x10x10x32xf32, #tpu.memory_space<vmem>>, vector<4x1x10x32xf32>,
    %c0_19 = arith.constant 0 : index
    %c0_20 = arith.constant 0 : index
    %c0_21 = arith.constant 0 : index
    %c0_22 = arith.constant 0 : index
    %19 = vector.load %arg17[%c0_19, %c0_20, %c0_21, %c0_22] : memref<4x10x10x32xf32, #tpu.memory_space<vmem>>, vector<4x10x1x32xf32>
    %20 = vector.shape_cast %19 : vector<4x10x1x32xf32> to vector<4x10x32xf32>
    %21 = vector.shape_cast %12 : vector<4x10x32xf32> to vector<4x10x1x32xf32>
    tpu.vector_store %arg17[%c0_19, %c0_20, %c0_21, %c0_22], %21 {strides = array<i32>} : memref<4x10x10x32xf32, #tpu.memory_space<vmem>>, vector<4x10x1x32xf32>,
    %c0_23 = arith.constant 0 : index
    %c0_24 = arith.constant 0 : index
    %c9_25 = arith.constant 9 : index
    %c0_26 = arith.constant 0 : index
    %22 = vector.load %arg17[%c0_23, %c0_24, %c9_25, %c0_26] : memref<4x10x10x32xf32, #tpu.memory_space<vmem>>, vector<4x10x1x32xf32>
    %23 = vector.shape_cast %22 : vector<4x10x1x32xf32> to vector<4x10x32xf32>
    %24 = vector.shape_cast %12 : vector<4x10x32xf32> to vector<4x10x1x32xf32>
    tpu.vector_store %arg17[%c0_23, %c0_24, %c9_25, %c0_26], %24 {strides = array<i32>} : memref<4x10x10x32xf32, #tpu.memory_space<vmem>>, vector<4x10x1x32xf32>,
    %c0_27 = arith.constant 0 : index
    %c0_28 = arith.constant 0 : index
    %c0_29 = arith.constant 0 : index
    %25 = tpu.strided_load %arg21[%c0_27, %c0_28, %c0_29] {strides = array<i32: 1, 2, 1>} : memref<4x256x32xf32, #tpu.memory_space<vmem>>, vector<4x8x32xf32>
    %c0_30 = arith.constant 0 : index
    %c1 = arith.constant 1 : index
    %c0_31 = arith.constant 0 : index
    %26 = tpu.strided_load %arg21[%c0_30, %c1, %c0_31] {strides = array<i32: 1, 2, 1>} : memref<4x256x32xf32, #tpu.memory_space<vmem>>, vector<4x8x32xf32>
    %27 = arith.maximumf %25, %26 : vector<4x8x32xf32>
    %c0_32 = arith.constant 0 : index
    %c16 = arith.constant 16 : index
    %c0_33 = arith.constant 0 : index
    %28 = tpu.strided_load %arg21[%c0_32, %c16, %c0_33] {strides = array<i32: 1, 2, 1>} : memref<4x256x32xf32, #tpu.memory_space<vmem>>, vector<4x8x32xf32>
    %c0_34 = arith.constant 0 : index
    %c17 = arith.constant 17 : index
    %c0_35 = arith.constant 0 : index
    %29 = tpu.strided_load %arg21[%c0_34, %c17, %c0_35] {strides = array<i32: 1, 2, 1>} : memref<4x256x32xf32, #tpu.memory_space<vmem>>, vector<4x8x32xf32>
    %30 = arith.maximumf %28, %29 : vector<4x8x32xf32>
    %31 = arith.maximumf %27, %30 : vector<4x8x32xf32>
    %c0_36 = arith.constant 0 : index
    %c1_37 = arith.constant 1 : index
    %c1_38 = arith.constant 1 : index
    %c0_39 = arith.constant 0 : index
    %32 = vector.load %arg17[%c0_36, %c1_37, %c1_38, %c0_39] : memref<4x10x10x32xf32, #tpu.memory_space<vmem>>, vector<4x1x8x32xf32>
    %33 = vector.shape_cast %32 : vector<4x1x8x32xf32> to vector<4x8x32xf32>
    %34 = vector.shape_cast %31 : vector<4x8x32xf32> to vector<4x1x8x32xf32>
    tpu.vector_store %arg17[%c0_36, %c1_37, %c1_38, %c0_39], %34 {strides = array<i32>} : memref<4x10x10x32xf32, #tpu.memory_space<vmem>>, vector<4x1x8x32xf32>,
    %c0_40 = arith.constant 0 : index
    %c32 = arith.constant 32 : index
    %c0_41 = arith.constant 0 : index
    %35 = tpu.strided_load %arg21[%c0_40, %c32, %c0_41] {strides = array<i32: 1, 2, 1>} : memref<4x256x32xf32, #tpu.memory_space<vmem>>, vector<4x8x32xf32>
    %c0_42 = arith.constant 0 : index
    %c33 = arith.constant 33 : index
    %c0_43 = arith.constant 0 : index
    %36 = tpu.strided_load %arg21[%c0_42, %c33, %c0_43] {strides = array<i32: 1, 2, 1>} : memref<4x256x32xf32, #tpu.memory_space<vmem>>, vector<4x8x32xf32>
    %37 = arith.maximumf %35, %36 : vector<4x8x32xf32>
    %c0_44 = arith.constant 0 : index
    %c48 = arith.constant 48 : index
    %c0_45 = arith.constant 0 : index
    %38 = tpu.strided_load %arg21[%c0_44, %c48, %c0_45] {strides = array<i32: 1, 2, 1>} : memref<4x256x32xf32, #tpu.memory_space<vmem>>, vector<4x8x32xf32>
    %c0_46 = arith.constant 0 : index
    %c49 = arith.constant 49 : index
    %c0_47 = arith.constant 0 : index
    %39 = tpu.strided_load %arg21[%c0_46, %c49, %c0_47] {strides = array<i32: 1, 2, 1>} : memref<4x256x32xf32, #tpu.memory_space<vmem>>, vector<4x8x32xf32>
    %40 = arith.maximumf %38, %39 : vector<4x8x32xf32>
    %41 = arith.maximumf %37, %40 : vector<4x8x32xf32>
    %c0_48 = arith.constant 0 : index
    %c2 = arith.constant 2 : index
    %c1_49 = arith.constant 1 : index
    %c0_50 = arith.constant 0 : index
    %42 = vector.load %arg17[%c0_48, %c2, %c1_49, %c0_50] : memref<4x10x10x32xf32, #tpu.memory_space<vmem>>, vector<4x1x8x32xf32>
    %43 = vector.shape_cast %42 : vector<4x1x8x32xf32> to vector<4x8x32xf32>
    %44 = vector.shape_cast %41 : vector<4x8x32xf32> to vector<4x1x8x32xf32>
    tpu.vector_store %arg17[%c0_48, %c2, %c1_49, %c0_50], %44 {strides = array<i32>} : memref<4x10x10x32xf32, #tpu.memory_space<vmem>>, vector<4x1x8x32xf32>,
    %c0_51 = arith.constant 0 : index
    %c64 = arith.constant 64 : index
    %c0_52 = arith.constant 0 : index
    %45 = tpu.strided_load %arg21[%c0_51, %c64, %c0_52] {strides = array<i32: 1, 2, 1>} : memref<4x256x32xf32, #tpu.memory_space<vmem>>, vector<4x8x32xf32>
    %c0_53 = arith.constant 0 : index
    %c65 = arith.constant 65 : index
    %c0_54 = arith.constant 0 : index
    %46 = tpu.strided_load %arg21[%c0_53, %c65, %c0_54] {strides = array<i32: 1, 2, 1>} : memref<4x256x32xf32, #tpu.memory_space<vmem>>, vector<4x8x32xf32>
    %47 = arith.maximumf %45, %46 : vector<4x8x32xf32>
    %c0_55 = arith.constant 0 : index
    %c80 = arith.constant 80 : index
    %c0_56 = arith.constant 0 : index
    %48 = tpu.strided_load %arg21[%c0_55, %c80, %c0_56] {strides = array<i32: 1, 2, 1>} : memref<4x256x32xf32, #tpu.memory_space<vmem>>, vector<4x8x32xf32>
    %c0_57 = arith.constant 0 : index
    %c81 = arith.constant 81 : index
    %c0_58 = arith.constant 0 : index
    %49 = tpu.strided_load %arg21[%c0_57, %c81, %c0_58] {strides = array<i32: 1, 2, 1>} : memref<4x256x32xf32, #tpu.memory_space<vmem>>, vector<4x8x32xf32>
    %50 = arith.maximumf %48, %49 : vector<4x8x32xf32>
    %51 = arith.maximumf %47, %50 : vector<4x8x32xf32>
    %c0_59 = arith.constant 0 : index
    %c3 = arith.constant 3 : index
    %c1_60 = arith.constant 1 : index
    %c0_61 = arith.constant 0 : index
    %52 = vector.load %arg17[%c0_59, %c3, %c1_60, %c0_61] : memref<4x10x10x32xf32, #tpu.memory_space<vmem>>, vector<4x1x8x32xf32>
    %53 = vector.shape_cast %52 : vector<4x1x8x32xf32> to vector<4x8x32xf32>
    %54 = vector.shape_cast %51 : vector<4x8x32xf32> to vector<4x1x8x32xf32>
    tpu.vector_store %arg17[%c0_59, %c3, %c1_60, %c0_61], %54 {strides = array<i32>} : memref<4x10x10x32xf32, #tpu.memory_space<vmem>>, vector<4x1x8x32xf32>,
    %c0_62 = arith.constant 0 : index
    %c96 = arith.constant 96 : index
    %c0_63 = arith.constant 0 : index
    %55 = tpu.strided_load %arg21[%c0_62, %c96, %c0_63] {strides = array<i32: 1, 2, 1>} : memref<4x256x32xf32, #tpu.memory_space<vmem>>, vector<4x8x32xf32>
    %c0_64 = arith.constant 0 : index
    %c97 = arith.constant 97 : index
    %c0_65 = arith.constant 0 : index
    %56 = tpu.strided_load %arg21[%c0_64, %c97, %c0_65] {strides = array<i32: 1, 2, 1>} : memref<4x256x32xf32, #tpu.memory_space<vmem>>, vector<4x8x32xf32>
    %57 = arith.maximumf %55, %56 : vector<4x8x32xf32>
    %c0_66 = arith.constant 0 : index
    %c112 = arith.constant 112 : index
    %c0_67 = arith.constant 0 : index
    %58 = tpu.strided_load %arg21[%c0_66, %c112, %c0_67] {strides = array<i32: 1, 2, 1>} : memref<4x256x32xf32, #tpu.memory_space<vmem>>, vector<4x8x32xf32>
    %c0_68 = arith.constant 0 : index
    %c113 = arith.constant 113 : index
    %c0_69 = arith.constant 0 : index
    %59 = tpu.strided_load %arg21[%c0_68, %c113, %c0_69] {strides = array<i32: 1, 2, 1>} : memref<4x256x32xf32, #tpu.memory_space<vmem>>, vector<4x8x32xf32>
    %60 = arith.maximumf %58, %59 : vector<4x8x32xf32>
    %61 = arith.maximumf %57, %60 : vector<4x8x32xf32>
    %c0_70 = arith.constant 0 : index
    %c4 = arith.constant 4 : index
    %c1_71 = arith.constant 1 : index
    %c0_72 = arith.constant 0 : index
    %62 = vector.load %arg17[%c0_70, %c4, %c1_71, %c0_72] : memref<4x10x10x32xf32, #tpu.memory_space<vmem>>, vector<4x1x8x32xf32>
    %63 = vector.shape_cast %62 : vector<4x1x8x32xf32> to vector<4x8x32xf32>
    %64 = vector.shape_cast %61 : vector<4x8x32xf32> to vector<4x1x8x32xf32>
    tpu.vector_store %arg17[%c0_70, %c4, %c1_71, %c0_72], %64 {strides = array<i32>} : memref<4x10x10x32xf32, #tpu.memory_space<vmem>>, vector<4x1x8x32xf32>,
    %c0_73 = arith.constant 0 : index
    %c128 = arith.constant 128 : index
    %c0_74 = arith.constant 0 : index
    %65 = tpu.strided_load %arg21[%c0_73, %c128, %c0_74] {strides = array<i32: 1, 2, 1>} : memref<4x256x32xf32, #tpu.memory_space<vmem>>, vector<4x8x32xf32>
    %c0_75 = arith.constant 0 : index
    %c129 = arith.constant 129 : index
    %c0_76 = arith.constant 0 : index
    %66 = tpu.strided_load %arg21[%c0_75, %c129, %c0_76] {strides = array<i32: 1, 2, 1>} : memref<4x256x32xf32, #tpu.memory_space<vmem>>, vector<4x8x32xf32>
    %67 = arith.maximumf %65, %66 : vector<4x8x32xf32>
    %c0_77 = arith.constant 0 : index
    %c144 = arith.constant 144 : index
    %c0_78 = arith.constant 0 : index
    %68 = tpu.strided_load %arg21[%c0_77, %c144, %c0_78] {strides = array<i32: 1, 2, 1>} : memref<4x256x32xf32, #tpu.memory_space<vmem>>, vector<4x8x32xf32>
    %c0_79 = arith.constant 0 : index
    %c145 = arith.constant 145 : index
    %c0_80 = arith.constant 0 : index
    %69 = tpu.strided_load %arg21[%c0_79, %c145, %c0_80] {strides = array<i32: 1, 2, 1>} : memref<4x256x32xf32, #tpu.memory_space<vmem>>, vector<4x8x32xf32>
    %70 = arith.maximumf %68, %69 : vector<4x8x32xf32>
    %71 = arith.maximumf %67, %70 : vector<4x8x32xf32>
    %c0_81 = arith.constant 0 : index
    %c5 = arith.constant 5 : index
    %c1_82 = arith.constant 1 : index
    %c0_83 = arith.constant 0 : index
    %72 = vector.load %arg17[%c0_81, %c5, %c1_82, %c0_83] : memref<4x10x10x32xf32, #tpu.memory_space<vmem>>, vector<4x1x8x32xf32>
    %73 = vector.shape_cast %72 : vector<4x1x8x32xf32> to vector<4x8x32xf32>
    %74 = vector.shape_cast %71 : vector<4x8x32xf32> to vector<4x1x8x32xf32>
    tpu.vector_store %arg17[%c0_81, %c5, %c1_82, %c0_83], %74 {strides = array<i32>} : memref<4x10x10x32xf32, #tpu.memory_space<vmem>>, vector<4x1x8x32xf32>,
    %c0_84 = arith.constant 0 : index
    %c160 = arith.constant 160 : index
    %c0_85 = arith.constant 0 : index
    %75 = tpu.strided_load %arg21[%c0_84, %c160, %c0_85] {strides = array<i32: 1, 2, 1>} : memref<4x256x32xf32, #tpu.memory_space<vmem>>, vector<4x8x32xf32>
    %c0_86 = arith.constant 0 : index
    %c161 = arith.constant 161 : index
    %c0_87 = arith.constant 0 : index
    %76 = tpu.strided_load %arg21[%c0_86, %c161, %c0_87] {strides = array<i32: 1, 2, 1>} : memref<4x256x32xf32, #tpu.memory_space<vmem>>, vector<4x8x32xf32>
    %77 = arith.maximumf %75, %76 : vector<4x8x32xf32>
    %c0_88 = arith.constant 0 : index
    %c176 = arith.constant 176 : index
    %c0_89 = arith.constant 0 : index
    %78 = tpu.strided_load %arg21[%c0_88, %c176, %c0_89] {strides = array<i32: 1, 2, 1>} : memref<4x256x32xf32, #tpu.memory_space<vmem>>, vector<4x8x32xf32>
    %c0_90 = arith.constant 0 : index
    %c177 = arith.constant 177 : index
    %c0_91 = arith.constant 0 : index
    %79 = tpu.strided_load %arg21[%c0_90, %c177, %c0_91] {strides = array<i32: 1, 2, 1>} : memref<4x256x32xf32, #tpu.memory_space<vmem>>, vector<4x8x32xf32>
    %80 = arith.maximumf %78, %79 : vector<4x8x32xf32>
    %81 = arith.maximumf %77, %80 : vector<4x8x32xf32>
    %c0_92 = arith.constant 0 : index
    %c6 = arith.constant 6 : index
    %c1_93 = arith.constant 1 : index
    %c0_94 = arith.constant 0 : index
    %82 = vector.load %arg17[%c0_92, %c6, %c1_93, %c0_94] : memref<4x10x10x32xf32, #tpu.memory_space<vmem>>, vector<4x1x8x32xf32>
    %83 = vector.shape_cast %82 : vector<4x1x8x32xf32> to vector<4x8x32xf32>
    %84 = vector.shape_cast %81 : vector<4x8x32xf32> to vector<4x1x8x32xf32>
    tpu.vector_store %arg17[%c0_92, %c6, %c1_93, %c0_94], %84 {strides = array<i32>} : memref<4x10x10x32xf32, #tpu.memory_space<vmem>>, vector<4x1x8x32xf32>,
    %c0_95 = arith.constant 0 : index
    %c192 = arith.constant 192 : index
    %c0_96 = arith.constant 0 : index
    %85 = tpu.strided_load %arg21[%c0_95, %c192, %c0_96] {strides = array<i32: 1, 2, 1>} : memref<4x256x32xf32, #tpu.memory_space<vmem>>, vector<4x8x32xf32>
    %c0_97 = arith.constant 0 : index
    %c193 = arith.constant 193 : index
    %c0_98 = arith.constant 0 : index
    %86 = tpu.strided_load %arg21[%c0_97, %c193, %c0_98] {strides = array<i32: 1, 2, 1>} : memref<4x256x32xf32, #tpu.memory_space<vmem>>, vector<4x8x32xf32>
    %87 = arith.maximumf %85, %86 : vector<4x8x32xf32>
    %c0_99 = arith.constant 0 : index
    %c208 = arith.constant 208 : index
    %c0_100 = arith.constant 0 : index
    %88 = tpu.strided_load %arg21[%c0_99, %c208, %c0_100] {strides = array<i32: 1, 2, 1>} : memref<4x256x32xf32, #tpu.memory_space<vmem>>, vector<4x8x32xf32>
    %c0_101 = arith.constant 0 : index
    %c209 = arith.constant 209 : index
    %c0_102 = arith.constant 0 : index
    %89 = tpu.strided_load %arg21[%c0_101, %c209, %c0_102] {strides = array<i32: 1, 2, 1>} : memref<4x256x32xf32, #tpu.memory_space<vmem>>, vector<4x8x32xf32>
    %90 = arith.maximumf %88, %89 : vector<4x8x32xf32>
    %91 = arith.maximumf %87, %90 : vector<4x8x32xf32>
    %c0_103 = arith.constant 0 : index
    %c7 = arith.constant 7 : index
    %c1_104 = arith.constant 1 : index
    %c0_105 = arith.constant 0 : index
    %92 = vector.load %arg17[%c0_103, %c7, %c1_104, %c0_105] : memref<4x10x10x32xf32, #tpu.memory_space<vmem>>, vector<4x1x8x32xf32>
    %93 = vector.shape_cast %92 : vector<4x1x8x32xf32> to vector<4x8x32xf32>
    %94 = vector.shape_cast %91 : vector<4x8x32xf32> to vector<4x1x8x32xf32>
    tpu.vector_store %arg17[%c0_103, %c7, %c1_104, %c0_105], %94 {strides = array<i32>} : memref<4x10x10x32xf32, #tpu.memory_space<vmem>>, vector<4x1x8x32xf32>,
    %c0_106 = arith.constant 0 : index
    %c224 = arith.constant 224 : index
    %c0_107 = arith.constant 0 : index
    %95 = tpu.strided_load %arg21[%c0_106, %c224, %c0_107] {strides = array<i32: 1, 2, 1>} : memref<4x256x32xf32, #tpu.memory_space<vmem>>, vector<4x8x32xf32>
    %c0_108 = arith.constant 0 : index
    %c225 = arith.constant 225 : index
    %c0_109 = arith.constant 0 : index
    %96 = tpu.strided_load %arg21[%c0_108, %c225, %c0_109] {strides = array<i32: 1, 2, 1>} : memref<4x256x32xf32, #tpu.memory_space<vmem>>, vector<4x8x32xf32>
    %97 = arith.maximumf %95, %96 : vector<4x8x32xf32>
    %c0_110 = arith.constant 0 : index
    %c240 = arith.constant 240 : index
    %c0_111 = arith.constant 0 : index
    %98 = tpu.strided_load %arg21[%c0_110, %c240, %c0_111] {strides = array<i32: 1, 2, 1>} : memref<4x256x32xf32, #tpu.memory_space<vmem>>, vector<4x8x32xf32>
    %c0_112 = arith.constant 0 : index
    %c241 = arith.constant 241 : index
    %c0_113 = arith.constant 0 : index
    %99 = tpu.strided_load %arg21[%c0_112, %c241, %c0_113] {strides = array<i32: 1, 2, 1>} : memref<4x256x32xf32, #tpu.memory_space<vmem>>, vector<4x8x32xf32>
    %100 = arith.maximumf %98, %99 : vector<4x8x32xf32>
    %101 = arith.maximumf %97, %100 : vector<4x8x32xf32>
    %c0_114 = arith.constant 0 : index
    %c8 = arith.constant 8 : index
    %c1_115 = arith.constant 1 : index
    %c0_116 = arith.constant 0 : index
    %102 = vector.load %arg17[%c0_114, %c8, %c1_115, %c0_116] : memref<4x10x10x32xf32, #tpu.memory_space<vmem>>, vector<4x1x8x32xf32>
    %103 = vector.shape_cast %102 : vector<4x1x8x32xf32> to vector<4x8x32xf32>
    %104 = vector.shape_cast %101 : vector<4x8x32xf32> to vector<4x1x8x32xf32>
    tpu.vector_store %arg17[%c0_114, %c8, %c1_115, %c0_116], %104 {strides = array<i32>} : memref<4x10x10x32xf32, #tpu.memory_space<vmem>>, vector<4x1x8x32xf32>,
    %c0_117 = arith.constant 0 : index
    %c0_118 = arith.constant 0 : index
    %c0_119 = arith.constant 0 : index
    %c0_120 = arith.constant 0 : index
    %105 = vector.load %arg17[%c0_117, %c0_118, %c0_119, %c0_120] : memref<4x10x10x32xf32, #tpu.memory_space<vmem>>, vector<4x8x8x32xf32>
    %106 = vector.shape_cast %105 : vector<4x8x8x32xf32> to vector<256x32xf32>
    %107 = arith.truncf %106 : vector<256x32xf32> to vector<256x32xbf16>
    %c0_121 = arith.constant 0 : index
    %c0_122 = arith.constant 0 : index
    %108 = vector.load %arg19[%c0_121, %c0_122] : memref<256x288xbf16, #tpu.memory_space<vmem>>, vector<256x32xbf16>
    tpu.vector_store %arg19[%c0_121, %c0_122], %107 {strides = array<i32>} : memref<256x288xbf16, #tpu.memory_space<vmem>>, vector<256x32xbf16>,
    %c0_123 = arith.constant 0 : index
    %c0_124 = arith.constant 0 : index
    %c1_125 = arith.constant 1 : index
    %c0_126 = arith.constant 0 : index
    %109 = vector.load %arg17[%c0_123, %c0_124, %c1_125, %c0_126] : memref<4x10x10x32xf32, #tpu.memory_space<vmem>>, vector<4x8x8x32xf32>
    %110 = vector.shape_cast %109 : vector<4x8x8x32xf32> to vector<256x32xf32>
    %111 = arith.truncf %110 : vector<256x32xf32> to vector<256x32xbf16>
    %c0_127 = arith.constant 0 : index
    %c32_128 = arith.constant 32 : index
    %112 = vector.load %arg19[%c0_127, %c32_128] : memref<256x288xbf16, #tpu.memory_space<vmem>>, vector<256x32xbf16>
    tpu.vector_store %arg19[%c0_127, %c32_128], %111 {strides = array<i32>} : memref<256x288xbf16, #tpu.memory_space<vmem>>, vector<256x32xbf16>,
    %c0_129 = arith.constant 0 : index
    %c0_130 = arith.constant 0 : index
    %c2_131 = arith.constant 2 : index
    %c0_132 = arith.constant 0 : index
    %113 = vector.load %arg17[%c0_129, %c0_130, %c2_131, %c0_132] : memref<4x10x10x32xf32, #tpu.memory_space<vmem>>, vector<4x8x8x32xf32>
    %114 = vector.shape_cast %113 : vector<4x8x8x32xf32> to vector<256x32xf32>
    %115 = arith.truncf %114 : vector<256x32xf32> to vector<256x32xbf16>
    %c0_133 = arith.constant 0 : index
    %c64_134 = arith.constant 64 : index
    %116 = vector.load %arg19[%c0_133, %c64_134] : memref<256x288xbf16, #tpu.memory_space<vmem>>, vector<256x32xbf16>
    tpu.vector_store %arg19[%c0_133, %c64_134], %115 {strides = array<i32>} : memref<256x288xbf16, #tpu.memory_space<vmem>>, vector<256x32xbf16>,
    %c0_135 = arith.constant 0 : index
    %c1_136 = arith.constant 1 : index
    %c0_137 = arith.constant 0 : index
    %c0_138 = arith.constant 0 : index
    %117 = vector.load %arg17[%c0_135, %c1_136, %c0_137, %c0_138] : memref<4x10x10x32xf32, #tpu.memory_space<vmem>>, vector<4x8x8x32xf32>
    %118 = vector.shape_cast %117 : vector<4x8x8x32xf32> to vector<256x32xf32>
    %119 = arith.truncf %118 : vector<256x32xf32> to vector<256x32xbf16>
    %c0_139 = arith.constant 0 : index
    %c96_140 = arith.constant 96 : index
    %120 = vector.load %arg19[%c0_139, %c96_140] : memref<256x288xbf16, #tpu.memory_space<vmem>>, vector<256x32xbf16>
    tpu.vector_store %arg19[%c0_139, %c96_140], %119 {strides = array<i32>} : memref<256x288xbf16, #tpu.memory_space<vmem>>, vector<256x32xbf16>,
    %c0_141 = arith.constant 0 : index
    %c1_142 = arith.constant 1 : index
    %c1_143 = arith.constant 1 : index
    %c0_144 = arith.constant 0 : index
    %121 = vector.load %arg17[%c0_141, %c1_142, %c1_143, %c0_144] : memref<4x10x10x32xf32, #tpu.memory_space<vmem>>, vector<4x8x8x32xf32>
    %122 = vector.shape_cast %121 : vector<4x8x8x32xf32> to vector<256x32xf32>
    %123 = arith.truncf %122 : vector<256x32xf32> to vector<256x32xbf16>
    %c0_145 = arith.constant 0 : index
    %c128_146 = arith.constant 128 : index
    %124 = vector.load %arg19[%c0_145, %c128_146] : memref<256x288xbf16, #tpu.memory_space<vmem>>, vector<256x32xbf16>
    tpu.vector_store %arg19[%c0_145, %c128_146], %123 {strides = array<i32>} : memref<256x288xbf16, #tpu.memory_space<vmem>>, vector<256x32xbf16>,
    %c0_147 = arith.constant 0 : index
    %c1_148 = arith.constant 1 : index
    %c2_149 = arith.constant 2 : index
    %c0_150 = arith.constant 0 : index
    %125 = vector.load %arg17[%c0_147, %c1_148, %c2_149, %c0_150] : memref<4x10x10x32xf32, #tpu.memory_space<vmem>>, vector<4x8x8x32xf32>
    %126 = vector.shape_cast %125 : vector<4x8x8x32xf32> to vector<256x32xf32>
    %127 = arith.truncf %126 : vector<256x32xf32> to vector<256x32xbf16>
    %c0_151 = arith.constant 0 : index
    %c160_152 = arith.constant 160 : index
    %128 = vector.load %arg19[%c0_151, %c160_152] : memref<256x288xbf16, #tpu.memory_space<vmem>>, vector<256x32xbf16>
    tpu.vector_store %arg19[%c0_151, %c160_152], %127 {strides = array<i32>} : memref<256x288xbf16, #tpu.memory_space<vmem>>, vector<256x32xbf16>,
    %c0_153 = arith.constant 0 : index
    %c2_154 = arith.constant 2 : index
    %c0_155 = arith.constant 0 : index
    %c0_156 = arith.constant 0 : index
    %129 = vector.load %arg17[%c0_153, %c2_154, %c0_155, %c0_156] : memref<4x10x10x32xf32, #tpu.memory_space<vmem>>, vector<4x8x8x32xf32>
    %130 = vector.shape_cast %129 : vector<4x8x8x32xf32> to vector<256x32xf32>
    %131 = arith.truncf %130 : vector<256x32xf32> to vector<256x32xbf16>
    %c0_157 = arith.constant 0 : index
    %c192_158 = arith.constant 192 : index
    %132 = vector.load %arg19[%c0_157, %c192_158] : memref<256x288xbf16, #tpu.memory_space<vmem>>, vector<256x32xbf16>
    tpu.vector_store %arg19[%c0_157, %c192_158], %131 {strides = array<i32>} : memref<256x288xbf16, #tpu.memory_space<vmem>>, vector<256x32xbf16>,
    %c0_159 = arith.constant 0 : index
    %c2_160 = arith.constant 2 : index
    %c1_161 = arith.constant 1 : index
    %c0_162 = arith.constant 0 : index
    %133 = vector.load %arg17[%c0_159, %c2_160, %c1_161, %c0_162] : memref<4x10x10x32xf32, #tpu.memory_space<vmem>>, vector<4x8x8x32xf32>
    %134 = vector.shape_cast %133 : vector<4x8x8x32xf32> to vector<256x32xf32>
    %135 = arith.truncf %134 : vector<256x32xf32> to vector<256x32xbf16>
    %c0_163 = arith.constant 0 : index
    %c224_164 = arith.constant 224 : index
    %136 = vector.load %arg19[%c0_163, %c224_164] : memref<256x288xbf16, #tpu.memory_space<vmem>>, vector<256x32xbf16>
    tpu.vector_store %arg19[%c0_163, %c224_164], %135 {strides = array<i32>} : memref<256x288xbf16, #tpu.memory_space<vmem>>, vector<256x32xbf16>,
    %c0_165 = arith.constant 0 : index
    %c2_166 = arith.constant 2 : index
    %c2_167 = arith.constant 2 : index
    %c0_168 = arith.constant 0 : index
    %137 = vector.load %arg17[%c0_165, %c2_166, %c2_167, %c0_168] : memref<4x10x10x32xf32, #tpu.memory_space<vmem>>, vector<4x8x8x32xf32>
    %138 = vector.shape_cast %137 : vector<4x8x8x32xf32> to vector<256x32xf32>
    %139 = arith.truncf %138 : vector<256x32xf32> to vector<256x32xbf16>
    %c0_169 = arith.constant 0 : index
    %c256 = arith.constant 256 : index
    %140 = vector.load %arg19[%c0_169, %c256] : memref<256x288xbf16, #tpu.memory_space<vmem>>, vector<256x32xbf16>
    tpu.vector_store %arg19[%c0_169, %c256], %139 {strides = array<i32>} : memref<256x288xbf16, #tpu.memory_space<vmem>>, vector<256x32xbf16>,
    %c0_170 = arith.constant 0 : index
    %c0_171 = arith.constant 0 : index
    %141 = vector.load %arg19[%c0_170, %c0_171] : memref<256x288xbf16, #tpu.memory_space<vmem>>, vector<256x288xbf16>
    %c0_172 = arith.constant 0 : index
    %c0_173 = arith.constant 0 : index
    %142 = vector.load %arg5[%c0_172, %c0_173] : memref<288x64xbf16, #tpu.memory_space<vmem>>, vector<288x64xbf16>
    %cst_174 = arith.constant dense<0.000000e+00> : vector<256x64xf32>
    %143 = tpu.matmul %141, %142, %cst_174 {dimension_numbers = #tpu.dot_dimension_numbers<[1], [0], [0], [1], [0, 0, 1, 1], [], []>} : vector<256x288xbf16>, vector<288x64xbf16>, vector<256x64xf32> -> vector<256x64xf32>
    %c0_175 = arith.constant 0 : index
    %c0_176 = arith.constant 0 : index
    %144 = vector.load %arg6[%c0_175, %c0_176] : memref<1x64xf32, #tpu.memory_space<vmem>>, vector<1x64xf32>
    %145 = vector.broadcast %144 : vector<1x64xf32> to vector<256x64xf32>
    %146 = arith.addf %143, %145 : vector<256x64xf32>
    %cst_177 = arith.constant 0.000000e+00 : f32
    %147 = vector.broadcast %cst_177 : f32 to vector<256x64xf32>
    %148 = arith.maximumf %146, %147 : vector<256x64xf32>
    %149 = vector.shape_cast %148 : vector<256x64xf32> to vector<4x64x64xf32>
    %c0_178 = arith.constant 0 : index
    %c0_179 = arith.constant 0 : index
    %c0_180 = arith.constant 0 : index
    %150 = vector.load %arg22[%c0_178, %c0_179, %c0_180] : memref<4x64x64xf32, #tpu.memory_space<vmem>>, vector<4x64x64xf32>
    tpu.vector_store %arg22[%c0_178, %c0_179, %c0_180], %149 {strides = array<i32>} : memref<4x64x64xf32, #tpu.memory_space<vmem>>, vector<4x64x64xf32>,
    %cst_181 = arith.constant 0.000000e+00 : f32
    %151 = vector.broadcast %cst_181 : f32 to vector<4x6x64xf32>
    %cst_182 = arith.constant 0.000000e+00 : f32
    %152 = vector.broadcast %cst_182 : f32 to vector<4x6x64xf32>
    %c0_183 = arith.constant 0 : index
    %c0_184 = arith.constant 0 : index
    %c0_185 = arith.constant 0 : index
    %c0_186 = arith.constant 0 : index
    %153 = vector.load %arg18[%c0_183, %c0_184, %c0_185, %c0_186] : memref<4x6x6x64xf32, #tpu.memory_space<vmem>>, vector<4x1x6x64xf32>
    %154 = vector.shape_cast %153 : vector<4x1x6x64xf32> to vector<4x6x64xf32>
    %155 = vector.shape_cast %151 : vector<4x6x64xf32> to vector<4x1x6x64xf32>
    tpu.vector_store %arg18[%c0_183, %c0_184, %c0_185, %c0_186], %155 {strides = array<i32>} : memref<4x6x6x64xf32, #tpu.memory_space<vmem>>, vector<4x1x6x64xf32>,
    %c0_187 = arith.constant 0 : index
    %c5_188 = arith.constant 5 : index
    %c0_189 = arith.constant 0 : index
    %c0_190 = arith.constant 0 : index
    %156 = vector.load %arg18[%c0_187, %c5_188, %c0_189, %c0_190] : memref<4x6x6x64xf32, #tpu.memory_space<vmem>>, vector<4x1x6x64xf32>
    %157 = vector.shape_cast %156 : vector<4x1x6x64xf32> to vector<4x6x64xf32>
    %158 = vector.shape_cast %151 : vector<4x6x64xf32> to vector<4x1x6x64xf32>
    tpu.vector_store %arg18[%c0_187, %c5_188, %c0_189, %c0_190], %158 {strides = array<i32>} : memref<4x6x6x64xf32, #tpu.memory_space<vmem>>, vector<4x1x6x64xf32>,
    %c0_191 = arith.constant 0 : index
    %c0_192 = arith.constant 0 : index
    %c0_193 = arith.constant 0 : index
    %c0_194 = arith.constant 0 : index
    %159 = vector.load %arg18[%c0_191, %c0_192, %c0_193, %c0_194] : memref<4x6x6x64xf32, #tpu.memory_space<vmem>>, vector<4x6x1x64xf32>
    %160 = vector.shape_cast %159 : vector<4x6x1x64xf32> to vector<4x6x64xf32>
    %161 = vector.shape_cast %152 : vector<4x6x64xf32> to vector<4x6x1x64xf32>
    tpu.vector_store %arg18[%c0_191, %c0_192, %c0_193, %c0_194], %161 {strides = array<i32>} : memref<4x6x6x64xf32, #tpu.memory_space<vmem>>, vector<4x6x1x64xf32>,
    %c0_195 = arith.constant 0 : index
    %c0_196 = arith.constant 0 : index
    %c5_197 = arith.constant 5 : index
    %c0_198 = arith.constant 0 : index
    %162 = vector.load %arg18[%c0_195, %c0_196, %c5_197, %c0_198] : memref<4x6x6x64xf32, #tpu.memory_space<vmem>>, vector<4x6x1x64xf32>
    %163 = vector.shape_cast %162 : vector<4x6x1x64xf32> to vector<4x6x64xf32>
    %164 = vector.shape_cast %152 : vector<4x6x64xf32> to vector<4x6x1x64xf32>
    tpu.vector_store %arg18[%c0_195, %c0_196, %c5_197, %c0_198], %164 {strides = array<i32>} : memref<4x6x6x64xf32, #tpu.memory_space<vmem>>, vector<4x6x1x64xf32>,
    %c0_199 = arith.constant 0 : index
    %c0_200 = arith.constant 0 : index
    %c0_201 = arith.constant 0 : index
    %165 = tpu.strided_load %arg22[%c0_199, %c0_200, %c0_201] {strides = array<i32: 1, 2, 1>} : memref<4x64x64xf32, #tpu.memory_space<vmem>>, vector<4x4x64xf32>
    %c0_202 = arith.constant 0 : index
    %c1_203 = arith.constant 1 : index
    %c0_204 = arith.constant 0 : index
    %166 = tpu.strided_load %arg22[%c0_202, %c1_203, %c0_204] {strides = array<i32: 1, 2, 1>} : memref<4x64x64xf32, #tpu.memory_space<vmem>>, vector<4x4x64xf32>
    %167 = arith.maximumf %165, %166 : vector<4x4x64xf32>
    %c0_205 = arith.constant 0 : index
    %c8_206 = arith.constant 8 : index
    %c0_207 = arith.constant 0 : index
    %168 = tpu.strided_load %arg22[%c0_205, %c8_206, %c0_207] {strides = array<i32: 1, 2, 1>} : memref<4x64x64xf32, #tpu.memory_space<vmem>>, vector<4x4x64xf32>
    %c0_208 = arith.constant 0 : index
    %c9_209 = arith.constant 9 : index
    %c0_210 = arith.constant 0 : index
    %169 = tpu.strided_load %arg22[%c0_208, %c9_209, %c0_210] {strides = array<i32: 1, 2, 1>} : memref<4x64x64xf32, #tpu.memory_space<vmem>>, vector<4x4x64xf32>
    %170 = arith.maximumf %168, %169 : vector<4x4x64xf32>
    %171 = arith.maximumf %167, %170 : vector<4x4x64xf32>
    %c0_211 = arith.constant 0 : index
    %c1_212 = arith.constant 1 : index
    %c1_213 = arith.constant 1 : index
    %c0_214 = arith.constant 0 : index
    %172 = vector.load %arg18[%c0_211, %c1_212, %c1_213, %c0_214] : memref<4x6x6x64xf32, #tpu.memory_space<vmem>>, vector<4x1x4x64xf32>
    %173 = vector.shape_cast %172 : vector<4x1x4x64xf32> to vector<4x4x64xf32>
    %174 = vector.shape_cast %171 : vector<4x4x64xf32> to vector<4x1x4x64xf32>
    tpu.vector_store %arg18[%c0_211, %c1_212, %c1_213, %c0_214], %174 {strides = array<i32>} : memref<4x6x6x64xf32, #tpu.memory_space<vmem>>, vector<4x1x4x64xf32>,
    %c0_215 = arith.constant 0 : index
    %c16_216 = arith.constant 16 : index
    %c0_217 = arith.constant 0 : index
    %175 = tpu.strided_load %arg22[%c0_215, %c16_216, %c0_217] {strides = array<i32: 1, 2, 1>} : memref<4x64x64xf32, #tpu.memory_space<vmem>>, vector<4x4x64xf32>
    %c0_218 = arith.constant 0 : index
    %c17_219 = arith.constant 17 : index
    %c0_220 = arith.constant 0 : index
    %176 = tpu.strided_load %arg22[%c0_218, %c17_219, %c0_220] {strides = array<i32: 1, 2, 1>} : memref<4x64x64xf32, #tpu.memory_space<vmem>>, vector<4x4x64xf32>
    %177 = arith.maximumf %175, %176 : vector<4x4x64xf32>
    %c0_221 = arith.constant 0 : index
    %c24 = arith.constant 24 : index
    %c0_222 = arith.constant 0 : index
    %178 = tpu.strided_load %arg22[%c0_221, %c24, %c0_222] {strides = array<i32: 1, 2, 1>} : memref<4x64x64xf32, #tpu.memory_space<vmem>>, vector<4x4x64xf32>
    %c0_223 = arith.constant 0 : index
    %c25 = arith.constant 25 : index
    %c0_224 = arith.constant 0 : index
    %179 = tpu.strided_load %arg22[%c0_223, %c25, %c0_224] {strides = array<i32: 1, 2, 1>} : memref<4x64x64xf32, #tpu.memory_space<vmem>>, vector<4x4x64xf32>
    %180 = arith.maximumf %178, %179 : vector<4x4x64xf32>
    %181 = arith.maximumf %177, %180 : vector<4x4x64xf32>
    %c0_225 = arith.constant 0 : index
    %c2_226 = arith.constant 2 : index
    %c1_227 = arith.constant 1 : index
    %c0_228 = arith.constant 0 : index
    %182 = vector.load %arg18[%c0_225, %c2_226, %c1_227, %c0_228] : memref<4x6x6x64xf32, #tpu.memory_space<vmem>>, vector<4x1x4x64xf32>
    %183 = vector.shape_cast %182 : vector<4x1x4x64xf32> to vector<4x4x64xf32>
    %184 = vector.shape_cast %181 : vector<4x4x64xf32> to vector<4x1x4x64xf32>
    tpu.vector_store %arg18[%c0_225, %c2_226, %c1_227, %c0_228], %184 {strides = array<i32>} : memref<4x6x6x64xf32, #tpu.memory_space<vmem>>, vector<4x1x4x64xf32>,
    %c0_229 = arith.constant 0 : index
    %c32_230 = arith.constant 32 : index
    %c0_231 = arith.constant 0 : index
    %185 = tpu.strided_load %arg22[%c0_229, %c32_230, %c0_231] {strides = array<i32: 1, 2, 1>} : memref<4x64x64xf32, #tpu.memory_space<vmem>>, vector<4x4x64xf32>
    %c0_232 = arith.constant 0 : index
    %c33_233 = arith.constant 33 : index
    %c0_234 = arith.constant 0 : index
    %186 = tpu.strided_load %arg22[%c0_232, %c33_233, %c0_234] {strides = array<i32: 1, 2, 1>} : memref<4x64x64xf32, #tpu.memory_space<vmem>>, vector<4x4x64xf32>
    %187 = arith.maximumf %185, %186 : vector<4x4x64xf32>
    %c0_235 = arith.constant 0 : index
    %c40 = arith.constant 40 : index
    %c0_236 = arith.constant 0 : index
    %188 = tpu.strided_load %arg22[%c0_235, %c40, %c0_236] {strides = array<i32: 1, 2, 1>} : memref<4x64x64xf32, #tpu.memory_space<vmem>>, vector<4x4x64xf32>
    %c0_237 = arith.constant 0 : index
    %c41 = arith.constant 41 : index
    %c0_238 = arith.constant 0 : index
    %189 = tpu.strided_load %arg22[%c0_237, %c41, %c0_238] {strides = array<i32: 1, 2, 1>} : memref<4x64x64xf32, #tpu.memory_space<vmem>>, vector<4x4x64xf32>
    %190 = arith.maximumf %188, %189 : vector<4x4x64xf32>
    %191 = arith.maximumf %187, %190 : vector<4x4x64xf32>
    %c0_239 = arith.constant 0 : index
    %c3_240 = arith.constant 3 : index
    %c1_241 = arith.constant 1 : index
    %c0_242 = arith.constant 0 : index
    %192 = vector.load %arg18[%c0_239, %c3_240, %c1_241, %c0_242] : memref<4x6x6x64xf32, #tpu.memory_space<vmem>>, vector<4x1x4x64xf32>
    %193 = vector.shape_cast %192 : vector<4x1x4x64xf32> to vector<4x4x64xf32>
    %194 = vector.shape_cast %191 : vector<4x4x64xf32> to vector<4x1x4x64xf32>
    tpu.vector_store %arg18[%c0_239, %c3_240, %c1_241, %c0_242], %194 {strides = array<i32>} : memref<4x6x6x64xf32, #tpu.memory_space<vmem>>, vector<4x1x4x64xf32>,
    %c0_243 = arith.constant 0 : index
    %c48_244 = arith.constant 48 : index
    %c0_245 = arith.constant 0 : index
    %195 = tpu.strided_load %arg22[%c0_243, %c48_244, %c0_245] {strides = array<i32: 1, 2, 1>} : memref<4x64x64xf32, #tpu.memory_space<vmem>>, vector<4x4x64xf32>
    %c0_246 = arith.constant 0 : index
    %c49_247 = arith.constant 49 : index
    %c0_248 = arith.constant 0 : index
    %196 = tpu.strided_load %arg22[%c0_246, %c49_247, %c0_248] {strides = array<i32: 1, 2, 1>} : memref<4x64x64xf32, #tpu.memory_space<vmem>>, vector<4x4x64xf32>
    %197 = arith.maximumf %195, %196 : vector<4x4x64xf32>
    %c0_249 = arith.constant 0 : index
    %c56 = arith.constant 56 : index
    %c0_250 = arith.constant 0 : index
    %198 = tpu.strided_load %arg22[%c0_249, %c56, %c0_250] {strides = array<i32: 1, 2, 1>} : memref<4x64x64xf32, #tpu.memory_space<vmem>>, vector<4x4x64xf32>
    %c0_251 = arith.constant 0 : index
    %c57 = arith.constant 57 : index
    %c0_252 = arith.constant 0 : index
    %199 = tpu.strided_load %arg22[%c0_251, %c57, %c0_252] {strides = array<i32: 1, 2, 1>} : memref<4x64x64xf32, #tpu.memory_space<vmem>>, vector<4x4x64xf32>
    %200 = arith.maximumf %198, %199 : vector<4x4x64xf32>
    %201 = arith.maximumf %197, %200 : vector<4x4x64xf32>
    %c0_253 = arith.constant 0 : index
    %c4_254 = arith.constant 4 : index
    %c1_255 = arith.constant 1 : index
    %c0_256 = arith.constant 0 : index
    %202 = vector.load %arg18[%c0_253, %c4_254, %c1_255, %c0_256] : memref<4x6x6x64xf32, #tpu.memory_space<vmem>>, vector<4x1x4x64xf32>
    %203 = vector.shape_cast %202 : vector<4x1x4x64xf32> to vector<4x4x64xf32>
    %204 = vector.shape_cast %201 : vector<4x4x64xf32> to vector<4x1x4x64xf32>
    tpu.vector_store %arg18[%c0_253, %c4_254, %c1_255, %c0_256], %204 {strides = array<i32>} : memref<4x6x6x64xf32, #tpu.memory_space<vmem>>, vector<4x1x4x64xf32>,
    %c0_257 = arith.constant 0 : index
    %c0_258 = arith.constant 0 : index
    %c0_259 = arith.constant 0 : index
    %c0_260 = arith.constant 0 : index
    %205 = vector.load %arg18[%c0_257, %c0_258, %c0_259, %c0_260] : memref<4x6x6x64xf32, #tpu.memory_space<vmem>>, vector<4x4x4x64xf32>
    %206 = vector.shape_cast %205 : vector<4x4x4x64xf32> to vector<64x64xf32>
    %207 = arith.truncf %206 : vector<64x64xf32> to vector<64x64xbf16>
    %c0_261 = arith.constant 0 : index
    %c0_262 = arith.constant 0 : index
    %208 = vector.load %arg20[%c0_261, %c0_262] : memref<64x576xbf16, #tpu.memory_space<vmem>>, vector<64x64xbf16>
    tpu.vector_store %arg20[%c0_261, %c0_262], %207 {strides = array<i32>} : memref<64x576xbf16, #tpu.memory_space<vmem>>, vector<64x64xbf16>,
    %c0_263 = arith.constant 0 : index
    %c0_264 = arith.constant 0 : index
    %c1_265 = arith.constant 1 : index
    %c0_266 = arith.constant 0 : index
    %209 = vector.load %arg18[%c0_263, %c0_264, %c1_265, %c0_266] : memref<4x6x6x64xf32, #tpu.memory_space<vmem>>, vector<4x4x4x64xf32>
    %210 = vector.shape_cast %209 : vector<4x4x4x64xf32> to vector<64x64xf32>
    %211 = arith.truncf %210 : vector<64x64xf32> to vector<64x64xbf16>
    %c0_267 = arith.constant 0 : index
    %c64_268 = arith.constant 64 : index
    %212 = vector.load %arg20[%c0_267, %c64_268] : memref<64x576xbf16, #tpu.memory_space<vmem>>, vector<64x64xbf16>
    tpu.vector_store %arg20[%c0_267, %c64_268], %211 {strides = array<i32>} : memref<64x576xbf16, #tpu.memory_space<vmem>>, vector<64x64xbf16>,
    %c0_269 = arith.constant 0 : index
    %c0_270 = arith.constant 0 : index
    %c2_271 = arith.constant 2 : index
    %c0_272 = arith.constant 0 : index
    %213 = vector.load %arg18[%c0_269, %c0_270, %c2_271, %c0_272] : memref<4x6x6x64xf32, #tpu.memory_space<vmem>>, vector<4x4x4x64xf32>
    %214 = vector.shape_cast %213 : vector<4x4x4x64xf32> to vector<64x64xf32>
    %215 = arith.truncf %214 : vector<64x64xf32> to vector<64x64xbf16>
    %c0_273 = arith.constant 0 : index
    %c128_274 = arith.constant 128 : index
    %216 = vector.load %arg20[%c0_273, %c128_274] : memref<64x576xbf16, #tpu.memory_space<vmem>>, vector<64x64xbf16>
    tpu.vector_store %arg20[%c0_273, %c128_274], %215 {strides = array<i32>} : memref<64x576xbf16, #tpu.memory_space<vmem>>, vector<64x64xbf16>,
    %c0_275 = arith.constant 0 : index
    %c1_276 = arith.constant 1 : index
    %c0_277 = arith.constant 0 : index
    %c0_278 = arith.constant 0 : index
    %217 = vector.load %arg18[%c0_275, %c1_276, %c0_277, %c0_278] : memref<4x6x6x64xf32, #tpu.memory_space<vmem>>, vector<4x4x4x64xf32>
    %218 = vector.shape_cast %217 : vector<4x4x4x64xf32> to vector<64x64xf32>
    %219 = arith.truncf %218 : vector<64x64xf32> to vector<64x64xbf16>
    %c0_279 = arith.constant 0 : index
    %c192_280 = arith.constant 192 : index
    %220 = vector.load %arg20[%c0_279, %c192_280] : memref<64x576xbf16, #tpu.memory_space<vmem>>, vector<64x64xbf16>
    tpu.vector_store %arg20[%c0_279, %c192_280], %219 {strides = array<i32>} : memref<64x576xbf16, #tpu.memory_space<vmem>>, vector<64x64xbf16>,
    %c0_281 = arith.constant 0 : index
    %c1_282 = arith.constant 1 : index
    %c1_283 = arith.constant 1 : index
    %c0_284 = arith.constant 0 : index
    %221 = vector.load %arg18[%c0_281, %c1_282, %c1_283, %c0_284] : memref<4x6x6x64xf32, #tpu.memory_space<vmem>>, vector<4x4x4x64xf32>
    %222 = vector.shape_cast %221 : vector<4x4x4x64xf32> to vector<64x64xf32>
    %223 = arith.truncf %222 : vector<64x64xf32> to vector<64x64xbf16>
    %c0_285 = arith.constant 0 : index
    %c256_286 = arith.constant 256 : index
    %224 = vector.load %arg20[%c0_285, %c256_286] : memref<64x576xbf16, #tpu.memory_space<vmem>>, vector<64x64xbf16>
    tpu.vector_store %arg20[%c0_285, %c256_286], %223 {strides = array<i32>} : memref<64x576xbf16, #tpu.memory_space<vmem>>, vector<64x64xbf16>,
    %c0_287 = arith.constant 0 : index
    %c1_288 = arith.constant 1 : index
    %c2_289 = arith.constant 2 : index
    %c0_290 = arith.constant 0 : index
    %225 = vector.load %arg18[%c0_287, %c1_288, %c2_289, %c0_290] : memref<4x6x6x64xf32, #tpu.memory_space<vmem>>, vector<4x4x4x64xf32>
    %226 = vector.shape_cast %225 : vector<4x4x4x64xf32> to vector<64x64xf32>
    %227 = arith.truncf %226 : vector<64x64xf32> to vector<64x64xbf16>
    %c0_291 = arith.constant 0 : index
    %c320 = arith.constant 320 : index
    %228 = vector.load %arg20[%c0_291, %c320] : memref<64x576xbf16, #tpu.memory_space<vmem>>, vector<64x64xbf16>
    tpu.vector_store %arg20[%c0_291, %c320], %227 {strides = array<i32>} : memref<64x576xbf16, #tpu.memory_space<vmem>>, vector<64x64xbf16>,
    %c0_292 = arith.constant 0 : index
    %c2_293 = arith.constant 2 : index
    %c0_294 = arith.constant 0 : index
    %c0_295 = arith.constant 0 : index
    %229 = vector.load %arg18[%c0_292, %c2_293, %c0_294, %c0_295] : memref<4x6x6x64xf32, #tpu.memory_space<vmem>>, vector<4x4x4x64xf32>
    %230 = vector.shape_cast %229 : vector<4x4x4x64xf32> to vector<64x64xf32>
    %231 = arith.truncf %230 : vector<64x64xf32> to vector<64x64xbf16>
    %c0_296 = arith.constant 0 : index
    %c384 = arith.constant 384 : index
    %232 = vector.load %arg20[%c0_296, %c384] : memref<64x576xbf16, #tpu.memory_space<vmem>>, vector<64x64xbf16>
    tpu.vector_store %arg20[%c0_296, %c384], %231 {strides = array<i32>} : memref<64x576xbf16, #tpu.memory_space<vmem>>, vector<64x64xbf16>,
    %c0_297 = arith.constant 0 : index
    %c2_298 = arith.constant 2 : index
    %c1_299 = arith.constant 1 : index
    %c0_300 = arith.constant 0 : index
    %233 = vector.load %arg18[%c0_297, %c2_298, %c1_299, %c0_300] : memref<4x6x6x64xf32, #tpu.memory_space<vmem>>, vector<4x4x4x64xf32>
    %234 = vector.shape_cast %233 : vector<4x4x4x64xf32> to vector<64x64xf32>
    %235 = arith.truncf %234 : vector<64x64xf32> to vector<64x64xbf16>
    %c0_301 = arith.constant 0 : index
    %c448 = arith.constant 448 : index
    %236 = vector.load %arg20[%c0_301, %c448] : memref<64x576xbf16, #tpu.memory_space<vmem>>, vector<64x64xbf16>
    tpu.vector_store %arg20[%c0_301, %c448], %235 {strides = array<i32>} : memref<64x576xbf16, #tpu.memory_space<vmem>>, vector<64x64xbf16>,
    %c0_302 = arith.constant 0 : index
    %c2_303 = arith.constant 2 : index
    %c2_304 = arith.constant 2 : index
    %c0_305 = arith.constant 0 : index
    %237 = vector.load %arg18[%c0_302, %c2_303, %c2_304, %c0_305] : memref<4x6x6x64xf32, #tpu.memory_space<vmem>>, vector<4x4x4x64xf32>
    %238 = vector.shape_cast %237 : vector<4x4x4x64xf32> to vector<64x64xf32>
    %239 = arith.truncf %238 : vector<64x64xf32> to vector<64x64xbf16>
    %c0_306 = arith.constant 0 : index
    %c512 = arith.constant 512 : index
    %240 = vector.load %arg20[%c0_306, %c512] : memref<64x576xbf16, #tpu.memory_space<vmem>>, vector<64x64xbf16>
    tpu.vector_store %arg20[%c0_306, %c512], %239 {strides = array<i32>} : memref<64x576xbf16, #tpu.memory_space<vmem>>, vector<64x64xbf16>,
    %c0_307 = arith.constant 0 : index
    %c0_308 = arith.constant 0 : index
    %241 = vector.load %arg20[%c0_307, %c0_308] : memref<64x576xbf16, #tpu.memory_space<vmem>>, vector<64x576xbf16>
    %c0_309 = arith.constant 0 : index
    %c0_310 = arith.constant 0 : index
    %242 = vector.load %arg7[%c0_309, %c0_310] : memref<576x128xbf16, #tpu.memory_space<vmem>>, vector<576x128xbf16>
    %cst_311 = arith.constant dense<0.000000e+00> : vector<64x128xf32>
    %243 = tpu.matmul %241, %242, %cst_311 {dimension_numbers = #tpu.dot_dimension_numbers<[1], [0], [0], [1], [0, 0, 1, 1], [], []>} : vector<64x576xbf16>, vector<576x128xbf16>, vector<64x128xf32> -> vector<64x128xf32>
    %c0_312 = arith.constant 0 : index
    %c0_313 = arith.constant 0 : index
    %244 = vector.load %arg8[%c0_312, %c0_313] : memref<1x128xf32, #tpu.memory_space<vmem>>, vector<1x128xf32>
    %245 = vector.broadcast %244 : vector<1x128xf32> to vector<64x128xf32>
    %246 = arith.addf %243, %245 : vector<64x128xf32>
    %cst_314 = arith.constant 0.000000e+00 : f32
    %247 = vector.broadcast %cst_314 : f32 to vector<64x128xf32>
    %248 = arith.maximumf %246, %247 : vector<64x128xf32>
    %249 = vector.shape_cast %248 : vector<64x128xf32> to vector<4x16x128xf32>
    %c0_315 = arith.constant 0 : index
    %c0_316 = arith.constant 0 : index
    %c0_317 = arith.constant 0 : index
    %250 = vector.load %arg23[%c0_315, %c0_316, %c0_317] : memref<4x16x128xf32, #tpu.memory_space<vmem>>, vector<4x16x128xf32>
    tpu.vector_store %arg23[%c0_315, %c0_316, %c0_317], %249 {strides = array<i32>} : memref<4x16x128xf32, #tpu.memory_space<vmem>>, vector<4x16x128xf32>,
    %c0_318 = arith.constant 0 : index
    %c0_319 = arith.constant 0 : index
    %c0_320 = arith.constant 0 : index
    %251 = tpu.strided_load %arg23[%c0_318, %c0_319, %c0_320] {strides = array<i32: 1, 2, 1>} : memref<4x16x128xf32, #tpu.memory_space<vmem>>, vector<4x2x128xf32>
    %c0_321 = arith.constant 0 : index
    %c1_322 = arith.constant 1 : index
    %c0_323 = arith.constant 0 : index
    %252 = tpu.strided_load %arg23[%c0_321, %c1_322, %c0_323] {strides = array<i32: 1, 2, 1>} : memref<4x16x128xf32, #tpu.memory_space<vmem>>, vector<4x2x128xf32>
    %253 = arith.maximumf %251, %252 : vector<4x2x128xf32>
    %c0_324 = arith.constant 0 : index
    %c4_325 = arith.constant 4 : index
    %c0_326 = arith.constant 0 : index
    %254 = tpu.strided_load %arg23[%c0_324, %c4_325, %c0_326] {strides = array<i32: 1, 2, 1>} : memref<4x16x128xf32, #tpu.memory_space<vmem>>, vector<4x2x128xf32>
    %c0_327 = arith.constant 0 : index
    %c5_328 = arith.constant 5 : index
    %c0_329 = arith.constant 0 : index
    %255 = tpu.strided_load %arg23[%c0_327, %c5_328, %c0_329] {strides = array<i32: 1, 2, 1>} : memref<4x16x128xf32, #tpu.memory_space<vmem>>, vector<4x2x128xf32>
    %256 = arith.maximumf %254, %255 : vector<4x2x128xf32>
    %257 = arith.maximumf %253, %256 : vector<4x2x128xf32>
    %258 = vector.shape_cast %257 : vector<4x2x128xf32> to vector<4x256xf32>
    %c0_330 = arith.constant 0 : index
    %c0_331 = arith.constant 0 : index
    %259 = vector.load %arg24[%c0_330, %c0_331] : memref<4x512xf32, #tpu.memory_space<vmem>>, vector<4x256xf32>
    tpu.vector_store %arg24[%c0_330, %c0_331], %258 {strides = array<i32>} : memref<4x512xf32, #tpu.memory_space<vmem>>, vector<4x256xf32>,
    %c0_332 = arith.constant 0 : index
    %c8_333 = arith.constant 8 : index
    %c0_334 = arith.constant 0 : index
    %260 = tpu.strided_load %arg23[%c0_332, %c8_333, %c0_334] {strides = array<i32: 1, 2, 1>} : memref<4x16x128xf32, #tpu.memory_space<vmem>>, vector<4x2x128xf32>
    %c0_335 = arith.constant 0 : index
    %c9_336 = arith.constant 9 : index
    %c0_337 = arith.constant 0 : index
    %261 = tpu.strided_load %arg23[%c0_335, %c9_336, %c0_337] {strides = array<i32: 1, 2, 1>} : memref<4x16x128xf32, #tpu.memory_space<vmem>>, vector<4x2x128xf32>
    %262 = arith.maximumf %260, %261 : vector<4x2x128xf32>
    %c0_338 = arith.constant 0 : index
    %c12 = arith.constant 12 : index
    %c0_339 = arith.constant 0 : index
    %263 = tpu.strided_load %arg23[%c0_338, %c12, %c0_339] {strides = array<i32: 1, 2, 1>} : memref<4x16x128xf32, #tpu.memory_space<vmem>>, vector<4x2x128xf32>
    %c0_340 = arith.constant 0 : index
    %c13 = arith.constant 13 : index
    %c0_341 = arith.constant 0 : index
    %264 = tpu.strided_load %arg23[%c0_340, %c13, %c0_341] {strides = array<i32: 1, 2, 1>} : memref<4x16x128xf32, #tpu.memory_space<vmem>>, vector<4x2x128xf32>
    %265 = arith.maximumf %263, %264 : vector<4x2x128xf32>
    %266 = arith.maximumf %262, %265 : vector<4x2x128xf32>
    %267 = vector.shape_cast %266 : vector<4x2x128xf32> to vector<4x256xf32>
    %c0_342 = arith.constant 0 : index
    %c256_343 = arith.constant 256 : index
    %268 = vector.load %arg24[%c0_342, %c256_343] : memref<4x512xf32, #tpu.memory_space<vmem>>, vector<4x256xf32>
    tpu.vector_store %arg24[%c0_342, %c256_343], %267 {strides = array<i32>} : memref<4x512xf32, #tpu.memory_space<vmem>>, vector<4x256xf32>,
    %c0_344 = arith.constant 0 : index
    %c0_345 = arith.constant 0 : index
    %269 = vector.load %arg24[%c0_344, %c0_345] : memref<4x512xf32, #tpu.memory_space<vmem>>, vector<4x512xf32>
    %270 = arith.truncf %269 : vector<4x512xf32> to vector<4x512xbf16>
    %c0_346 = arith.constant 0 : index
    %c0_347 = arith.constant 0 : index
    %271 = vector.load %arg9[%c0_346, %c0_347] : memref<512x128xbf16, #tpu.memory_space<vmem>>, vector<512x128xbf16>
    %cst_348 = arith.constant dense<0.000000e+00> : vector<4x128xf32>
    %272 = tpu.matmul %270, %271, %cst_348 {dimension_numbers = #tpu.dot_dimension_numbers<[1], [0], [0], [1], [0, 0, 1, 1], [], []>} : vector<4x512xbf16>, vector<512x128xbf16>, vector<4x128xf32> -> vector<4x128xf32>
    %c0_349 = arith.constant 0 : index
    %c0_350 = arith.constant 0 : index
    %273 = vector.load %arg10[%c0_349, %c0_350] : memref<1x128xf32, #tpu.memory_space<vmem>>, vector<1x128xf32>
    %274 = vector.broadcast %273 : vector<1x128xf32> to vector<4x128xf32>
    %275 = arith.addf %272, %274 : vector<4x128xf32>
    %cst_351 = arith.constant 0.000000e+00 : f32
    %276 = vector.broadcast %cst_351 : f32 to vector<4x128xf32>
    %277 = arith.maximumf %275, %276 : vector<4x128xf32>
    %c0_352 = arith.constant 0 : index
    %c0_353 = arith.constant 0 : index
    %c0_354 = arith.constant 0 : index
    %278 = vector.load %arg2[%c0_352, %c0_353, %c0_354] : memref<4x1x8xf32, #tpu.memory_space<vmem>>, vector<4x1x8xf32>
    %279 = vector.shape_cast %278 : vector<4x1x8xf32> to vector<4x8xf32>
    %c0_355 = arith.constant 0 : index
    %c0_356 = arith.constant 0 : index
    %280 = vector.load %arg11[%c0_355, %c0_356] : memref<8x64xf32, #tpu.memory_space<vmem>>, vector<8x64xf32>
    %cst_357 = arith.constant dense<0.000000e+00> : vector<4x64xf32>
    %281 = tpu.matmul %279, %280, %cst_357 {dimension_numbers = #tpu.dot_dimension_numbers<[1], [0], [0], [1], [0, 0, 1, 1], [], []>} : vector<4x8xf32>, vector<8x64xf32>, vector<4x64xf32> -> vector<4x64xf32>
    %c0_358 = arith.constant 0 : index
    %c0_359 = arith.constant 0 : index
    %282 = vector.load %arg12[%c0_358, %c0_359] : memref<1x64xf32, #tpu.memory_space<vmem>>, vector<1x64xf32>
    %283 = vector.broadcast %282 : vector<1x64xf32> to vector<4x64xf32>
    %284 = arith.addf %281, %283 : vector<4x64xf32>
    %cst_360 = arith.constant 0.000000e+00 : f32
    %285 = vector.broadcast %cst_360 : f32 to vector<4x64xf32>
    %286 = arith.maximumf %284, %285 : vector<4x64xf32>
    %c0_361 = arith.constant 0 : index
    %c0_362 = arith.constant 0 : index
    %287 = vector.load %arg13[%c0_361, %c0_362] : memref<128x128xf32, #tpu.memory_space<vmem>>, vector<128x128xf32>
    %cst_363 = arith.constant dense<0.000000e+00> : vector<4x128xf32>
    %288 = tpu.matmul %277, %287, %cst_363 {dimension_numbers = #tpu.dot_dimension_numbers<[1], [0], [0], [1], [0, 0, 1, 1], [], []>} : vector<4x128xf32>, vector<128x128xf32>, vector<4x128xf32> -> vector<4x128xf32>
    %c0_364 = arith.constant 0 : index
    %c0_365 = arith.constant 0 : index
    %289 = vector.load %arg14[%c0_364, %c0_365] : memref<64x128xf32, #tpu.memory_space<vmem>>, vector<64x128xf32>
    %cst_366 = arith.constant dense<0.000000e+00> : vector<4x128xf32>
    %290 = tpu.matmul %286, %289, %cst_366 {dimension_numbers = #tpu.dot_dimension_numbers<[1], [0], [0], [1], [0, 0, 1, 1], [], []>} : vector<4x64xf32>, vector<64x128xf32>, vector<4x128xf32> -> vector<4x128xf32>
    %291 = arith.addf %288, %290 : vector<4x128xf32>
    %c0_367 = arith.constant 0 : index
    %c0_368 = arith.constant 0 : index
    %292 = vector.load %arg15[%c0_367, %c0_368] : memref<1x128xf32, #tpu.memory_space<vmem>>, vector<1x128xf32>
    %293 = vector.broadcast %292 : vector<1x128xf32> to vector<4x128xf32>
    %294 = arith.addf %291, %293 : vector<4x128xf32>
    %c0_369 = arith.constant 0 : index
    %c0_370 = arith.constant 0 : index
    %c0_371 = arith.constant 0 : index
    %295 = vector.load %arg16[%c0_369, %c0_370, %c0_371] : memref<4x1x128xf32, #tpu.memory_space<vmem>>, vector<4x1x128xf32>
    %296 = vector.shape_cast %295 : vector<4x1x128xf32> to vector<4x128xf32>
    %297 = vector.shape_cast %294 : vector<4x128xf32> to vector<4x1x128xf32>
    tpu.vector_store %arg16[%c0_369, %c0_370, %c0_371], %297 {strides = array<i32>} : memref<4x1x128xf32, #tpu.memory_space<vmem>>, vector<4x1x128xf32>,
    return
  }
  func.func @transform_0(%arg0: i32) -> (i32, i32, i32) {
    %c0_i32 = arith.constant 0 : i32
    %c0_i32_0 = arith.constant 0 : i32
    %c0_i32_1 = arith.constant 0 : i32
    return %arg0, %c0_i32, %c0_i32_0 : i32, i32, i32
  }
  func.func @transform_1(%arg0: i32) -> (i32, i32, i32) {
    %c0_i32 = arith.constant 0 : i32
    %c0_i32_0 = arith.constant 0 : i32
    %c0_i32_1 = arith.constant 0 : i32
    return %arg0, %c0_i32, %c0_i32_0 : i32, i32, i32
  }
  func.func @transform_2(%arg0: i32) -> (i32, i32) {
    %c0_i32 = arith.constant 0 : i32
    %c0_i32_0 = arith.constant 0 : i32
    %c0_i32_1 = arith.constant 0 : i32
    return %c0_i32, %c0_i32_0 : i32, i32
  }
  func.func @transform_3(%arg0: i32) -> (i32, i32) {
    %c0_i32 = arith.constant 0 : i32
    %c0_i32_0 = arith.constant 0 : i32
    %c0_i32_1 = arith.constant 0 : i32
    return %c0_i32, %c0_i32_0 : i32, i32
  }
  func.func @transform_4(%arg0: i32) -> (i32, i32) {
    %c0_i32 = arith.constant 0 : i32
    %c0_i32_0 = arith.constant 0 : i32
    %c0_i32_1 = arith.constant 0 : i32
    return %c0_i32, %c0_i32_0 : i32, i32
  }
  func.func @transform_5(%arg0: i32) -> (i32, i32) {
    %c0_i32 = arith.constant 0 : i32
    %c0_i32_0 = arith.constant 0 : i32
    %c0_i32_1 = arith.constant 0 : i32
    return %c0_i32, %c0_i32_0 : i32, i32
  }
  func.func @transform_6(%arg0: i32) -> (i32, i32) {
    %c0_i32 = arith.constant 0 : i32
    %c0_i32_0 = arith.constant 0 : i32
    %c0_i32_1 = arith.constant 0 : i32
    return %c0_i32, %c0_i32_0 : i32, i32
  }
  func.func @transform_7(%arg0: i32) -> (i32, i32) {
    %c0_i32 = arith.constant 0 : i32
    %c0_i32_0 = arith.constant 0 : i32
    %c0_i32_1 = arith.constant 0 : i32
    return %c0_i32, %c0_i32_0 : i32, i32
  }
  func.func @transform_8(%arg0: i32) -> (i32, i32) {
    %c0_i32 = arith.constant 0 : i32
    %c0_i32_0 = arith.constant 0 : i32
    %c0_i32_1 = arith.constant 0 : i32
    return %c0_i32, %c0_i32_0 : i32, i32
  }
  func.func @transform_9(%arg0: i32) -> (i32, i32) {
    %c0_i32 = arith.constant 0 : i32
    %c0_i32_0 = arith.constant 0 : i32
    %c0_i32_1 = arith.constant 0 : i32
    return %c0_i32, %c0_i32_0 : i32, i32
  }
  func.func @transform_10(%arg0: i32) -> (i32, i32) {
    %c0_i32 = arith.constant 0 : i32
    %c0_i32_0 = arith.constant 0 : i32
    %c0_i32_1 = arith.constant 0 : i32
    return %c0_i32, %c0_i32_0 : i32, i32
  }
  func.func @transform_11(%arg0: i32) -> (i32, i32) {
    %c0_i32 = arith.constant 0 : i32
    %c0_i32_0 = arith.constant 0 : i32
    %c0_i32_1 = arith.constant 0 : i32
    return %c0_i32, %c0_i32_0 : i32, i32
  }
  func.func @transform_12(%arg0: i32) -> (i32, i32) {
    %c0_i32 = arith.constant 0 : i32
    %c0_i32_0 = arith.constant 0 : i32
    %c0_i32_1 = arith.constant 0 : i32
    return %c0_i32, %c0_i32_0 : i32, i32
  }
  func.func @transform_13(%arg0: i32) -> (i32, i32) {
    %c0_i32 = arith.constant 0 : i32
    %c0_i32_0 = arith.constant 0 : i32
    %c0_i32_1 = arith.constant 0 : i32
    return %c0_i32, %c0_i32_0 : i32, i32
  }
  func.func @transform_14(%arg0: i32) -> (i32, i32) {
    %c0_i32 = arith.constant 0 : i32
    %c0_i32_0 = arith.constant 0 : i32
    %c0_i32_1 = arith.constant 0 : i32
    return %c0_i32, %c0_i32_0 : i32, i32
  }
  func.func @transform_15(%arg0: i32) -> (i32, i32, i32) {
    %c0_i32 = arith.constant 0 : i32
    %c0_i32_0 = arith.constant 0 : i32
    %c0_i32_1 = arith.constant 0 : i32
    return %arg0, %c0_i32, %c0_i32_0 : i32, i32, i32
  }
}

</mosaic_0001>

<llo_original>
// kernel: model_forward.1
$region0: #{model_forward.1}
  #allocation0 [shape = 'u32[]', space=smem, size = 0x4, offset = 0x4, fixed_abs, tag = 'smem constant byte address 0x4 - core index']
  #allocation1 [shape = 'u32[144,128]{1,0:T(1,128)}', space=vmem, size = 0x12000, scoped, tag = 'internal scratch']
  #allocation2 [shape = 'f32[4,10,10,32]{3,2,1,0:T(8,128)}', space=vmem, size = 0x50000, scoped, tag = 'scratch operand']
  #allocation3 [shape = 'f32[4,6,6,64]{3,2,1,0:T(8,128)}', space=vmem, size = 0x18000, scoped, tag = 'scratch operand']
  #allocation4 [shape = 'bf16[256,288]{1,0:T(16,128)(2,1)}', space=vmem, size = 0x30000, scoped, tag = 'scratch operand']
  #allocation5 [shape = 'bf16[64,576]{1,0:T(16,128)(2,1)}', space=vmem, size = 0x14000, scoped, tag = 'scratch operand']
  #allocation6 [shape = 'f32[4,256,32]{2,1,0:T(8,128)}', space=vmem, size = 0x80000, scoped, tag = 'scratch operand']
  #allocation7 [shape = 'f32[4,64,64]{2,1,0:T(8,128)}', space=vmem, size = 0x20000, scoped, tag = 'scratch operand']
  #allocation8 [shape = 'f32[4,16,128]{2,1,0:T(8,128)}', space=vmem, size = 0x8000, scoped, tag = 'scratch operand']
  #allocation9 [shape = 'f32[4,512]{1,0:T(4,128)}', space=vmem, size = 0x2000, scoped, tag = 'scratch operand']
  %s0 = inlined_call_operand.vmem [shape: bf16[8,256,36], index: 0, kind: input, shape index: {}]
  %s1 = inlined_call_operand.vmem [shape: f32[8,1,8], index: 1, kind: input, shape index: {}]
  %s2 = inlined_call_operand.vmem [shape: bf16[36,32], index: 2, kind: input, shape index: {}]
  %s3 = inlined_call_operand.vmem [shape: f32[1,32], index: 3, kind: input, shape index: {}]
  %s4 = inlined_call_operand.vmem [shape: bf16[288,64], index: 4, kind: input, shape index: {}]
  %s5 = inlined_call_operand.vmem [shape: f32[1,64], index: 5, kind: input, shape index: {}]
  %s6 = inlined_call_operand.vmem [shape: bf16[576,128], index: 6, kind: input, shape index: {}]
  %s7 = inlined_call_operand.vmem [shape: f32[1,128], index: 7, kind: input, shape index: {}]
  %s8 = inlined_call_operand.vmem [shape: bf16[512,128], index: 8, kind: input, shape index: {}]
  %s9 = inlined_call_operand.vmem [shape: f32[1,128], index: 9, kind: input, shape index: {}]
  %s10 = inlined_call_operand.vmem [shape: f32[8,64], index: 10, kind: input, shape index: {}]
  %s11 = inlined_call_operand.vmem [shape: f32[1,64], index: 11, kind: input, shape index: {}]
  %s12 = inlined_call_operand.vmem [shape: f32[128,128], index: 12, kind: input, shape index: {}]
  %s13 = inlined_call_operand.vmem [shape: f32[64,128], index: 13, kind: input, shape index: {}]
  %s14 = inlined_call_operand.vmem [shape: f32[1,128], index: 14, kind: input, shape index: {}]
  %s15 = inlined_call_operand.vmem [shape: f32[8,1,128], index: 15, kind: output, shape index: {}]
  %s16 = sld [smem:[#allocation0]]
  $region93: #{model_forward.1} parent=0
    _
  %s18 = ssub.s32 1, %s16
  %s19 = scalar_select 0, %s18, %s16
  loop: start=0, step=1, limit=4
  $region2: #{model_forward.1} parent=0 // loop_pre_header
    _
  $region3: #{model_forward.1} parent=0 // loop_header
    %s21 = sphi 0, %s25
    %p22 = scmp.ge.s32.totalorder %s21, 4
    %s31 = sphi 0, %s33
    %s34 = sphi 0, %s31
    %s35 = sphi 0, %s34
    %s51 = sphi 0, %s35
    %s57 = sphi 0, %s59
    %s60 = sphi 0, %s57
    %s61 = sphi 0, %s60
    %s77 = sphi 0, %s61
    %s81 = sphi 0, %s81
    %s83 = sphi 0, %s81
    %s84 = sphi 0, %s83
    %s98 = sphi 0, %s84
    %s102 = sphi 0, %s102
    %s104 = sphi 0, %s102
    %s105 = sphi 0, %s104
    %s119 = sphi 0, %s105
    %s123 = sphi 0, %s123
    %s125 = sphi 0, %s123
    %s126 = sphi 0, %s125
    %s140 = sphi 0, %s126
    %s144 = sphi 0, %s144
    %s146 = sphi 0, %s144
    %s147 = sphi 0, %s146
    %s161 = sphi 0, %s147
    %s165 = sphi 0, %s165
    %s167 = sphi 0, %s165
    %s168 = sphi 0, %s167
    %s182 = sphi 0, %s168
    %s186 = sphi 0, %s186
    %s188 = sphi 0, %s186
    %s189 = sphi 0, %s188
    %s203 = sphi 0, %s189
    %s207 = sphi 0, %s207
    %s209 = sphi 0, %s207
    %s210 = sphi 0, %s209
    %s224 = sphi 0, %s210
    %s228 = sphi 0, %s228
    %s230 = sphi 0, %s228
    %s231 = sphi 0, %s230
    %s245 = sphi 0, %s231
    %s249 = sphi 0, %s249
    %s251 = sphi 0, %s249
    %s252 = sphi 0, %s251
    %s266 = sphi 0, %s252
    %s270 = sphi 0, %s270
    %s272 = sphi 0, %s270
    %s273 = sphi 0, %s272
    %s287 = sphi 0, %s273
    %s291 = sphi 0, %s291
    %s293 = sphi 0, %s291
    %s294 = sphi 0, %s293
    %s308 = sphi 0, %s294
    %s312 = sphi 0, %s312
    %s314 = sphi 0, %s312
    %s315 = sphi 0, %s314
    %s329 = sphi 0, %s315
    %s333 = sphi 0, %s333
    %s335 = sphi 0, %s333
    %s336 = sphi 0, %s335
    %s350 = sphi 0, %s336
    %s356 = sphi 0, %s358
    %s359 = sphi 0, %s356
    %s360 = sphi 0, %s359
    %s376 = sphi 0, %s360
  $region4: #{model_forward.1} parent=0 // loop_header_branch
    %24 = sbr.rel (%p22) target = $region8
  $region5: #{model_forward.1} parent=0 // loop_body
    %s26 = ssub.s32 %s21, 1
    %s27 = ssub.s32 %s21, 2
    %s28 = sadd.s32 %s21, 1
    %s29 = ssub.s32 %s21, %s28
    %p30 = scmp.eq.s32.totalorder %s29, 0
    %s32 = sadd.s32 %s31, 1
    %s33 = scalar_select %p30, %s31, %s32
    %p36 = pneg %p30
    %p37 = scmp.eq.s32.totalorder %s21, 1
    %p38 = por %p36, %p37
    %p39 = scmp.ne.s32.totalorder %s31, %s34
    %p40 = scmp.eq.s32.totalorder %s21, 0
    %p41 = por %p39, %p40
    %p42 = scmp.ne.s32.totalorder %s31, %s34
    %p43 = scmp.eq.s32.totalorder %s26, 1
    %p44 = por %p42, %p43
    %p45 = scmp.ne.s32.totalorder %s34, %s35
    %p46 = scmp.eq.s32.totalorder %s26, 0
    %p47 = por %p45, %p46
    %p48 = scmp.ne.s32.totalorder %s34, %s35
    %p49 = scmp.eq.s32.totalorder %s27, 1
    %p50 = por %p48, %p49
    %p52 = scmp.ne.s32.totalorder %s35, %s51
    %p53 = scmp.eq.s32.totalorder %s27, 0
    %p54 = por %p52, %p53
    %s55 = ssub.s32 %s21, %s28
    %p56 = scmp.eq.s32.totalorder %s55, 0
    %s58 = sadd.s32 %s57, 1
    %s59 = scalar_select %p56, %s57, %s58
    %p62 = pneg %p56
    %p63 = scmp.eq.s32.totalorder %s21, 1
    %p64 = por %p62, %p63
    %p65 = scmp.ne.s32.totalorder %s57, %s60
    %p66 = scmp.eq.s32.totalorder %s21, 0
    %p67 = por %p65, %p66
    %p68 = scmp.ne.s32.totalorder %s57, %s60
    %p69 = scmp.eq.s32.totalorder %s26, 1
    %p70 = por %p68, %p69
    %p71 = scmp.ne.s32.totalorder %s60, %s61
    %p72 = scmp.eq.s32.totalorder %s26, 0
    %p73 = por %p71, %p72
    %p74 = scmp.ne.s32.totalorder %s60, %s61
    %p75 = scmp.eq.s32.totalorder %s27, 1
    %p76 = por %p74, %p75
    %p78 = scmp.ne.s32.totalorder %s61, %s77
    %p79 = scmp.eq.s32.totalorder %s27, 0
    %p80 = por %p78, %p79
    %s82 = sadd.s32 %s81, 1
    %p85 = scmp.eq.s32.totalorder %s21, 1
    %p86 = scmp.ne.s32.totalorder %s81, %s83
    %p87 = scmp.eq.s32.totalorder %s21, 0
    %p88 = por %p86, %p87
    %p89 = scmp.ne.s32.totalorder %s81, %s83
    %p90 = scmp.eq.s32.totalorder %s26, 1
    %p91 = por %p89, %p90
    %p92 = scmp.ne.s32.totalorder %s83, %s84
    %p93 = scmp.eq.s32.totalorder %s26, 0
    %p94 = por %p92, %p93
    %p95 = scmp.ne.s32.totalorder %s83, %s84
    %p96 = scmp.eq.s32.totalorder %s27, 1
    %p97 = por %p95, %p96
    %p99 = scmp.ne.s32.totalorder %s84, %s98
    %p100 = scmp.eq.s32.totalorder %s27, 0
    %p101 = por %p99, %p100
    %s103 = sadd.s32 %s102, 1
    %p106 = scmp.eq.s32.totalorder %s21, 1
    %p107 = scmp.ne.s32.totalorder %s102, %s104
    %p108 = scmp.eq.s32.totalorder %s21, 0
    %p109 = por %p107, %p108
    %p110 = scmp.ne.s32.totalorder %s102, %s104
    %p111 = scmp.eq.s32.totalorder %s26, 1
    %p112 = por %p110, %p111
    %p113 = scmp.ne.s32.totalorder %s104, %s105
    %p114 = scmp.eq.s32.totalorder %s26, 0
    %p115 = por %p113, %p114
    %p116 = scmp.ne.s32.totalorder %s104, %s105
    %p117 = scmp.eq.s32.totalorder %s27, 1
    %p118 = por %p116, %p117
    %p120 = scmp.ne.s32.totalorder %s105, %s119
    %p121 = scmp.eq.s32.totalorder %s27, 0
    %p122 = por %p120, %p121
    %s124 = sadd.s32 %s123, 1
    %p127 = scmp.eq.s32.totalorder %s21, 1
    %p128 = scmp.ne.s32.totalorder %s123, %s125
    %p129 = scmp.eq.s32.totalorder %s21, 0
    %p130 = por %p128, %p129
    %p131 = scmp.ne.s32.totalorder %s123, %s125
    %p132 = scmp.eq.s32.totalorder %s26, 1
    %p133 = por %p131, %p132
    %p134 = scmp.ne.s32.totalorder %s125, %s126
    %p135 = scmp.eq.s32.totalorder %s26, 0
    %p136 = por %p134, %p135
    %p137 = scmp.ne.s32.totalorder %s125, %s126
    %p138 = scmp.eq.s32.totalorder %s27, 1
    %p139 = por %p137, %p138
    %p141 = scmp.ne.s32.totalorder %s126, %s140
    %p142 = scmp.eq.s32.totalorder %s27, 0
    %p143 = por %p141, %p142
    %s145 = sadd.s32 %s144, 1
    %p148 = scmp.eq.s32.totalorder %s21, 1
    %p149 = scmp.ne.s32.totalorder %s144, %s146
    %p150 = scmp.eq.s32.totalorder %s21, 0
    %p151 = por %p149, %p150
    %p152 = scmp.ne.s32.totalorder %s144, %s146
    %p153 = scmp.eq.s32.totalorder %s26, 1
    %p154 = por %p152, %p153
    %p155 = scmp.ne.s32.totalorder %s146, %s147
    %p156 = scmp.eq.s32.totalorder %s26, 0
    %p157 = por %p155, %p156
    %p158 = scmp.ne.s32.totalorder %s146, %s147
    %p159 = scmp.eq.s32.totalorder %s27, 1
    %p160 = por %p158, %p159
    %p162 = scmp.ne.s32.totalorder %s147, %s161
    %p163 = scmp.eq.s32.totalorder %s27, 0
    %p164 = por %p162, %p163
    %s166 = sadd.s32 %s165, 1
    %p169 = scmp.eq.s32.totalorder %s21, 1
    %p170 = scmp.ne.s32.totalorder %s165, %s167
    %p171 = scmp.eq.s32.totalorder %s21, 0
    %p172 = por %p170, %p171
    %p173 = scmp.ne.s32.totalorder %s165, %s167
    %p174 = scmp.eq.s32.totalorder %s26, 1
    %p175 = por %p173, %p174
    %p176 = scmp.ne.s32.totalorder %s167, %s168
    %p177 = scmp.eq.s32.totalorder %s26, 0
    %p178 = por %p176, %p177
    %p179 = scmp.ne.s32.totalorder %s167, %s168
    %p180 = scmp.eq.s32.totalorder %s27, 1
    %p181 = por %p179, %p180
    %p183 = scmp.ne.s32.totalorder %s168, %s182
    %p184 = scmp.eq.s32.totalorder %s27, 0
    %p185 = por %p183, %p184
    %s187 = sadd.s32 %s186, 1
    %p190 = scmp.eq.s32.totalorder %s21, 1
    %p191 = scmp.ne.s32.totalorder %s186, %s188
    %p192 = scmp.eq.s32.totalorder %s21, 0
    %p193 = por %p191, %p192
    %p194 = scmp.ne.s32.totalorder %s186, %s188
    %p195 = scmp.eq.s32.totalorder %s26, 1
    %p196 = por %p194, %p195
    %p197 = scmp.ne.s32.totalorder %s188, %s189
    %p198 = scmp.eq.s32.totalorder %s26, 0
    %p199 = por %p197, %p198
    %p200 = scmp.ne.s32.totalorder %s188, %s189
    %p201 = scmp.eq.s32.totalorder %s27, 1
    %p202 = por %p200, %p201
    %p204 = scmp.ne.s32.totalorder %s189, %s203
    %p205 = scmp.eq.s32.totalorder %s27, 0
    %p206 = por %p204, %p205
    %s208 = sadd.s32 %s207, 1
    %p211 = scmp.eq.s32.totalorder %s21, 1
    %p212 = scmp.ne.s32.totalorder %s207, %s209
    %p213 = scmp.eq.s32.totalorder %s21, 0
    %p214 = por %p212, %p213
    %p215 = scmp.ne.s32.totalorder %s207, %s209
    %p216 = scmp.eq.s32.totalorder %s26, 1
    %p217 = por %p215, %p216
    %p218 = scmp.ne.s32.totalorder %s209, %s210
    %p219 = scmp.eq.s32.totalorder %s26, 0
    %p220 = por %p218, %p219
    %p221 = scmp.ne.s32.totalorder %s209, %s210
    %p222 = scmp.eq.s32.totalorder %s27, 1
    %p223 = por %p221, %p222
    %p225 = scmp.ne.s32.totalorder %s210, %s224
    %p226 = scmp.eq.s32.totalorder %s27, 0
    %p227 = por %p225, %p226
    %s229 = sadd.s32 %s228, 1
    %p232 = scmp.eq.s32.totalorder %s21, 1
    %p233 = scmp.ne.s32.totalorder %s228, %s230
    %p234 = scmp.eq.s32.totalorder %s21, 0
    %p235 = por %p233, %p234
    %p236 = scmp.ne.s32.totalorder %s228, %s230
    %p237 = scmp.eq.s32.totalorder %s26, 1
    %p238 = por %p236, %p237
    %p239 = scmp.ne.s32.totalorder %s230, %s231
    %p240 = scmp.eq.s32.totalorder %s26, 0
    %p241 = por %p239, %p240
    %p242 = scmp.ne.s32.totalorder %s230, %s231
    %p243 = scmp.eq.s32.totalorder %s27, 1
    %p244 = por %p242, %p243
    %p246 = scmp.ne.s32.totalorder %s231, %s245
    %p247 = scmp.eq.s32.totalorder %s27, 0
    %p248 = por %p246, %p247
    %s250 = sadd.s32 %s249, 1
    %p253 = scmp.eq.s32.totalorder %s21, 1
    %p254 = scmp.ne.s32.totalorder %s249, %s251
    %p255 = scmp.eq.s32.totalorder %s21, 0
    %p256 = por %p254, %p255
    %p257 = scmp.ne.s32.totalorder %s249, %s251
    %p258 = scmp.eq.s32.totalorder %s26, 1
    %p259 = por %p257, %p258
    %p260 = scmp.ne.s32.totalorder %s251, %s252
    %p261 = scmp.eq.s32.totalorder %s26, 0
    %p262 = por %p260, %p261
    %p263 = scmp.ne.s32.totalorder %s251, %s252
    %p264 = scmp.eq.s32.totalorder %s27, 1
    %p265 = por %p263, %p264
    %p267 = scmp.ne.s32.totalorder %s252, %s266
    %p268 = scmp.eq.s32.totalorder %s27, 0
    %p269 = por %p267, %p268
    %s271 = sadd.s32 %s270, 1
    %p274 = scmp.eq.s32.totalorder %s21, 1
    %p275 = scmp.ne.s32.totalorder %s270, %s272
    %p276 = scmp.eq.s32.totalorder %s21, 0
    %p277 = por %p275, %p276
    %p278 = scmp.ne.s32.totalorder %s270, %s272
    %p279 = scmp.eq.s32.totalorder %s26, 1
    %p280 = por %p278, %p279
    %p281 = scmp.ne.s32.totalorder %s272, %s273
    %p282 = scmp.eq.s32.totalorder %s26, 0
    %p283 = por %p281, %p282
    %p284 = scmp.ne.s32.totalorder %s272, %s273
    %p285 = scmp.eq.s32.totalorder %s27, 1
    %p286 = por %p284, %p285
    %p288 = scmp.ne.s32.totalorder %s273, %s287
    %p289 = scmp.eq.s32.totalorder %s27, 0
    %p290 = por %p288, %p289
    %s292 = sadd.s32 %s291, 1
    %p295 = scmp.eq.s32.totalorder %s21, 1
    %p296 = scmp.ne.s32.totalorder %s291, %s293
    %p297 = scmp.eq.s32.totalorder %s21, 0
    %p298 = por %p296, %p297
    %p299 = scmp.ne.s32.totalorder %s291, %s293
    %p300 = scmp.eq.s32.totalorder %s26, 1
    %p301 = por %p299, %p300
    %p302 = scmp.ne.s32.totalorder %s293, %s294
    %p303 = scmp.eq.s32.totalorder %s26, 0
    %p304 = por %p302, %p303
    %p305 = scmp.ne.s32.totalorder %s293, %s294
    %p306 = scmp.eq.s32.totalorder %s27, 1
    %p307 = por %p305, %p306
    %p309 = scmp.ne.s32.totalorder %s294, %s308
    %p310 = scmp.eq.s32.totalorder %s27, 0
    %p311 = por %p309, %p310
    %s313 = sadd.s32 %s312, 1
    %p316 = scmp.eq.s32.totalorder %s21, 1
    %p317 = scmp.ne.s32.totalorder %s312, %s314
    %p318 = scmp.eq.s32.totalorder %s21, 0
    %p319 = por %p317, %p318
    %p320 = scmp.ne.s32.totalorder %s312, %s314
    %p321 = scmp.eq.s32.totalorder %s26, 1
    %p322 = por %p320, %p321
    %p323 = scmp.ne.s32.totalorder %s314, %s315
    %p324 = scmp.eq.s32.totalorder %s26, 0
    %p325 = por %p323, %p324
    %p326 = scmp.ne.s32.totalorder %s314, %s315
    %p327 = scmp.eq.s32.totalorder %s27, 1
    %p328 = por %p326, %p327
    %p330 = scmp.ne.s32.totalorder %s315, %s329
    %p331 = scmp.eq.s32.totalorder %s27, 0
    %p332 = por %p330, %p331
    %s334 = sadd.s32 %s333, 1
    %p337 = scmp.eq.s32.totalorder %s21, 1
    %p338 = scmp.ne.s32.totalorder %s333, %s335
    %p339 = scmp.eq.s32.totalorder %s21, 0
    %p340 = por %p338, %p339
    %p341 = scmp.ne.s32.totalorder %s333, %s335
    %p342 = scmp.eq.s32.totalorder %s26, 1
    %p343 = por %p341, %p342
    %p344 = scmp.ne.s32.totalorder %s335, %s336
    %p345 = scmp.eq.s32.totalorder %s26, 0
    %p346 = por %p344, %p345
    %p347 = scmp.ne.s32.totalorder %s335, %s336
    %p348 = scmp.eq.s32.totalorder %s27, 1
    %p349 = por %p347, %p348
    %p351 = scmp.ne.s32.totalorder %s336, %s350
    %p352 = scmp.eq.s32.totalorder %s27, 0
    %p353 = por %p351, %p352
    %s354 = ssub.s32 %s21, %s28
    %p355 = scmp.eq.s32.totalorder %s354, 0
    %s357 = sadd.s32 %s356, 1
    %s358 = scalar_select %p355, %s356, %s357
    %p361 = pneg %p355
    %p362 = scmp.eq.s32.totalorder %s21, 1
    %p363 = por %p361, %p362
    %p364 = scmp.ne.s32.totalorder %s356, %s359
    %p365 = scmp.eq.s32.totalorder %s21, 0
    %p366 = por %p364, %p365
    %p367 = scmp.ne.s32.totalorder %s356, %s359
    %p368 = scmp.eq.s32.totalorder %s26, 1
    %p369 = por %p367, %p368
    %p370 = scmp.ne.s32.totalorder %s359, %s360
    %p371 = scmp.eq.s32.totalorder %s26, 0
    %p372 = por %p370, %p371
    %p373 = scmp.ne.s32.totalorder %s359, %s360
    %p374 = scmp.eq.s32.totalorder %s27, 1
    %p375 = por %p373, %p374
    %p377 = scmp.ne.s32.totalorder %s360, %s376
    %p378 = scmp.eq.s32.totalorder %s27, 0
    %p379 = por %p377, %p378
    %p380 = scmp.le.s32.totalorder 1, %s21
    %p381 = scmp.lt.s32.totalorder %s21, 3
    %p382 = pnand %p380, %p381
    %p383 = pneg %p382
    // Predicated region
    $region9: #{model_forward.1} parent=5 // pred_check
      _
    $region10: #{model_forward.1} parent=5 // pred_check_branch
      %385 = sbr.rel (%p382) target = $region12
    $region11: #{model_forward.1} parent=5 // pred_region
      %s386 = ssub.s32 %s21, 1
      // Predicated region
      $region13: #{model_forward.1} parent=11 // pred_check
        %p387 = pneg %p94
      $region14: #{model_forward.1} parent=11 // pred_check_branch
        %389 = sbr.rel (%p387) target = $region16
      $region15: #{model_forward.1} parent=11 // pred_region
        _
      $region16: #{model_forward.1} parent=11 // pred_fallthru
        _
      // Predicated region
      $region17: #{model_forward.1} parent=11 // pred_check
        %p390 = pneg %p115
      $region18: #{model_forward.1} parent=11 // pred_check_branch
        %392 = sbr.rel (%p390) target = $region20
      $region19: #{model_forward.1} parent=11 // pred_region
        _
      $region20: #{model_forward.1} parent=11 // pred_fallthru
        _
      // Predicated region
      $region21: #{model_forward.1} parent=11 // pred_check
        %p393 = pneg %p136
      $region22: #{model_forward.1} parent=11 // pred_check_branch
        %395 = sbr.rel (%p393) target = $region24
      $region23: #{model_forward.1} parent=11 // pred_region
        _
      $region24: #{model_forward.1} parent=11 // pred_fallthru
        _
      // Predicated region
      $region25: #{model_forward.1} parent=11 // pred_check
        %p396 = pneg %p157
      $region26: #{model_forward.1} parent=11 // pred_check_branch
        %398 = sbr.rel (%p396) target = $region28
      $region27: #{model_forward.1} parent=11 // pred_region
        _
      $region28: #{model_forward.1} parent=11 // pred_fallthru
        _
      // Predicated region
      $region29: #{model_forward.1} parent=11 // pred_check
        %p399 = pneg %p178
      $region30: #{model_forward.1} parent=11 // pred_check_branch
        %401 = sbr.rel (%p399) target = $region32
      $region31: #{model_forward.1} parent=11 // pred_region
        _
      $region32: #{model_forward.1} parent=11 // pred_fallthru
        _
      // Predicated region
      $region33: #{model_forward.1} parent=11 // pred_check
        %p402 = pneg %p199
      $region34: #{model_forward.1} parent=11 // pred_check_branch
        %404 = sbr.rel (%p402) target = $region36
      $region35: #{model_forward.1} parent=11 // pred_region
        _
      $region36: #{model_forward.1} parent=11 // pred_fallthru
        _
      // Predicated region
      $region37: #{model_forward.1} parent=11 // pred_check
        %p405 = pneg %p220
      $region38: #{model_forward.1} parent=11 // pred_check_branch
        %407 = sbr.rel (%p405) target = $region40
      $region39: #{model_forward.1} parent=11 // pred_region
        _
      $region40: #{model_forward.1} parent=11 // pred_fallthru
        _
      // Predicated region
      $region41: #{model_forward.1} parent=11 // pred_check
        %p408 = pneg %p241
      $region42: #{model_forward.1} parent=11 // pred_check_branch
        %410 = sbr.rel (%p408) target = $region44
      $region43: #{model_forward.1} parent=11 // pred_region
        _
      $region44: #{model_forward.1} parent=11 // pred_fallthru
        _
      // Predicated region
      $region45: #{model_forward.1} parent=11 // pred_check
        %p411 = pneg %p262
      $region46: #{model_forward.1} parent=11 // pred_check_branch
        %413 = sbr.rel (%p411) target = $region48
      $region47: #{model_forward.1} parent=11 // pred_region
        _
      $region48: #{model_forward.1} parent=11 // pred_fallthru
        _
      // Predicated region
      $region49: #{model_forward.1} parent=11 // pred_check
        %p414 = pneg %p283
      $region50: #{model_forward.1} parent=11 // pred_check_branch
        %416 = sbr.rel (%p414) target = $region52
      $region51: #{model_forward.1} parent=11 // pred_region
        _
      $region52: #{model_forward.1} parent=11 // pred_fallthru
        _
      // Predicated region
      $region53: #{model_forward.1} parent=11 // pred_check
        %p417 = pneg %p304
      $region54: #{model_forward.1} parent=11 // pred_check_branch
        %419 = sbr.rel (%p417) target = $region56
      $region55: #{model_forward.1} parent=11 // pred_region
        _
      $region56: #{model_forward.1} parent=11 // pred_fallthru
        _
      // Predicated region
      $region57: #{model_forward.1} parent=11 // pred_check
        %p420 = pneg %p325
      $region58: #{model_forward.1} parent=11 // pred_check_branch
        %422 = sbr.rel (%p420) target = $region60
      $region59: #{model_forward.1} parent=11 // pred_region
        _
      $region60: #{model_forward.1} parent=11 // pred_fallthru
        _
      // Predicated region
      $region61: #{model_forward.1} parent=11 // pred_check
        %p423 = pneg %p346
      $region62: #{model_forward.1} parent=11 // pred_check_branch
        %425 = sbr.rel (%p423) target = $region64
      $region63: #{model_forward.1} parent=11 // pred_region
        _
      $region64: #{model_forward.1} parent=11 // pred_fallthru
        _
    $region12: #{model_forward.1} parent=5 // pred_fallthru
      _
    %p426 = scmp.lt.s32.totalorder %s21, 2
    // Predicated region
    $region65: #{model_forward.1} parent=5 // pred_check
      %p427 = pneg %p426
    $region66: #{model_forward.1} parent=5 // pred_check_branch
      %429 = sbr.rel (%p427) target = $region68
    $region67: #{model_forward.1} parent=5 // pred_region
      // Predicated region
      $region69: #{model_forward.1} parent=67 // pred_check
        %p430 = pneg %p41
      $region70: #{model_forward.1} parent=67 // pred_check_branch
        %432 = sbr.rel (%p430) target = $region72
      $region71: #{model_forward.1} parent=67 // pred_region
        %s433 = smul.u32 4, %s21
        %p434 = scmp.lt.s32.totalorder %s433, 7
        %s435 = scalar_select %p434, %s433, 7
        %s436 = smul.addr %s435, 32
        %s437 = smul.addr %s436, 4
        %s438 = scalar_lea.vmem %s0, %s437
        %s439 = smul.u32 4, %s21
      $region72: #{model_forward.1} parent=67 // pred_fallthru
        _
      // Predicated region
      $region73: #{model_forward.1} parent=67 // pred_check
        %p440 = pneg %p67
      $region74: #{model_forward.1} parent=67 // pred_check_branch
        %442 = sbr.rel (%p440) target = $region76
      $region75: #{model_forward.1} parent=67 // pred_region
        %s443 = smul.u32 4, %s21
        %p444 = scmp.lt.s32.totalorder %s443, 7
        %s445 = scalar_select %p444, %s443, 7
        %s446 = scalar_lea.vmem %s1, %s445
        %s447 = smul.u32 4, %s21
      $region76: #{model_forward.1} parent=67 // pred_fallthru
        _
    $region68: #{model_forward.1} parent=5 // pred_fallthru
      _
    %p448 = scmp.le.s32.totalorder 1, %s21
    %p449 = scmp.lt.s32.totalorder %s21, 3
    %p450 = pnand %p448, %p449
    %p451 = pneg %p450
    // Predicated region
    $region77: #{model_forward.1} parent=5 // pred_check
      _
    $region78: #{model_forward.1} parent=5 // pred_check_branch
      %453 = sbr.rel (%p450) target = $region80
    $region79: #{model_forward.1} parent=5 // pred_region
      %s454 = ssub.s32 %s21, 1
      %s455 = smul.u32 4, %s26
      %p456 = scmp.lt.s32.totalorder %s455, 7
      %s457 = scalar_select %p456, %s455, 7
      %s458 = smul.addr %s457, 32
      %s459 = smul.addr %s458, 4
      %s460 = scalar_lea.vmem %s0, %s459
      %p461 = pneg %p47
      %p462 = pneg %p44
      %s463 = smul.u32 4, %s26
      %p464 = scmp.lt.s32.totalorder %s463, 7
      %s465 = scalar_select %p464, %s463, 7
      %s466 = scalar_lea.vmem %s1, %s465
      %p467 = pneg %p73
      %p468 = pneg %p70
      %p469 = pneg %p94
      %p470 = pneg %p91
      %p471 = pneg %p115
      %p472 = pneg %p112
      %p473 = pneg %p136
      %p474 = pneg %p133
      %p475 = pneg %p157
      %p476 = pneg %p154
      %p477 = pneg %p178
      %p478 = pneg %p175
      %p479 = pneg %p199
      %p480 = pneg %p196
      %p481 = pneg %p220
      %p482 = pneg %p217
      %p483 = pneg %p241
      %p484 = pneg %p238
      %p485 = pneg %p262
      %p486 = pneg %p259
      %p487 = pneg %p283
      %p488 = pneg %p280
      %p489 = pneg %p304
      %p490 = pneg %p301
      %p491 = pneg %p325
      %p492 = pneg %p322
      %p493 = pneg %p346
      %p494 = pneg %p343
      %p495 = pneg %p372
      %p496 = pneg %p369
      %s497 = smul.u32 4, %s26
      %p498 = scmp.lt.s32.totalorder %s497, 7
      %s499 = scalar_select %p498, %s497, 7
      %s500 = scalar_lea.vmem %s15, %s499
      %s501 = smul.u32 4, %s26
      %p502 = scmp.lt.s32.totalorder %s501, 7
      %s503 = scalar_select %p502, %s501, 7
      %s504 = smul.addr %s503, 32
      %s505 = smul.addr %s504, 4
      %s506 = scalar_lea.vmem %s0, %s505
      %s507 = smul.u32 4, %s26
      %s508 = smul.u32 4, %s26
      %p509 = scmp.lt.s32.totalorder %s508, 7
      %s510 = scalar_select %p509, %s508, 7
      %s511 = scalar_lea.vmem %s1, %s510
      %s512 = smul.u32 4, %s26
      %s513 = smul.u32 4, %s26
      %p514 = scmp.lt.s32.totalorder %s513, 7
      %s515 = scalar_select %p514, %s513, 7
      %s516 = scalar_lea.vmem %s15, %s515
      %s517 = smul.u32 4, %s26
      %v519 = vld [vmem:[%s506] sm:$0xf]
      %v520 = vld [vmem:[%s506 + $0x4] sm:$0xf]
      %v521 = vld [vmem:[%s506 + $0x8] sm:$0xf]
      %v522 = vld [vmem:[%s506 + $0xc] sm:$0xf]
      %v523 = vld [vmem:[%s506 + $0x10] sm:$0xf]
      %v524 = vld [vmem:[%s506 + $0x14] sm:$0xf]
      %v525 = vld [vmem:[%s506 + $0x18] sm:$0xf]
      %v526 = vld [vmem:[%s506 + $0x1c] sm:$0xf]
      %v527 = vld [vmem:[%s506 + $0x20] sm:$0xf]
      %v528 = vld [vmem:[%s506 + $0x24] sm:$0xf]
      %v529 = vld [vmem:[%s506 + $0x28] sm:$0xf]
      %v530 = vld [vmem:[%s506 + $0x2c] sm:$0xf]
      %v531 = vld [vmem:[%s506 + $0x30] sm:$0xf]
      %v532 = vld [vmem:[%s506 + $0x34] sm:$0xf]
      %v533 = vld [vmem:[%s506 + $0x38] sm:$0xf]
      %v534 = vld [vmem:[%s506 + $0x3c] sm:$0xf]
      %v535 = vld [vmem:[%s506 + $0x40] sm:$0xf]
      %v536 = vld [vmem:[%s506 + $0x44] sm:$0xf]
      %v537 = vld [vmem:[%s506 + $0x48] sm:$0xf]
      %v538 = vld [vmem:[%s506 + $0x4c] sm:$0xf]
      %v539 = vld [vmem:[%s506 + $0x50] sm:$0xf]
      %v540 = vld [vmem:[%s506 + $0x54] sm:$0xf]
      %v541 = vld [vmem:[%s506 + $0x58] sm:$0xf]
      %v542 = vld [vmem:[%s506 + $0x5c] sm:$0xf]
      %v543 = vld [vmem:[%s506 + $0x60] sm:$0xf]
      %v544 = vld [vmem:[%s506 + $0x64] sm:$0xf]
      %v545 = vld [vmem:[%s506 + $0x68] sm:$0xf]
      %v546 = vld [vmem:[%s506 + $0x6c] sm:$0xf]
      %v547 = vld [vmem:[%s506 + $0x70] sm:$0xf]
      %v548 = vld [vmem:[%s506 + $0x74] sm:$0xf]
      %v549 = vld [vmem:[%s506 + $0x78] sm:$0xf]
      %v550 = vld [vmem:[%s506 + $0x7c] sm:$0xf]
      %v551 = vld [vmem:[%s506 + $0x80] sm:$0xf]
      %v552 = vld [vmem:[%s506 + $0x84] sm:$0xf]
      %v553 = vld [vmem:[%s506 + $0x88] sm:$0xf]
      %v554 = vld [vmem:[%s506 + $0x8c] sm:$0xf]
      %v555 = vld [vmem:[%s506 + $0x90] sm:$0xf]
      %v556 = vld [vmem:[%s506 + $0x94] sm:$0xf]
      %v557 = vld [vmem:[%s506 + $0x98] sm:$0xf]
      %v558 = vld [vmem:[%s506 + $0x9c] sm:$0xf]
      %v559 = vld [vmem:[%s506 + $0xa0] sm:$0xf]
      %v560 = vld [vmem:[%s506 + $0xa4] sm:$0xf]
      %v561 = vld [vmem:[%s506 + $0xa8] sm:$0xf]
      %v562 = vld [vmem:[%s506 + $0xac] sm:$0xf]
      %v563 = vld [vmem:[%s506 + $0xb0] sm:$0xf]
      %v564 = vld [vmem:[%s506 + $0xb4] sm:$0xf]
      %v565 = vld [vmem:[%s506 + $0xb8] sm:$0xf]
      %v566 = vld [vmem:[%s506 + $0xbc] sm:$0xf]
      %v567 = vld [vmem:[%s506 + $0xc0] sm:$0xf]
      %v568 = vld [vmem:[%s506 + $0xc4] sm:$0xf]
      %v569 = vld [vmem:[%s506 + $0xc8] sm:$0xf]
      %v570 = vld [vmem:[%s506 + $0xcc] sm:$0xf]
      %v571 = vld [vmem:[%s506 + $0xd0] sm:$0xf]
      %v572 = vld [vmem:[%s506 + $0xd4] sm:$0xf]
      %v573 = vld [vmem:[%s506 + $0xd8] sm:$0xf]
      %v574 = vld [vmem:[%s506 + $0xdc] sm:$0xf]
      %v575 = vld [vmem:[%s506 + $0xe0] sm:$0xf]
      %v576 = vld [vmem:[%s506 + $0xe4] sm:$0xf]
      %v577 = vld [vmem:[%s506 + $0xe8] sm:$0xf]
      %v578 = vld [vmem:[%s506 + $0xec] sm:$0xf]
      %v579 = vld [vmem:[%s506 + $0xf0] sm:$0xf]
      %v580 = vld [vmem:[%s506 + $0xf4] sm:$0xf]
      %v581 = vld [vmem:[%s506 + $0xf8] sm:$0xf]
      %v582 = vld [vmem:[%s506 + $0xfc] sm:$0xf]
      %v583 = vld [vmem:[%s506 + $0x100] sm:$0xf]
      %v584 = vld [vmem:[%s506 + $0x104] sm:$0xf]
      %v585 = vld [vmem:[%s506 + $0x108] sm:$0xf]
      %v586 = vld [vmem:[%s506 + $0x10c] sm:$0xf]
      %v587 = vld [vmem:[%s506 + $0x110] sm:$0xf]
      %v588 = vld [vmem:[%s506 + $0x114] sm:$0xf]
      %v589 = vld [vmem:[%s506 + $0x118] sm:$0xf]
      %v590 = vld [vmem:[%s506 + $0x11c] sm:$0xf]
      %v591 = vld [vmem:[%s506 + $0x120] sm:$0xf]
      %v592 = vld [vmem:[%s506 + $0x124] sm:$0xf]
      %v593 = vld [vmem:[%s506 + $0x128] sm:$0xf]
      %v594 = vld [vmem:[%s506 + $0x12c] sm:$0xf]
      %v595 = vld [vmem:[%s506 + $0x130] sm:$0xf]
      %v596 = vld [vmem:[%s506 + $0x134] sm:$0xf]
      %v597 = vld [vmem:[%s506 + $0x138] sm:$0xf]
      %v598 = vld [vmem:[%s506 + $0x13c] sm:$0xf]
      %v599 = vld [vmem:[%s506 + $0x140] sm:$0xf]
      %v600 = vld [vmem:[%s506 + $0x144] sm:$0xf]
      %v601 = vld [vmem:[%s506 + $0x148] sm:$0xf]
      %v602 = vld [vmem:[%s506 + $0x14c] sm:$0xf]
      %v603 = vld [vmem:[%s506 + $0x150] sm:$0xf]
      %v604 = vld [vmem:[%s506 + $0x154] sm:$0xf]
      %v605 = vld [vmem:[%s506 + $0x158] sm:$0xf]
      %v606 = vld [vmem:[%s506 + $0x15c] sm:$0xf]
      %v607 = vld [vmem:[%s506 + $0x160] sm:$0xf]
      %v608 = vld [vmem:[%s506 + $0x164] sm:$0xf]
      %v609 = vld [vmem:[%s506 + $0x168] sm:$0xf]
      %v610 = vld [vmem:[%s506 + $0x16c] sm:$0xf]
      %v611 = vld [vmem:[%s506 + $0x170] sm:$0xf]
      %v612 = vld [vmem:[%s506 + $0x174] sm:$0xf]
      %v613 = vld [vmem:[%s506 + $0x178] sm:$0xf]
      %v614 = vld [vmem:[%s506 + $0x17c] sm:$0xf]
      %v615 = vld [vmem:[%s506 + $0x180] sm:$0xf]
      %v616 = vld [vmem:[%s506 + $0x184] sm:$0xf]
      %v617 = vld [vmem:[%s506 + $0x188] sm:$0xf]
      %v618 = vld [vmem:[%s506 + $0x18c] sm:$0xf]
      %v619 = vld [vmem:[%s506 + $0x190] sm:$0xf]
      %v620 = vld [vmem:[%s506 + $0x194] sm:$0xf]
      %v621 = vld [vmem:[%s506 + $0x198] sm:$0xf]
      %v622 = vld [vmem:[%s506 + $0x19c] sm:$0xf]
      %v623 = vld [vmem:[%s506 + $0x1a0] sm:$0xf]
      %v624 = vld [vmem:[%s506 + $0x1a4] sm:$0xf]
      %v625 = vld [vmem:[%s506 + $0x1a8] sm:$0xf]
      %v626 = vld [vmem:[%s506 + $0x1ac] sm:$0xf]
      %v627 = vld [vmem:[%s506 + $0x1b0] sm:$0xf]
      %v628 = vld [vmem:[%s506 + $0x1b4] sm:$0xf]
      %v629 = vld [vmem:[%s506 + $0x1b8] sm:$0xf]
      %v630 = vld [vmem:[%s506 + $0x1bc] sm:$0xf]
      %v631 = vld [vmem:[%s506 + $0x1c0] sm:$0xf]
      %v632 = vld [vmem:[%s506 + $0x1c4] sm:$0xf]
      %v633 = vld [vmem:[%s506 + $0x1c8] sm:$0xf]
      %v634 = vld [vmem:[%s506 + $0x1cc] sm:$0xf]
      %v635 = vld [vmem:[%s506 + $0x1d0] sm:$0xf]
      %v636 = vld [vmem:[%s506 + $0x1d4] sm:$0xf]
      %v637 = vld [vmem:[%s506 + $0x1d8] sm:$0xf]
      %v638 = vld [vmem:[%s506 + $0x1dc] sm:$0xf]
      %v639 = vld [vmem:[%s506 + $0x1e0] sm:$0xf]
      %v640 = vld [vmem:[%s506 + $0x1e4] sm:$0xf]
      %v641 = vld [vmem:[%s506 + $0x1e8] sm:$0xf]
      %v642 = vld [vmem:[%s506 + $0x1ec] sm:$0xf]
      %v643 = vld [vmem:[%s506 + $0x1f0] sm:$0xf]
      %v644 = vld [vmem:[%s506 + $0x1f4] sm:$0xf]
      %v645 = vld [vmem:[%s506 + $0x1f8] sm:$0xf]
      %v646 = vld [vmem:[%s506 + $0x1fc] sm:$0xf]
      %v647 = vld [vmem:[%s2] sm:$0xf]
      %v648 = vld [vmem:[%s2 + $0x4] sm:$0xf]
      %v649 = vld [vmem:[%s2 + $0x8] sm:$0xf]
      %v650 = vld [vmem:[%s2 + $0xc] sm:$0xf]
      %v651 = vld [vmem:[%s2 + $0x10] sm:$0x3]
      %v652 = vld [vmem:[%s3] sm:$0x1]
      %v654 = vlaneseq
      %v655 = vshrl.u32 %v654, 7
      %v656 = vsub.s32 0, %v655
      %v657 = vrot.slane %v652, %v656
      %v787 = vunpack.c.l.b16 %v519
      %v788 = vunpack.c.l.b16 %v520
      %v789 = vunpack.c.l.b16 %v521
      %v790 = vunpack.c.l.b16 %v522
      %v791 = vunpack.c.l.b16 %v523
      %v792 = vunpack.c.l.b16 %v524
      %v793 = vunpack.c.l.b16 %v525
      %v794 = vunpack.c.l.b16 %v526
      %v795 = vunpack.c.l.b16 %v527
      %v796 = vunpack.c.l.b16 %v528
      %v797 = vunpack.c.l.b16 %v529
      %v798 = vunpack.c.l.b16 %v530
      %v799 = vunpack.c.l.b16 %v531
      %v800 = vunpack.c.l.b16 %v532
      %v801 = vunpack.c.l.b16 %v533
      %v802 = vunpack.c.l.b16 %v534
      %v803 = vunpack.c.l.b16 %v535
      %v804 = vunpack.c.l.b16 %v536
      %v805 = vunpack.c.l.b16 %v537
      %v806 = vunpack.c.l.b16 %v538
      %v807 = vunpack.c.l.b16 %v539
      %v808 = vunpack.c.l.b16 %v540
      %v809 = vunpack.c.l.b16 %v541
      %v810 = vunpack.c.l.b16 %v542
      %v811 = vunpack.c.l.b16 %v543
      %v812 = vunpack.c.l.b16 %v544
      %v813 = vunpack.c.l.b16 %v545
      %v814 = vunpack.c.l.b16 %v546
      %v815 = vunpack.c.l.b16 %v547
      %v816 = vunpack.c.l.b16 %v548
      %v817 = vunpack.c.l.b16 %v549
      %v818 = vunpack.c.l.b16 %v550
      %v819 = vunpack.c.l.b16 %v551
      %v820 = vunpack.c.l.b16 %v552
      %v821 = vunpack.c.l.b16 %v553
      %v822 = vunpack.c.l.b16 %v554
      %v823 = vunpack.c.l.b16 %v555
      %v824 = vunpack.c.l.b16 %v556
      %v825 = vunpack.c.l.b16 %v557
      %v826 = vunpack.c.l.b16 %v558
      %v827 = vunpack.c.l.b16 %v559
      %v828 = vunpack.c.l.b16 %v560
      %v829 = vunpack.c.l.b16 %v561
      %v830 = vunpack.c.l.b16 %v562
      %v831 = vunpack.c.l.b16 %v563
      %v832 = vunpack.c.l.b16 %v564
      %v833 = vunpack.c.l.b16 %v565
      %v834 = vunpack.c.l.b16 %v566
      %v835 = vunpack.c.l.b16 %v567
      %v836 = vunpack.c.l.b16 %v568
      %v837 = vunpack.c.l.b16 %v569
      %v838 = vunpack.c.l.b16 %v570
      %v839 = vunpack.c.l.b16 %v571
      %v840 = vunpack.c.l.b16 %v572
      %v841 = vunpack.c.l.b16 %v573
      %v842 = vunpack.c.l.b16 %v574
      %v843 = vunpack.c.l.b16 %v575
      %v844 = vunpack.c.l.b16 %v576
      %v845 = vunpack.c.l.b16 %v577
      %v846 = vunpack.c.l.b16 %v578
      %v847 = vunpack.c.l.b16 %v579
      %v848 = vunpack.c.l.b16 %v580
      %v849 = vunpack.c.l.b16 %v581
      %v850 = vunpack.c.l.b16 %v582
      %v851 = vunpack.c.l.b16 %v583
      %v852 = vunpack.c.l.b16 %v584
      %v853 = vunpack.c.l.b16 %v585
      %v854 = vunpack.c.l.b16 %v586
      %v855 = vunpack.c.l.b16 %v587
      %v856 = vunpack.c.l.b16 %v588
      %v857 = vunpack.c.l.b16 %v589
      %v858 = vunpack.c.l.b16 %v590
      %v859 = vunpack.c.l.b16 %v591
      %v860 = vunpack.c.l.b16 %v592
      %v861 = vunpack.c.l.b16 %v593
      %v862 = vunpack.c.l.b16 %v594
      %v863 = vunpack.c.l.b16 %v595
      %v864 = vunpack.c.l.b16 %v596
      %v865 = vunpack.c.l.b16 %v597
      %v866 = vunpack.c.l.b16 %v598
      %v867 = vunpack.c.l.b16 %v599
      %v868 = vunpack.c.l.b16 %v600
      %v869 = vunpack.c.l.b16 %v601
      %v870 = vunpack.c.l.b16 %v602
      %v871 = vunpack.c.l.b16 %v603
      %v872 = vunpack.c.l.b16 %v604
      %v873 = vunpack.c.l.b16 %v605
      %v874 = vunpack.c.l.b16 %v606
      %v875 = vunpack.c.l.b16 %v607
      %v876 = vunpack.c.l.b16 %v608
      %v877 = vunpack.c.l.b16 %v609
      %v878 = vunpack.c.l.b16 %v610
      %v879 = vunpack.c.l.b16 %v611
      %v880 = vunpack.c.l.b16 %v612
      %v881 = vunpack.c.l.b16 %v613
      %v882 = vunpack.c.l.b16 %v614
      %v883 = vunpack.c.l.b16 %v615
      %v884 = vunpack.c.l.b16 %v616
      %v885 = vunpack.c.l.b16 %v617
      %v886 = vunpack.c.l.b16 %v618
      %v887 = vunpack.c.l.b16 %v619
      %v888 = vunpack.c.l.b16 %v620
      %v889 = vunpack.c.l.b16 %v621
      %v890 = vunpack.c.l.b16 %v622
      %v891 = vunpack.c.l.b16 %v623
      %v892 = vunpack.c.l.b16 %v624
      %v893 = vunpack.c.l.b16 %v625
      %v894 = vunpack.c.l.b16 %v626
      %v895 = vunpack.c.l.b16 %v627
      %v896 = vunpack.c.l.b16 %v628
      %v897 = vunpack.c.l.b16 %v629
      %v898 = vunpack.c.l.b16 %v630
      %v899 = vunpack.c.l.b16 %v631
      %v900 = vunpack.c.l.b16 %v632
      %v901 = vunpack.c.l.b16 %v633
      %v902 = vunpack.c.l.b16 %v634
      %v903 = vunpack.c.l.b16 %v635
      %v904 = vunpack.c.l.b16 %v636
      %v905 = vunpack.c.l.b16 %v637
      %v906 = vunpack.c.l.b16 %v638
      %v907 = vunpack.c.l.b16 %v639
      %v908 = vunpack.c.l.b16 %v640
      %v909 = vunpack.c.l.b16 %v641
      %v910 = vunpack.c.l.b16 %v642
      %v911 = vunpack.c.l.b16 %v643
      %v912 = vunpack.c.l.b16 %v644
      %v913 = vunpack.c.l.b16 %v645
      %v914 = vunpack.c.l.b16 %v646
      %v915 = vpack.c.b16 %v788, %v787
      %v916 = vpack.c.b16 %v790, %v789
      %v917 = vpack.c.b16 %v792, %v791
      %v918 = vpack.c.b16 %v794, %v793
      %v919 = vpack.c.b16 %v796, %v795
      %v920 = vpack.c.b16 %v798, %v797
      %v921 = vpack.c.b16 %v800, %v799
      %v922 = vpack.c.b16 %v802, %v801
      %v923 = vpack.c.b16 %v804, %v803
      %v924 = vpack.c.b16 %v806, %v805
      %v925 = vpack.c.b16 %v808, %v807
      %v926 = vpack.c.b16 %v810, %v809
      %v927 = vpack.c.b16 %v812, %v811
      %v928 = vpack.c.b16 %v814, %v813
      %v929 = vpack.c.b16 %v816, %v815
      %v930 = vpack.c.b16 %v818, %v817
      %v931 = vpack.c.b16 %v820, %v819
      %v932 = vpack.c.b16 %v822, %v821
      %v933 = vpack.c.b16 %v824, %v823
      %v934 = vpack.c.b16 %v826, %v825
      %v935 = vpack.c.b16 %v828, %v827
      %v936 = vpack.c.b16 %v830, %v829
      %v937 = vpack.c.b16 %v832, %v831
      %v938 = vpack.c.b16 %v834, %v833
      %v939 = vpack.c.b16 %v836, %v835
      %v940 = vpack.c.b16 %v838, %v837
      %v941 = vpack.c.b16 %v840, %v839
      %v942 = vpack.c.b16 %v842, %v841
      %v943 = vpack.c.b16 %v844, %v843
      %v944 = vpack.c.b16 %v846, %v845
      %v945 = vpack.c.b16 %v848, %v847
      %v946 = vpack.c.b16 %v850, %v849
      %v947 = vpack.c.b16 %v852, %v851
      %v948 = vpack.c.b16 %v854, %v853
      %v949 = vpack.c.b16 %v856, %v855
      %v950 = vpack.c.b16 %v858, %v857
      %v951 = vpack.c.b16 %v860, %v859
      %v952 = vpack.c.b16 %v862, %v861
      %v953 = vpack.c.b16 %v864, %v863
      %v954 = vpack.c.b16 %v866, %v865
      %v955 = vpack.c.b16 %v868, %v867
      %v956 = vpack.c.b16 %v870, %v869
      %v957 = vpack.c.b16 %v872, %v871
      %v958 = vpack.c.b16 %v874, %v873
      %v959 = vpack.c.b16 %v876, %v875
      %v960 = vpack.c.b16 %v878, %v877
      %v961 = vpack.c.b16 %v880, %v879
      %v962 = vpack.c.b16 %v882, %v881
      %v963 = vpack.c.b16 %v884, %v883
      %v964 = vpack.c.b16 %v886, %v885
      %v965 = vpack.c.b16 %v888, %v887
      %v966 = vpack.c.b16 %v890, %v889
      %v967 = vpack.c.b16 %v892, %v891
      %v968 = vpack.c.b16 %v894, %v893
      %v969 = vpack.c.b16 %v896, %v895
      %v970 = vpack.c.b16 %v898, %v897
      %v971 = vpack.c.b16 %v900, %v899
      %v972 = vpack.c.b16 %v902, %v901
      %v973 = vpack.c.b16 %v904, %v903
      %v974 = vpack.c.b16 %v906, %v905
      %v975 = vpack.c.b16 %v908, %v907
      %v976 = vpack.c.b16 %v910, %v909
      %v977 = vpack.c.b16 %v912, %v911
      %v978 = vpack.c.b16 %v914, %v913
      %v984 = vunpack.c.l.b16 %v647
      %v985 = vunpack.c.l.b16 %v648
      %v986 = vunpack.c.l.b16 %v649
      %v987 = vunpack.c.l.b16 %v650
      %v988 = vunpack.c.l.b16 %v651
      %v989 = vpack.c.b16 %v985, %v984
      %v990 = vpack.c.b16 %v987, %v986
      %v991 = vpack.c.b16 %v988, %v988
      %vm994 = vcmask 293888
      %v996 = vsel %vm994, %v915, 0
      %v999 = vsel %vm994, %v916, 0
      %v1002 = vsel %vm994, %v917, 0
      %v1005 = vsel %vm994, %v918, 0
      %v1008 = vsel %vm994, %v919, 0
      %v1011 = vsel %vm994, %v920, 0
      %v1014 = vsel %vm994, %v921, 0
      %v1017 = vsel %vm994, %v922, 0
      %v1020 = vsel %vm994, %v923, 0
      %v1023 = vsel %vm994, %v924, 0
      %v1026 = vsel %vm994, %v925, 0
      %v1029 = vsel %vm994, %v926, 0
      %v1032 = vsel %vm994, %v927, 0
      %v1035 = vsel %vm994, %v928, 0
      %v1038 = vsel %vm994, %v929, 0
      %v1041 = vsel %vm994, %v930, 0
      %v1044 = vsel %vm994, %v931, 0
      %v1047 = vsel %vm994, %v932, 0
      %v1050 = vsel %vm994, %v933, 0
      %v1053 = vsel %vm994, %v934, 0
      %v1056 = vsel %vm994, %v935, 0
      %v1059 = vsel %vm994, %v936, 0
      %v1062 = vsel %vm994, %v937, 0
      %v1065 = vsel %vm994, %v938, 0
      %v1068 = vsel %vm994, %v939, 0
      %v1071 = vsel %vm994, %v940, 0
      %v1074 = vsel %vm994, %v941, 0
      %v1077 = vsel %vm994, %v942, 0
      %v1080 = vsel %vm994, %v943, 0
      %v1083 = vsel %vm994, %v944, 0
      %v1086 = vsel %vm994, %v945, 0
      %v1089 = vsel %vm994, %v946, 0
      %v1092 = vsel %vm994, %v947, 0
      %v1095 = vsel %vm994, %v948, 0
      %v1098 = vsel %vm994, %v949, 0
      %v1101 = vsel %vm994, %v950, 0
      %v1104 = vsel %vm994, %v951, 0
      %v1107 = vsel %vm994, %v952, 0
      %v1110 = vsel %vm994, %v953, 0
      %v1113 = vsel %vm994, %v954, 0
      %v1116 = vsel %vm994, %v955, 0
      %v1119 = vsel %vm994, %v956, 0
      %v1122 = vsel %vm994, %v957, 0
      %v1125 = vsel %vm994, %v958, 0
      %v1128 = vsel %vm994, %v959, 0
      %v1131 = vsel %vm994, %v960, 0
      %v1134 = vsel %vm994, %v961, 0
      %v1137 = vsel %vm994, %v962, 0
      %v1140 = vsel %vm994, %v963, 0
      %v1143 = vsel %vm994, %v964, 0
      %v1146 = vsel %vm994, %v965, 0
      %v1149 = vsel %vm994, %v966, 0
      %v1152 = vsel %vm994, %v967, 0
      %v1155 = vsel %vm994, %v968, 0
      %v1158 = vsel %vm994, %v969, 0
      %v1161 = vsel %vm994, %v970, 0
      %v1164 = vsel %vm994, %v971, 0
      %v1167 = vsel %vm994, %v972, 0
      %v1170 = vsel %vm994, %v973, 0
      %v1173 = vsel %vm994, %v974, 0
      %v1176 = vsel %vm994, %v975, 0
      %v1179 = vsel %vm994, %v976, 0
      %v1182 = vsel %vm994, %v977, 0
      %v1185 = vsel %vm994, %v978, 0
      %vm1187 = vcmask 1041408
      %v1189 = vsel %vm1187, %v991, 0
      %1191 = vmatprep.subr.bf16.mxu0 0
      %1192 = vmatpush1.bf16.msra.mxu0 %v989
      %1193 = vmatprep.subr.bf16.mxu0 0
      %1194 = vmatpush1.bf16.msra.mxu0 %v990
      %1195 = vmatprep.subr.bf16.mxu0 0
      %1196 = vmatpush1.bf16.msra.mxu0 %v1189
      %1197 = vmatprep.subr.bf16.mxu0 0
      %1198 = vmatpush1.bf16.msra.mxu0 0
      %1199 = vmatprep.subr.bf16.mxu0 0
      %1200 = vmatpush1.bf16.msra.mxu0 0
      %1201 = vmatprep.subr.bf16.mxu0 0
      %1202 = vmatpush1.bf16.msra.mxu0 0
      %1203 = vmatprep.subr.bf16.mxu0 0
      %1204 = vmatpush1.bf16.msra.mxu0 0
      %1205 = vmatprep.subr.bf16.mxu0 0
      %1206 = vmatpush1.bf16.msra.mxu0 0
      %1207 = vmatprep.subr.bf16.mxu0 0
      %1208 = vmatpush1.bf16.msra.mxu0 0
      %1209 = vmatprep.subr.bf16.mxu0 0
      %1210 = vmatpush1.bf16.msra.mxu0 0
      %1211 = vmatprep.subr.bf16.mxu0 0
      %1212 = vmatpush1.bf16.msra.mxu0 0
      %1213 = vmatprep.subr.bf16.mxu0 0
      %1214 = vmatpush1.bf16.msra.mxu0 0
      %1215 = vmatprep.subr.bf16.mxu0 0
      %1216 = vmatpush1.bf16.msra.mxu0 0
      %1217 = vmatprep.subr.bf16.mxu0 0
      %1218 = vmatpush1.bf16.msra.mxu0 0
      %1219 = vmatprep.subr.bf16.mxu0 0
      %1220 = vmatpush1.bf16.msra.mxu0 0
      %1221 = vmatprep.subr.bf16.mxu0 0
      %1222 = vmatpush1.bf16.msra.mxu0 0
      %1223 = vmatprep.mubr.bf16.mxu0 0
      %1224 = vmatmul.mubr.bf16.gmra.mrb[0].mxu0 %v996
      %v1225 = vpop.f32.mrb[0].mxu0
      %v1226 = vadd.f32 %v657, %v1225
      %v1227 = vpop.f32.mrb[0].mxu0
      %v1228 = vpop.f32.mrb[0].mxu0
      %v1229 = vadd.f32 %v657, %v1228
      %v1230 = vpop.f32.mrb[0].mxu0
      %1231 = vmatprep.mubr.bf16.mxu0 0
      %1232 = vmatmul.mubr.bf16.gmra.mrb[0].mxu0 %v999
      %v1233 = vpop.f32.mrb[0].mxu0
      %v1234 = vadd.f32 %v657, %v1233
      %v1235 = vpop.f32.mrb[0].mxu0
      %v1236 = vpop.f32.mrb[0].mxu0
      %v1237 = vadd.f32 %v657, %v1236
      %v1238 = vpop.f32.mrb[0].mxu0
      %1239 = vmatprep.mubr.bf16.mxu0 0
      %1240 = vmatmul.mubr.bf16.gmra.mrb[0].mxu0 %v1002
      %v1241 = vpop.f32.mrb[0].mxu0
      %v1242 = vadd.f32 %v657, %v1241
      %v1243 = vpop.f32.mrb[0].mxu0
      %v1244 = vpop.f32.mrb[0].mxu0
      %v1245 = vadd.f32 %v657, %v1244
      %v1246 = vpop.f32.mrb[0].mxu0
      %1247 = vmatprep.mubr.bf16.mxu0 0
      %1248 = vmatmul.mubr.bf16.gmra.mrb[0].mxu0 %v1005
      %v1249 = vpop.f32.mrb[0].mxu0
      %v1250 = vadd.f32 %v657, %v1249
      %v1251 = vpop.f32.mrb[0].mxu0
      %v1252 = vpop.f32.mrb[0].mxu0
      %v1253 = vadd.f32 %v657, %v1252
      %v1254 = vpop.f32.mrb[0].mxu0
      %1255 = vmatprep.mubr.bf16.mxu0 0
      %1256 = vmatmul.mubr.bf16.gmra.mrb[0].mxu0 %v1008
      %v1257 = vpop.f32.mrb[0].mxu0
      %v1258 = vadd.f32 %v657, %v1257
      %v1259 = vpop.f32.mrb[0].mxu0
      %v1260 = vpop.f32.mrb[0].mxu0
      %v1261 = vadd.f32 %v657, %v1260
      %v1262 = vpop.f32.mrb[0].mxu0
      %1263 = vmatprep.mubr.bf16.mxu0 0
      %1264 = vmatmul.mubr.bf16.gmra.mrb[0].mxu0 %v1011
      %v1265 = vpop.f32.mrb[0].mxu0
      %v1266 = vadd.f32 %v657, %v1265
      %v1267 = vpop.f32.mrb[0].mxu0
      %v1268 = vpop.f32.mrb[0].mxu0
      %v1269 = vadd.f32 %v657, %v1268
      %v1270 = vpop.f32.mrb[0].mxu0
      %1271 = vmatprep.mubr.bf16.mxu0 0
      %1272 = vmatmul.mubr.bf16.gmra.mrb[0].mxu0 %v1014
      %v1273 = vpop.f32.mrb[0].mxu0
      %v1274 = vadd.f32 %v657, %v1273
      %v1275 = vpop.f32.mrb[0].mxu0
      %v1276 = vpop.f32.mrb[0].mxu0
      %v1277 = vadd.f32 %v657, %v1276
      %v1278 = vpop.f32.mrb[0].mxu0
      %1279 = vmatprep.mubr.bf16.mxu0 0
      %1280 = vmatmul.mubr.bf16.gmra.mrb[0].mxu0 %v1017
      %v1281 = vpop.f32.mrb[0].mxu0
      %v1282 = vadd.f32 %v657, %v1281
      %v1283 = vpop.f32.mrb[0].mxu0
      %v1284 = vpop.f32.mrb[0].mxu0
      %v1285 = vadd.f32 %v657, %v1284
      %v1286 = vpop.f32.mrb[0].mxu0
      %1287 = vmatprep.mubr.bf16.mxu0 0
      %1288 = vmatmul.mubr.bf16.gmra.mrb[0].mxu0 %v1020
      %v1289 = vpop.f32.mrb[0].mxu0
      %v1290 = vadd.f32 %v657, %v1289
      %v1291 = vpop.f32.mrb[0].mxu0
      %v1292 = vpop.f32.mrb[0].mxu0
      %v1293 = vadd.f32 %v657, %v1292
      %v1294 = vpop.f32.mrb[0].mxu0
      %1295 = vmatprep.mubr.bf16.mxu0 0
      %1296 = vmatmul.mubr.bf16.gmra.mrb[0].mxu0 %v1023
      %v1297 = vpop.f32.mrb[0].mxu0
      %v1298 = vadd.f32 %v657, %v1297
      %v1299 = vpop.f32.mrb[0].mxu0
      %v1300 = vpop.f32.mrb[0].mxu0
      %v1301 = vadd.f32 %v657, %v1300
      %v1302 = vpop.f32.mrb[0].mxu0
      %1303 = vmatprep.mubr.bf16.mxu0 0
      %1304 = vmatmul.mubr.bf16.gmra.mrb[0].mxu0 %v1026
      %v1305 = vpop.f32.mrb[0].mxu0
      %v1306 = vadd.f32 %v657, %v1305
      %v1307 = vpop.f32.mrb[0].mxu0
      %v1308 = vpop.f32.mrb[0].mxu0
      %v1309 = vadd.f32 %v657, %v1308
      %v1310 = vpop.f32.mrb[0].mxu0
      %1311 = vmatprep.mubr.bf16.mxu0 0
      %1312 = vmatmul.mubr.bf16.gmra.mrb[0].mxu0 %v1029
      %v1313 = vpop.f32.mrb[0].mxu0
      %v1314 = vadd.f32 %v657, %v1313
      %v1315 = vpop.f32.mrb[0].mxu0
      %v1316 = vpop.f32.mrb[0].mxu0
      %v1317 = vadd.f32 %v657, %v1316
      %v1318 = vpop.f32.mrb[0].mxu0
      %1319 = vmatprep.mubr.bf16.mxu0 0
      %1320 = vmatmul.mubr.bf16.gmra.mrb[0].mxu0 %v1032
      %v1321 = vpop.f32.mrb[0].mxu0
      %v1322 = vadd.f32 %v657, %v1321
      %v1323 = vpop.f32.mrb[0].mxu0
      %v1324 = vpop.f32.mrb[0].mxu0
      %v1325 = vadd.f32 %v657, %v1324
      %v1326 = vpop.f32.mrb[0].mxu0
      %1327 = vmatprep.mubr.bf16.mxu0 0
      %1328 = vmatmul.mubr.bf16.gmra.mrb[0].mxu0 %v1035
      %v1329 = vpop.f32.mrb[0].mxu0
      %v1330 = vadd.f32 %v657, %v1329
      %v1331 = vpop.f32.mrb[0].mxu0
      %v1332 = vpop.f32.mrb[0].mxu0
      %v1333 = vadd.f32 %v657, %v1332
      %v1334 = vpop.f32.mrb[0].mxu0
      %1335 = vmatprep.mubr.bf16.mxu0 0
      %1336 = vmatmul.mubr.bf16.gmra.mrb[0].mxu0 %v1038
      %v1337 = vpop.f32.mrb[0].mxu0
      %v1338 = vadd.f32 %v657, %v1337
      %v1339 = vpop.f32.mrb[0].mxu0
      %v1340 = vpop.f32.mrb[0].mxu0
      %v1341 = vadd.f32 %v657, %v1340
      %v1342 = vpop.f32.mrb[0].mxu0
      %1343 = vmatprep.mubr.bf16.mxu0 0
      %1344 = vmatmul.mubr.bf16.gmra.mrb[0].mxu0 %v1041
      %v1345 = vpop.f32.mrb[0].mxu0
      %v1346 = vadd.f32 %v657, %v1345
      %v1347 = vpop.f32.mrb[0].mxu0
      %v1348 = vpop.f32.mrb[0].mxu0
      %v1349 = vadd.f32 %v657, %v1348
      %v1350 = vpop.f32.mrb[0].mxu0
      %1351 = vmatprep.mubr.bf16.mxu0 0
      %1352 = vmatmul.mubr.bf16.gmra.mrb[0].mxu0 %v1044
      %v1353 = vpop.f32.mrb[0].mxu0
      %v1354 = vadd.f32 %v657, %v1353
      %v1355 = vpop.f32.mrb[0].mxu0
      %v1356 = vpop.f32.mrb[0].mxu0
      %v1357 = vadd.f32 %v657, %v1356
      %v1358 = vpop.f32.mrb[0].mxu0
      %1359 = vmatprep.mubr.bf16.mxu0 0
      %1360 = vmatmul.mubr.bf16.gmra.mrb[0].mxu0 %v1047
      %v1361 = vpop.f32.mrb[0].mxu0
      %v1362 = vadd.f32 %v657, %v1361
      %v1363 = vpop.f32.mrb[0].mxu0
      %v1364 = vpop.f32.mrb[0].mxu0
      %v1365 = vadd.f32 %v657, %v1364
      %v1366 = vpop.f32.mrb[0].mxu0
      %1367 = vmatprep.mubr.bf16.mxu0 0
      %1368 = vmatmul.mubr.bf16.gmra.mrb[0].mxu0 %v1050
      %v1369 = vpop.f32.mrb[0].mxu0
      %v1370 = vadd.f32 %v657, %v1369
      %v1371 = vpop.f32.mrb[0].mxu0
      %v1372 = vpop.f32.mrb[0].mxu0
      %v1373 = vadd.f32 %v657, %v1372
      %v1374 = vpop.f32.mrb[0].mxu0
      %1375 = vmatprep.mubr.bf16.mxu0 0
      %1376 = vmatmul.mubr.bf16.gmra.mrb[0].mxu0 %v1053
      %v1377 = vpop.f32.mrb[0].mxu0
      %v1378 = vadd.f32 %v657, %v1377
      %v1379 = vpop.f32.mrb[0].mxu0
      %v1380 = vpop.f32.mrb[0].mxu0
      %v1381 = vadd.f32 %v657, %v1380
      %v1382 = vpop.f32.mrb[0].mxu0
      %1383 = vmatprep.mubr.bf16.mxu0 0
      %1384 = vmatmul.mubr.bf16.gmra.mrb[0].mxu0 %v1056
      %v1385 = vpop.f32.mrb[0].mxu0
      %v1386 = vadd.f32 %v657, %v1385
      %v1387 = vpop.f32.mrb[0].mxu0
      %v1388 = vpop.f32.mrb[0].mxu0
      %v1389 = vadd.f32 %v657, %v1388
      %v1390 = vpop.f32.mrb[0].mxu0
      %1391 = vmatprep.mubr.bf16.mxu0 0
      %1392 = vmatmul.mubr.bf16.gmra.mrb[0].mxu0 %v1059
      %v1393 = vpop.f32.mrb[0].mxu0
      %v1394 = vadd.f32 %v657, %v1393
      %v1395 = vpop.f32.mrb[0].mxu0
      %v1396 = vpop.f32.mrb[0].mxu0
      %v1397 = vadd.f32 %v657, %v1396
      %v1398 = vpop.f32.mrb[0].mxu0
      %1399 = vmatprep.mubr.bf16.mxu0 0
      %1400 = vmatmul.mubr.bf16.gmra.mrb[0].mxu0 %v1062
      %v1401 = vpop.f32.mrb[0].mxu0
      %v1402 = vadd.f32 %v657, %v1401
      %v1403 = vpop.f32.mrb[0].mxu0
      %v1404 = vpop.f32.mrb[0].mxu0
      %v1405 = vadd.f32 %v657, %v1404
      %v1406 = vpop.f32.mrb[0].mxu0
      %1407 = vmatprep.mubr.bf16.mxu0 0
      %1408 = vmatmul.mubr.bf16.gmra.mrb[0].mxu0 %v1065
      %v1409 = vpop.f32.mrb[0].mxu0
      %v1410 = vadd.f32 %v657, %v1409
      %v1411 = vpop.f32.mrb[0].mxu0
      %v1412 = vpop.f32.mrb[0].mxu0
      %v1413 = vadd.f32 %v657, %v1412
      %v1414 = vpop.f32.mrb[0].mxu0
      %1415 = vmatprep.mubr.bf16.mxu0 0
      %1416 = vmatmul.mubr.bf16.gmra.mrb[0].mxu0 %v1068
      %v1417 = vpop.f32.mrb[0].mxu0
      %v1418 = vadd.f32 %v657, %v1417
      %v1419 = vpop.f32.mrb[0].mxu0
      %v1420 = vpop.f32.mrb[0].mxu0
      %v1421 = vadd.f32 %v657, %v1420
      %v1422 = vpop.f32.mrb[0].mxu0
      %1423 = vmatprep.mubr.bf16.mxu0 0
      %1424 = vmatmul.mubr.bf16.gmra.mrb[0].mxu0 %v1071
      %v1425 = vpop.f32.mrb[0].mxu0
      %v1426 = vadd.f32 %v657, %v1425
      %v1427 = vpop.f32.mrb[0].mxu0
      %v1428 = vpop.f32.mrb[0].mxu0
      %v1429 = vadd.f32 %v657, %v1428
      %v1430 = vpop.f32.mrb[0].mxu0
      %1431 = vmatprep.mubr.bf16.mxu0 0
      %1432 = vmatmul.mubr.bf16.gmra.mrb[0].mxu0 %v1074
      %v1433 = vpop.f32.mrb[0].mxu0
      %v1434 = vadd.f32 %v657, %v1433
      %v1435 = vpop.f32.mrb[0].mxu0
      %v1436 = vpop.f32.mrb[0].mxu0
      %v1437 = vadd.f32 %v657, %v1436
      %v1438 = vpop.f32.mrb[0].mxu0
      %1439 = vmatprep.mubr.bf16.mxu0 0
      %1440 = vmatmul.mubr.bf16.gmra.mrb[0].mxu0 %v1077
      %v1441 = vpop.f32.mrb[0].mxu0
      %v1442 = vadd.f32 %v657, %v1441
      %v1443 = vpop.f32.mrb[0].mxu0
      %v1444 = vpop.f32.mrb[0].mxu0
      %v1445 = vadd.f32 %v657, %v1444
      %v1446 = vpop.f32.mrb[0].mxu0
      %1447 = vmatprep.mubr.bf16.mxu0 0
      %1448 = vmatmul.mubr.bf16.gmra.mrb[0].mxu0 %v1080
      %v1449 = vpop.f32.mrb[0].mxu0
      %v1450 = vadd.f32 %v657, %v1449
      %v1451 = vpop.f32.mrb[0].mxu0
      %v1452 = vpop.f32.mrb[0].mxu0
      %v1453 = vadd.f32 %v657, %v1452
      %v1454 = vpop.f32.mrb[0].mxu0
      %1455 = vmatprep.mubr.bf16.mxu0 0
      %1456 = vmatmul.mubr.bf16.gmra.mrb[0].mxu0 %v1083
      %v1457 = vpop.f32.mrb[0].mxu0
      %v1458 = vadd.f32 %v657, %v1457
      %v1459 = vpop.f32.mrb[0].mxu0
      %v1460 = vpop.f32.mrb[0].mxu0
      %v1461 = vadd.f32 %v657, %v1460
      %v1462 = vpop.f32.mrb[0].mxu0
      %1463 = vmatprep.mubr.bf16.mxu0 0
      %1464 = vmatmul.mubr.bf16.gmra.mrb[0].mxu0 %v1086
      %v1465 = vpop.f32.mrb[0].mxu0
      %v1466 = vadd.f32 %v657, %v1465
      %v1467 = vpop.f32.mrb[0].mxu0
      %v1468 = vpop.f32.mrb[0].mxu0
      %v1469 = vadd.f32 %v657, %v1468
      %v1470 = vpop.f32.mrb[0].mxu0
      %1471 = vmatprep.mubr.bf16.mxu0 0
      %1472 = vmatmul.mubr.bf16.gmra.mrb[0].mxu0 %v1089
      %v1473 = vpop.f32.mrb[0].mxu0
      %v1474 = vadd.f32 %v657, %v1473
      %v1475 = vpop.f32.mrb[0].mxu0
      %v1476 = vpop.f32.mrb[0].mxu0
      %v1477 = vadd.f32 %v657, %v1476
      %v1478 = vpop.f32.mrb[0].mxu0
      %1479 = vmatprep.mubr.bf16.mxu0 0
      %1480 = vmatmul.mubr.bf16.gmra.mrb[0].mxu0 %v1092
      %v1481 = vpop.f32.mrb[0].mxu0
      %v1482 = vadd.f32 %v657, %v1481
      %v1483 = vpop.f32.mrb[0].mxu0
      %v1484 = vpop.f32.mrb[0].mxu0
      %v1485 = vadd.f32 %v657, %v1484
      %v1486 = vpop.f32.mrb[0].mxu0
      %1487 = vmatprep.mubr.bf16.mxu0 0
      %1488 = vmatmul.mubr.bf16.gmra.mrb[0].mxu0 %v1095
      %v1489 = vpop.f32.mrb[0].mxu0
      %v1490 = vadd.f32 %v657, %v1489
      %v1491 = vpop.f32.mrb[0].mxu0
      %v1492 = vpop.f32.mrb[0].mxu0
      %v1493 = vadd.f32 %v657, %v1492
      %v1494 = vpop.f32.mrb[0].mxu0
      %1495 = vmatprep.mubr.bf16.mxu0 0
      %1496 = vmatmul.mubr.bf16.gmra.mrb[0].mxu0 %v1098
      %v1497 = vpop.f32.mrb[0].mxu0
      %v1498 = vadd.f32 %v657, %v1497
      %v1499 = vpop.f32.mrb[0].mxu0
      %v1500 = vpop.f32.mrb[0].mxu0
      %v1501 = vadd.f32 %v657, %v1500
      %v1502 = vpop.f32.mrb[0].mxu0
      %1503 = vmatprep.mubr.bf16.mxu0 0
      %1504 = vmatmul.mubr.bf16.gmra.mrb[0].mxu0 %v1101
      %v1505 = vpop.f32.mrb[0].mxu0
      %v1506 = vadd.f32 %v657, %v1505
      %v1507 = vpop.f32.mrb[0].mxu0
      %v1508 = vpop.f32.mrb[0].mxu0
      %v1509 = vadd.f32 %v657, %v1508
      %v1510 = vpop.f32.mrb[0].mxu0
      %1511 = vmatprep.mubr.bf16.mxu0 0
      %1512 = vmatmul.mubr.bf16.gmra.mrb[0].mxu0 %v1104
      %v1513 = vpop.f32.mrb[0].mxu0
      %v1514 = vadd.f32 %v657, %v1513
      %v1515 = vpop.f32.mrb[0].mxu0
      %v1516 = vpop.f32.mrb[0].mxu0
      %v1517 = vadd.f32 %v657, %v1516
      %v1518 = vpop.f32.mrb[0].mxu0
      %1519 = vmatprep.mubr.bf16.mxu0 0
      %1520 = vmatmul.mubr.bf16.gmra.mrb[0].mxu0 %v1107
      %v1521 = vpop.f32.mrb[0].mxu0
      %v1522 = vadd.f32 %v657, %v1521
      %v1523 = vpop.f32.mrb[0].mxu0
      %v1524 = vpop.f32.mrb[0].mxu0
      %v1525 = vadd.f32 %v657, %v1524
      %v1526 = vpop.f32.mrb[0].mxu0
      %1527 = vmatprep.mubr.bf16.mxu0 0
      %1528 = vmatmul.mubr.bf16.gmra.mrb[0].mxu0 %v1110
      %v1529 = vpop.f32.mrb[0].mxu0
      %v1530 = vadd.f32 %v657, %v1529
      %v1531 = vpop.f32.mrb[0].mxu0
      %v1532 = vpop.f32.mrb[0].mxu0
      %v1533 = vadd.f32 %v657, %v1532
      %v1534 = vpop.f32.mrb[0].mxu0
      %1535 = vmatprep.mubr.bf16.mxu0 0
      %1536 = vmatmul.mubr.bf16.gmra.mrb[0].mxu0 %v1113
      %v1537 = vpop.f32.mrb[0].mxu0
      %v1538 = vadd.f32 %v657, %v1537
      %v1539 = vpop.f32.mrb[0].mxu0
      %v1540 = vpop.f32.mrb[0].mxu0
      %v1541 = vadd.f32 %v657, %v1540
      %v1542 = vpop.f32.mrb[0].mxu0
      %1543 = vmatprep.mubr.bf16.mxu0 0
      %1544 = vmatmul.mubr.bf16.gmra.mrb[0].mxu0 %v1116
      %v1545 = vpop.f32.mrb[0].mxu0
      %v1546 = vadd.f32 %v657, %v1545
      %v1547 = vpop.f32.mrb[0].mxu0
      %v1548 = vpop.f32.mrb[0].mxu0
      %v1549 = vadd.f32 %v657, %v1548
      %v1550 = vpop.f32.mrb[0].mxu0
      %1551 = vmatprep.mubr.bf16.mxu0 0
      %1552 = vmatmul.mubr.bf16.gmra.mrb[0].mxu0 %v1119
      %v1553 = vpop.f32.mrb[0].mxu0
      %v1554 = vadd.f32 %v657, %v1553
      %v1555 = vpop.f32.mrb[0].mxu0
      %v1556 = vpop.f32.mrb[0].mxu0
      %v1557 = vadd.f32 %v657, %v1556
      %v1558 = vpop.f32.mrb[0].mxu0
      %1559 = vmatprep.mubr.bf16.mxu0 0
      %1560 = vmatmul.mubr.bf16.gmra.mrb[0].mxu0 %v1122
      %v1561 = vpop.f32.mrb[0].mxu0
      %v1562 = vadd.f32 %v657, %v1561
      %v1563 = vpop.f32.mrb[0].mxu0
      %v1564 = vpop.f32.mrb[0].mxu0
      %v1565 = vadd.f32 %v657, %v1564
      %v1566 = vpop.f32.mrb[0].mxu0
      %1567 = vmatprep.mubr.bf16.mxu0 0
      %1568 = vmatmul.mubr.bf16.gmra.mrb[0].mxu0 %v1125
      %v1569 = vpop.f32.mrb[0].mxu0
      %v1570 = vadd.f32 %v657, %v1569
      %v1571 = vpop.f32.mrb[0].mxu0
      %v1572 = vpop.f32.mrb[0].mxu0
      %v1573 = vadd.f32 %v657, %v1572
      %v1574 = vpop.f32.mrb[0].mxu0
      %1575 = vmatprep.mubr.bf16.mxu0 0
      %1576 = vmatmul.mubr.bf16.gmra.mrb[0].mxu0 %v1128
      %v1577 = vpop.f32.mrb[0].mxu0
      %v1578 = vadd.f32 %v657, %v1577
      %v1579 = vpop.f32.mrb[0].mxu0
      %v1580 = vpop.f32.mrb[0].mxu0
      %v1581 = vadd.f32 %v657, %v1580
      %v1582 = vpop.f32.mrb[0].mxu0
      %1583 = vmatprep.mubr.bf16.mxu0 0
      %1584 = vmatmul.mubr.bf16.gmra.mrb[0].mxu0 %v1131
      %v1585 = vpop.f32.mrb[0].mxu0
      %v1586 = vadd.f32 %v657, %v1585
      %v1587 = vpop.f32.mrb[0].mxu0
      %v1588 = vpop.f32.mrb[0].mxu0
      %v1589 = vadd.f32 %v657, %v1588
      %v1590 = vpop.f32.mrb[0].mxu0
      %1591 = vmatprep.mubr.bf16.mxu0 0
      %1592 = vmatmul.mubr.bf16.gmra.mrb[0].mxu0 %v1134
      %v1593 = vpop.f32.mrb[0].mxu0
      %v1594 = vadd.f32 %v657, %v1593
      %v1595 = vpop.f32.mrb[0].mxu0
      %v1596 = vpop.f32.mrb[0].mxu0
      %v1597 = vadd.f32 %v657, %v1596
      %v1598 = vpop.f32.mrb[0].mxu0
      %1599 = vmatprep.mubr.bf16.mxu0 0
      %1600 = vmatmul.mubr.bf16.gmra.mrb[0].mxu0 %v1137
      %v1601 = vpop.f32.mrb[0].mxu0
      %v1602 = vadd.f32 %v657, %v1601
      %v1603 = vpop.f32.mrb[0].mxu0
      %v1604 = vpop.f32.mrb[0].mxu0
      %v1605 = vadd.f32 %v657, %v1604
      %v1606 = vpop.f32.mrb[0].mxu0
      %1607 = vmatprep.mubr.bf16.mxu0 0
      %1608 = vmatmul.mubr.bf16.gmra.mrb[0].mxu0 %v1140
      %v1609 = vpop.f32.mrb[0].mxu0
      %v1610 = vadd.f32 %v657, %v1609
      %v1611 = vpop.f32.mrb[0].mxu0
      %v1612 = vpop.f32.mrb[0].mxu0
      %v1613 = vadd.f32 %v657, %v1612
      %v1614 = vpop.f32.mrb[0].mxu0
      %1615 = vmatprep.mubr.bf16.mxu0 0
      %1616 = vmatmul.mubr.bf16.gmra.mrb[0].mxu0 %v1143
      %v1617 = vpop.f32.mrb[0].mxu0
      %v1618 = vadd.f32 %v657, %v1617
      %v1619 = vpop.f32.mrb[0].mxu0
      %v1620 = vpop.f32.mrb[0].mxu0
      %v1621 = vadd.f32 %v657, %v1620
      %v1622 = vpop.f32.mrb[0].mxu0
      %1623 = vmatprep.mubr.bf16.mxu0 0
      %1624 = vmatmul.mubr.bf16.gmra.mrb[0].mxu0 %v1146
      %v1625 = vpop.f32.mrb[0].mxu0
      %v1626 = vadd.f32 %v657, %v1625
      %v1627 = vpop.f32.mrb[0].mxu0
      %v1628 = vpop.f32.mrb[0].mxu0
      %v1629 = vadd.f32 %v657, %v1628
      %v1630 = vpop.f32.mrb[0].mxu0
      %1631 = vmatprep.mubr.bf16.mxu0 0
      %1632 = vmatmul.mubr.bf16.gmra.mrb[0].mxu0 %v1149
      %v1633 = vpop.f32.mrb[0].mxu0
      %v1634 = vadd.f32 %v657, %v1633
      %v1635 = vpop.f32.mrb[0].mxu0
      %v1636 = vpop.f32.mrb[0].mxu0
      %v1637 = vadd.f32 %v657, %v1636
      %v1638 = vpop.f32.mrb[0].mxu0
      %1639 = vmatprep.mubr.bf16.mxu0 0
      %1640 = vmatmul.mubr.bf16.gmra.mrb[0].mxu0 %v1152
      %v1641 = vpop.f32.mrb[0].mxu0
      %v1642 = vadd.f32 %v657, %v1641
      %v1643 = vpop.f32.mrb[0].mxu0
      %v1644 = vpop.f32.mrb[0].mxu0
      %v1645 = vadd.f32 %v657, %v1644
      %v1646 = vpop.f32.mrb[0].mxu0
      %1647 = vmatprep.mubr.bf16.mxu0 0
      %1648 = vmatmul.mubr.bf16.gmra.mrb[0].mxu0 %v1155
      %v1649 = vpop.f32.mrb[0].mxu0
      %v1650 = vadd.f32 %v657, %v1649
      %v1651 = vpop.f32.mrb[0].mxu0
      %v1652 = vpop.f32.mrb[0].mxu0
      %v1653 = vadd.f32 %v657, %v1652
      %v1654 = vpop.f32.mrb[0].mxu0
      %1655 = vmatprep.mubr.bf16.mxu0 0
      %1656 = vmatmul.mubr.bf16.gmra.mrb[0].mxu0 %v1158
      %v1657 = vpop.f32.mrb[0].mxu0
      %v1658 = vadd.f32 %v657, %v1657
      %v1659 = vpop.f32.mrb[0].mxu0
      %v1660 = vpop.f32.mrb[0].mxu0
      %v1661 = vadd.f32 %v657, %v1660
      %v1662 = vpop.f32.mrb[0].mxu0
      %1663 = vmatprep.mubr.bf16.mxu0 0
      %1664 = vmatmul.mubr.bf16.gmra.mrb[0].mxu0 %v1161
      %v1665 = vpop.f32.mrb[0].mxu0
      %v1666 = vadd.f32 %v657, %v1665
      %v1667 = vpop.f32.mrb[0].mxu0
      %v1668 = vpop.f32.mrb[0].mxu0
      %v1669 = vadd.f32 %v657, %v1668
      %v1670 = vpop.f32.mrb[0].mxu0
      %1671 = vmatprep.mubr.bf16.mxu0 0
      %1672 = vmatmul.mubr.bf16.gmra.mrb[0].mxu0 %v1164
      %v1673 = vpop.f32.mrb[0].mxu0
      %v1674 = vadd.f32 %v657, %v1673
      %v1675 = vpop.f32.mrb[0].mxu0
      %v1676 = vpop.f32.mrb[0].mxu0
      %v1677 = vadd.f32 %v657, %v1676
      %v1678 = vpop.f32.mrb[0].mxu0
      %1679 = vmatprep.mubr.bf16.mxu0 0
      %1680 = vmatmul.mubr.bf16.gmra.mrb[0].mxu0 %v1167
      %v1681 = vpop.f32.mrb[0].mxu0
      %v1682 = vadd.f32 %v657, %v1681
      %v1683 = vpop.f32.mrb[0].mxu0
      %v1684 = vpop.f32.mrb[0].mxu0
      %v1685 = vadd.f32 %v657, %v1684
      %v1686 = vpop.f32.mrb[0].mxu0
      %1687 = vmatprep.mubr.bf16.mxu0 0
      %1688 = vmatmul.mubr.bf16.gmra.mrb[0].mxu0 %v1170
      %v1689 = vpop.f32.mrb[0].mxu0
      %v1690 = vadd.f32 %v657, %v1689
      %v1691 = vpop.f32.mrb[0].mxu0
      %v1692 = vpop.f32.mrb[0].mxu0
      %v1693 = vadd.f32 %v657, %v1692
      %v1694 = vpop.f32.mrb[0].mxu0
      %1695 = vmatprep.mubr.bf16.mxu0 0
      %1696 = vmatmul.mubr.bf16.gmra.mrb[0].mxu0 %v1173
      %v1697 = vpop.f32.mrb[0].mxu0
      %v1698 = vadd.f32 %v657, %v1697
      %v1699 = vpop.f32.mrb[0].mxu0
      %v1700 = vpop.f32.mrb[0].mxu0
      %v1701 = vadd.f32 %v657, %v1700
      %v1702 = vpop.f32.mrb[0].mxu0
      %1703 = vmatprep.mubr.bf16.mxu0 0
      %1704 = vmatmul.mubr.bf16.gmra.mrb[0].mxu0 %v1176
      %v1705 = vpop.f32.mrb[0].mxu0
      %v1706 = vadd.f32 %v657, %v1705
      %v1707 = vpop.f32.mrb[0].mxu0
      %v1708 = vpop.f32.mrb[0].mxu0
      %v1709 = vadd.f32 %v657, %v1708
      %v1710 = vpop.f32.mrb[0].mxu0
      %1711 = vmatprep.mubr.bf16.mxu0 0
      %1712 = vmatmul.mubr.bf16.gmra.mrb[0].mxu0 %v1179
      %v1713 = vpop.f32.mrb[0].mxu0
      %v1714 = vadd.f32 %v657, %v1713
      %v1715 = vpop.f32.mrb[0].mxu0
      %v1716 = vpop.f32.mrb[0].mxu0
      %v1717 = vadd.f32 %v657, %v1716
      %v1718 = vpop.f32.mrb[0].mxu0
      %1719 = vmatprep.mubr.bf16.mxu0 0
      %1720 = vmatmul.mubr.bf16.gmra.mrb[0].mxu0 %v1182
      %v1721 = vpop.f32.mrb[0].mxu0
      %v1722 = vadd.f32 %v657, %v1721
      %v1723 = vpop.f32.mrb[0].mxu0
      %v1724 = vpop.f32.mrb[0].mxu0
      %v1725 = vadd.f32 %v657, %v1724
      %v1726 = vpop.f32.mrb[0].mxu0
      %1727 = vmatprep.mubr.bf16.mxu0 0
      %1728 = vmatmul.mubr.bf16.gmra.mrb[0].mxu0 %v1185
      %v1729 = vpop.f32.mrb[0].mxu0
      %v1730 = vadd.f32 %v657, %v1729
      %v1731 = vpop.f32.mrb[0].mxu0
      %v1732 = vpop.f32.mrb[0].mxu0
      %v1733 = vadd.f32 %v657, %v1732
      %v1734 = vpop.f32.mrb[0].mxu0
      %1735 = vdwg.mxu0
      %v1736 = vmax.f32 %v1226, 0.0
      %v1737 = vmax.f32 %v1229, 0.0
      %v1738 = vmax.f32 %v1234, 0.0
      %v1739 = vmax.f32 %v1237, 0.0
      %v1740 = vmax.f32 %v1242, 0.0
      %v1741 = vmax.f32 %v1245, 0.0
      %v1742 = vmax.f32 %v1250, 0.0
      %v1743 = vmax.f32 %v1253, 0.0
      %v1744 = vmax.f32 %v1258, 0.0
      %v1745 = vmax.f32 %v1261, 0.0
      %v1746 = vmax.f32 %v1266, 0.0
      %v1747 = vmax.f32 %v1269, 0.0
      %v1748 = vmax.f32 %v1274, 0.0
      %v1749 = vmax.f32 %v1277, 0.0
      %v1750 = vmax.f32 %v1282, 0.0
      %v1751 = vmax.f32 %v1285, 0.0
      %v1752 = vmax.f32 %v1290, 0.0
      %v1753 = vmax.f32 %v1293, 0.0
      %v1754 = vmax.f32 %v1298, 0.0
      %v1755 = vmax.f32 %v1301, 0.0
      %v1756 = vmax.f32 %v1306, 0.0
      %v1757 = vmax.f32 %v1309, 0.0
      %v1758 = vmax.f32 %v1314, 0.0
      %v1759 = vmax.f32 %v1317, 0.0
      %v1760 = vmax.f32 %v1322, 0.0
      %v1761 = vmax.f32 %v1325, 0.0
      %v1762 = vmax.f32 %v1330, 0.0
      %v1763 = vmax.f32 %v1333, 0.0
      %v1764 = vmax.f32 %v1338, 0.0
      %v1765 = vmax.f32 %v1341, 0.0
      %v1766 = vmax.f32 %v1346, 0.0
      %v1767 = vmax.f32 %v1349, 0.0
      %v1768 = vmax.f32 %v1354, 0.0
      %v1769 = vmax.f32 %v1357, 0.0
      %v1770 = vmax.f32 %v1362, 0.0
      %v1771 = vmax.f32 %v1365, 0.0
      %v1772 = vmax.f32 %v1370, 0.0
      %v1773 = vmax.f32 %v1373, 0.0
      %v1774 = vmax.f32 %v1378, 0.0
      %v1775 = vmax.f32 %v1381, 0.0
      %v1776 = vmax.f32 %v1386, 0.0
      %v1777 = vmax.f32 %v1389, 0.0
      %v1778 = vmax.f32 %v1394, 0.0
      %v1779 = vmax.f32 %v1397, 0.0
      %v1780 = vmax.f32 %v1402, 0.0
      %v1781 = vmax.f32 %v1405, 0.0
      %v1782 = vmax.f32 %v1410, 0.0
      %v1783 = vmax.f32 %v1413, 0.0
      %v1784 = vmax.f32 %v1418, 0.0
      %v1785 = vmax.f32 %v1421, 0.0
      %v1786 = vmax.f32 %v1426, 0.0
      %v1787 = vmax.f32 %v1429, 0.0
      %v1788 = vmax.f32 %v1434, 0.0
      %v1789 = vmax.f32 %v1437, 0.0
      %v1790 = vmax.f32 %v1442, 0.0
      %v1791 = vmax.f32 %v1445, 0.0
      %v1792 = vmax.f32 %v1450, 0.0
      %v1793 = vmax.f32 %v1453, 0.0
      %v1794 = vmax.f32 %v1458, 0.0
      %v1795 = vmax.f32 %v1461, 0.0
      %v1796 = vmax.f32 %v1466, 0.0
      %v1797 = vmax.f32 %v1469, 0.0
      %v1798 = vmax.f32 %v1474, 0.0
      %v1799 = vmax.f32 %v1477, 0.0
      %v1800 = vmax.f32 %v1482, 0.0
      %v1801 = vmax.f32 %v1485, 0.0
      %v1802 = vmax.f32 %v1490, 0.0
      %v1803 = vmax.f32 %v1493, 0.0
      %v1804 = vmax.f32 %v1498, 0.0
      %v1805 = vmax.f32 %v1501, 0.0
      %v1806 = vmax.f32 %v1506, 0.0
      %v1807 = vmax.f32 %v1509, 0.0
      %v1808 = vmax.f32 %v1514, 0.0
      %v1809 = vmax.f32 %v1517, 0.0
      %v1810 = vmax.f32 %v1522, 0.0
      %v1811 = vmax.f32 %v1525, 0.0
      %v1812 = vmax.f32 %v1530, 0.0
      %v1813 = vmax.f32 %v1533, 0.0
      %v1814 = vmax.f32 %v1538, 0.0
      %v1815 = vmax.f32 %v1541, 0.0
      %v1816 = vmax.f32 %v1546, 0.0
      %v1817 = vmax.f32 %v1549, 0.0
      %v1818 = vmax.f32 %v1554, 0.0
      %v1819 = vmax.f32 %v1557, 0.0
      %v1820 = vmax.f32 %v1562, 0.0
      %v1821 = vmax.f32 %v1565, 0.0
      %v1822 = vmax.f32 %v1570, 0.0
      %v1823 = vmax.f32 %v1573, 0.0
      %v1824 = vmax.f32 %v1578, 0.0
      %v1825 = vmax.f32 %v1581, 0.0
      %v1826 = vmax.f32 %v1586, 0.0
      %v1827 = vmax.f32 %v1589, 0.0
      %v1828 = vmax.f32 %v1594, 0.0
      %v1829 = vmax.f32 %v1597, 0.0
      %v1830 = vmax.f32 %v1602, 0.0
      %v1831 = vmax.f32 %v1605, 0.0
      %v1832 = vmax.f32 %v1610, 0.0
      %v1833 = vmax.f32 %v1613, 0.0
      %v1834 = vmax.f32 %v1618, 0.0
      %v1835 = vmax.f32 %v1621, 0.0
      %v1836 = vmax.f32 %v1626, 0.0
      %v1837 = vmax.f32 %v1629, 0.0
      %v1838 = vmax.f32 %v1634, 0.0
      %v1839 = vmax.f32 %v1637, 0.0
      %v1840 = vmax.f32 %v1642, 0.0
      %v1841 = vmax.f32 %v1645, 0.0
      %v1842 = vmax.f32 %v1650, 0.0
      %v1843 = vmax.f32 %v1653, 0.0
      %v1844 = vmax.f32 %v1658, 0.0
      %v1845 = vmax.f32 %v1661, 0.0
      %v1846 = vmax.f32 %v1666, 0.0
      %v1847 = vmax.f32 %v1669, 0.0
      %v1848 = vmax.f32 %v1674, 0.0
      %v1849 = vmax.f32 %v1677, 0.0
      %v1850 = vmax.f32 %v1682, 0.0
      %v1851 = vmax.f32 %v1685, 0.0
      %v1852 = vmax.f32 %v1690, 0.0
      %v1853 = vmax.f32 %v1693, 0.0
      %v1854 = vmax.f32 %v1698, 0.0
      %v1855 = vmax.f32 %v1701, 0.0
      %v1856 = vmax.f32 %v1706, 0.0
      %v1857 = vmax.f32 %v1709, 0.0
      %v1858 = vmax.f32 %v1714, 0.0
      %v1859 = vmax.f32 %v1717, 0.0
      %v1860 = vmax.f32 %v1722, 0.0
      %v1861 = vmax.f32 %v1725, 0.0
      %v1862 = vmax.f32 %v1730, 0.0
      %v1863 = vmax.f32 %v1733, 0.0
      %vm1864 = vcmask 261120
      %1865 = vst.msk [vmem:[#allocation6] sm:$0xff] %vm1864, %v1736
      %1866 = vst.msk [vmem:[#allocation6 + $0x8] sm:$0xff] %vm1864, %v1737
      %1867 = vst.msk [vmem:[#allocation6 + $0x10] sm:$0xff] %vm1864, %v1738
      %1868 = vst.msk [vmem:[#allocation6 + $0x18] sm:$0xff] %vm1864, %v1739
      %1869 = vst.msk [vmem:[#allocation6 + $0x20] sm:$0xff] %vm1864, %v1740
      %1870 = vst.msk [vmem:[#allocation6 + $0x28] sm:$0xff] %vm1864, %v1741
      %1871 = vst.msk [vmem:[#allocation6 + $0x30] sm:$0xff] %vm1864, %v1742
      %1872 = vst.msk [vmem:[#allocation6 + $0x38] sm:$0xff] %vm1864, %v1743
      %1873 = vst.msk [vmem:[#allocation6 + $0x40] sm:$0xff] %vm1864, %v1744
      %1874 = vst.msk [vmem:[#allocation6 + $0x48] sm:$0xff] %vm1864, %v1745
      %1875 = vst.msk [vmem:[#allocation6 + $0x50] sm:$0xff] %vm1864, %v1746
      %1876 = vst.msk [vmem:[#allocation6 + $0x58] sm:$0xff] %vm1864, %v1747
      %1877 = vst.msk [vmem:[#allocation6 + $0x60] sm:$0xff] %vm1864, %v1748
      %1878 = vst.msk [vmem:[#allocation6 + $0x68] sm:$0xff] %vm1864, %v1749
      %1879 = vst.msk [vmem:[#allocation6 + $0x70] sm:$0xff] %vm1864, %v1750
      %1880 = vst.msk [vmem:[#allocation6 + $0x78] sm:$0xff] %vm1864, %v1751
      %1881 = vst.msk [vmem:[#allocation6 + $0x80] sm:$0xff] %vm1864, %v1752
      %1882 = vst.msk [vmem:[#allocation6 + $0x88] sm:$0xff] %vm1864, %v1753
      %1883 = vst.msk [vmem:[#allocation6 + $0x90] sm:$0xff] %vm1864, %v1754
      %1884 = vst.msk [vmem:[#allocation6 + $0x98] sm:$0xff] %vm1864, %v1755
      %1885 = vst.msk [vmem:[#allocation6 + $0xa0] sm:$0xff] %vm1864, %v1756
      %1886 = vst.msk [vmem:[#allocation6 + $0xa8] sm:$0xff] %vm1864, %v1757
      %1887 = vst.msk [vmem:[#allocation6 + $0xb0] sm:$0xff] %vm1864, %v1758
      %1888 = vst.msk [vmem:[#allocation6 + $0xb8] sm:$0xff] %vm1864, %v1759
      %1889 = vst.msk [vmem:[#allocation6 + $0xc0] sm:$0xff] %vm1864, %v1760
      %1890 = vst.msk [vmem:[#allocation6 + $0xc8] sm:$0xff] %vm1864, %v1761
      %1891 = vst.msk [vmem:[#allocation6 + $0xd0] sm:$0xff] %vm1864, %v1762
      %1892 = vst.msk [vmem:[#allocation6 + $0xd8] sm:$0xff] %vm1864, %v1763
      %1893 = vst.msk [vmem:[#allocation6 + $0xe0] sm:$0xff] %vm1864, %v1764
      %1894 = vst.msk [vmem:[#allocation6 + $0xe8] sm:$0xff] %vm1864, %v1765
      %1895 = vst.msk [vmem:[#allocation6 + $0xf0] sm:$0xff] %vm1864, %v1766
      %1896 = vst.msk [vmem:[#allocation6 + $0xf8] sm:$0xff] %vm1864, %v1767
      %1897 = vst.msk [vmem:[#allocation6 + $0x100] sm:$0xff] %vm1864, %v1768
      %1898 = vst.msk [vmem:[#allocation6 + $0x108] sm:$0xff] %vm1864, %v1769
      %1899 = vst.msk [vmem:[#allocation6 + $0x110] sm:$0xff] %vm1864, %v1770
      %1900 = vst.msk [vmem:[#allocation6 + $0x118] sm:$0xff] %vm1864, %v1771
      %1901 = vst.msk [vmem:[#allocation6 + $0x120] sm:$0xff] %vm1864, %v1772
      %1902 = vst.msk [vmem:[#allocation6 + $0x128] sm:$0xff] %vm1864, %v1773
      %1903 = vst.msk [vmem:[#allocation6 + $0x130] sm:$0xff] %vm1864, %v1774
      %1904 = vst.msk [vmem:[#allocation6 + $0x138] sm:$0xff] %vm1864, %v1775
      %1905 = vst.msk [vmem:[#allocation6 + $0x140] sm:$0xff] %vm1864, %v1776
      %1906 = vst.msk [vmem:[#allocation6 + $0x148] sm:$0xff] %vm1864, %v1777
      %1907 = vst.msk [vmem:[#allocation6 + $0x150] sm:$0xff] %vm1864, %v1778
      %1908 = vst.msk [vmem:[#allocation6 + $0x158] sm:$0xff] %vm1864, %v1779
      %1909 = vst.msk [vmem:[#allocation6 + $0x160] sm:$0xff] %vm1864, %v1780
      %1910 = vst.msk [vmem:[#allocation6 + $0x168] sm:$0xff] %vm1864, %v1781
      %1911 = vst.msk [vmem:[#allocation6 + $0x170] sm:$0xff] %vm1864, %v1782
      %1912 = vst.msk [vmem:[#allocation6 + $0x178] sm:$0xff] %vm1864, %v1783
      %1913 = vst.msk [vmem:[#allocation6 + $0x180] sm:$0xff] %vm1864, %v1784
      %1914 = vst.msk [vmem:[#allocation6 + $0x188] sm:$0xff] %vm1864, %v1785
      %1915 = vst.msk [vmem:[#allocation6 + $0x190] sm:$0xff] %vm1864, %v1786
      %1916 = vst.msk [vmem:[#allocation6 + $0x198] sm:$0xff] %vm1864, %v1787
      %1917 = vst.msk [vmem:[#allocation6 + $0x1a0] sm:$0xff] %vm1864, %v1788
      %1918 = vst.msk [vmem:[#allocation6 + $0x1a8] sm:$0xff] %vm1864, %v1789
      %1919 = vst.msk [vmem:[#allocation6 + $0x1b0] sm:$0xff] %vm1864, %v1790
      %1920 = vst.msk [vmem:[#allocation6 + $0x1b8] sm:$0xff] %vm1864, %v1791
      %1921 = vst.msk [vmem:[#allocation6 + $0x1c0] sm:$0xff] %vm1864, %v1792
      %1922 = vst.msk [vmem:[#allocation6 + $0x1c8] sm:$0xff] %vm1864, %v1793
      %1923 = vst.msk [vmem:[#allocation6 + $0x1d0] sm:$0xff] %vm1864, %v1794
      %1924 = vst.msk [vmem:[#allocation6 + $0x1d8] sm:$0xff] %vm1864, %v1795
      %1925 = vst.msk [vmem:[#allocation6 + $0x1e0] sm:$0xff] %vm1864, %v1796
      %1926 = vst.msk [vmem:[#allocation6 + $0x1e8] sm:$0xff] %vm1864, %v1797
      %1927 = vst.msk [vmem:[#allocation6 + $0x1f0] sm:$0xff] %vm1864, %v1798
      %1928 = vst.msk [vmem:[#allocation6 + $0x1f8] sm:$0xff] %vm1864, %v1799
      %1929 = vst.msk [vmem:[#allocation6 + $0x200] sm:$0xff] %vm1864, %v1800
      %1930 = vst.msk [vmem:[#allocation6 + $0x208] sm:$0xff] %vm1864, %v1801
      %1931 = vst.msk [vmem:[#allocation6 + $0x210] sm:$0xff] %vm1864, %v1802
      %1932 = vst.msk [vmem:[#allocation6 + $0x218] sm:$0xff] %vm1864, %v1803
      %1933 = vst.msk [vmem:[#allocation6 + $0x220] sm:$0xff] %vm1864, %v1804
      %1934 = vst.msk [vmem:[#allocation6 + $0x228] sm:$0xff] %vm1864, %v1805
      %1935 = vst.msk [vmem:[#allocation6 + $0x230] sm:$0xff] %vm1864, %v1806
      %1936 = vst.msk [vmem:[#allocation6 + $0x238] sm:$0xff] %vm1864, %v1807
      %1937 = vst.msk [vmem:[#allocation6 + $0x240] sm:$0xff] %vm1864, %v1808
      %1938 = vst.msk [vmem:[#allocation6 + $0x248] sm:$0xff] %vm1864, %v1809
      %1939 = vst.msk [vmem:[#allocation6 + $0x250] sm:$0xff] %vm1864, %v1810
      %1940 = vst.msk [vmem:[#allocation6 + $0x258] sm:$0xff] %vm1864, %v1811
      %1941 = vst.msk [vmem:[#allocation6 + $0x260] sm:$0xff] %vm1864, %v1812
      %1942 = vst.msk [vmem:[#allocation6 + $0x268] sm:$0xff] %vm1864, %v1813
      %1943 = vst.msk [vmem:[#allocation6 + $0x270] sm:$0xff] %vm1864, %v1814
      %1944 = vst.msk [vmem:[#allocation6 + $0x278] sm:$0xff] %vm1864, %v1815
      %1945 = vst.msk [vmem:[#allocation6 + $0x280] sm:$0xff] %vm1864, %v1816
      %1946 = vst.msk [vmem:[#allocation6 + $0x288] sm:$0xff] %vm1864, %v1817
      %1947 = vst.msk [vmem:[#allocation6 + $0x290] sm:$0xff] %vm1864, %v1818
      %1948 = vst.msk [vmem:[#allocation6 + $0x298] sm:$0xff] %vm1864, %v1819
      %1949 = vst.msk [vmem:[#allocation6 + $0x2a0] sm:$0xff] %vm1864, %v1820
      %1950 = vst.msk [vmem:[#allocation6 + $0x2a8] sm:$0xff] %vm1864, %v1821
      %1951 = vst.msk [vmem:[#allocation6 + $0x2b0] sm:$0xff] %vm1864, %v1822
      %1952 = vst.msk [vmem:[#allocation6 + $0x2b8] sm:$0xff] %vm1864, %v1823
      %1953 = vst.msk [vmem:[#allocation6 + $0x2c0] sm:$0xff] %vm1864, %v1824
      %1954 = vst.msk [vmem:[#allocation6 + $0x2c8] sm:$0xff] %vm1864, %v1825
      %1955 = vst.msk [vmem:[#allocation6 + $0x2d0] sm:$0xff] %vm1864, %v1826
      %1956 = vst.msk [vmem:[#allocation6 + $0x2d8] sm:$0xff] %vm1864, %v1827
      %1957 = vst.msk [vmem:[#allocation6 + $0x2e0] sm:$0xff] %vm1864, %v1828
      %1958 = vst.msk [vmem:[#allocation6 + $0x2e8] sm:$0xff] %vm1864, %v1829
      %1959 = vst.msk [vmem:[#allocation6 + $0x2f0] sm:$0xff] %vm1864, %v1830
      %1960 = vst.msk [vmem:[#allocation6 + $0x2f8] sm:$0xff] %vm1864, %v1831
      %1961 = vst.msk [vmem:[#allocation6 + $0x300] sm:$0xff] %vm1864, %v1832
      %1962 = vst.msk [vmem:[#allocation6 + $0x308] sm:$0xff] %vm1864, %v1833
      %1963 = vst.msk [vmem:[#allocation6 + $0x310] sm:$0xff] %vm1864, %v1834
      %1964 = vst.msk [vmem:[#allocation6 + $0x318] sm:$0xff] %vm1864, %v1835
      %1965 = vst.msk [vmem:[#allocation6 + $0x320] sm:$0xff] %vm1864, %v1836
      %1966 = vst.msk [vmem:[#allocation6 + $0x328] sm:$0xff] %vm1864, %v1837
      %1967 = vst.msk [vmem:[#allocation6 + $0x330] sm:$0xff] %vm1864, %v1838
      %1968 = vst.msk [vmem:[#allocation6 + $0x338] sm:$0xff] %vm1864, %v1839
      %1969 = vst.msk [vmem:[#allocation6 + $0x340] sm:$0xff] %vm1864, %v1840
      %1970 = vst.msk [vmem:[#allocation6 + $0x348] sm:$0xff] %vm1864, %v1841
      %1971 = vst.msk [vmem:[#allocation6 + $0x350] sm:$0xff] %vm1864, %v1842
      %1972 = vst.msk [vmem:[#allocation6 + $0x358] sm:$0xff] %vm1864, %v1843
      %1973 = vst.msk [vmem:[#allocation6 + $0x360] sm:$0xff] %vm1864, %v1844
      %1974 = vst.msk [vmem:[#allocation6 + $0x368] sm:$0xff] %vm1864, %v1845
      %1975 = vst.msk [vmem:[#allocation6 + $0x370] sm:$0xff] %vm1864, %v1846
      %1976 = vst.msk [vmem:[#allocation6 + $0x378] sm:$0xff] %vm1864, %v1847
      %1977 = vst.msk [vmem:[#allocation6 + $0x380] sm:$0xff] %vm1864, %v1848
      %1978 = vst.msk [vmem:[#allocation6 + $0x388] sm:$0xff] %vm1864, %v1849
      %1979 = vst.msk [vmem:[#allocation6 + $0x390] sm:$0xff] %vm1864, %v1850
      %1980 = vst.msk [vmem:[#allocation6 + $0x398] sm:$0xff] %vm1864, %v1851
      %1981 = vst.msk [vmem:[#allocation6 + $0x3a0] sm:$0xff] %vm1864, %v1852
      %1982 = vst.msk [vmem:[#allocation6 + $0x3a8] sm:$0xff] %vm1864, %v1853
      %1983 = vst.msk [vmem:[#allocation6 + $0x3b0] sm:$0xff] %vm1864, %v1854
      %1984 = vst.msk [vmem:[#allocation6 + $0x3b8] sm:$0xff] %vm1864, %v1855
      %1985 = vst.msk [vmem:[#allocation6 + $0x3c0] sm:$0xff] %vm1864, %v1856
      %1986 = vst.msk [vmem:[#allocation6 + $0x3c8] sm:$0xff] %vm1864, %v1857
      %1987 = vst.msk [vmem:[#allocation6 + $0x3d0] sm:$0xff] %vm1864, %v1858
      %1988 = vst.msk [vmem:[#allocation6 + $0x3d8] sm:$0xff] %vm1864, %v1859
      %1989 = vst.msk [vmem:[#allocation6 + $0x3e0] sm:$0xff] %vm1864, %v1860
      %1990 = vst.msk [vmem:[#allocation6 + $0x3e8] sm:$0xff] %vm1864, %v1861
      %1991 = vst.msk [vmem:[#allocation6 + $0x3f0] sm:$0xff] %vm1864, %v1862
      %1992 = vst.msk [vmem:[#allocation6 + $0x3f8] sm:$0xff] %vm1864, %v1863
      %1993 = vst.msk [vmem:[#allocation2] sm:$0xff] %vm1864, 0.0
      %vm1994 = vcmask 254976
      %1995 = vst.msk [vmem:[#allocation2 + $0x8] sm:$0x3] %vm1994, 0.0
      %1996 = vst.msk [vmem:[#allocation2 + $0xa0] sm:$0xff] %vm1864, 0.0
      %1997 = vst.msk [vmem:[#allocation2 + $0xa8] sm:$0x3] %vm1994, 0.0
      %1998 = vst.msk [vmem:[#allocation2 + $0x140] sm:$0xff] %vm1864, 0.0
      %1999 = vst.msk [vmem:[#allocation2 + $0x148] sm:$0x3] %vm1994, 0.0
      %2000 = vst.msk [vmem:[#allocation2 + $0x1e0] sm:$0xff] %vm1864, 0.0
      %2001 = vst.msk [vmem:[#allocation2 + $0x1e8] sm:$0x3] %vm1994, 0.0
      %s2002 = scalar_lea.vmem [#allocation2], 144
      %2003 = vst.msk [vmem:[%s2002] sm:$0xff] %vm1864, 0.0
      %2004 = vst.msk [vmem:[%s2002 + $0x8] sm:$0x3] %vm1994, 0.0
      %2005 = vst.msk [vmem:[%s2002 + $0xa0] sm:$0xff] %vm1864, 0.0
      %2006 = vst.msk [vmem:[%s2002 + $0xa8] sm:$0x3] %vm1994, 0.0
      %2007 = vst.msk [vmem:[%s2002 + $0x140] sm:$0xff] %vm1864, 0.0
      %2008 = vst.msk [vmem:[%s2002 + $0x148] sm:$0x3] %vm1994, 0.0
      %2009 = vst.msk [vmem:[%s2002 + $0x1e0] sm:$0xff] %vm1864, 0.0
      %2010 = vst.msk [vmem:[%s2002 + $0x1e8] sm:$0x3] %vm1994, 0.0
      %vm2011 = vcmask 253952
      %2012 = vst.msk [vmem:[#allocation2] sm:$0x1] %vm2011, 0.0
      %2013 = vst.msk [vmem:[#allocation2 + $0x10] sm:$0x1] %vm2011, 0.0
      %2014 = vst.msk [vmem:[#allocation2 + $0x20] sm:$0x1] %vm2011, 0.0
      %2015 = vst.msk [vmem:[#allocation2 + $0x30] sm:$0x1] %vm2011, 0.0
      %2016 = vst.msk [vmem:[#allocation2 + $0x40] sm:$0x1] %vm2011, 0.0
      %2017 = vst.msk [vmem:[#allocation2 + $0x50] sm:$0x1] %vm2011, 0.0
      %2018 = vst.msk [vmem:[#allocation2 + $0x60] sm:$0x1] %vm2011, 0.0
      %2019 = vst.msk [vmem:[#allocation2 + $0x70] sm:$0x1] %vm2011, 0.0
      %2020 = vst.msk [vmem:[#allocation2 + $0x80] sm:$0x1] %vm2011, 0.0
      %2021 = vst.msk [vmem:[#allocation2 + $0x90] sm:$0x1] %vm2011, 0.0
      %2022 = vst.msk [vmem:[#allocation2 + $0xa0] sm:$0x1] %vm2011, 0.0
      %2023 = vst.msk [vmem:[#allocation2 + $0xb0] sm:$0x1] %vm2011, 0.0
      %2024 = vst.msk [vmem:[#allocation2 + $0xc0] sm:$0x1] %vm2011, 0.0
      %2025 = vst.msk [vmem:[#allocation2 + $0xd0] sm:$0x1] %vm2011, 0.0
      %2026 = vst.msk [vmem:[#allocation2 + $0xe0] sm:$0x1] %vm2011, 0.0
      %2027 = vst.msk [vmem:[#allocation2 + $0xf0] sm:$0x1] %vm2011, 0.0
      %2028 = vst.msk [vmem:[#allocation2 + $0x100] sm:$0x1] %vm2011, 0.0
      %2029 = vst.msk [vmem:[#allocation2 + $0x110] sm:$0x1] %vm2011, 0.0
      %2030 = vst.msk [vmem:[#allocation2 + $0x120] sm:$0x1] %vm2011, 0.0
      %2031 = vst.msk [vmem:[#allocation2 + $0x130] sm:$0x1] %vm2011, 0.0
      %2032 = vst.msk [vmem:[#allocation2 + $0x140] sm:$0x1] %vm2011, 0.0
      %2033 = vst.msk [vmem:[#allocation2 + $0x150] sm:$0x1] %vm2011, 0.0
      %2034 = vst.msk [vmem:[#allocation2 + $0x160] sm:$0x1] %vm2011, 0.0
      %2035 = vst.msk [vmem:[#allocation2 + $0x170] sm:$0x1] %vm2011, 0.0
      %2036 = vst.msk [vmem:[#allocation2 + $0x180] sm:$0x1] %vm2011, 0.0
      %2037 = vst.msk [vmem:[#allocation2 + $0x190] sm:$0x1] %vm2011, 0.0
      %2038 = vst.msk [vmem:[#allocation2 + $0x1a0] sm:$0x1] %vm2011, 0.0
      %2039 = vst.msk [vmem:[#allocation2 + $0x1b0] sm:$0x1] %vm2011, 0.0
      %2040 = vst.msk [vmem:[#allocation2 + $0x1c0] sm:$0x1] %vm2011, 0.0
      %2041 = vst.msk [vmem:[#allocation2 + $0x1d0] sm:$0x1] %vm2011, 0.0
      %2042 = vst.msk [vmem:[#allocation2 + $0x1e0] sm:$0x1] %vm2011, 0.0
      %2043 = vst.msk [vmem:[#allocation2 + $0x1f0] sm:$0x1] %vm2011, 0.0
      %2044 = vst.msk [vmem:[#allocation2 + $0x200] sm:$0x1] %vm2011, 0.0
      %2045 = vst.msk [vmem:[#allocation2 + $0x210] sm:$0x1] %vm2011, 0.0
      %2046 = vst.msk [vmem:[#allocation2 + $0x220] sm:$0x1] %vm2011, 0.0
      %2047 = vst.msk [vmem:[#allocation2 + $0x230] sm:$0x1] %vm2011, 0.0
      %2048 = vst.msk [vmem:[#allocation2 + $0x240] sm:$0x1] %vm2011, 0.0
      %2049 = vst.msk [vmem:[#allocation2 + $0x250] sm:$0x1] %vm2011, 0.0
      %2050 = vst.msk [vmem:[#allocation2 + $0x260] sm:$0x1] %vm2011, 0.0
      %2051 = vst.msk [vmem:[#allocation2 + $0x270] sm:$0x1] %vm2011, 0.0
      %2052 = vst.msk [vmem:[#allocation2 + $0x9] sm:$0x1] %vm2011, 0.0
      %2053 = vst.msk [vmem:[#allocation2 + $0x19] sm:$0x1] %vm2011, 0.0
      %2054 = vst.msk [vmem:[#allocation2 + $0x29] sm:$0x1] %vm2011, 0.0
      %2055 = vst.msk [vmem:[#allocation2 + $0x39] sm:$0x1] %vm2011, 0.0
      %2056 = vst.msk [vmem:[#allocation2 + $0x49] sm:$0x1] %vm2011, 0.0
      %2057 = vst.msk [vmem:[#allocation2 + $0x59] sm:$0x1] %vm2011, 0.0
      %2058 = vst.msk [vmem:[#allocation2 + $0x69] sm:$0x1] %vm2011, 0.0
      %2059 = vst.msk [vmem:[#allocation2 + $0x79] sm:$0x1] %vm2011, 0.0
      %2060 = vst.msk [vmem:[#allocation2 + $0x89] sm:$0x1] %vm2011, 0.0
      %2061 = vst.msk [vmem:[#allocation2 + $0x99] sm:$0x1] %vm2011, 0.0
      %2062 = vst.msk [vmem:[#allocation2 + $0xa9] sm:$0x1] %vm2011, 0.0
      %2063 = vst.msk [vmem:[#allocation2 + $0xb9] sm:$0x1] %vm2011, 0.0
      %2064 = vst.msk [vmem:[#allocation2 + $0xc9] sm:$0x1] %vm2011, 0.0
      %2065 = vst.msk [vmem:[#allocation2 + $0xd9] sm:$0x1] %vm2011, 0.0
      %2066 = vst.msk [vmem:[#allocation2 + $0xe9] sm:$0x1] %vm2011, 0.0
      %2067 = vst.msk [vmem:[#allocation2 + $0xf9] sm:$0x1] %vm2011, 0.0
      %2068 = vst.msk [vmem:[#allocation2 + $0x109] sm:$0x1] %vm2011, 0.0
      %2069 = vst.msk [vmem:[#allocation2 + $0x119] sm:$0x1] %vm2011, 0.0
      %2070 = vst.msk [vmem:[#allocation2 + $0x129] sm:$0x1] %vm2011, 0.0
      %2071 = vst.msk [vmem:[#allocation2 + $0x139] sm:$0x1] %vm2011, 0.0
      %2072 = vst.msk [vmem:[#allocation2 + $0x149] sm:$0x1] %vm2011, 0.0
      %2073 = vst.msk [vmem:[#allocation2 + $0x159] sm:$0x1] %vm2011, 0.0
      %2074 = vst.msk [vmem:[#allocation2 + $0x169] sm:$0x1] %vm2011, 0.0
      %2075 = vst.msk [vmem:[#allocation2 + $0x179] sm:$0x1] %vm2011, 0.0
      %2076 = vst.msk [vmem:[#allocation2 + $0x189] sm:$0x1] %vm2011, 0.0
      %2077 = vst.msk [vmem:[#allocation2 + $0x199] sm:$0x1] %vm2011, 0.0
      %2078 = vst.msk [vmem:[#allocation2 + $0x1a9] sm:$0x1] %vm2011, 0.0
      %2079 = vst.msk [vmem:[#allocation2 + $0x1b9] sm:$0x1] %vm2011, 0.0
      %2080 = vst.msk [vmem:[#allocation2 + $0x1c9] sm:$0x1] %vm2011, 0.0
      %2081 = vst.msk [vmem:[#allocation2 + $0x1d9] sm:$0x1] %vm2011, 0.0
      %2082 = vst.msk [vmem:[#allocation2 + $0x1e9] sm:$0x1] %vm2011, 0.0
      %2083 = vst.msk [vmem:[#allocation2 + $0x1f9] sm:$0x1] %vm2011, 0.0
      %2084 = vst.msk [vmem:[#allocation2 + $0x209] sm:$0x1] %vm2011, 0.0
      %2085 = vst.msk [vmem:[#allocation2 + $0x219] sm:$0x1] %vm2011, 0.0
      %2086 = vst.msk [vmem:[#allocation2 + $0x229] sm:$0x1] %vm2011, 0.0
      %2087 = vst.msk [vmem:[#allocation2 + $0x239] sm:$0x1] %vm2011, 0.0
      %2088 = vst.msk [vmem:[#allocation2 + $0x249] sm:$0x1] %vm2011, 0.0
      %2089 = vst.msk [vmem:[#allocation2 + $0x259] sm:$0x1] %vm2011, 0.0
      %2090 = vst.msk [vmem:[#allocation2 + $0x269] sm:$0x1] %vm2011, 0.0
      %2091 = vst.msk [vmem:[#allocation2 + $0x279] sm:$0x1] %vm2011, 0.0
      %v2092 = vld [vmem:[#allocation6] ss:$2 sm:$0xff]
      %s2093 = scalar_lea.vmem [#allocation6], 256
      %v2094 = vld [vmem:[%s2093] ss:$2 sm:$0xff]
      %s2095 = scalar_lea.vmem [#allocation6], 512
      %v2096 = vld [vmem:[%s2095] ss:$2 sm:$0xff]
      %s2097 = scalar_lea.vmem [#allocation6], 768
      %v2098 = vld [vmem:[%s2097] ss:$2 sm:$0xff]
      %s2099 = scalar_lea.vmem [#allocation6], 1
      %v2100 = vld [vmem:[%s2099] ss:$2 sm:$0xff]
      %s2101 = scalar_lea.vmem [#allocation6], 257
      %v2102 = vld [vmem:[%s2101] ss:$2 sm:$0xff]
      %s2103 = scalar_lea.vmem [#allocation6], 513
      %v2104 = vld [vmem:[%s2103] ss:$2 sm:$0xff]
      %s2105 = scalar_lea.vmem [#allocation6], 769
      %v2106 = vld [vmem:[%s2105] ss:$2 sm:$0xff]
      %v2107 = vmax.f32 %v2092, %v2100
      %v2108 = vmax.f32 %v2094, %v2102
      %v2109 = vmax.f32 %v2096, %v2104
      %v2110 = vmax.f32 %v2098, %v2106
      %s2111 = scalar_lea.vmem [#allocation6], 16
      %v2112 = vld [vmem:[%s2111] ss:$2 sm:$0xff]
      %s2113 = scalar_lea.vmem [#allocation6], 272
      %v2114 = vld [vmem:[%s2113] ss:$2 sm:$0xff]
      %s2115 = scalar_lea.vmem [#allocation6], 528
      %v2116 = vld [vmem:[%s2115] ss:$2 sm:$0xff]
      %s2117 = scalar_lea.vmem [#allocation6], 784
      %v2118 = vld [vmem:[%s2117] ss:$2 sm:$0xff]
      %s2119 = scalar_lea.vmem [#allocation6], 17
      %v2120 = vld [vmem:[%s2119] ss:$2 sm:$0xff]
      %s2121 = scalar_lea.vmem [#allocation6], 273
      %v2122 = vld [vmem:[%s2121] ss:$2 sm:$0xff]
      %s2123 = scalar_lea.vmem [#allocation6], 529
      %v2124 = vld [vmem:[%s2123] ss:$2 sm:$0xff]
      %s2125 = scalar_lea.vmem [#allocation6], 785
      %v2126 = vld [vmem:[%s2125] ss:$2 sm:$0xff]
      %v2127 = vmax.f32 %v2112, %v2120
      %v2128 = vmax.f32 %v2114, %v2122
      %v2129 = vmax.f32 %v2116, %v2124
      %v2130 = vmax.f32 %v2118, %v2126
      %v2131 = vmax.f32 %v2107, %v2127
      %v2132 = vmax.f32 %v2108, %v2128
      %v2133 = vmax.f32 %v2109, %v2129
      %v2134 = vmax.f32 %v2110, %v2130
      %s2135 = scalar_lea.vmem [#allocation2], 16
      %2136 = vst.msk [vmem:[%s2135 + $0x1] sm:$0xff] %vm1864, %v2131
      %2137 = vst.msk [vmem:[%s2135 + $0xa1] sm:$0xff] %vm1864, %v2132
      %2138 = vst.msk [vmem:[%s2135 + $0x141] sm:$0xff] %vm1864, %v2133
      %2139 = vst.msk [vmem:[%s2135 + $0x1e1] sm:$0xff] %vm1864, %v2134
      %s2140 = scalar_lea.vmem [#allocation6], 32
      %v2141 = vld [vmem:[%s2140] ss:$2 sm:$0xff]
      %s2142 = scalar_lea.vmem [#allocation6], 288
      %v2143 = vld [vmem:[%s2142] ss:$2 sm:$0xff]
      %s2144 = scalar_lea.vmem [#allocation6], 544
      %v2145 = vld [vmem:[%s2144] ss:$2 sm:$0xff]
      %s2146 = scalar_lea.vmem [#allocation6], 800
      %v2147 = vld [vmem:[%s2146] ss:$2 sm:$0xff]
      %s2148 = scalar_lea.vmem [#allocation6], 33
      %v2149 = vld [vmem:[%s2148] ss:$2 sm:$0xff]
      %s2150 = scalar_lea.vmem [#allocation6], 289
      %v2151 = vld [vmem:[%s2150] ss:$2 sm:$0xff]
      %s2152 = scalar_lea.vmem [#allocation6], 545
      %v2153 = vld [vmem:[%s2152] ss:$2 sm:$0xff]
      %s2154 = scalar_lea.vmem [#allocation6], 801
      %v2155 = vld [vmem:[%s2154] ss:$2 sm:$0xff]
      %v2156 = vmax.f32 %v2141, %v2149
      %v2157 = vmax.f32 %v2143, %v2151
      %v2158 = vmax.f32 %v2145, %v2153
      %v2159 = vmax.f32 %v2147, %v2155
      %s2160 = scalar_lea.vmem [#allocation6], 48
      %v2161 = vld [vmem:[%s2160] ss:$2 sm:$0xff]
      %s2162 = scalar_lea.vmem [#allocation6], 304
      %v2163 = vld [vmem:[%s2162] ss:$2 sm:$0xff]
      %s2164 = scalar_lea.vmem [#allocation6], 560
      %v2165 = vld [vmem:[%s2164] ss:$2 sm:$0xff]
      %s2166 = scalar_lea.vmem [#allocation6], 816
      %v2167 = vld [vmem:[%s2166] ss:$2 sm:$0xff]
      %s2168 = scalar_lea.vmem [#allocation6], 49
      %v2169 = vld [vmem:[%s2168] ss:$2 sm:$0xff]
      %s2170 = scalar_lea.vmem [#allocation6], 305
      %v2171 = vld [vmem:[%s2170] ss:$2 sm:$0xff]
      %s2172 = scalar_lea.vmem [#allocation6], 561
      %v2173 = vld [vmem:[%s2172] ss:$2 sm:$0xff]
      %s2174 = scalar_lea.vmem [#allocation6], 817
      %v2175 = vld [vmem:[%s2174] ss:$2 sm:$0xff]
      %v2176 = vmax.f32 %v2161, %v2169
      %v2177 = vmax.f32 %v2163, %v2171
      %v2178 = vmax.f32 %v2165, %v2173
      %v2179 = vmax.f32 %v2167, %v2175
      %v2180 = vmax.f32 %v2156, %v2176
      %v2181 = vmax.f32 %v2157, %v2177
      %v2182 = vmax.f32 %v2158, %v2178
      %v2183 = vmax.f32 %v2159, %v2179
      %s2184 = scalar_lea.vmem [#allocation2], 32
      %2185 = vst.msk [vmem:[%s2184 + $0x1] sm:$0xff] %vm1864, %v2180
      %2186 = vst.msk [vmem:[%s2184 + $0xa1] sm:$0xff] %vm1864, %v2181
      %2187 = vst.msk [vmem:[%s2184 + $0x141] sm:$0xff] %vm1864, %v2182
      %2188 = vst.msk [vmem:[%s2184 + $0x1e1] sm:$0xff] %vm1864, %v2183
      %s2189 = scalar_lea.vmem [#allocation6], 64
      %v2190 = vld [vmem:[%s2189] ss:$2 sm:$0xff]
      %s2191 = scalar_lea.vmem [#allocation6], 320
      %v2192 = vld [vmem:[%s2191] ss:$2 sm:$0xff]
      %s2193 = scalar_lea.vmem [#allocation6], 576
      %v2194 = vld [vmem:[%s2193] ss:$2 sm:$0xff]
      %s2195 = scalar_lea.vmem [#allocation6], 832
      %v2196 = vld [vmem:[%s2195] ss:$2 sm:$0xff]
      %s2197 = scalar_lea.vmem [#allocation6], 65
      %v2198 = vld [vmem:[%s2197] ss:$2 sm:$0xff]
      %s2199 = scalar_lea.vmem [#allocation6], 321
      %v2200 = vld [vmem:[%s2199] ss:$2 sm:$0xff]
      %s2201 = scalar_lea.vmem [#allocation6], 577
      %v2202 = vld [vmem:[%s2201] ss:$2 sm:$0xff]
      %s2203 = scalar_lea.vmem [#allocation6], 833
      %v2204 = vld [vmem:[%s2203] ss:$2 sm:$0xff]
      %v2205 = vmax.f32 %v2190, %v2198
      %v2206 = vmax.f32 %v2192, %v2200
      %v2207 = vmax.f32 %v2194, %v2202
      %v2208 = vmax.f32 %v2196, %v2204
      %s2209 = scalar_lea.vmem [#allocation6], 80
      %v2210 = vld [vmem:[%s2209] ss:$2 sm:$0xff]
      %s2211 = scalar_lea.vmem [#allocation6], 336
      %v2212 = vld [vmem:[%s2211] ss:$2 sm:$0xff]
      %s2213 = scalar_lea.vmem [#allocation6], 592
      %v2214 = vld [vmem:[%s2213] ss:$2 sm:$0xff]
      %s2215 = scalar_lea.vmem [#allocation6], 848
      %v2216 = vld [vmem:[%s2215] ss:$2 sm:$0xff]
      %s2217 = scalar_lea.vmem [#allocation6], 81
      %v2218 = vld [vmem:[%s2217] ss:$2 sm:$0xff]
      %s2219 = scalar_lea.vmem [#allocation6], 337
      %v2220 = vld [vmem:[%s2219] ss:$2 sm:$0xff]
      %s2221 = scalar_lea.vmem [#allocation6], 593
      %v2222 = vld [vmem:[%s2221] ss:$2 sm:$0xff]
      %s2223 = scalar_lea.vmem [#allocation6], 849
      %v2224 = vld [vmem:[%s2223] ss:$2 sm:$0xff]
      %v2225 = vmax.f32 %v2210, %v2218
      %v2226 = vmax.f32 %v2212, %v2220
      %v2227 = vmax.f32 %v2214, %v2222
      %v2228 = vmax.f32 %v2216, %v2224
      %v2229 = vmax.f32 %v2205, %v2225
      %v2230 = vmax.f32 %v2206, %v2226
      %v2231 = vmax.f32 %v2207, %v2227
      %v2232 = vmax.f32 %v2208, %v2228
      %s2233 = scalar_lea.vmem [#allocation2], 48
      %2234 = vst.msk [vmem:[%s2233 + $0x1] sm:$0xff] %vm1864, %v2229
      %2235 = vst.msk [vmem:[%s2233 + $0xa1] sm:$0xff] %vm1864, %v2230
      %2236 = vst.msk [vmem:[%s2233 + $0x141] sm:$0xff] %vm1864, %v2231
      %2237 = vst.msk [vmem:[%s2233 + $0x1e1] sm:$0xff] %vm1864, %v2232
      %s2238 = scalar_lea.vmem [#allocation6], 96
      %v2239 = vld [vmem:[%s2238] ss:$2 sm:$0xff]
      %s2240 = scalar_lea.vmem [#allocation6], 352
      %v2241 = vld [vmem:[%s2240] ss:$2 sm:$0xff]
      %s2242 = scalar_lea.vmem [#allocation6], 608
      %v2243 = vld [vmem:[%s2242] ss:$2 sm:$0xff]
      %s2244 = scalar_lea.vmem [#allocation6], 864
      %v2245 = vld [vmem:[%s2244] ss:$2 sm:$0xff]
      %s2246 = scalar_lea.vmem [#allocation6], 97
      %v2247 = vld [vmem:[%s2246] ss:$2 sm:$0xff]
      %s2248 = scalar_lea.vmem [#allocation6], 353
      %v2249 = vld [vmem:[%s2248] ss:$2 sm:$0xff]
      %s2250 = scalar_lea.vmem [#allocation6], 609
      %v2251 = vld [vmem:[%s2250] ss:$2 sm:$0xff]
      %s2252 = scalar_lea.vmem [#allocation6], 865
      %v2253 = vld [vmem:[%s2252] ss:$2 sm:$0xff]
      %v2254 = vmax.f32 %v2239, %v2247
      %v2255 = vmax.f32 %v2241, %v2249
      %v2256 = vmax.f32 %v2243, %v2251
      %v2257 = vmax.f32 %v2245, %v2253
      %s2258 = scalar_lea.vmem [#allocation6], 112
      %v2259 = vld [vmem:[%s2258] ss:$2 sm:$0xff]
      %s2260 = scalar_lea.vmem [#allocation6], 368
      %v2261 = vld [vmem:[%s2260] ss:$2 sm:$0xff]
      %s2262 = scalar_lea.vmem [#allocation6], 624
      %v2263 = vld [vmem:[%s2262] ss:$2 sm:$0xff]
      %s2264 = scalar_lea.vmem [#allocation6], 880
      %v2265 = vld [vmem:[%s2264] ss:$2 sm:$0xff]
      %s2266 = scalar_lea.vmem [#allocation6], 113
      %v2267 = vld [vmem:[%s2266] ss:$2 sm:$0xff]
      %s2268 = scalar_lea.vmem [#allocation6], 369
      %v2269 = vld [vmem:[%s2268] ss:$2 sm:$0xff]
      %s2270 = scalar_lea.vmem [#allocation6], 625
      %v2271 = vld [vmem:[%s2270] ss:$2 sm:$0xff]
      %s2272 = scalar_lea.vmem [#allocation6], 881
      %v2273 = vld [vmem:[%s2272] ss:$2 sm:$0xff]
      %v2274 = vmax.f32 %v2259, %v2267
      %v2275 = vmax.f32 %v2261, %v2269
      %v2276 = vmax.f32 %v2263, %v2271
      %v2277 = vmax.f32 %v2265, %v2273
      %v2278 = vmax.f32 %v2254, %v2274
      %v2279 = vmax.f32 %v2255, %v2275
      %v2280 = vmax.f32 %v2256, %v2276
      %v2281 = vmax.f32 %v2257, %v2277
      %s2282 = scalar_lea.vmem [#allocation2], 64
      %2283 = vst.msk [vmem:[%s2282 + $0x1] sm:$0xff] %vm1864, %v2278
      %2284 = vst.msk [vmem:[%s2282 + $0xa1] sm:$0xff] %vm1864, %v2279
      %2285 = vst.msk [vmem:[%s2282 + $0x141] sm:$0xff] %vm1864, %v2280
      %2286 = vst.msk [vmem:[%s2282 + $0x1e1] sm:$0xff] %vm1864, %v2281
      %s2287 = scalar_lea.vmem [#allocation6], 128
      %v2288 = vld [vmem:[%s2287] ss:$2 sm:$0xff]
      %s2289 = scalar_lea.vmem [#allocation6], 384
      %v2290 = vld [vmem:[%s2289] ss:$2 sm:$0xff]
      %s2291 = scalar_lea.vmem [#allocation6], 640
      %v2292 = vld [vmem:[%s2291] ss:$2 sm:$0xff]
      %s2293 = scalar_lea.vmem [#allocation6], 896
      %v2294 = vld [vmem:[%s2293] ss:$2 sm:$0xff]
      %s2295 = scalar_lea.vmem [#allocation6], 129
      %v2296 = vld [vmem:[%s2295] ss:$2 sm:$0xff]
      %s2297 = scalar_lea.vmem [#allocation6], 385
      %v2298 = vld [vmem:[%s2297] ss:$2 sm:$0xff]
      %s2299 = scalar_lea.vmem [#allocation6], 641
      %v2300 = vld [vmem:[%s2299] ss:$2 sm:$0xff]
      %s2301 = scalar_lea.vmem [#allocation6], 897
      %v2302 = vld [vmem:[%s2301] ss:$2 sm:$0xff]
      %v2303 = vmax.f32 %v2288, %v2296
      %v2304 = vmax.f32 %v2290, %v2298
      %v2305 = vmax.f32 %v2292, %v2300
      %v2306 = vmax.f32 %v2294, %v2302
      %s2307 = scalar_lea.vmem [#allocation6], 144
      %v2308 = vld [vmem:[%s2307] ss:$2 sm:$0xff]
      %s2309 = scalar_lea.vmem [#allocation6], 400
      %v2310 = vld [vmem:[%s2309] ss:$2 sm:$0xff]
      %s2311 = scalar_lea.vmem [#allocation6], 656
      %v2312 = vld [vmem:[%s2311] ss:$2 sm:$0xff]
      %s2313 = scalar_lea.vmem [#allocation6], 912
      %v2314 = vld [vmem:[%s2313] ss:$2 sm:$0xff]
      %s2315 = scalar_lea.vmem [#allocation6], 145
      %v2316 = vld [vmem:[%s2315] ss:$2 sm:$0xff]
      %s2317 = scalar_lea.vmem [#allocation6], 401
      %v2318 = vld [vmem:[%s2317] ss:$2 sm:$0xff]
      %s2319 = scalar_lea.vmem [#allocation6], 657
      %v2320 = vld [vmem:[%s2319] ss:$2 sm:$0xff]
      %s2321 = scalar_lea.vmem [#allocation6], 913
      %v2322 = vld [vmem:[%s2321] ss:$2 sm:$0xff]
      %v2323 = vmax.f32 %v2308, %v2316
      %v2324 = vmax.f32 %v2310, %v2318
      %v2325 = vmax.f32 %v2312, %v2320
      %v2326 = vmax.f32 %v2314, %v2322
      %v2327 = vmax.f32 %v2303, %v2323
      %v2328 = vmax.f32 %v2304, %v2324
      %v2329 = vmax.f32 %v2305, %v2325
      %v2330 = vmax.f32 %v2306, %v2326
      %s2331 = scalar_lea.vmem [#allocation2], 80
      %2332 = vst.msk [vmem:[%s2331 + $0x1] sm:$0xff] %vm1864, %v2327
      %2333 = vst.msk [vmem:[%s2331 + $0xa1] sm:$0xff] %vm1864, %v2328
      %2334 = vst.msk [vmem:[%s2331 + $0x141] sm:$0xff] %vm1864, %v2329
      %2335 = vst.msk [vmem:[%s2331 + $0x1e1] sm:$0xff] %vm1864, %v2330
      %s2336 = scalar_lea.vmem [#allocation6], 160
      %v2337 = vld [vmem:[%s2336] ss:$2 sm:$0xff]
      %s2338 = scalar_lea.vmem [#allocation6], 416
      %v2339 = vld [vmem:[%s2338] ss:$2 sm:$0xff]
      %s2340 = scalar_lea.vmem [#allocation6], 672
      %v2341 = vld [vmem:[%s2340] ss:$2 sm:$0xff]
      %s2342 = scalar_lea.vmem [#allocation6], 928
      %v2343 = vld [vmem:[%s2342] ss:$2 sm:$0xff]
      %s2344 = scalar_lea.vmem [#allocation6], 161
      %v2345 = vld [vmem:[%s2344] ss:$2 sm:$0xff]
      %s2346 = scalar_lea.vmem [#allocation6], 417
      %v2347 = vld [vmem:[%s2346] ss:$2 sm:$0xff]
      %s2348 = scalar_lea.vmem [#allocation6], 673
      %v2349 = vld [vmem:[%s2348] ss:$2 sm:$0xff]
      %s2350 = scalar_lea.vmem [#allocation6], 929
      %v2351 = vld [vmem:[%s2350] ss:$2 sm:$0xff]
      %v2352 = vmax.f32 %v2337, %v2345
      %v2353 = vmax.f32 %v2339, %v2347
      %v2354 = vmax.f32 %v2341, %v2349
      %v2355 = vmax.f32 %v2343, %v2351
      %s2356 = scalar_lea.vmem [#allocation6], 176
      %v2357 = vld [vmem:[%s2356] ss:$2 sm:$0xff]
      %s2358 = scalar_lea.vmem [#allocation6], 432
      %v2359 = vld [vmem:[%s2358] ss:$2 sm:$0xff]
      %s2360 = scalar_lea.vmem [#allocation6], 688
      %v2361 = vld [vmem:[%s2360] ss:$2 sm:$0xff]
      %s2362 = scalar_lea.vmem [#allocation6], 944
      %v2363 = vld [vmem:[%s2362] ss:$2 sm:$0xff]
      %s2364 = scalar_lea.vmem [#allocation6], 177
      %v2365 = vld [vmem:[%s2364] ss:$2 sm:$0xff]
      %s2366 = scalar_lea.vmem [#allocation6], 433
      %v2367 = vld [vmem:[%s2366] ss:$2 sm:$0xff]
      %s2368 = scalar_lea.vmem [#allocation6], 689
      %v2369 = vld [vmem:[%s2368] ss:$2 sm:$0xff]
      %s2370 = scalar_lea.vmem [#allocation6], 945
      %v2371 = vld [vmem:[%s2370] ss:$2 sm:$0xff]
      %v2372 = vmax.f32 %v2357, %v2365
      %v2373 = vmax.f32 %v2359, %v2367
      %v2374 = vmax.f32 %v2361, %v2369
      %v2375 = vmax.f32 %v2363, %v2371
      %v2376 = vmax.f32 %v2352, %v2372
      %v2377 = vmax.f32 %v2353, %v2373
      %v2378 = vmax.f32 %v2354, %v2374
      %v2379 = vmax.f32 %v2355, %v2375
      %s2380 = scalar_lea.vmem [#allocation2], 96
      %2381 = vst.msk [vmem:[%s2380 + $0x1] sm:$0xff] %vm1864, %v2376
      %2382 = vst.msk [vmem:[%s2380 + $0xa1] sm:$0xff] %vm1864, %v2377
      %2383 = vst.msk [vmem:[%s2380 + $0x141] sm:$0xff] %vm1864, %v2378
      %2384 = vst.msk [vmem:[%s2380 + $0x1e1] sm:$0xff] %vm1864, %v2379
      %s2385 = scalar_lea.vmem [#allocation6], 192
      %v2386 = vld [vmem:[%s2385] ss:$2 sm:$0xff]
      %s2387 = scalar_lea.vmem [#allocation6], 448
      %v2388 = vld [vmem:[%s2387] ss:$2 sm:$0xff]
      %s2389 = scalar_lea.vmem [#allocation6], 704
      %v2390 = vld [vmem:[%s2389] ss:$2 sm:$0xff]
      %s2391 = scalar_lea.vmem [#allocation6], 960
      %v2392 = vld [vmem:[%s2391] ss:$2 sm:$0xff]
      %s2393 = scalar_lea.vmem [#allocation6], 193
      %v2394 = vld [vmem:[%s2393] ss:$2 sm:$0xff]
      %s2395 = scalar_lea.vmem [#allocation6], 449
      %v2396 = vld [vmem:[%s2395] ss:$2 sm:$0xff]
      %s2397 = scalar_lea.vmem [#allocation6], 705
      %v2398 = vld [vmem:[%s2397] ss:$2 sm:$0xff]
      %s2399 = scalar_lea.vmem [#allocation6], 961
      %v2400 = vld [vmem:[%s2399] ss:$2 sm:$0xff]
      %v2401 = vmax.f32 %v2386, %v2394
      %v2402 = vmax.f32 %v2388, %v2396
      %v2403 = vmax.f32 %v2390, %v2398
      %v2404 = vmax.f32 %v2392, %v2400
      %s2405 = scalar_lea.vmem [#allocation6], 208
      %v2406 = vld [vmem:[%s2405] ss:$2 sm:$0xff]
      %s2407 = scalar_lea.vmem [#allocation6], 464
      %v2408 = vld [vmem:[%s2407] ss:$2 sm:$0xff]
      %s2409 = scalar_lea.vmem [#allocation6], 720
      %v2410 = vld [vmem:[%s2409] ss:$2 sm:$0xff]
      %s2411 = scalar_lea.vmem [#allocation6], 976
      %v2412 = vld [vmem:[%s2411] ss:$2 sm:$0xff]
      %s2413 = scalar_lea.vmem [#allocation6], 209
      %v2414 = vld [vmem:[%s2413] ss:$2 sm:$0xff]
      %s2415 = scalar_lea.vmem [#allocation6], 465
      %v2416 = vld [vmem:[%s2415] ss:$2 sm:$0xff]
      %s2417 = scalar_lea.vmem [#allocation6], 721
      %v2418 = vld [vmem:[%s2417] ss:$2 sm:$0xff]
      %s2419 = scalar_lea.vmem [#allocation6], 977
      %v2420 = vld [vmem:[%s2419] ss:$2 sm:$0xff]
      %v2421 = vmax.f32 %v2406, %v2414
      %v2422 = vmax.f32 %v2408, %v2416
      %v2423 = vmax.f32 %v2410, %v2418
      %v2424 = vmax.f32 %v2412, %v2420
      %v2425 = vmax.f32 %v2401, %v2421
      %v2426 = vmax.f32 %v2402, %v2422
      %v2427 = vmax.f32 %v2403, %v2423
      %v2428 = vmax.f32 %v2404, %v2424
      %s2429 = scalar_lea.vmem [#allocation2], 112
      %2430 = vst.msk [vmem:[%s2429 + $0x1] sm:$0xff] %vm1864, %v2425
      %2431 = vst.msk [vmem:[%s2429 + $0xa1] sm:$0xff] %vm1864, %v2426
      %2432 = vst.msk [vmem:[%s2429 + $0x141] sm:$0xff] %vm1864, %v2427
      %2433 = vst.msk [vmem:[%s2429 + $0x1e1] sm:$0xff] %vm1864, %v2428
      %s2434 = scalar_lea.vmem [#allocation6], 224
      %v2435 = vld [vmem:[%s2434] ss:$2 sm:$0xff]
      %s2436 = scalar_lea.vmem [#allocation6], 480
      %v2437 = vld [vmem:[%s2436] ss:$2 sm:$0xff]
      %s2438 = scalar_lea.vmem [#allocation6], 736
      %v2439 = vld [vmem:[%s2438] ss:$2 sm:$0xff]
      %s2440 = scalar_lea.vmem [#allocation6], 992
      %v2441 = vld [vmem:[%s2440] ss:$2 sm:$0xff]
      %s2442 = scalar_lea.vmem [#allocation6], 225
      %v2443 = vld [vmem:[%s2442] ss:$2 sm:$0xff]
      %s2444 = scalar_lea.vmem [#allocation6], 481
      %v2445 = vld [vmem:[%s2444] ss:$2 sm:$0xff]
      %s2446 = scalar_lea.vmem [#allocation6], 737
      %v2447 = vld [vmem:[%s2446] ss:$2 sm:$0xff]
      %s2448 = scalar_lea.vmem [#allocation6], 993
      %v2449 = vld [vmem:[%s2448] ss:$2 sm:$0xff]
      %v2450 = vmax.f32 %v2435, %v2443
      %v2451 = vmax.f32 %v2437, %v2445
      %v2452 = vmax.f32 %v2439, %v2447
      %v2453 = vmax.f32 %v2441, %v2449
      %s2454 = scalar_lea.vmem [#allocation6], 240
      %v2455 = vld [vmem:[%s2454] ss:$2 sm:$0xff]
      %s2456 = scalar_lea.vmem [#allocation6], 496
      %v2457 = vld [vmem:[%s2456] ss:$2 sm:$0xff]
      %s2458 = scalar_lea.vmem [#allocation6], 752
      %v2459 = vld [vmem:[%s2458] ss:$2 sm:$0xff]
      %s2460 = scalar_lea.vmem [#allocation6], 1008
      %v2461 = vld [vmem:[%s2460] ss:$2 sm:$0xff]
      %s2462 = scalar_lea.vmem [#allocation6], 241
      %v2463 = vld [vmem:[%s2462] ss:$2 sm:$0xff]
      %s2464 = scalar_lea.vmem [#allocation6], 497
      %v2465 = vld [vmem:[%s2464] ss:$2 sm:$0xff]
      %s2466 = scalar_lea.vmem [#allocation6], 753
      %v2467 = vld [vmem:[%s2466] ss:$2 sm:$0xff]
      %s2468 = scalar_lea.vmem [#allocation6], 1009
      %v2469 = vld [vmem:[%s2468] ss:$2 sm:$0xff]
      %v2470 = vmax.f32 %v2455, %v2463
      %v2471 = vmax.f32 %v2457, %v2465
      %v2472 = vmax.f32 %v2459, %v2467
      %v2473 = vmax.f32 %v2461, %v2469
      %v2474 = vmax.f32 %v2450, %v2470
      %v2475 = vmax.f32 %v2451, %v2471
      %v2476 = vmax.f32 %v2452, %v2472
      %v2477 = vmax.f32 %v2453, %v2473
      %s2478 = scalar_lea.vmem [#allocation2], 128
      %2479 = vst.msk [vmem:[%s2478 + $0x1] sm:$0xff] %vm1864, %v2474
      %2480 = vst.msk [vmem:[%s2478 + $0xa1] sm:$0xff] %vm1864, %v2475
      %2481 = vst.msk [vmem:[%s2478 + $0x141] sm:$0xff] %vm1864, %v2476
      %2482 = vst.msk [vmem:[%s2478 + $0x1e1] sm:$0xff] %vm1864, %v2477
      %v2483 = vld [vmem:[#allocation2] sm:$0xff]
      %v2484 = vld [vmem:[#allocation2 + $0x10] sm:$0xff]
      %v2485 = vld [vmem:[#allocation2 + $0x20] sm:$0xff]
      %v2486 = vld [vmem:[#allocation2 + $0x30] sm:$0xff]
      %v2487 = vld [vmem:[#allocation2 + $0x40] sm:$0xff]
      %v2488 = vld [vmem:[#allocation2 + $0x50] sm:$0xff]
      %v2489 = vld [vmem:[#allocation2 + $0x60] sm:$0xff]
      %v2490 = vld [vmem:[#allocation2 + $0x70] sm:$0xff]
      %v2491 = vld [vmem:[#allocation2 + $0xa0] sm:$0xff]
      %v2492 = vld [vmem:[#allocation2 + $0xb0] sm:$0xff]
      %v2493 = vld [vmem:[#allocation2 + $0xc0] sm:$0xff]
      %v2494 = vld [vmem:[#allocation2 + $0xd0] sm:$0xff]
      %v2495 = vld [vmem:[#allocation2 + $0xe0] sm:$0xff]
      %v2496 = vld [vmem:[#allocation2 + $0xf0] sm:$0xff]
      %v2497 = vld [vmem:[#allocation2 + $0x100] sm:$0xff]
      %v2498 = vld [vmem:[#allocation2 + $0x110] sm:$0xff]
      %v2499 = vld [vmem:[#allocation2 + $0x140] sm:$0xff]
      %v2500 = vld [vmem:[#allocation2 + $0x150] sm:$0xff]
      %v2501 = vld [vmem:[#allocation2 + $0x160] sm:$0xff]
      %v2502 = vld [vmem:[#allocation2 + $0x170] sm:$0xff]
      %v2503 = vld [vmem:[#allocation2 + $0x180] sm:$0xff]
      %v2504 = vld [vmem:[#allocation2 + $0x190] sm:$0xff]
      %v2505 = vld [vmem:[#allocation2 + $0x1a0] sm:$0xff]
      %v2506 = vld [vmem:[#allocation2 + $0x1b0] sm:$0xff]
      %v2507 = vld [vmem:[#allocation2 + $0x1e0] sm:$0xff]
      %v2508 = vld [vmem:[#allocation2 + $0x1f0] sm:$0xff]
      %v2509 = vld [vmem:[#allocation2 + $0x200] sm:$0xff]
      %v2510 = vld [vmem:[#allocation2 + $0x210] sm:$0xff]
      %v2511 = vld [vmem:[#allocation2 + $0x220] sm:$0xff]
      %v2512 = vld [vmem:[#allocation2 + $0x230] sm:$0xff]
      %v2513 = vld [vmem:[#allocation2 + $0x240] sm:$0xff]
      %v2514 = vld [vmem:[#allocation2 + $0x250] sm:$0xff]
      %v2515 = vpack.c.bf16 %v2484, %v2483
      %v2516 = vpack.c.bf16 %v2486, %v2485
      %v2517 = vpack.c.bf16 %v2488, %v2487
      %v2518 = vpack.c.bf16 %v2490, %v2489
      %v2519 = vpack.c.bf16 %v2492, %v2491
      %v2520 = vpack.c.bf16 %v2494, %v2493
      %v2521 = vpack.c.bf16 %v2496, %v2495
      %v2522 = vpack.c.bf16 %v2498, %v2497
      %v2523 = vpack.c.bf16 %v2500, %v2499
      %v2524 = vpack.c.bf16 %v2502, %v2501
      %v2525 = vpack.c.bf16 %v2504, %v2503
      %v2526 = vpack.c.bf16 %v2506, %v2505
      %v2527 = vpack.c.bf16 %v2508, %v2507
      %v2528 = vpack.c.bf16 %v2510, %v2509
      %v2529 = vpack.c.bf16 %v2512, %v2511
      %v2530 = vpack.c.bf16 %v2514, %v2513
      %2531 = vst.msk [vmem:[#allocation4] sm:$0xff] %vm1864, %v2515
      %2532 = vst.msk [vmem:[#allocation4 + $0x18] sm:$0xff] %vm1864, %v2516
      %2533 = vst.msk [vmem:[#allocation4 + $0x30] sm:$0xff] %vm1864, %v2517
      %2534 = vst.msk [vmem:[#allocation4 + $0x48] sm:$0xff] %vm1864, %v2518
      %2535 = vst.msk [vmem:[#allocation4 + $0x60] sm:$0xff] %vm1864, %v2519
      %2536 = vst.msk [vmem:[#allocation4 + $0x78] sm:$0xff] %vm1864, %v2520
      %2537 = vst.msk [vmem:[#allocation4 + $0x90] sm:$0xff] %vm1864, %v2521
      %2538 = vst.msk [vmem:[#allocation4 + $0xa8] sm:$0xff] %vm1864, %v2522
      %2539 = vst.msk [vmem:[#allocation4 + $0xc0] sm:$0xff] %vm1864, %v2523
      %2540 = vst.msk [vmem:[#allocation4 + $0xd8] sm:$0xff] %vm1864, %v2524
      %2541 = vst.msk [vmem:[#allocation4 + $0xf0] sm:$0xff] %vm1864, %v2525
      %2542 = vst.msk [vmem:[#allocation4 + $0x108] sm:$0xff] %vm1864, %v2526
      %2543 = vst.msk [vmem:[#allocation4 + $0x120] sm:$0xff] %vm1864, %v2527
      %2544 = vst.msk [vmem:[#allocation4 + $0x138] sm:$0xff] %vm1864, %v2528
      %2545 = vst.msk [vmem:[#allocation4 + $0x150] sm:$0xff] %vm1864, %v2529
      %2546 = vst.msk [vmem:[#allocation4 + $0x168] sm:$0xff] %vm1864, %v2530
      %v2547 = vld [vmem:[#allocation2 + $0x1] sm:$0xff]
      %v2548 = vld [vmem:[#allocation2 + $0x11] sm:$0xff]
      %v2549 = vld [vmem:[#allocation2 + $0x21] sm:$0xff]
      %v2550 = vld [vmem:[#allocation2 + $0x31] sm:$0xff]
      %v2551 = vld [vmem:[#allocation2 + $0x41] sm:$0xff]
      %v2552 = vld [vmem:[#allocation2 + $0x51] sm:$0xff]
      %v2553 = vld [vmem:[#allocation2 + $0x61] sm:$0xff]
      %v2554 = vld [vmem:[#allocation2 + $0x71] sm:$0xff]
      %v2555 = vld [vmem:[#allocation2 + $0xa1] sm:$0xff]
      %v2556 = vld [vmem:[#allocation2 + $0xb1] sm:$0xff]
      %v2557 = vld [vmem:[#allocation2 + $0xc1] sm:$0xff]
      %v2558 = vld [vmem:[#allocation2 + $0xd1] sm:$0xff]
      %v2559 = vld [vmem:[#allocation2 + $0xe1] sm:$0xff]
      %v2560 = vld [vmem:[#allocation2 + $0xf1] sm:$0xff]
      %v2561 = vld [vmem:[#allocation2 + $0x101] sm:$0xff]
      %v2562 = vld [vmem:[#allocation2 + $0x111] sm:$0xff]
      %v2563 = vld [vmem:[#allocation2 + $0x141] sm:$0xff]
      %v2564 = vld [vmem:[#allocation2 + $0x151] sm:$0xff]
      %v2565 = vld [vmem:[#allocation2 + $0x161] sm:$0xff]
      %v2566 = vld [vmem:[#allocation2 + $0x171] sm:$0xff]
      %v2567 = vld [vmem:[#allocation2 + $0x181] sm:$0xff]
      %v2568 = vld [vmem:[#allocation2 + $0x191] sm:$0xff]
      %v2569 = vld [vmem:[#allocation2 + $0x1a1] sm:$0xff]
      %v2570 = vld [vmem:[#allocation2 + $0x1b1] sm:$0xff]
      %v2571 = vld [vmem:[#allocation2 + $0x1e1] sm:$0xff]
      %v2572 = vld [vmem:[#allocation2 + $0x1f1] sm:$0xff]
      %v2573 = vld [vmem:[#allocation2 + $0x201] sm:$0xff]
      %v2574 = vld [vmem:[#allocation2 + $0x211] sm:$0xff]
      %v2575 = vld [vmem:[#allocation2 + $0x221] sm:$0xff]
      %v2576 = vld [vmem:[#allocation2 + $0x231] sm:$0xff]
      %v2577 = vld [vmem:[#allocation2 + $0x241] sm:$0xff]
      %v2578 = vld [vmem:[#allocation2 + $0x251] sm:$0xff]
      %v2579 = vpack.c.bf16 %v2548, %v2547
      %v2580 = vpack.c.bf16 %v2550, %v2549
      %v2581 = vpack.c.bf16 %v2552, %v2551
      %v2582 = vpack.c.bf16 %v2554, %v2553
      %v2583 = vpack.c.bf16 %v2556, %v2555
      %v2584 = vpack.c.bf16 %v2558, %v2557
      %v2585 = vpack.c.bf16 %v2560, %v2559
      %v2586 = vpack.c.bf16 %v2562, %v2561
      %v2587 = vpack.c.bf16 %v2564, %v2563
      %v2588 = vpack.c.bf16 %v2566, %v2565
      %v2589 = vpack.c.bf16 %v2568, %v2567
      %v2590 = vpack.c.bf16 %v2570, %v2569
      %v2591 = vpack.c.bf16 %v2572, %v2571
      %v2592 = vpack.c.bf16 %v2574, %v2573
      %v2593 = vpack.c.bf16 %v2576, %v2575
      %v2594 = vpack.c.bf16 %v2578, %v2577
      %2611 = vrot.lane.b32.xlu0 %v2579, 32
      %v2612 = vpop.permute.xlu0 %2611
      %2613 = vrot.lane.b32.xlu0 %v2580, 32
      %v2614 = vpop.permute.xlu0 %2613
      %2615 = vrot.lane.b32.xlu0 %v2581, 32
      %v2616 = vpop.permute.xlu0 %2615
      %2617 = vrot.lane.b32.xlu0 %v2582, 32
      %v2618 = vpop.permute.xlu0 %2617
      %2619 = vrot.lane.b32.xlu0 %v2583, 32
      %v2620 = vpop.permute.xlu0 %2619
      %2621 = vrot.lane.b32.xlu0 %v2584, 32
      %v2622 = vpop.permute.xlu0 %2621
      %2623 = vrot.lane.b32.xlu0 %v2585, 32
      %v2624 = vpop.permute.xlu0 %2623
      %2625 = vrot.lane.b32.xlu0 %v2586, 32
      %v2626 = vpop.permute.xlu0 %2625
      %2627 = vrot.lane.b32.xlu0 %v2587, 32
      %v2628 = vpop.permute.xlu0 %2627
      %2629 = vrot.lane.b32.xlu0 %v2588, 32
      %v2630 = vpop.permute.xlu0 %2629
      %2631 = vrot.lane.b32.xlu0 %v2589, 32
      %v2632 = vpop.permute.xlu0 %2631
      %2633 = vrot.lane.b32.xlu0 %v2590, 32
      %v2634 = vpop.permute.xlu0 %2633
      %2635 = vrot.lane.b32.xlu0 %v2591, 32
      %v2636 = vpop.permute.xlu0 %2635
      %2637 = vrot.lane.b32.xlu0 %v2592, 32
      %v2638 = vpop.permute.xlu0 %2637
      %2639 = vrot.lane.b32.xlu0 %v2593, 32
      %v2640 = vpop.permute.xlu0 %2639
      %2641 = vrot.lane.b32.xlu0 %v2594, 32
      %v2642 = vpop.permute.xlu0 %2641
      %vm2659 = vcmask 523520
      %2660 = vst.msk [vmem:[#allocation4] sm:$0xff] %vm2659, %v2612
      %2661 = vst.msk [vmem:[#allocation4 + $0x18] sm:$0xff] %vm2659, %v2614
      %2662 = vst.msk [vmem:[#allocation4 + $0x30] sm:$0xff] %vm2659, %v2616
      %2663 = vst.msk [vmem:[#allocation4 + $0x48] sm:$0xff] %vm2659, %v2618
      %2664 = vst.msk [vmem:[#allocation4 + $0x60] sm:$0xff] %vm2659, %v2620
      %2665 = vst.msk [vmem:[#allocation4 + $0x78] sm:$0xff] %vm2659, %v2622
      %2666 = vst.msk [vmem:[#allocation4 + $0x90] sm:$0xff] %vm2659, %v2624
      %2667 = vst.msk [vmem:[#allocation4 + $0xa8] sm:$0xff] %vm2659, %v2626
      %2668 = vst.msk [vmem:[#allocation4 + $0xc0] sm:$0xff] %vm2659, %v2628
      %2669 = vst.msk [vmem:[#allocation4 + $0xd8] sm:$0xff] %vm2659, %v2630
      %2670 = vst.msk [vmem:[#allocation4 + $0xf0] sm:$0xff] %vm2659, %v2632
      %2671 = vst.msk [vmem:[#allocation4 + $0x108] sm:$0xff] %vm2659, %v2634
      %2672 = vst.msk [vmem:[#allocation4 + $0x120] sm:$0xff] %vm2659, %v2636
      %2673 = vst.msk [vmem:[#allocation4 + $0x138] sm:$0xff] %vm2659, %v2638
      %2674 = vst.msk [vmem:[#allocation4 + $0x150] sm:$0xff] %vm2659, %v2640
      %2675 = vst.msk [vmem:[#allocation4 + $0x168] sm:$0xff] %vm2659, %v2642
      %v2676 = vld [vmem:[#allocation2 + $0x2] sm:$0xff]
      %v2677 = vld [vmem:[#allocation2 + $0x12] sm:$0xff]
      %v2678 = vld [vmem:[#allocation2 + $0x22] sm:$0xff]
      %v2679 = vld [vmem:[#allocation2 + $0x32] sm:$0xff]
      %v2680 = vld [vmem:[#allocation2 + $0x42] sm:$0xff]
      %v2681 = vld [vmem:[#allocation2 + $0x52] sm:$0xff]
      %v2682 = vld [vmem:[#allocation2 + $0x62] sm:$0xff]
      %v2683 = vld [vmem:[#allocation2 + $0x72] sm:$0xff]
      %v2684 = vld [vmem:[#allocation2 + $0xa2] sm:$0xff]
      %v2685 = vld [vmem:[#allocation2 + $0xb2] sm:$0xff]
      %v2686 = vld [vmem:[#allocation2 + $0xc2] sm:$0xff]
      %v2687 = vld [vmem:[#allocation2 + $0xd2] sm:$0xff]
      %v2688 = vld [vmem:[#allocation2 + $0xe2] sm:$0xff]
      %v2689 = vld [vmem:[#allocation2 + $0xf2] sm:$0xff]
      %v2690 = vld [vmem:[#allocation2 + $0x102] sm:$0xff]
      %v2691 = vld [vmem:[#allocation2 + $0x112] sm:$0xff]
      %v2692 = vld [vmem:[#allocation2 + $0x142] sm:$0xff]
      %v2693 = vld [vmem:[#allocation2 + $0x152] sm:$0xff]
      %v2694 = vld [vmem:[#allocation2 + $0x162] sm:$0xff]
      %v2695 = vld [vmem:[#allocation2 + $0x172] sm:$0xff]
      %v2696 = vld [vmem:[#allocation2 + $0x182] sm:$0xff]
      %v2697 = vld [vmem:[#allocation2 + $0x192] sm:$0xff]
      %v2698 = vld [vmem:[#allocation2 + $0x1a2] sm:$0xff]
      %v2699 = vld [vmem:[#allocation2 + $0x1b2] sm:$0xff]
      %v2700 = vld [vmem:[#allocation2 + $0x1e2] sm:$0xff]
      %v2701 = vld [vmem:[#allocation2 + $0x1f2] sm:$0xff]
      %v2702 = vld [vmem:[#allocation2 + $0x202] sm:$0xff]
      %v2703 = vld [vmem:[#allocation2 + $0x212] sm:$0xff]
      %v2704 = vld [vmem:[#allocation2 + $0x222] sm:$0xff]
      %v2705 = vld [vmem:[#allocation2 + $0x232] sm:$0xff]
      %v2706 = vld [vmem:[#allocation2 + $0x242] sm:$0xff]
      %v2707 = vld [vmem:[#allocation2 + $0x252] sm:$0xff]
      %v2708 = vpack.c.bf16 %v2677, %v2676
      %v2709 = vpack.c.bf16 %v2679, %v2678
      %v2710 = vpack.c.bf16 %v2681, %v2680
      %v2711 = vpack.c.bf16 %v2683, %v2682
      %v2712 = vpack.c.bf16 %v2685, %v2684
      %v2713 = vpack.c.bf16 %v2687, %v2686
      %v2714 = vpack.c.bf16 %v2689, %v2688
      %v2715 = vpack.c.bf16 %v2691, %v2690
      %v2716 = vpack.c.bf16 %v2693, %v2692
      %v2717 = vpack.c.bf16 %v2695, %v2694
      %v2718 = vpack.c.bf16 %v2697, %v2696
      %v2719 = vpack.c.bf16 %v2699, %v2698
      %v2720 = vpack.c.bf16 %v2701, %v2700
      %v2721 = vpack.c.bf16 %v2703, %v2702
      %v2722 = vpack.c.bf16 %v2705, %v2704
      %v2723 = vpack.c.bf16 %v2707, %v2706
      %2740 = vrot.lane.b32.xlu0 %v2708, 64
      %v2741 = vpop.permute.xlu0 %2740
      %2742 = vrot.lane.b32.xlu0 %v2709, 64
      %v2743 = vpop.permute.xlu0 %2742
      %2744 = vrot.lane.b32.xlu0 %v2710, 64
      %v2745 = vpop.permute.xlu0 %2744
      %2746 = vrot.lane.b32.xlu0 %v2711, 64
      %v2747 = vpop.permute.xlu0 %2746
      %2748 = vrot.lane.b32.xlu0 %v2712, 64
      %v2749 = vpop.permute.xlu0 %2748
      %2750 = vrot.lane.b32.xlu0 %v2713, 64
      %v2751 = vpop.permute.xlu0 %2750
      %2752 = vrot.lane.b32.xlu0 %v2714, 64
      %v2753 = vpop.permute.xlu0 %2752
      %2754 = vrot.lane.b32.xlu0 %v2715, 64
      %v2755 = vpop.permute.xlu0 %2754
      %2756 = vrot.lane.b32.xlu0 %v2716, 64
      %v2757 = vpop.permute.xlu0 %2756
      %2758 = vrot.lane.b32.xlu0 %v2717, 64
      %v2759 = vpop.permute.xlu0 %2758
      %2760 = vrot.lane.b32.xlu0 %v2718, 64
      %v2761 = vpop.permute.xlu0 %2760
      %2762 = vrot.lane.b32.xlu0 %v2719, 64
      %v2763 = vpop.permute.xlu0 %2762
      %2764 = vrot.lane.b32.xlu0 %v2720, 64
      %v2765 = vpop.permute.xlu0 %2764
      %2766 = vrot.lane.b32.xlu0 %v2721, 64
      %v2767 = vpop.permute.xlu0 %2766
      %2768 = vrot.lane.b32.xlu0 %v2722, 64
      %v2769 = vpop.permute.xlu0 %2768
      %2770 = vrot.lane.b32.xlu0 %v2723, 64
      %v2771 = vpop.permute.xlu0 %2770
      %vm2788 = vcmask 785920
      %2789 = vst.msk [vmem:[#allocation4] sm:$0xff] %vm2788, %v2741
      %2790 = vst.msk [vmem:[#allocation4 + $0x18] sm:$0xff] %vm2788, %v2743
      %2791 = vst.msk [vmem:[#allocation4 + $0x30] sm:$0xff] %vm2788, %v2745
      %2792 = vst.msk [vmem:[#allocation4 + $0x48] sm:$0xff] %vm2788, %v2747
      %2793 = vst.msk [vmem:[#allocation4 + $0x60] sm:$0xff] %vm2788, %v2749
      %2794 = vst.msk [vmem:[#allocation4 + $0x78] sm:$0xff] %vm2788, %v2751
      %2795 = vst.msk [vmem:[#allocation4 + $0x90] sm:$0xff] %vm2788, %v2753
      %2796 = vst.msk [vmem:[#allocation4 + $0xa8] sm:$0xff] %vm2788, %v2755
      %2797 = vst.msk [vmem:[#allocation4 + $0xc0] sm:$0xff] %vm2788, %v2757
      %2798 = vst.msk [vmem:[#allocation4 + $0xd8] sm:$0xff] %vm2788, %v2759
      %2799 = vst.msk [vmem:[#allocation4 + $0xf0] sm:$0xff] %vm2788, %v2761
      %2800 = vst.msk [vmem:[#allocation4 + $0x108] sm:$0xff] %vm2788, %v2763
      %2801 = vst.msk [vmem:[#allocation4 + $0x120] sm:$0xff] %vm2788, %v2765
      %2802 = vst.msk [vmem:[#allocation4 + $0x138] sm:$0xff] %vm2788, %v2767
      %2803 = vst.msk [vmem:[#allocation4 + $0x150] sm:$0xff] %vm2788, %v2769
      %2804 = vst.msk [vmem:[#allocation4 + $0x168] sm:$0xff] %vm2788, %v2771
      %v2805 = vld [vmem:[%s2135] sm:$0xff]
      %v2806 = vld [vmem:[%s2135 + $0x10] sm:$0xff]
      %v2807 = vld [vmem:[%s2135 + $0x20] sm:$0xff]
      %v2808 = vld [vmem:[%s2135 + $0x30] sm:$0xff]
      %v2809 = vld [vmem:[%s2135 + $0x40] sm:$0xff]
      %v2810 = vld [vmem:[%s2135 + $0x50] sm:$0xff]
      %v2811 = vld [vmem:[%s2135 + $0x60] sm:$0xff]
      %v2812 = vld [vmem:[%s2135 + $0x70] sm:$0xff]
      %v2813 = vld [vmem:[%s2135 + $0xa0] sm:$0xff]
      %v2814 = vld [vmem:[%s2135 + $0xb0] sm:$0xff]
      %v2815 = vld [vmem:[%s2135 + $0xc0] sm:$0xff]
      %v2816 = vld [vmem:[%s2135 + $0xd0] sm:$0xff]
      %v2817 = vld [vmem:[%s2135 + $0xe0] sm:$0xff]
      %v2818 = vld [vmem:[%s2135 + $0xf0] sm:$0xff]
      %v2819 = vld [vmem:[%s2135 + $0x100] sm:$0xff]
      %v2820 = vld [vmem:[%s2135 + $0x110] sm:$0xff]
      %v2821 = vld [vmem:[%s2135 + $0x140] sm:$0xff]
      %v2822 = vld [vmem:[%s2135 + $0x150] sm:$0xff]
      %v2823 = vld [vmem:[%s2135 + $0x160] sm:$0xff]
      %v2824 = vld [vmem:[%s2135 + $0x170] sm:$0xff]
      %v2825 = vld [vmem:[%s2135 + $0x180] sm:$0xff]
      %v2826 = vld [vmem:[%s2135 + $0x190] sm:$0xff]
      %v2827 = vld [vmem:[%s2135 + $0x1a0] sm:$0xff]
      %v2828 = vld [vmem:[%s2135 + $0x1b0] sm:$0xff]
      %v2829 = vld [vmem:[%s2135 + $0x1e0] sm:$0xff]
      %v2830 = vld [vmem:[%s2135 + $0x1f0] sm:$0xff]
      %v2831 = vld [vmem:[%s2135 + $0x200] sm:$0xff]
      %v2832 = vld [vmem:[%s2135 + $0x210] sm:$0xff]
      %v2833 = vld [vmem:[%s2135 + $0x220] sm:$0xff]
      %v2834 = vld [vmem:[%s2135 + $0x230] sm:$0xff]
      %v2835 = vld [vmem:[%s2135 + $0x240] sm:$0xff]
      %v2836 = vld [vmem:[%s2135 + $0x250] sm:$0xff]
      %v2837 = vpack.c.bf16 %v2806, %v2805
      %v2838 = vpack.c.bf16 %v2808, %v2807
      %v2839 = vpack.c.bf16 %v2810, %v2809
      %v2840 = vpack.c.bf16 %v2812, %v2811
      %v2841 = vpack.c.bf16 %v2814, %v2813
      %v2842 = vpack.c.bf16 %v2816, %v2815
      %v2843 = vpack.c.bf16 %v2818, %v2817
      %v2844 = vpack.c.bf16 %v2820, %v2819
      %v2845 = vpack.c.bf16 %v2822, %v2821
      %v2846 = vpack.c.bf16 %v2824, %v2823
      %v2847 = vpack.c.bf16 %v2826, %v2825
      %v2848 = vpack.c.bf16 %v2828, %v2827
      %v2849 = vpack.c.bf16 %v2830, %v2829
      %v2850 = vpack.c.bf16 %v2832, %v2831
      %v2851 = vpack.c.bf16 %v2834, %v2833
      %v2852 = vpack.c.bf16 %v2836, %v2835
      %2869 = vrot.lane.b32.xlu0 %v2837, 96
      %v2870 = vpop.permute.xlu0 %2869
      %2871 = vrot.lane.b32.xlu0 %v2838, 96
      %v2872 = vpop.permute.xlu0 %2871
      %2873 = vrot.lane.b32.xlu0 %v2839, 96
      %v2874 = vpop.permute.xlu0 %2873
      %2875 = vrot.lane.b32.xlu0 %v2840, 96
      %v2876 = vpop.permute.xlu0 %2875
      %2877 = vrot.lane.b32.xlu0 %v2841, 96
      %v2878 = vpop.permute.xlu0 %2877
      %2879 = vrot.lane.b32.xlu0 %v2842, 96
      %v2880 = vpop.permute.xlu0 %2879
      %2881 = vrot.lane.b32.xlu0 %v2843, 96
      %v2882 = vpop.permute.xlu0 %2881
      %2883 = vrot.lane.b32.xlu0 %v2844, 96
      %v2884 = vpop.permute.xlu0 %2883
      %2885 = vrot.lane.b32.xlu0 %v2845, 96
      %v2886 = vpop.permute.xlu0 %2885
      %2887 = vrot.lane.b32.xlu0 %v2846, 96
      %v2888 = vpop.permute.xlu0 %2887
      %2889 = vrot.lane.b32.xlu0 %v2847, 96
      %v2890 = vpop.permute.xlu0 %2889
      %2891 = vrot.lane.b32.xlu0 %v2848, 96
      %v2892 = vpop.permute.xlu0 %2891
      %2893 = vrot.lane.b32.xlu0 %v2849, 96
      %v2894 = vpop.permute.xlu0 %2893
      %2895 = vrot.lane.b32.xlu0 %v2850, 96
      %v2896 = vpop.permute.xlu0 %2895
      %2897 = vrot.lane.b32.xlu0 %v2851, 96
      %v2898 = vpop.permute.xlu0 %2897
      %2899 = vrot.lane.b32.xlu0 %v2852, 96
      %v2900 = vpop.permute.xlu0 %2899
      %vm2917 = vcmask 1048320
      %2918 = vst.msk [vmem:[#allocation4] sm:$0xff] %vm2917, %v2870
      %2919 = vst.msk [vmem:[#allocation4 + $0x18] sm:$0xff] %vm2917, %v2872
      %2920 = vst.msk [vmem:[#allocation4 + $0x30] sm:$0xff] %vm2917, %v2874
      %2921 = vst.msk [vmem:[#allocation4 + $0x48] sm:$0xff] %vm2917, %v2876
      %2922 = vst.msk [vmem:[#allocation4 + $0x60] sm:$0xff] %vm2917, %v2878
      %2923 = vst.msk [vmem:[#allocation4 + $0x78] sm:$0xff] %vm2917, %v2880
      %2924 = vst.msk [vmem:[#allocation4 + $0x90] sm:$0xff] %vm2917, %v2882
      %2925 = vst.msk [vmem:[#allocation4 + $0xa8] sm:$0xff] %vm2917, %v2884
      %2926 = vst.msk [vmem:[#allocation4 + $0xc0] sm:$0xff] %vm2917, %v2886
      %2927 = vst.msk [vmem:[#allocation4 + $0xd8] sm:$0xff] %vm2917, %v2888
      %2928 = vst.msk [vmem:[#allocation4 + $0xf0] sm:$0xff] %vm2917, %v2890
      %2929 = vst.msk [vmem:[#allocation4 + $0x108] sm:$0xff] %vm2917, %v2892
      %2930 = vst.msk [vmem:[#allocation4 + $0x120] sm:$0xff] %vm2917, %v2894
      %2931 = vst.msk [vmem:[#allocation4 + $0x138] sm:$0xff] %vm2917, %v2896
      %2932 = vst.msk [vmem:[#allocation4 + $0x150] sm:$0xff] %vm2917, %v2898
      %2933 = vst.msk [vmem:[#allocation4 + $0x168] sm:$0xff] %vm2917, %v2900
      %v2934 = vld [vmem:[%s2135 + $0x1] sm:$0xff]
      %v2935 = vld [vmem:[%s2135 + $0x11] sm:$0xff]
      %v2936 = vld [vmem:[%s2135 + $0x21] sm:$0xff]
      %v2937 = vld [vmem:[%s2135 + $0x31] sm:$0xff]
      %v2938 = vld [vmem:[%s2135 + $0x41] sm:$0xff]
      %v2939 = vld [vmem:[%s2135 + $0x51] sm:$0xff]
      %v2940 = vld [vmem:[%s2135 + $0x61] sm:$0xff]
      %v2941 = vld [vmem:[%s2135 + $0x71] sm:$0xff]
      %v2942 = vld [vmem:[%s2135 + $0xa1] sm:$0xff]
      %v2943 = vld [vmem:[%s2135 + $0xb1] sm:$0xff]
      %v2944 = vld [vmem:[%s2135 + $0xc1] sm:$0xff]
      %v2945 = vld [vmem:[%s2135 + $0xd1] sm:$0xff]
      %v2946 = vld [vmem:[%s2135 + $0xe1] sm:$0xff]
      %v2947 = vld [vmem:[%s2135 + $0xf1] sm:$0xff]
      %v2948 = vld [vmem:[%s2135 + $0x101] sm:$0xff]
      %v2949 = vld [vmem:[%s2135 + $0x111] sm:$0xff]
      %v2950 = vld [vmem:[%s2135 + $0x141] sm:$0xff]
      %v2951 = vld [vmem:[%s2135 + $0x151] sm:$0xff]
      %v2952 = vld [vmem:[%s2135 + $0x161] sm:$0xff]
      %v2953 = vld [vmem:[%s2135 + $0x171] sm:$0xff]
      %v2954 = vld [vmem:[%s2135 + $0x181] sm:$0xff]
      %v2955 = vld [vmem:[%s2135 + $0x191] sm:$0xff]
      %v2956 = vld [vmem:[%s2135 + $0x1a1] sm:$0xff]
      %v2957 = vld [vmem:[%s2135 + $0x1b1] sm:$0xff]
      %v2958 = vld [vmem:[%s2135 + $0x1e1] sm:$0xff]
      %v2959 = vld [vmem:[%s2135 + $0x1f1] sm:$0xff]
      %v2960 = vld [vmem:[%s2135 + $0x201] sm:$0xff]
      %v2961 = vld [vmem:[%s2135 + $0x211] sm:$0xff]
      %v2962 = vld [vmem:[%s2135 + $0x221] sm:$0xff]
      %v2963 = vld [vmem:[%s2135 + $0x231] sm:$0xff]
      %v2964 = vld [vmem:[%s2135 + $0x241] sm:$0xff]
      %v2965 = vld [vmem:[%s2135 + $0x251] sm:$0xff]
      %v2966 = vpack.c.bf16 %v2935, %v2934
      %v2967 = vpack.c.bf16 %v2937, %v2936
      %v2968 = vpack.c.bf16 %v2939, %v2938
      %v2969 = vpack.c.bf16 %v2941, %v2940
      %v2970 = vpack.c.bf16 %v2943, %v2942
      %v2971 = vpack.c.bf16 %v2945, %v2944
      %v2972 = vpack.c.bf16 %v2947, %v2946
      %v2973 = vpack.c.bf16 %v2949, %v2948
      %v2974 = vpack.c.bf16 %v2951, %v2950
      %v2975 = vpack.c.bf16 %v2953, %v2952
      %v2976 = vpack.c.bf16 %v2955, %v2954
      %v2977 = vpack.c.bf16 %v2957, %v2956
      %v2978 = vpack.c.bf16 %v2959, %v2958
      %v2979 = vpack.c.bf16 %v2961, %v2960
      %v2980 = vpack.c.bf16 %v2963, %v2962
      %v2981 = vpack.c.bf16 %v2965, %v2964
      %2982 = vst.msk [vmem:[#allocation4 + $0x8] sm:$0xff] %vm1864, %v2966
      %2983 = vst.msk [vmem:[#allocation4 + $0x20] sm:$0xff] %vm1864, %v2967
      %2984 = vst.msk [vmem:[#allocation4 + $0x38] sm:$0xff] %vm1864, %v2968
      %2985 = vst.msk [vmem:[#allocation4 + $0x50] sm:$0xff] %vm1864, %v2969
      %2986 = vst.msk [vmem:[#allocation4 + $0x68] sm:$0xff] %vm1864, %v2970
      %2987 = vst.msk [vmem:[#allocation4 + $0x80] sm:$0xff] %vm1864, %v2971
      %2988 = vst.msk [vmem:[#allocation4 + $0x98] sm:$0xff] %vm1864, %v2972
      %2989 = vst.msk [vmem:[#allocation4 + $0xb0] sm:$0xff] %vm1864, %v2973
      %2990 = vst.msk [vmem:[#allocation4 + $0xc8] sm:$0xff] %vm1864, %v2974
      %2991 = vst.msk [vmem:[#allocation4 + $0xe0] sm:$0xff] %vm1864, %v2975
      %2992 = vst.msk [vmem:[#allocation4 + $0xf8] sm:$0xff] %vm1864, %v2976
      %2993 = vst.msk [vmem:[#allocation4 + $0x110] sm:$0xff] %vm1864, %v2977
      %2994 = vst.msk [vmem:[#allocation4 + $0x128] sm:$0xff] %vm1864, %v2978
      %2995 = vst.msk [vmem:[#allocation4 + $0x140] sm:$0xff] %vm1864, %v2979
      %2996 = vst.msk [vmem:[#allocation4 + $0x158] sm:$0xff] %vm1864, %v2980
      %2997 = vst.msk [vmem:[#allocation4 + $0x170] sm:$0xff] %vm1864, %v2981
      %v2998 = vld [vmem:[%s2135 + $0x2] sm:$0xff]
      %v2999 = vld [vmem:[%s2135 + $0x12] sm:$0xff]
      %v3000 = vld [vmem:[%s2135 + $0x22] sm:$0xff]
      %v3001 = vld [vmem:[%s2135 + $0x32] sm:$0xff]
      %v3002 = vld [vmem:[%s2135 + $0x42] sm:$0xff]
      %v3003 = vld [vmem:[%s2135 + $0x52] sm:$0xff]
      %v3004 = vld [vmem:[%s2135 + $0x62] sm:$0xff]
      %v3005 = vld [vmem:[%s2135 + $0x72] sm:$0xff]
      %v3006 = vld [vmem:[%s2135 + $0xa2] sm:$0xff]
      %v3007 = vld [vmem:[%s2135 + $0xb2] sm:$0xff]
      %v3008 = vld [vmem:[%s2135 + $0xc2] sm:$0xff]
      %v3009 = vld [vmem:[%s2135 + $0xd2] sm:$0xff]
      %v3010 = vld [vmem:[%s2135 + $0xe2] sm:$0xff]
      %v3011 = vld [vmem:[%s2135 + $0xf2] sm:$0xff]
      %v3012 = vld [vmem:[%s2135 + $0x102] sm:$0xff]
      %v3013 = vld [vmem:[%s2135 + $0x112] sm:$0xff]
      %v3014 = vld [vmem:[%s2135 + $0x142] sm:$0xff]
      %v3015 = vld [vmem:[%s2135 + $0x152] sm:$0xff]
      %v3016 = vld [vmem:[%s2135 + $0x162] sm:$0xff]
      %v3017 = vld [vmem:[%s2135 + $0x172] sm:$0xff]
      %v3018 = vld [vmem:[%s2135 + $0x182] sm:$0xff]
      %v3019 = vld [vmem:[%s2135 + $0x192] sm:$0xff]
      %v3020 = vld [vmem:[%s2135 + $0x1a2] sm:$0xff]
      %v3021 = vld [vmem:[%s2135 + $0x1b2] sm:$0xff]
      %v3022 = vld [vmem:[%s2135 + $0x1e2] sm:$0xff]
      %v3023 = vld [vmem:[%s2135 + $0x1f2] sm:$0xff]
      %v3024 = vld [vmem:[%s2135 + $0x202] sm:$0xff]
      %v3025 = vld [vmem:[%s2135 + $0x212] sm:$0xff]
      %v3026 = vld [vmem:[%s2135 + $0x222] sm:$0xff]
      %v3027 = vld [vmem:[%s2135 + $0x232] sm:$0xff]
      %v3028 = vld [vmem:[%s2135 + $0x242] sm:$0xff]
      %v3029 = vld [vmem:[%s2135 + $0x252] sm:$0xff]
      %v3030 = vpack.c.bf16 %v2999, %v2998
      %v3031 = vpack.c.bf16 %v3001, %v3000
      %v3032 = vpack.c.bf16 %v3003, %v3002
      %v3033 = vpack.c.bf16 %v3005, %v3004
      %v3034 = vpack.c.bf16 %v3007, %v3006
      %v3035 = vpack.c.bf16 %v3009, %v3008
      %v3036 = vpack.c.bf16 %v3011, %v3010
      %v3037 = vpack.c.bf16 %v3013, %v3012
      %v3038 = vpack.c.bf16 %v3015, %v3014
      %v3039 = vpack.c.bf16 %v3017, %v3016
      %v3040 = vpack.c.bf16 %v3019, %v3018
      %v3041 = vpack.c.bf16 %v3021, %v3020
      %v3042 = vpack.c.bf16 %v3023, %v3022
      %v3043 = vpack.c.bf16 %v3025, %v3024
      %v3044 = vpack.c.bf16 %v3027, %v3026
      %v3045 = vpack.c.bf16 %v3029, %v3028
      %3062 = vrot.lane.b32.xlu0 %v3030, 32
      %v3063 = vpop.permute.xlu0 %3062
      %3064 = vrot.lane.b32.xlu0 %v3031, 32
      %v3065 = vpop.permute.xlu0 %3064
      %3066 = vrot.lane.b32.xlu0 %v3032, 32
      %v3067 = vpop.permute.xlu0 %3066
      %3068 = vrot.lane.b32.xlu0 %v3033, 32
      %v3069 = vpop.permute.xlu0 %3068
      %3070 = vrot.lane.b32.xlu0 %v3034, 32
      %v3071 = vpop.permute.xlu0 %3070
      %3072 = vrot.lane.b32.xlu0 %v3035, 32
      %v3073 = vpop.permute.xlu0 %3072
      %3074 = vrot.lane.b32.xlu0 %v3036, 32
      %v3075 = vpop.permute.xlu0 %3074
      %3076 = vrot.lane.b32.xlu0 %v3037, 32
      %v3077 = vpop.permute.xlu0 %3076
      %3078 = vrot.lane.b32.xlu0 %v3038, 32
      %v3079 = vpop.permute.xlu0 %3078
      %3080 = vrot.lane.b32.xlu0 %v3039, 32
      %v3081 = vpop.permute.xlu0 %3080
      %3082 = vrot.lane.b32.xlu0 %v3040, 32
      %v3083 = vpop.permute.xlu0 %3082
      %3084 = vrot.lane.b32.xlu0 %v3041, 32
      %v3085 = vpop.permute.xlu0 %3084
      %3086 = vrot.lane.b32.xlu0 %v3042, 32
      %v3087 = vpop.permute.xlu0 %3086
      %3088 = vrot.lane.b32.xlu0 %v3043, 32
      %v3089 = vpop.permute.xlu0 %3088
      %3090 = vrot.lane.b32.xlu0 %v3044, 32
      %v3091 = vpop.permute.xlu0 %3090
      %3092 = vrot.lane.b32.xlu0 %v3045, 32
      %v3093 = vpop.permute.xlu0 %3092
      %3110 = vst.msk [vmem:[#allocation4 + $0x8] sm:$0xff] %vm2659, %v3063
      %3111 = vst.msk [vmem:[#allocation4 + $0x20] sm:$0xff] %vm2659, %v3065
      %3112 = vst.msk [vmem:[#allocation4 + $0x38] sm:$0xff] %vm2659, %v3067
      %3113 = vst.msk [vmem:[#allocation4 + $0x50] sm:$0xff] %vm2659, %v3069
      %3114 = vst.msk [vmem:[#allocation4 + $0x68] sm:$0xff] %vm2659, %v3071
      %3115 = vst.msk [vmem:[#allocation4 + $0x80] sm:$0xff] %vm2659, %v3073
      %3116 = vst.msk [vmem:[#allocation4 + $0x98] sm:$0xff] %vm2659, %v3075
      %3117 = vst.msk [vmem:[#allocation4 + $0xb0] sm:$0xff] %vm2659, %v3077
      %3118 = vst.msk [vmem:[#allocation4 + $0xc8] sm:$0xff] %vm2659, %v3079
      %3119 = vst.msk [vmem:[#allocation4 + $0xe0] sm:$0xff] %vm2659, %v3081
      %3120 = vst.msk [vmem:[#allocation4 + $0xf8] sm:$0xff] %vm2659, %v3083
      %3121 = vst.msk [vmem:[#allocation4 + $0x110] sm:$0xff] %vm2659, %v3085
      %3122 = vst.msk [vmem:[#allocation4 + $0x128] sm:$0xff] %vm2659, %v3087
      %3123 = vst.msk [vmem:[#allocation4 + $0x140] sm:$0xff] %vm2659, %v3089
      %3124 = vst.msk [vmem:[#allocation4 + $0x158] sm:$0xff] %vm2659, %v3091
      %3125 = vst.msk [vmem:[#allocation4 + $0x170] sm:$0xff] %vm2659, %v3093
      %v3126 = vld [vmem:[%s2184] sm:$0xff]
      %v3127 = vld [vmem:[%s2184 + $0x10] sm:$0xff]
      %v3128 = vld [vmem:[%s2184 + $0x20] sm:$0xff]
      %v3129 = vld [vmem:[%s2184 + $0x30] sm:$0xff]
      %v3130 = vld [vmem:[%s2184 + $0x40] sm:$0xff]
      %v3131 = vld [vmem:[%s2184 + $0x50] sm:$0xff]
      %v3132 = vld [vmem:[%s2184 + $0x60] sm:$0xff]
      %v3133 = vld [vmem:[%s2184 + $0x70] sm:$0xff]
      %v3134 = vld [vmem:[%s2184 + $0xa0] sm:$0xff]
      %v3135 = vld [vmem:[%s2184 + $0xb0] sm:$0xff]
      %v3136 = vld [vmem:[%s2184 + $0xc0] sm:$0xff]
      %v3137 = vld [vmem:[%s2184 + $0xd0] sm:$0xff]
      %v3138 = vld [vmem:[%s2184 + $0xe0] sm:$0xff]
      %v3139 = vld [vmem:[%s2184 + $0xf0] sm:$0xff]
      %v3140 = vld [vmem:[%s2184 + $0x100] sm:$0xff]
      %v3141 = vld [vmem:[%s2184 + $0x110] sm:$0xff]
      %v3142 = vld [vmem:[%s2184 + $0x140] sm:$0xff]
      %v3143 = vld [vmem:[%s2184 + $0x150] sm:$0xff]
      %v3144 = vld [vmem:[%s2184 + $0x160] sm:$0xff]
      %v3145 = vld [vmem:[%s2184 + $0x170] sm:$0xff]
      %v3146 = vld [vmem:[%s2184 + $0x180] sm:$0xff]
      %v3147 = vld [vmem:[%s2184 + $0x190] sm:$0xff]
      %v3148 = vld [vmem:[%s2184 + $0x1a0] sm:$0xff]
      %v3149 = vld [vmem:[%s2184 + $0x1b0] sm:$0xff]
      %v3150 = vld [vmem:[%s2184 + $0x1e0] sm:$0xff]
      %v3151 = vld [vmem:[%s2184 + $0x1f0] sm:$0xff]
      %v3152 = vld [vmem:[%s2184 + $0x200] sm:$0xff]
      %v3153 = vld [vmem:[%s2184 + $0x210] sm:$0xff]
      %v3154 = vld [vmem:[%s2184 + $0x220] sm:$0xff]
      %v3155 = vld [vmem:[%s2184 + $0x230] sm:$0xff]
      %v3156 = vld [vmem:[%s2184 + $0x240] sm:$0xff]
      %v3157 = vld [vmem:[%s2184 + $0x250] sm:$0xff]
      %v3158 = vpack.c.bf16 %v3127, %v3126
      %v3159 = vpack.c.bf16 %v3129, %v3128
      %v3160 = vpack.c.bf16 %v3131, %v3130
      %v3161 = vpack.c.bf16 %v3133, %v3132
      %v3162 = vpack.c.bf16 %v3135, %v3134
      %v3163 = vpack.c.bf16 %v3137, %v3136
      %v3164 = vpack.c.bf16 %v3139, %v3138
      %v3165 = vpack.c.bf16 %v3141, %v3140
      %v3166 = vpack.c.bf16 %v3143, %v3142
      %v3167 = vpack.c.bf16 %v3145, %v3144
      %v3168 = vpack.c.bf16 %v3147, %v3146
      %v3169 = vpack.c.bf16 %v3149, %v3148
      %v3170 = vpack.c.bf16 %v3151, %v3150
      %v3171 = vpack.c.bf16 %v3153, %v3152
      %v3172 = vpack.c.bf16 %v3155, %v3154
      %v3173 = vpack.c.bf16 %v3157, %v3156
      %3190 = vrot.lane.b32.xlu0 %v3158, 64
      %v3191 = vpop.permute.xlu0 %3190
      %3192 = vrot.lane.b32.xlu0 %v3159, 64
      %v3193 = vpop.permute.xlu0 %3192
      %3194 = vrot.lane.b32.xlu0 %v3160, 64
      %v3195 = vpop.permute.xlu0 %3194
      %3196 = vrot.lane.b32.xlu0 %v3161, 64
      %v3197 = vpop.permute.xlu0 %3196
      %3198 = vrot.lane.b32.xlu0 %v3162, 64
      %v3199 = vpop.permute.xlu0 %3198
      %3200 = vrot.lane.b32.xlu0 %v3163, 64
      %v3201 = vpop.permute.xlu0 %3200
      %3202 = vrot.lane.b32.xlu0 %v3164, 64
      %v3203 = vpop.permute.xlu0 %3202
      %3204 = vrot.lane.b32.xlu0 %v3165, 64
      %v3205 = vpop.permute.xlu0 %3204
      %3206 = vrot.lane.b32.xlu0 %v3166, 64
      %v3207 = vpop.permute.xlu0 %3206
      %3208 = vrot.lane.b32.xlu0 %v3167, 64
      %v3209 = vpop.permute.xlu0 %3208
      %3210 = vrot.lane.b32.xlu0 %v3168, 64
      %v3211 = vpop.permute.xlu0 %3210
      %3212 = vrot.lane.b32.xlu0 %v3169, 64
      %v3213 = vpop.permute.xlu0 %3212
      %3214 = vrot.lane.b32.xlu0 %v3170, 64
      %v3215 = vpop.permute.xlu0 %3214
      %3216 = vrot.lane.b32.xlu0 %v3171, 64
      %v3217 = vpop.permute.xlu0 %3216
      %3218 = vrot.lane.b32.xlu0 %v3172, 64
      %v3219 = vpop.permute.xlu0 %3218
      %3220 = vrot.lane.b32.xlu0 %v3173, 64
      %v3221 = vpop.permute.xlu0 %3220
      %3238 = vst.msk [vmem:[#allocation4 + $0x8] sm:$0xff] %vm2788, %v3191
      %3239 = vst.msk [vmem:[#allocation4 + $0x20] sm:$0xff] %vm2788, %v3193
      %3240 = vst.msk [vmem:[#allocation4 + $0x38] sm:$0xff] %vm2788, %v3195
      %3241 = vst.msk [vmem:[#allocation4 + $0x50] sm:$0xff] %vm2788, %v3197
      %3242 = vst.msk [vmem:[#allocation4 + $0x68] sm:$0xff] %vm2788, %v3199
      %3243 = vst.msk [vmem:[#allocation4 + $0x80] sm:$0xff] %vm2788, %v3201
      %3244 = vst.msk [vmem:[#allocation4 + $0x98] sm:$0xff] %vm2788, %v3203
      %3245 = vst.msk [vmem:[#allocation4 + $0xb0] sm:$0xff] %vm2788, %v3205
      %3246 = vst.msk [vmem:[#allocation4 + $0xc8] sm:$0xff] %vm2788, %v3207
      %3247 = vst.msk [vmem:[#allocation4 + $0xe0] sm:$0xff] %vm2788, %v3209
      %3248 = vst.msk [vmem:[#allocation4 + $0xf8] sm:$0xff] %vm2788, %v3211
      %3249 = vst.msk [vmem:[#allocation4 + $0x110] sm:$0xff] %vm2788, %v3213
      %3250 = vst.msk [vmem:[#allocation4 + $0x128] sm:$0xff] %vm2788, %v3215
      %3251 = vst.msk [vmem:[#allocation4 + $0x140] sm:$0xff] %vm2788, %v3217
      %3252 = vst.msk [vmem:[#allocation4 + $0x158] sm:$0xff] %vm2788, %v3219
      %3253 = vst.msk [vmem:[#allocation4 + $0x170] sm:$0xff] %vm2788, %v3221
      %v3254 = vld [vmem:[%s2184 + $0x1] sm:$0xff]
      %v3255 = vld [vmem:[%s2184 + $0x11] sm:$0xff]
      %v3256 = vld [vmem:[%s2184 + $0x21] sm:$0xff]
      %v3257 = vld [vmem:[%s2184 + $0x31] sm:$0xff]
      %v3258 = vld [vmem:[%s2184 + $0x41] sm:$0xff]
      %v3259 = vld [vmem:[%s2184 + $0x51] sm:$0xff]
      %v3260 = vld [vmem:[%s2184 + $0x61] sm:$0xff]
      %v3261 = vld [vmem:[%s2184 + $0x71] sm:$0xff]
      %v3262 = vld [vmem:[%s2184 + $0xa1] sm:$0xff]
      %v3263 = vld [vmem:[%s2184 + $0xb1] sm:$0xff]
      %v3264 = vld [vmem:[%s2184 + $0xc1] sm:$0xff]
      %v3265 = vld [vmem:[%s2184 + $0xd1] sm:$0xff]
      %v3266 = vld [vmem:[%s2184 + $0xe1] sm:$0xff]
      %v3267 = vld [vmem:[%s2184 + $0xf1] sm:$0xff]
      %v3268 = vld [vmem:[%s2184 + $0x101] sm:$0xff]
      %v3269 = vld [vmem:[%s2184 + $0x111] sm:$0xff]
      %v3270 = vld [vmem:[%s2184 + $0x141] sm:$0xff]
      %v3271 = vld [vmem:[%s2184 + $0x151] sm:$0xff]
      %v3272 = vld [vmem:[%s2184 + $0x161] sm:$0xff]
      %v3273 = vld [vmem:[%s2184 + $0x171] sm:$0xff]
      %v3274 = vld [vmem:[%s2184 + $0x181] sm:$0xff]
      %v3275 = vld [vmem:[%s2184 + $0x191] sm:$0xff]
      %v3276 = vld [vmem:[%s2184 + $0x1a1] sm:$0xff]
      %v3277 = vld [vmem:[%s2184 + $0x1b1] sm:$0xff]
      %v3278 = vld [vmem:[%s2184 + $0x1e1] sm:$0xff]
      %v3279 = vld [vmem:[%s2184 + $0x1f1] sm:$0xff]
      %v3280 = vld [vmem:[%s2184 + $0x201] sm:$0xff]
      %v3281 = vld [vmem:[%s2184 + $0x211] sm:$0xff]
      %v3282 = vld [vmem:[%s2184 + $0x221] sm:$0xff]
      %v3283 = vld [vmem:[%s2184 + $0x231] sm:$0xff]
      %v3284 = vld [vmem:[%s2184 + $0x241] sm:$0xff]
      %v3285 = vld [vmem:[%s2184 + $0x251] sm:$0xff]
      %v3286 = vpack.c.bf16 %v3255, %v3254
      %v3287 = vpack.c.bf16 %v3257, %v3256
      %v3288 = vpack.c.bf16 %v3259, %v3258
      %v3289 = vpack.c.bf16 %v3261, %v3260
      %v3290 = vpack.c.bf16 %v3263, %v3262
      %v3291 = vpack.c.bf16 %v3265, %v3264
      %v3292 = vpack.c.bf16 %v3267, %v3266
      %v3293 = vpack.c.bf16 %v3269, %v3268
      %v3294 = vpack.c.bf16 %v3271, %v3270
      %v3295 = vpack.c.bf16 %v3273, %v3272
      %v3296 = vpack.c.bf16 %v3275, %v3274
      %v3297 = vpack.c.bf16 %v3277, %v3276
      %v3298 = vpack.c.bf16 %v3279, %v3278
      %v3299 = vpack.c.bf16 %v3281, %v3280
      %v3300 = vpack.c.bf16 %v3283, %v3282
      %v3301 = vpack.c.bf16 %v3285, %v3284
      %3318 = vrot.lane.b32.xlu0 %v3286, 96
      %v3319 = vpop.permute.xlu0 %3318
      %3320 = vrot.lane.b32.xlu0 %v3287, 96
      %v3321 = vpop.permute.xlu0 %3320
      %3322 = vrot.lane.b32.xlu0 %v3288, 96
      %v3323 = vpop.permute.xlu0 %3322
      %3324 = vrot.lane.b32.xlu0 %v3289, 96
      %v3325 = vpop.permute.xlu0 %3324
      %3326 = vrot.lane.b32.xlu0 %v3290, 96
      %v3327 = vpop.permute.xlu0 %3326
      %3328 = vrot.lane.b32.xlu0 %v3291, 96
      %v3329 = vpop.permute.xlu0 %3328
      %3330 = vrot.lane.b32.xlu0 %v3292, 96
      %v3331 = vpop.permute.xlu0 %3330
      %3332 = vrot.lane.b32.xlu0 %v3293, 96
      %v3333 = vpop.permute.xlu0 %3332
      %3334 = vrot.lane.b32.xlu0 %v3294, 96
      %v3335 = vpop.permute.xlu0 %3334
      %3336 = vrot.lane.b32.xlu0 %v3295, 96
      %v3337 = vpop.permute.xlu0 %3336
      %3338 = vrot.lane.b32.xlu0 %v3296, 96
      %v3339 = vpop.permute.xlu0 %3338
      %3340 = vrot.lane.b32.xlu0 %v3297, 96
      %v3341 = vpop.permute.xlu0 %3340
      %3342 = vrot.lane.b32.xlu0 %v3298, 96
      %v3343 = vpop.permute.xlu0 %3342
      %3344 = vrot.lane.b32.xlu0 %v3299, 96
      %v3345 = vpop.permute.xlu0 %3344
      %3346 = vrot.lane.b32.xlu0 %v3300, 96
      %v3347 = vpop.permute.xlu0 %3346
      %3348 = vrot.lane.b32.xlu0 %v3301, 96
      %v3349 = vpop.permute.xlu0 %3348
      %3366 = vst.msk [vmem:[#allocation4 + $0x8] sm:$0xff] %vm2917, %v3319
      %3367 = vst.msk [vmem:[#allocation4 + $0x20] sm:$0xff] %vm2917, %v3321
      %3368 = vst.msk [vmem:[#allocation4 + $0x38] sm:$0xff] %vm2917, %v3323
      %3369 = vst.msk [vmem:[#allocation4 + $0x50] sm:$0xff] %vm2917, %v3325
      %3370 = vst.msk [vmem:[#allocation4 + $0x68] sm:$0xff] %vm2917, %v3327
      %3371 = vst.msk [vmem:[#allocation4 + $0x80] sm:$0xff] %vm2917, %v3329
      %3372 = vst.msk [vmem:[#allocation4 + $0x98] sm:$0xff] %vm2917, %v3331
      %3373 = vst.msk [vmem:[#allocation4 + $0xb0] sm:$0xff] %vm2917, %v3333
      %3374 = vst.msk [vmem:[#allocation4 + $0xc8] sm:$0xff] %vm2917, %v3335
      %3375 = vst.msk [vmem:[#allocation4 + $0xe0] sm:$0xff] %vm2917, %v3337
      %3376 = vst.msk [vmem:[#allocation4 + $0xf8] sm:$0xff] %vm2917, %v3339
      %3377 = vst.msk [vmem:[#allocation4 + $0x110] sm:$0xff] %vm2917, %v3341
      %3378 = vst.msk [vmem:[#allocation4 + $0x128] sm:$0xff] %vm2917, %v3343
      %3379 = vst.msk [vmem:[#allocation4 + $0x140] sm:$0xff] %vm2917, %v3345
      %3380 = vst.msk [vmem:[#allocation4 + $0x158] sm:$0xff] %vm2917, %v3347
      %3381 = vst.msk [vmem:[#allocation4 + $0x170] sm:$0xff] %vm2917, %v3349
      %v3382 = vld [vmem:[%s2184 + $0x2] sm:$0xff]
      %v3383 = vld [vmem:[%s2184 + $0x12] sm:$0xff]
      %v3384 = vld [vmem:[%s2184 + $0x22] sm:$0xff]
      %v3385 = vld [vmem:[%s2184 + $0x32] sm:$0xff]
      %v3386 = vld [vmem:[%s2184 + $0x42] sm:$0xff]
      %v3387 = vld [vmem:[%s2184 + $0x52] sm:$0xff]
      %v3388 = vld [vmem:[%s2184 + $0x62] sm:$0xff]
      %v3389 = vld [vmem:[%s2184 + $0x72] sm:$0xff]
      %v3390 = vld [vmem:[%s2184 + $0xa2] sm:$0xff]
      %v3391 = vld [vmem:[%s2184 + $0xb2] sm:$0xff]
      %v3392 = vld [vmem:[%s2184 + $0xc2] sm:$0xff]
      %v3393 = vld [vmem:[%s2184 + $0xd2] sm:$0xff]
      %v3394 = vld [vmem:[%s2184 + $0xe2] sm:$0xff]
      %v3395 = vld [vmem:[%s2184 + $0xf2] sm:$0xff]
      %v3396 = vld [vmem:[%s2184 + $0x102] sm:$0xff]
      %v3397 = vld [vmem:[%s2184 + $0x112] sm:$0xff]
      %v3398 = vld [vmem:[%s2184 + $0x142] sm:$0xff]
      %v3399 = vld [vmem:[%s2184 + $0x152] sm:$0xff]
      %v3400 = vld [vmem:[%s2184 + $0x162] sm:$0xff]
      %v3401 = vld [vmem:[%s2184 + $0x172] sm:$0xff]
      %v3402 = vld [vmem:[%s2184 + $0x182] sm:$0xff]
      %v3403 = vld [vmem:[%s2184 + $0x192] sm:$0xff]
      %v3404 = vld [vmem:[%s2184 + $0x1a2] sm:$0xff]
      %v3405 = vld [vmem:[%s2184 + $0x1b2] sm:$0xff]
      %v3406 = vld [vmem:[%s2184 + $0x1e2] sm:$0xff]
      %v3407 = vld [vmem:[%s2184 + $0x1f2] sm:$0xff]
      %v3408 = vld [vmem:[%s2184 + $0x202] sm:$0xff]
      %v3409 = vld [vmem:[%s2184 + $0x212] sm:$0xff]
      %v3410 = vld [vmem:[%s2184 + $0x222] sm:$0xff]
      %v3411 = vld [vmem:[%s2184 + $0x232] sm:$0xff]
      %v3412 = vld [vmem:[%s2184 + $0x242] sm:$0xff]
      %v3413 = vld [vmem:[%s2184 + $0x252] sm:$0xff]
      %v3414 = vpack.c.bf16 %v3383, %v3382
      %v3415 = vpack.c.bf16 %v3385, %v3384
      %v3416 = vpack.c.bf16 %v3387, %v3386
      %v3417 = vpack.c.bf16 %v3389, %v3388
      %v3418 = vpack.c.bf16 %v3391, %v3390
      %v3419 = vpack.c.bf16 %v3393, %v3392
      %v3420 = vpack.c.bf16 %v3395, %v3394
      %v3421 = vpack.c.bf16 %v3397, %v3396
      %v3422 = vpack.c.bf16 %v3399, %v3398
      %v3423 = vpack.c.bf16 %v3401, %v3400
      %v3424 = vpack.c.bf16 %v3403, %v3402
      %v3425 = vpack.c.bf16 %v3405, %v3404
      %v3426 = vpack.c.bf16 %v3407, %v3406
      %v3427 = vpack.c.bf16 %v3409, %v3408
      %v3428 = vpack.c.bf16 %v3411, %v3410
      %v3429 = vpack.c.bf16 %v3413, %v3412
      %3430 = vst.msk [vmem:[#allocation4 + $0x10] sm:$0xff] %vm1864, %v3414
      %3431 = vst.msk [vmem:[#allocation4 + $0x28] sm:$0xff] %vm1864, %v3415
      %3432 = vst.msk [vmem:[#allocation4 + $0x40] sm:$0xff] %vm1864, %v3416
      %3433 = vst.msk [vmem:[#allocation4 + $0x58] sm:$0xff] %vm1864, %v3417
      %3434 = vst.msk [vmem:[#allocation4 + $0x70] sm:$0xff] %vm1864, %v3418
      %3435 = vst.msk [vmem:[#allocation4 + $0x88] sm:$0xff] %vm1864, %v3419
      %3436 = vst.msk [vmem:[#allocation4 + $0xa0] sm:$0xff] %vm1864, %v3420
      %3437 = vst.msk [vmem:[#allocation4 + $0xb8] sm:$0xff] %vm1864, %v3421
      %3438 = vst.msk [vmem:[#allocation4 + $0xd0] sm:$0xff] %vm1864, %v3422
      %3439 = vst.msk [vmem:[#allocation4 + $0xe8] sm:$0xff] %vm1864, %v3423
      %3440 = vst.msk [vmem:[#allocation4 + $0x100] sm:$0xff] %vm1864, %v3424
      %3441 = vst.msk [vmem:[#allocation4 + $0x118] sm:$0xff] %vm1864, %v3425
      %3442 = vst.msk [vmem:[#allocation4 + $0x130] sm:$0xff] %vm1864, %v3426
      %3443 = vst.msk [vmem:[#allocation4 + $0x148] sm:$0xff] %vm1864, %v3427
      %3444 = vst.msk [vmem:[#allocation4 + $0x160] sm:$0xff] %vm1864, %v3428
      %3445 = vst.msk [vmem:[#allocation4 + $0x178] sm:$0xff] %vm1864, %v3429
      %v3446 = vld [vmem:[#allocation4] sm:$0xff]
      %v3447 = vld [vmem:[#allocation4 + $0x8] sm:$0xff]
      %v3448 = vld [vmem:[#allocation4 + $0x10] sm:$0xff]
      %v3449 = vld [vmem:[#allocation4 + $0x18] sm:$0xff]
      %v3450 = vld [vmem:[#allocation4 + $0x20] sm:$0xff]
      %v3451 = vld [vmem:[#allocation4 + $0x28] sm:$0xff]
      %v3452 = vld [vmem:[#allocation4 + $0x30] sm:$0xff]
      %v3453 = vld [vmem:[#allocation4 + $0x38] sm:$0xff]
      %v3454 = vld [vmem:[#allocation4 + $0x40] sm:$0xff]
      %v3455 = vld [vmem:[#allocation4 + $0x48] sm:$0xff]
      %v3456 = vld [vmem:[#allocation4 + $0x50] sm:$0xff]
      %v3457 = vld [vmem:[#allocation4 + $0x58] sm:$0xff]
      %v3458 = vld [vmem:[#allocation4 + $0x60] sm:$0xff]
      %v3459 = vld [vmem:[#allocation4 + $0x68] sm:$0xff]
      %v3460 = vld [vmem:[#allocation4 + $0x70] sm:$0xff]
      %v3461 = vld [vmem:[#allocation4 + $0x78] sm:$0xff]
      %v3462 = vld [vmem:[#allocation4 + $0x80] sm:$0xff]
      %v3463 = vld [vmem:[#allocation4 + $0x88] sm:$0xff]
      %v3464 = vld [vmem:[#allocation4 + $0x90] sm:$0xff]
      %v3465 = vld [vmem:[#allocation4 + $0x98] sm:$0xff]
      %v3466 = vld [vmem:[#allocation4 + $0xa0] sm:$0xff]
      %v3467 = vld [vmem:[#allocation4 + $0xa8] sm:$0xff]
      %v3468 = vld [vmem:[#allocation4 + $0xb0] sm:$0xff]
      %v3469 = vld [vmem:[#allocation4 + $0xb8] sm:$0xff]
      %v3470 = vld [vmem:[#allocation4 + $0xc0] sm:$0xff]
      %v3471 = vld [vmem:[#allocation4 + $0xc8] sm:$0xff]
      %v3472 = vld [vmem:[#allocation4 + $0xd0] sm:$0xff]
      %v3473 = vld [vmem:[#allocation4 + $0xd8] sm:$0xff]
      %v3474 = vld [vmem:[#allocation4 + $0xe0] sm:$0xff]
      %v3475 = vld [vmem:[#allocation4 + $0xe8] sm:$0xff]
      %v3476 = vld [vmem:[#allocation4 + $0xf0] sm:$0xff]
      %v3477 = vld [vmem:[#allocation4 + $0xf8] sm:$0xff]
      %v3478 = vld [vmem:[#allocation4 + $0x100] sm:$0xff]
      %v3479 = vld [vmem:[#allocation4 + $0x108] sm:$0xff]
      %v3480 = vld [vmem:[#allocation4 + $0x110] sm:$0xff]
      %v3481 = vld [vmem:[#allocation4 + $0x118] sm:$0xff]
      %v3482 = vld [vmem:[#allocation4 + $0x120] sm:$0xff]
      %v3483 = vld [vmem:[#allocation4 + $0x128] sm:$0xff]
      %v3484 = vld [vmem:[#allocation4 + $0x130] sm:$0xff]
      %v3485 = vld [vmem:[#allocation4 + $0x138] sm:$0xff]
      %v3486 = vld [vmem:[#allocation4 + $0x140] sm:$0xff]
      %v3487 = vld [vmem:[#allocation4 + $0x148] sm:$0xff]
      %v3488 = vld [vmem:[#allocation4 + $0x150] sm:$0xff]
      %v3489 = vld [vmem:[#allocation4 + $0x158] sm:$0xff]
      %v3490 = vld [vmem:[#allocation4 + $0x160] sm:$0xff]
      %v3491 = vld [vmem:[#allocation4 + $0x168] sm:$0xff]
      %v3492 = vld [vmem:[#allocation4 + $0x170] sm:$0xff]
      %v3493 = vld [vmem:[#allocation4 + $0x178] sm:$0xff]
      %v3494 = vld [vmem:[%s4] sm:$0xf]
      %v3495 = vld [vmem:[%s4 + $0x4] sm:$0xf]
      %v3496 = vld [vmem:[%s4 + $0x8] sm:$0xf]
      %v3497 = vld [vmem:[%s4 + $0xc] sm:$0xf]
      %v3498 = vld [vmem:[%s4 + $0x10] sm:$0xf]
      %v3499 = vld [vmem:[%s4 + $0x14] sm:$0xf]
      %v3500 = vld [vmem:[%s4 + $0x18] sm:$0xf]
      %v3501 = vld [vmem:[%s4 + $0x1c] sm:$0xf]
      %v3502 = vld [vmem:[%s4 + $0x20] sm:$0xf]
      %v3503 = vld [vmem:[%s4 + $0x24] sm:$0xf]
      %v3504 = vld [vmem:[%s4 + $0x28] sm:$0xf]
      %v3505 = vld [vmem:[%s4 + $0x2c] sm:$0xf]
      %v3506 = vld [vmem:[%s4 + $0x30] sm:$0xf]
      %v3507 = vld [vmem:[%s4 + $0x34] sm:$0xf]
      %v3508 = vld [vmem:[%s4 + $0x38] sm:$0xf]
      %v3509 = vld [vmem:[%s4 + $0x3c] sm:$0xf]
      %v3510 = vld [vmem:[%s4 + $0x40] sm:$0xf]
      %v3511 = vld [vmem:[%s4 + $0x44] sm:$0xf]
      %v3512 = vld [vmem:[%s4 + $0x48] sm:$0xf]
      %v3513 = vld [vmem:[%s4 + $0x4c] sm:$0xf]
      %v3514 = vld [vmem:[%s4 + $0x50] sm:$0xf]
      %v3515 = vld [vmem:[%s4 + $0x54] sm:$0xf]
      %v3516 = vld [vmem:[%s4 + $0x58] sm:$0xf]
      %v3517 = vld [vmem:[%s4 + $0x5c] sm:$0xf]
      %v3518 = vld [vmem:[%s4 + $0x60] sm:$0xf]
      %v3519 = vld [vmem:[%s4 + $0x64] sm:$0xf]
      %v3520 = vld [vmem:[%s4 + $0x68] sm:$0xf]
      %v3521 = vld [vmem:[%s4 + $0x6c] sm:$0xf]
      %v3522 = vld [vmem:[%s4 + $0x70] sm:$0xf]
      %v3523 = vld [vmem:[%s4 + $0x74] sm:$0xf]
      %v3524 = vld [vmem:[%s4 + $0x78] sm:$0xf]
      %v3525 = vld [vmem:[%s4 + $0x7c] sm:$0xf]
      %v3526 = vld [vmem:[%s4 + $0x80] sm:$0xf]
      %v3527 = vld [vmem:[%s4 + $0x84] sm:$0xf]
      %v3528 = vld [vmem:[%s4 + $0x88] sm:$0xf]
      %v3529 = vld [vmem:[%s4 + $0x8c] sm:$0xf]
      %v3530 = vld [vmem:[%s5] sm:$0x1]
      %v3532 = vlaneseq
      %v3533 = vshrl.u32 %v3532, 7
      %v3534 = vsub.s32 0, %v3533
      %v3535 = vrot.slane %v3530, %v3534
      %v3573 = vunpack.c.l.b16 %v3494
      %v3574 = vunpack.c.l.b16 %v3495
      %v3575 = vunpack.c.l.b16 %v3496
      %v3576 = vunpack.c.l.b16 %v3497
      %v3577 = vunpack.c.l.b16 %v3498
      %v3578 = vunpack.c.l.b16 %v3499
      %v3579 = vunpack.c.l.b16 %v3500
      %v3580 = vunpack.c.l.b16 %v3501
      %v3581 = vunpack.c.l.b16 %v3502
      %v3582 = vunpack.c.l.b16 %v3503
      %v3583 = vunpack.c.l.b16 %v3504
      %v3584 = vunpack.c.l.b16 %v3505
      %v3585 = vunpack.c.l.b16 %v3506
      %v3586 = vunpack.c.l.b16 %v3507
      %v3587 = vunpack.c.l.b16 %v3508
      %v3588 = vunpack.c.l.b16 %v3509
      %v3589 = vunpack.c.l.b16 %v3510
      %v3590 = vunpack.c.l.b16 %v3511
      %v3591 = vunpack.c.l.b16 %v3512
      %v3592 = vunpack.c.l.b16 %v3513
      %v3593 = vunpack.c.l.b16 %v3514
      %v3594 = vunpack.c.l.b16 %v3515
      %v3595 = vunpack.c.l.b16 %v3516
      %v3596 = vunpack.c.l.b16 %v3517
      %v3597 = vunpack.c.l.b16 %v3518
      %v3598 = vunpack.c.l.b16 %v3519
      %v3599 = vunpack.c.l.b16 %v3520
      %v3600 = vunpack.c.l.b16 %v3521
      %v3601 = vunpack.c.l.b16 %v3522
      %v3602 = vunpack.c.l.b16 %v3523
      %v3603 = vunpack.c.l.b16 %v3524
      %v3604 = vunpack.c.l.b16 %v3525
      %v3605 = vunpack.c.l.b16 %v3526
      %v3606 = vunpack.c.l.b16 %v3527
      %v3607 = vunpack.c.l.b16 %v3528
      %v3608 = vunpack.c.l.b16 %v3529
      %v3609 = vpack.c.b16 %v3574, %v3573
      %v3610 = vpack.c.b16 %v3576, %v3575
      %v3611 = vpack.c.b16 %v3578, %v3577
      %v3612 = vpack.c.b16 %v3580, %v3579
      %v3613 = vpack.c.b16 %v3582, %v3581
      %v3614 = vpack.c.b16 %v3584, %v3583
      %v3615 = vpack.c.b16 %v3586, %v3585
      %v3616 = vpack.c.b16 %v3588, %v3587
      %v3617 = vpack.c.b16 %v3590, %v3589
      %v3618 = vpack.c.b16 %v3592, %v3591
      %v3619 = vpack.c.b16 %v3594, %v3593
      %v3620 = vpack.c.b16 %v3596, %v3595
      %v3621 = vpack.c.b16 %v3598, %v3597
      %v3622 = vpack.c.b16 %v3600, %v3599
      %v3623 = vpack.c.b16 %v3602, %v3601
      %v3624 = vpack.c.b16 %v3604, %v3603
      %v3625 = vpack.c.b16 %v3606, %v3605
      %v3626 = vpack.c.b16 %v3608, %v3607
      %v3646 = vsel %vm1864, %v3448, 0
      %v3649 = vsel %vm1864, %v3451, 0
      %v3652 = vsel %vm1864, %v3454, 0
      %v3655 = vsel %vm1864, %v3457, 0
      %v3658 = vsel %vm1864, %v3460, 0
      %v3661 = vsel %vm1864, %v3463, 0
      %v3664 = vsel %vm1864, %v3466, 0
      %v3667 = vsel %vm1864, %v3469, 0
      %v3670 = vsel %vm1864, %v3472, 0
      %v3673 = vsel %vm1864, %v3475, 0
      %v3676 = vsel %vm1864, %v3478, 0
      %v3679 = vsel %vm1864, %v3481, 0
      %v3682 = vsel %vm1864, %v3484, 0
      %v3685 = vsel %vm1864, %v3487, 0
      %v3688 = vsel %vm1864, %v3490, 0
      %v3691 = vsel %vm1864, %v3493, 0
      %3693 = vmatprep.subr.bf16.mxu0 0
      %3694 = vmatpush1.bf16.msra.mxu0 %v3609
      %3695 = vmatprep.subr.bf16.mxu0 0
      %3696 = vmatpush1.bf16.msra.mxu0 %v3610
      %3697 = vmatprep.subr.bf16.mxu0 0
      %3698 = vmatpush1.bf16.msra.mxu0 %v3611
      %3699 = vmatprep.subr.bf16.mxu0 0
      %3700 = vmatpush1.bf16.msra.mxu0 %v3612
      %3701 = vmatprep.subr.bf16.mxu0 0
      %3702 = vmatpush1.bf16.msra.mxu0 %v3613
      %3703 = vmatprep.subr.bf16.mxu0 0
      %3704 = vmatpush1.bf16.msra.mxu0 %v3614
      %3705 = vmatprep.subr.bf16.mxu0 0
      %3706 = vmatpush1.bf16.msra.mxu0 %v3615
      %3707 = vmatprep.subr.bf16.mxu0 0
      %3708 = vmatpush1.bf16.msra.mxu0 %v3616
      %3709 = vmatprep.subr.bf16.mxu0 0
      %3710 = vmatpush1.bf16.msra.mxu0 %v3617
      %3711 = vmatprep.subr.bf16.mxu0 0
      %3712 = vmatpush1.bf16.msra.mxu0 %v3618
      %3713 = vmatprep.subr.bf16.mxu0 0
      %3714 = vmatpush1.bf16.msra.mxu0 %v3619
      %3715 = vmatprep.subr.bf16.mxu0 0
      %3716 = vmatpush1.bf16.msra.mxu0 %v3620
      %3717 = vmatprep.subr.bf16.mxu0 0
      %3718 = vmatpush1.bf16.msra.mxu0 %v3621
      %3719 = vmatprep.subr.bf16.mxu0 0
      %3720 = vmatpush1.bf16.msra.mxu0 %v3622
      %3721 = vmatprep.subr.bf16.mxu0 0
      %3722 = vmatpush1.bf16.msra.mxu0 %v3623
      %3723 = vmatprep.subr.bf16.mxu0 0
      %3724 = vmatpush1.bf16.msra.mxu0 %v3624
      %3725 = vmatprep.mubr.bf16.mxu0 %v3447
      %3726 = vmatmul.mubr.bf16.gmra.mrb[0].mxu0 %v3446
      %v3727 = vpop.f32.mrb[0].mxu0
      %v3728 = vadd.f32 %v3535, %v3727
      %v3729 = vpop.f32.mrb[0].mxu0
      %v3730 = vpop.f32.mrb[0].mxu0
      %v3731 = vadd.f32 %v3535, %v3730
      %v3732 = vpop.f32.mrb[0].mxu0
      %3733 = vmatprep.mubr.bf16.mxu0 %v3450
      %3734 = vmatmul.mubr.bf16.gmra.mrb[0].mxu0 %v3449
      %v3735 = vpop.f32.mrb[0].mxu0
      %v3736 = vadd.f32 %v3535, %v3735
      %v3737 = vpop.f32.mrb[0].mxu0
      %v3738 = vpop.f32.mrb[0].mxu0
      %v3739 = vadd.f32 %v3535, %v3738
      %v3740 = vpop.f32.mrb[0].mxu0
      %3741 = vmatprep.mubr.bf16.mxu0 %v3453
      %3742 = vmatmul.mubr.bf16.gmra.mrb[0].mxu0 %v3452
      %v3743 = vpop.f32.mrb[0].mxu0
      %v3744 = vadd.f32 %v3535, %v3743
      %v3745 = vpop.f32.mrb[0].mxu0
      %v3746 = vpop.f32.mrb[0].mxu0
      %v3747 = vadd.f32 %v3535, %v3746
      %v3748 = vpop.f32.mrb[0].mxu0
      %3749 = vmatprep.mubr.bf16.mxu0 %v3456
      %3750 = vmatmul.mubr.bf16.gmra.mrb[0].mxu0 %v3455
      %v3751 = vpop.f32.mrb[0].mxu0
      %v3752 = vadd.f32 %v3535, %v3751
      %v3753 = vpop.f32.mrb[0].mxu0
      %v3754 = vpop.f32.mrb[0].mxu0
      %v3755 = vadd.f32 %v3535, %v3754
      %v3756 = vpop.f32.mrb[0].mxu0
      %3757 = vmatprep.mubr.bf16.mxu0 %v3459
      %3758 = vmatmul.mubr.bf16.gmra.mrb[0].mxu0 %v3458
      %v3759 = vpop.f32.mrb[0].mxu0
      %v3760 = vadd.f32 %v3535, %v3759
      %v3761 = vpop.f32.mrb[0].mxu0
      %v3762 = vpop.f32.mrb[0].mxu0
      %v3763 = vadd.f32 %v3535, %v3762
      %v3764 = vpop.f32.mrb[0].mxu0
      %3765 = vmatprep.mubr.bf16.mxu0 %v3462
      %3766 = vmatmul.mubr.bf16.gmra.mrb[0].mxu0 %v3461
      %v3767 = vpop.f32.mrb[0].mxu0
      %v3768 = vadd.f32 %v3535, %v3767
      %v3769 = vpop.f32.mrb[0].mxu0
      %v3770 = vpop.f32.mrb[0].mxu0
      %v3771 = vadd.f32 %v3535, %v3770
      %v3772 = vpop.f32.mrb[0].mxu0
      %3773 = vmatprep.mubr.bf16.mxu0 %v3465
      %3774 = vmatmul.mubr.bf16.gmra.mrb[0].mxu0 %v3464
      %v3775 = vpop.f32.mrb[0].mxu0
      %v3776 = vadd.f32 %v3535, %v3775
      %v3777 = vpop.f32.mrb[0].mxu0
      %v3778 = vpop.f32.mrb[0].mxu0
      %v3779 = vadd.f32 %v3535, %v3778
      %v3780 = vpop.f32.mrb[0].mxu0
      %3781 = vmatprep.mubr.bf16.mxu0 %v3468
      %3782 = vmatmul.mubr.bf16.gmra.mrb[0].mxu0 %v3467
      %v3783 = vpop.f32.mrb[0].mxu0
      %v3784 = vadd.f32 %v3535, %v3783
      %v3785 = vpop.f32.mrb[0].mxu0
      %v3786 = vpop.f32.mrb[0].mxu0
      %v3787 = vadd.f32 %v3535, %v3786
      %v3788 = vpop.f32.mrb[0].mxu0
      %3789 = vmatprep.mubr.bf16.mxu0 %v3471
      %3790 = vmatmul.mubr.bf16.gmra.mrb[0].mxu0 %v3470
      %v3791 = vpop.f32.mrb[0].mxu0
      %v3792 = vadd.f32 %v3535, %v3791
      %v3793 = vpop.f32.mrb[0].mxu0
      %v3794 = vpop.f32.mrb[0].mxu0
      %v3795 = vadd.f32 %v3535, %v3794
      %v3796 = vpop.f32.mrb[0].mxu0
      %3797 = vmatprep.mubr.bf16.mxu0 %v3474
      %3798 = vmatmul.mubr.bf16.gmra.mrb[0].mxu0 %v3473
      %v3799 = vpop.f32.mrb[0].mxu0
      %v3800 = vadd.f32 %v3535, %v3799
      %v3801 = vpop.f32.mrb[0].mxu0
      %v3802 = vpop.f32.mrb[0].mxu0
      %v3803 = vadd.f32 %v3535, %v3802
      %v3804 = vpop.f32.mrb[0].mxu0
      %3805 = vmatprep.mubr.bf16.mxu0 %v3477
      %3806 = vmatmul.mubr.bf16.gmra.mrb[0].mxu0 %v3476
      %v3807 = vpop.f32.mrb[0].mxu0
      %v3808 = vadd.f32 %v3535, %v3807
      %v3809 = vpop.f32.mrb[0].mxu0
      %v3810 = vpop.f32.mrb[0].mxu0
      %v3811 = vadd.f32 %v3535, %v3810
      %v3812 = vpop.f32.mrb[0].mxu0
      %3813 = vmatprep.mubr.bf16.mxu0 %v3480
      %3814 = vmatmul.mubr.bf16.gmra.mrb[0].mxu0 %v3479
      %v3815 = vpop.f32.mrb[0].mxu0
      %v3816 = vadd.f32 %v3535, %v3815
      %v3817 = vpop.f32.mrb[0].mxu0
      %v3818 = vpop.f32.mrb[0].mxu0
      %v3819 = vadd.f32 %v3535, %v3818
      %v3820 = vpop.f32.mrb[0].mxu0
      %3821 = vmatprep.mubr.bf16.mxu0 %v3483
      %3822 = vmatmul.mubr.bf16.gmra.mrb[0].mxu0 %v3482
      %v3823 = vpop.f32.mrb[0].mxu0
      %v3824 = vadd.f32 %v3535, %v3823
      %v3825 = vpop.f32.mrb[0].mxu0
      %v3826 = vpop.f32.mrb[0].mxu0
      %v3827 = vadd.f32 %v3535, %v3826
      %v3828 = vpop.f32.mrb[0].mxu0
      %3829 = vmatprep.mubr.bf16.mxu0 %v3486
      %3830 = vmatmul.mubr.bf16.gmra.mrb[0].mxu0 %v3485
      %v3831 = vpop.f32.mrb[0].mxu0
      %v3832 = vadd.f32 %v3535, %v3831
      %v3833 = vpop.f32.mrb[0].mxu0
      %v3834 = vpop.f32.mrb[0].mxu0
      %v3835 = vadd.f32 %v3535, %v3834
      %v3836 = vpop.f32.mrb[0].mxu0
      %3837 = vmatprep.mubr.bf16.mxu0 %v3489
      %3838 = vmatmul.mubr.bf16.gmra.mrb[0].mxu0 %v3488
      %v3839 = vpop.f32.mrb[0].mxu0
      %v3840 = vadd.f32 %v3535, %v3839
      %v3841 = vpop.f32.mrb[0].mxu0
      %v3842 = vpop.f32.mrb[0].mxu0
      %v3843 = vadd.f32 %v3535, %v3842
      %v3844 = vpop.f32.mrb[0].mxu0
      %3845 = vmatprep.mubr.bf16.mxu0 %v3492
      %3846 = vmatmul.mubr.bf16.gmra.mrb[0].mxu0 %v3491
      %v3847 = vpop.f32.mrb[0].mxu0
      %v3848 = vadd.f32 %v3535, %v3847
      %v3849 = vpop.f32.mrb[0].mxu0
      %v3850 = vpop.f32.mrb[0].mxu0
      %v3851 = vadd.f32 %v3535, %v3850
      %v3852 = vpop.f32.mrb[0].mxu0
      %3853 = vdwg.mxu0
      %3854 = vmatprep.subr.bf16.mxu0 0
      %3855 = vmatpush1.bf16.msra.mxu0 %v3625
      %3856 = vmatprep.subr.bf16.mxu0 0
      %3857 = vmatpush1.bf16.msra.mxu0 %v3626
      %3858 = vmatprep.subr.bf16.mxu0 0
      %3859 = vmatpush1.bf16.msra.mxu0 0
      %3860 = vmatprep.subr.bf16.mxu0 0
      %3861 = vmatpush1.bf16.msra.mxu0 0
      %3862 = vmatprep.subr.bf16.mxu0 0
      %3863 = vmatpush1.bf16.msra.mxu0 0
      %3864 = vmatprep.subr.bf16.mxu0 0
      %3865 = vmatpush1.bf16.msra.mxu0 0
      %3866 = vmatprep.subr.bf16.mxu0 0
      %3867 = vmatpush1.bf16.msra.mxu0 0
      %3868 = vmatprep.subr.bf16.mxu0 0
      %3869 = vmatpush1.bf16.msra.mxu0 0
      %3870 = vmatprep.subr.bf16.mxu0 0
      %3871 = vmatpush1.bf16.msra.mxu0 0
      %3872 = vmatprep.subr.bf16.mxu0 0
      %3873 = vmatpush1.bf16.msra.mxu0 0
      %3874 = vmatprep.subr.bf16.mxu0 0
      %3875 = vmatpush1.bf16.msra.mxu0 0
      %3876 = vmatprep.subr.bf16.mxu0 0
      %3877 = vmatpush1.bf16.msra.mxu0 0
      %3878 = vmatprep.subr.bf16.mxu0 0
      %3879 = vmatpush1.bf16.msra.mxu0 0
      %3880 = vmatprep.subr.bf16.mxu0 0
      %3881 = vmatpush1.bf16.msra.mxu0 0
      %3882 = vmatprep.subr.bf16.mxu0 0
      %3883 = vmatpush1.bf16.msra.mxu0 0
      %3884 = vmatprep.subr.bf16.mxu0 0
      %3885 = vmatpush1.bf16.msra.mxu0 0
      %3886 = vmatprep.mubr.bf16.mxu0 0
      %3887 = vmatmul.mubr.bf16.gmra.mrb[0].mxu0 %v3646
      %v3888 = vpop.f32.mrb[0].mxu0
      %v3889 = vadd.f32 %v3728, %v3888
      %v3890 = vpop.f32.mrb[0].mxu0
      %v3891 = vpop.f32.mrb[0].mxu0
      %v3892 = vadd.f32 %v3731, %v3891
      %v3893 = vpop.f32.mrb[0].mxu0
      %3894 = vmatprep.mubr.bf16.mxu0 0
      %3895 = vmatmul.mubr.bf16.gmra.mrb[0].mxu0 %v3649
      %v3896 = vpop.f32.mrb[0].mxu0
      %v3897 = vadd.f32 %v3736, %v3896
      %v3898 = vpop.f32.mrb[0].mxu0
      %v3899 = vpop.f32.mrb[0].mxu0
      %v3900 = vadd.f32 %v3739, %v3899
      %v3901 = vpop.f32.mrb[0].mxu0
      %3902 = vmatprep.mubr.bf16.mxu0 0
      %3903 = vmatmul.mubr.bf16.gmra.mrb[0].mxu0 %v3652
      %v3904 = vpop.f32.mrb[0].mxu0
      %v3905 = vadd.f32 %v3744, %v3904
      %v3906 = vpop.f32.mrb[0].mxu0
      %v3907 = vpop.f32.mrb[0].mxu0
      %v3908 = vadd.f32 %v3747, %v3907
      %v3909 = vpop.f32.mrb[0].mxu0
      %3910 = vmatprep.mubr.bf16.mxu0 0
      %3911 = vmatmul.mubr.bf16.gmra.mrb[0].mxu0 %v3655
      %v3912 = vpop.f32.mrb[0].mxu0
      %v3913 = vadd.f32 %v3752, %v3912
      %v3914 = vpop.f32.mrb[0].mxu0
      %v3915 = vpop.f32.mrb[0].mxu0
      %v3916 = vadd.f32 %v3755, %v3915
      %v3917 = vpop.f32.mrb[0].mxu0
      %3918 = vmatprep.mubr.bf16.mxu0 0
      %3919 = vmatmul.mubr.bf16.gmra.mrb[0].mxu0 %v3658
      %v3920 = vpop.f32.mrb[0].mxu0
      %v3921 = vadd.f32 %v3760, %v3920
      %v3922 = vpop.f32.mrb[0].mxu0
      %v3923 = vpop.f32.mrb[0].mxu0
      %v3924 = vadd.f32 %v3763, %v3923
      %v3925 = vpop.f32.mrb[0].mxu0
      %3926 = vmatprep.mubr.bf16.mxu0 0
      %3927 = vmatmul.mubr.bf16.gmra.mrb[0].mxu0 %v3661
      %v3928 = vpop.f32.mrb[0].mxu0
      %v3929 = vadd.f32 %v3768, %v3928
      %v3930 = vpop.f32.mrb[0].mxu0
      %v3931 = vpop.f32.mrb[0].mxu0
      %v3932 = vadd.f32 %v3771, %v3931
      %v3933 = vpop.f32.mrb[0].mxu0
      %3934 = vmatprep.mubr.bf16.mxu0 0
      %3935 = vmatmul.mubr.bf16.gmra.mrb[0].mxu0 %v3664
      %v3936 = vpop.f32.mrb[0].mxu0
      %v3937 = vadd.f32 %v3776, %v3936
      %v3938 = vpop.f32.mrb[0].mxu0
      %v3939 = vpop.f32.mrb[0].mxu0
      %v3940 = vadd.f32 %v3779, %v3939
      %v3941 = vpop.f32.mrb[0].mxu0
      %3942 = vmatprep.mubr.bf16.mxu0 0
      %3943 = vmatmul.mubr.bf16.gmra.mrb[0].mxu0 %v3667
      %v3944 = vpop.f32.mrb[0].mxu0
      %v3945 = vadd.f32 %v3784, %v3944
      %v3946 = vpop.f32.mrb[0].mxu0
      %v3947 = vpop.f32.mrb[0].mxu0
      %v3948 = vadd.f32 %v3787, %v3947
      %v3949 = vpop.f32.mrb[0].mxu0
      %3950 = vmatprep.mubr.bf16.mxu0 0
      %3951 = vmatmul.mubr.bf16.gmra.mrb[0].mxu0 %v3670
      %v3952 = vpop.f32.mrb[0].mxu0
      %v3953 = vadd.f32 %v3792, %v3952
      %v3954 = vpop.f32.mrb[0].mxu0
      %v3955 = vpop.f32.mrb[0].mxu0
      %v3956 = vadd.f32 %v3795, %v3955
      %v3957 = vpop.f32.mrb[0].mxu0
      %3958 = vmatprep.mubr.bf16.mxu0 0
      %3959 = vmatmul.mubr.bf16.gmra.mrb[0].mxu0 %v3673
      %v3960 = vpop.f32.mrb[0].mxu0
      %v3961 = vadd.f32 %v3800, %v3960
      %v3962 = vpop.f32.mrb[0].mxu0
      %v3963 = vpop.f32.mrb[0].mxu0
      %v3964 = vadd.f32 %v3803, %v3963
      %v3965 = vpop.f32.mrb[0].mxu0
      %3966 = vmatprep.mubr.bf16.mxu0 0
      %3967 = vmatmul.mubr.bf16.gmra.mrb[0].mxu0 %v3676
      %v3968 = vpop.f32.mrb[0].mxu0
      %v3969 = vadd.f32 %v3808, %v3968
      %v3970 = vpop.f32.mrb[0].mxu0
      %v3971 = vpop.f32.mrb[0].mxu0
      %v3972 = vadd.f32 %v3811, %v3971
      %v3973 = vpop.f32.mrb[0].mxu0
      %3974 = vmatprep.mubr.bf16.mxu0 0
      %3975 = vmatmul.mubr.bf16.gmra.mrb[0].mxu0 %v3679
      %v3976 = vpop.f32.mrb[0].mxu0
      %v3977 = vadd.f32 %v3816, %v3976
      %v3978 = vpop.f32.mrb[0].mxu0
      %v3979 = vpop.f32.mrb[0].mxu0
      %v3980 = vadd.f32 %v3819, %v3979
      %v3981 = vpop.f32.mrb[0].mxu0
      %3982 = vmatprep.mubr.bf16.mxu0 0
      %3983 = vmatmul.mubr.bf16.gmra.mrb[0].mxu0 %v3682
      %v3984 = vpop.f32.mrb[0].mxu0
      %v3985 = vadd.f32 %v3824, %v3984
      %v3986 = vpop.f32.mrb[0].mxu0
      %v3987 = vpop.f32.mrb[0].mxu0
      %v3988 = vadd.f32 %v3827, %v3987
      %v3989 = vpop.f32.mrb[0].mxu0
      %3990 = vmatprep.mubr.bf16.mxu0 0
      %3991 = vmatmul.mubr.bf16.gmra.mrb[0].mxu0 %v3685
      %v3992 = vpop.f32.mrb[0].mxu0
      %v3993 = vadd.f32 %v3832, %v3992
      %v3994 = vpop.f32.mrb[0].mxu0
      %v3995 = vpop.f32.mrb[0].mxu0
      %v3996 = vadd.f32 %v3835, %v3995
      %v3997 = vpop.f32.mrb[0].mxu0
      %3998 = vmatprep.mubr.bf16.mxu0 0
      %3999 = vmatmul.mubr.bf16.gmra.mrb[0].mxu0 %v3688
      %v4000 = vpop.f32.mrb[0].mxu0
      %v4001 = vadd.f32 %v3840, %v4000
      %v4002 = vpop.f32.mrb[0].mxu0
      %v4003 = vpop.f32.mrb[0].mxu0
      %v4004 = vadd.f32 %v3843, %v4003
      %v4005 = vpop.f32.mrb[0].mxu0
      %4006 = vmatprep.mubr.bf16.mxu0 0
      %4007 = vmatmul.mubr.bf16.gmra.mrb[0].mxu0 %v3691
      %v4008 = vpop.f32.mrb[0].mxu0
      %v4009 = vadd.f32 %v3848, %v4008
      %v4010 = vpop.f32.mrb[0].mxu0
      %v4011 = vpop.f32.mrb[0].mxu0
      %v4012 = vadd.f32 %v3851, %v4011
      %v4013 = vpop.f32.mrb[0].mxu0
      %4014 = vdwg.mxu0
      %v4015 = vmax.f32 %v3889, 0.0
      %v4016 = vmax.f32 %v3892, 0.0
      %v4017 = vmax.f32 %v3897, 0.0
      %v4018 = vmax.f32 %v3900, 0.0
      %v4019 = vmax.f32 %v3905, 0.0
      %v4020 = vmax.f32 %v3908, 0.0
      %v4021 = vmax.f32 %v3913, 0.0
      %v4022 = vmax.f32 %v3916, 0.0
      %v4023 = vmax.f32 %v3921, 0.0
      %v4024 = vmax.f32 %v3924, 0.0
      %v4025 = vmax.f32 %v3929, 0.0
      %v4026 = vmax.f32 %v3932, 0.0
      %v4027 = vmax.f32 %v3937, 0.0
      %v4028 = vmax.f32 %v3940, 0.0
      %v4029 = vmax.f32 %v3945, 0.0
      %v4030 = vmax.f32 %v3948, 0.0
      %v4031 = vmax.f32 %v3953, 0.0
      %v4032 = vmax.f32 %v3956, 0.0
      %v4033 = vmax.f32 %v3961, 0.0
      %v4034 = vmax.f32 %v3964, 0.0
      %v4035 = vmax.f32 %v3969, 0.0
      %v4036 = vmax.f32 %v3972, 0.0
      %v4037 = vmax.f32 %v3977, 0.0
      %v4038 = vmax.f32 %v3980, 0.0
      %v4039 = vmax.f32 %v3985, 0.0
      %v4040 = vmax.f32 %v3988, 0.0
      %v4041 = vmax.f32 %v3993, 0.0
      %v4042 = vmax.f32 %v3996, 0.0
      %v4043 = vmax.f32 %v4001, 0.0
      %v4044 = vmax.f32 %v4004, 0.0
      %v4045 = vmax.f32 %v4009, 0.0
      %v4046 = vmax.f32 %v4012, 0.0
      %vm4047 = vcmask 523264
      %4048 = vst.msk [vmem:[#allocation7] sm:$0xff] %vm4047, %v4015
      %4049 = vst.msk [vmem:[#allocation7 + $0x8] sm:$0xff] %vm4047, %v4016
      %4050 = vst.msk [vmem:[#allocation7 + $0x10] sm:$0xff] %vm4047, %v4017
      %4051 = vst.msk [vmem:[#allocation7 + $0x18] sm:$0xff] %vm4047, %v4018
      %4052 = vst.msk [vmem:[#allocation7 + $0x20] sm:$0xff] %vm4047, %v4019
      %4053 = vst.msk [vmem:[#allocation7 + $0x28] sm:$0xff] %vm4047, %v4020
      %4054 = vst.msk [vmem:[#allocation7 + $0x30] sm:$0xff] %vm4047, %v4021
      %4055 = vst.msk [vmem:[#allocation7 + $0x38] sm:$0xff] %vm4047, %v4022
      %4056 = vst.msk [vmem:[#allocation7 + $0x40] sm:$0xff] %vm4047, %v4023
      %4057 = vst.msk [vmem:[#allocation7 + $0x48] sm:$0xff] %vm4047, %v4024
      %4058 = vst.msk [vmem:[#allocation7 + $0x50] sm:$0xff] %vm4047, %v4025
      %4059 = vst.msk [vmem:[#allocation7 + $0x58] sm:$0xff] %vm4047, %v4026
      %4060 = vst.msk [vmem:[#allocation7 + $0x60] sm:$0xff] %vm4047, %v4027
      %4061 = vst.msk [vmem:[#allocation7 + $0x68] sm:$0xff] %vm4047, %v4028
      %4062 = vst.msk [vmem:[#allocation7 + $0x70] sm:$0xff] %vm4047, %v4029
      %4063 = vst.msk [vmem:[#allocation7 + $0x78] sm:$0xff] %vm4047, %v4030
      %4064 = vst.msk [vmem:[#allocation7 + $0x80] sm:$0xff] %vm4047, %v4031
      %4065 = vst.msk [vmem:[#allocation7 + $0x88] sm:$0xff] %vm4047, %v4032
      %4066 = vst.msk [vmem:[#allocation7 + $0x90] sm:$0xff] %vm4047, %v4033
      %4067 = vst.msk [vmem:[#allocation7 + $0x98] sm:$0xff] %vm4047, %v4034
      %4068 = vst.msk [vmem:[#allocation7 + $0xa0] sm:$0xff] %vm4047, %v4035
      %4069 = vst.msk [vmem:[#allocation7 + $0xa8] sm:$0xff] %vm4047, %v4036
      %4070 = vst.msk [vmem:[#allocation7 + $0xb0] sm:$0xff] %vm4047, %v4037
      %4071 = vst.msk [vmem:[#allocation7 + $0xb8] sm:$0xff] %vm4047, %v4038
      %4072 = vst.msk [vmem:[#allocation7 + $0xc0] sm:$0xff] %vm4047, %v4039
      %4073 = vst.msk [vmem:[#allocation7 + $0xc8] sm:$0xff] %vm4047, %v4040
      %4074 = vst.msk [vmem:[#allocation7 + $0xd0] sm:$0xff] %vm4047, %v4041
      %4075 = vst.msk [vmem:[#allocation7 + $0xd8] sm:$0xff] %vm4047, %v4042
      %4076 = vst.msk [vmem:[#allocation7 + $0xe0] sm:$0xff] %vm4047, %v4043
      %4077 = vst.msk [vmem:[#allocation7 + $0xe8] sm:$0xff] %vm4047, %v4044
      %4078 = vst.msk [vmem:[#allocation7 + $0xf0] sm:$0xff] %vm4047, %v4045
      %4079 = vst.msk [vmem:[#allocation7 + $0xf8] sm:$0xff] %vm4047, %v4046
      %vm4080 = vcmask 521216
      %4081 = vst.msk [vmem:[#allocation3] sm:$0x3f] %vm4080, 0.0
      %4082 = vst.msk [vmem:[#allocation3 + $0x30] sm:$0x3f] %vm4080, 0.0
      %4083 = vst.msk [vmem:[#allocation3 + $0x60] sm:$0x3f] %vm4080, 0.0
      %4084 = vst.msk [vmem:[#allocation3 + $0x90] sm:$0x3f] %vm4080, 0.0
      %s4085 = scalar_lea.vmem [#allocation3], 40
      %4086 = vst.msk [vmem:[%s4085] sm:$0x3f] %vm4080, 0.0
      %4087 = vst.msk [vmem:[%s4085 + $0x30] sm:$0x3f] %vm4080, 0.0
      %4088 = vst.msk [vmem:[%s4085 + $0x60] sm:$0x3f] %vm4080, 0.0
      %4089 = vst.msk [vmem:[%s4085 + $0x90] sm:$0x3f] %vm4080, 0.0
      %vm4090 = vcmask 516096
      %4091 = vst.msk [vmem:[#allocation3] sm:$0x1] %vm4090, 0.0
      %4092 = vst.msk [vmem:[#allocation3 + $0x8] sm:$0x1] %vm4090, 0.0
      %4093 = vst.msk [vmem:[#allocation3 + $0x10] sm:$0x1] %vm4090, 0.0
      %4094 = vst.msk [vmem:[#allocation3 + $0x18] sm:$0x1] %vm4090, 0.0
      %4095 = vst.msk [vmem:[#allocation3 + $0x20] sm:$0x1] %vm4090, 0.0
      %4096 = vst.msk [vmem:[#allocation3 + $0x28] sm:$0x1] %vm4090, 0.0
      %4097 = vst.msk [vmem:[#allocation3 + $0x30] sm:$0x1] %vm4090, 0.0
      %4098 = vst.msk [vmem:[#allocation3 + $0x38] sm:$0x1] %vm4090, 0.0
      %4099 = vst.msk [vmem:[#allocation3 + $0x40] sm:$0x1] %vm4090, 0.0
      %4100 = vst.msk [vmem:[#allocation3 + $0x48] sm:$0x1] %vm4090, 0.0
      %4101 = vst.msk [vmem:[#allocation3 + $0x50] sm:$0x1] %vm4090, 0.0
      %4102 = vst.msk [vmem:[#allocation3 + $0x58] sm:$0x1] %vm4090, 0.0
      %4103 = vst.msk [vmem:[#allocation3 + $0x60] sm:$0x1] %vm4090, 0.0
      %4104 = vst.msk [vmem:[#allocation3 + $0x68] sm:$0x1] %vm4090, 0.0
      %4105 = vst.msk [vmem:[#allocation3 + $0x70] sm:$0x1] %vm4090, 0.0
      %4106 = vst.msk [vmem:[#allocation3 + $0x78] sm:$0x1] %vm4090, 0.0
      %4107 = vst.msk [vmem:[#allocation3 + $0x80] sm:$0x1] %vm4090, 0.0
      %4108 = vst.msk [vmem:[#allocation3 + $0x88] sm:$0x1] %vm4090, 0.0
      %4109 = vst.msk [vmem:[#allocation3 + $0x90] sm:$0x1] %vm4090, 0.0
      %4110 = vst.msk [vmem:[#allocation3 + $0x98] sm:$0x1] %vm4090, 0.0
      %4111 = vst.msk [vmem:[#allocation3 + $0xa0] sm:$0x1] %vm4090, 0.0
      %4112 = vst.msk [vmem:[#allocation3 + $0xa8] sm:$0x1] %vm4090, 0.0
      %4113 = vst.msk [vmem:[#allocation3 + $0xb0] sm:$0x1] %vm4090, 0.0
      %4114 = vst.msk [vmem:[#allocation3 + $0xb8] sm:$0x1] %vm4090, 0.0
      %4115 = vst.msk [vmem:[#allocation3 + $0x5] sm:$0x1] %vm4090, 0.0
      %4116 = vst.msk [vmem:[#allocation3 + $0xd] sm:$0x1] %vm4090, 0.0
      %4117 = vst.msk [vmem:[#allocation3 + $0x15] sm:$0x1] %vm4090, 0.0
      %4118 = vst.msk [vmem:[#allocation3 + $0x1d] sm:$0x1] %vm4090, 0.0
      %4119 = vst.msk [vmem:[#allocation3 + $0x25] sm:$0x1] %vm4090, 0.0
      %4120 = vst.msk [vmem:[#allocation3 + $0x2d] sm:$0x1] %vm4090, 0.0
      %4121 = vst.msk [vmem:[#allocation3 + $0x35] sm:$0x1] %vm4090, 0.0
      %4122 = vst.msk [vmem:[#allocation3 + $0x3d] sm:$0x1] %vm4090, 0.0
      %4123 = vst.msk [vmem:[#allocation3 + $0x45] sm:$0x1] %vm4090, 0.0
      %4124 = vst.msk [vmem:[#allocation3 + $0x4d] sm:$0x1] %vm4090, 0.0
      %4125 = vst.msk [vmem:[#allocation3 + $0x55] sm:$0x1] %vm4090, 0.0
      %4126 = vst.msk [vmem:[#allocation3 + $0x5d] sm:$0x1] %vm4090, 0.0
      %4127 = vst.msk [vmem:[#allocation3 + $0x65] sm:$0x1] %vm4090, 0.0
      %4128 = vst.msk [vmem:[#allocation3 + $0x6d] sm:$0x1] %vm4090, 0.0
      %4129 = vst.msk [vmem:[#allocation3 + $0x75] sm:$0x1] %vm4090, 0.0
      %4130 = vst.msk [vmem:[#allocation3 + $0x7d] sm:$0x1] %vm4090, 0.0
      %4131 = vst.msk [vmem:[#allocation3 + $0x85] sm:$0x1] %vm4090, 0.0
      %4132 = vst.msk [vmem:[#allocation3 + $0x8d] sm:$0x1] %vm4090, 0.0
      %4133 = vst.msk [vmem:[#allocation3 + $0x95] sm:$0x1] %vm4090, 0.0
      %4134 = vst.msk [vmem:[#allocation3 + $0x9d] sm:$0x1] %vm4090, 0.0
      %4135 = vst.msk [vmem:[#allocation3 + $0xa5] sm:$0x1] %vm4090, 0.0
      %4136 = vst.msk [vmem:[#allocation3 + $0xad] sm:$0x1] %vm4090, 0.0
      %4137 = vst.msk [vmem:[#allocation3 + $0xb5] sm:$0x1] %vm4090, 0.0
      %4138 = vst.msk [vmem:[#allocation3 + $0xbd] sm:$0x1] %vm4090, 0.0
      %v4139 = vld [vmem:[#allocation7] ss:$2 sm:$0xf]
      %s4140 = scalar_lea.vmem [#allocation7], 64
      %v4141 = vld [vmem:[%s4140] ss:$2 sm:$0xf]
      %s4142 = scalar_lea.vmem [#allocation7], 128
      %v4143 = vld [vmem:[%s4142] ss:$2 sm:$0xf]
      %s4144 = scalar_lea.vmem [#allocation7], 192
      %v4145 = vld [vmem:[%s4144] ss:$2 sm:$0xf]
      %s4146 = scalar_lea.vmem [#allocation7], 1
      %v4147 = vld [vmem:[%s4146] ss:$2 sm:$0xf]
      %s4148 = scalar_lea.vmem [#allocation7], 65
      %v4149 = vld [vmem:[%s4148] ss:$2 sm:$0xf]
      %s4150 = scalar_lea.vmem [#allocation7], 129
      %v4151 = vld [vmem:[%s4150] ss:$2 sm:$0xf]
      %s4152 = scalar_lea.vmem [#allocation7], 193
      %v4153 = vld [vmem:[%s4152] ss:$2 sm:$0xf]
      %v4154 = vmax.f32 %v4139, %v4147
      %v4155 = vmax.f32 %v4141, %v4149
      %v4156 = vmax.f32 %v4143, %v4151
      %v4157 = vmax.f32 %v4145, %v4153
      %s4158 = scalar_lea.vmem [#allocation7], 8
      %v4159 = vld [vmem:[%s4158] ss:$2 sm:$0xf]
      %s4160 = scalar_lea.vmem [#allocation7], 72
      %v4161 = vld [vmem:[%s4160] ss:$2 sm:$0xf]
      %s4162 = scalar_lea.vmem [#allocation7], 136
      %v4163 = vld [vmem:[%s4162] ss:$2 sm:$0xf]
      %s4164 = scalar_lea.vmem [#allocation7], 200
      %v4165 = vld [vmem:[%s4164] ss:$2 sm:$0xf]
      %s4166 = scalar_lea.vmem [#allocation7], 9
      %v4167 = vld [vmem:[%s4166] ss:$2 sm:$0xf]
      %s4168 = scalar_lea.vmem [#allocation7], 73
      %v4169 = vld [vmem:[%s4168] ss:$2 sm:$0xf]
      %s4170 = scalar_lea.vmem [#allocation7], 137
      %v4171 = vld [vmem:[%s4170] ss:$2 sm:$0xf]
      %s4172 = scalar_lea.vmem [#allocation7], 201
      %v4173 = vld [vmem:[%s4172] ss:$2 sm:$0xf]
      %v4174 = vmax.f32 %v4159, %v4167
      %v4175 = vmax.f32 %v4161, %v4169
      %v4176 = vmax.f32 %v4163, %v4171
      %v4177 = vmax.f32 %v4165, %v4173
      %v4178 = vmax.f32 %v4154, %v4174
      %v4179 = vmax.f32 %v4155, %v4175
      %v4180 = vmax.f32 %v4156, %v4176
      %v4181 = vmax.f32 %v4157, %v4177
      %s4182 = scalar_lea.vmem [#allocation3], 8
      %vm4183 = vcmask 519168
      %4184 = vst.msk [vmem:[%s4182 + $0x1] sm:$0xf] %vm4183, %v4178
      %4185 = vst.msk [vmem:[%s4182 + $0x31] sm:$0xf] %vm4183, %v4179
      %4186 = vst.msk [vmem:[%s4182 + $0x61] sm:$0xf] %vm4183, %v4180
      %4187 = vst.msk [vmem:[%s4182 + $0x91] sm:$0xf] %vm4183, %v4181
      %s4188 = scalar_lea.vmem [#allocation7], 16
      %v4189 = vld [vmem:[%s4188] ss:$2 sm:$0xf]
      %s4190 = scalar_lea.vmem [#allocation7], 80
      %v4191 = vld [vmem:[%s4190] ss:$2 sm:$0xf]
      %s4192 = scalar_lea.vmem [#allocation7], 144
      %v4193 = vld [vmem:[%s4192] ss:$2 sm:$0xf]
      %s4194 = scalar_lea.vmem [#allocation7], 208
      %v4195 = vld [vmem:[%s4194] ss:$2 sm:$0xf]
      %s4196 = scalar_lea.vmem [#allocation7], 17
      %v4197 = vld [vmem:[%s4196] ss:$2 sm:$0xf]
      %s4198 = scalar_lea.vmem [#allocation7], 81
      %v4199 = vld [vmem:[%s4198] ss:$2 sm:$0xf]
      %s4200 = scalar_lea.vmem [#allocation7], 145
      %v4201 = vld [vmem:[%s4200] ss:$2 sm:$0xf]
      %s4202 = scalar_lea.vmem [#allocation7], 209
      %v4203 = vld [vmem:[%s4202] ss:$2 sm:$0xf]
      %v4204 = vmax.f32 %v4189, %v4197
      %v4205 = vmax.f32 %v4191, %v4199
      %v4206 = vmax.f32 %v4193, %v4201
      %v4207 = vmax.f32 %v4195, %v4203
      %s4208 = scalar_lea.vmem [#allocation7], 24
      %v4209 = vld [vmem:[%s4208] ss:$2 sm:$0xf]
      %s4210 = scalar_lea.vmem [#allocation7], 88
      %v4211 = vld [vmem:[%s4210] ss:$2 sm:$0xf]
      %s4212 = scalar_lea.vmem [#allocation7], 152
      %v4213 = vld [vmem:[%s4212] ss:$2 sm:$0xf]
      %s4214 = scalar_lea.vmem [#allocation7], 216
      %v4215 = vld [vmem:[%s4214] ss:$2 sm:$0xf]
      %s4216 = scalar_lea.vmem [#allocation7], 25
      %v4217 = vld [vmem:[%s4216] ss:$2 sm:$0xf]
      %s4218 = scalar_lea.vmem [#allocation7], 89
      %v4219 = vld [vmem:[%s4218] ss:$2 sm:$0xf]
      %s4220 = scalar_lea.vmem [#allocation7], 153
      %v4221 = vld [vmem:[%s4220] ss:$2 sm:$0xf]
      %s4222 = scalar_lea.vmem [#allocation7], 217
      %v4223 = vld [vmem:[%s4222] ss:$2 sm:$0xf]
      %v4224 = vmax.f32 %v4209, %v4217
      %v4225 = vmax.f32 %v4211, %v4219
      %v4226 = vmax.f32 %v4213, %v4221
      %v4227 = vmax.f32 %v4215, %v4223
      %v4228 = vmax.f32 %v4204, %v4224
      %v4229 = vmax.f32 %v4205, %v4225
      %v4230 = vmax.f32 %v4206, %v4226
      %v4231 = vmax.f32 %v4207, %v4227
      %s4232 = scalar_lea.vmem [#allocation3], 16
      %4233 = vst.msk [vmem:[%s4232 + $0x1] sm:$0xf] %vm4183, %v4228
      %4234 = vst.msk [vmem:[%s4232 + $0x31] sm:$0xf] %vm4183, %v4229
      %4235 = vst.msk [vmem:[%s4232 + $0x61] sm:$0xf] %vm4183, %v4230
      %4236 = vst.msk [vmem:[%s4232 + $0x91] sm:$0xf] %vm4183, %v4231
      %s4237 = scalar_lea.vmem [#allocation7], 32
      %v4238 = vld [vmem:[%s4237] ss:$2 sm:$0xf]
      %s4239 = scalar_lea.vmem [#allocation7], 96
      %v4240 = vld [vmem:[%s4239] ss:$2 sm:$0xf]
      %s4241 = scalar_lea.vmem [#allocation7], 160
      %v4242 = vld [vmem:[%s4241] ss:$2 sm:$0xf]
      %s4243 = scalar_lea.vmem [#allocation7], 224
      %v4244 = vld [vmem:[%s4243] ss:$2 sm:$0xf]
      %s4245 = scalar_lea.vmem [#allocation7], 33
      %v4246 = vld [vmem:[%s4245] ss:$2 sm:$0xf]
      %s4247 = scalar_lea.vmem [#allocation7], 97
      %v4248 = vld [vmem:[%s4247] ss:$2 sm:$0xf]
      %s4249 = scalar_lea.vmem [#allocation7], 161
      %v4250 = vld [vmem:[%s4249] ss:$2 sm:$0xf]
      %s4251 = scalar_lea.vmem [#allocation7], 225
      %v4252 = vld [vmem:[%s4251] ss:$2 sm:$0xf]
      %v4253 = vmax.f32 %v4238, %v4246
      %v4254 = vmax.f32 %v4240, %v4248
      %v4255 = vmax.f32 %v4242, %v4250
      %v4256 = vmax.f32 %v4244, %v4252
      %s4257 = scalar_lea.vmem [#allocation7], 40
      %v4258 = vld [vmem:[%s4257] ss:$2 sm:$0xf]
      %s4259 = scalar_lea.vmem [#allocation7], 104
      %v4260 = vld [vmem:[%s4259] ss:$2 sm:$0xf]
      %s4261 = scalar_lea.vmem [#allocation7], 168
      %v4262 = vld [vmem:[%s4261] ss:$2 sm:$0xf]
      %s4263 = scalar_lea.vmem [#allocation7], 232
      %v4264 = vld [vmem:[%s4263] ss:$2 sm:$0xf]
      %s4265 = scalar_lea.vmem [#allocation7], 41
      %v4266 = vld [vmem:[%s4265] ss:$2 sm:$0xf]
      %s4267 = scalar_lea.vmem [#allocation7], 105
      %v4268 = vld [vmem:[%s4267] ss:$2 sm:$0xf]
      %s4269 = scalar_lea.vmem [#allocation7], 169
      %v4270 = vld [vmem:[%s4269] ss:$2 sm:$0xf]
      %s4271 = scalar_lea.vmem [#allocation7], 233
      %v4272 = vld [vmem:[%s4271] ss:$2 sm:$0xf]
      %v4273 = vmax.f32 %v4258, %v4266
      %v4274 = vmax.f32 %v4260, %v4268
      %v4275 = vmax.f32 %v4262, %v4270
      %v4276 = vmax.f32 %v4264, %v4272
      %v4277 = vmax.f32 %v4253, %v4273
      %v4278 = vmax.f32 %v4254, %v4274
      %v4279 = vmax.f32 %v4255, %v4275
      %v4280 = vmax.f32 %v4256, %v4276
      %s4281 = scalar_lea.vmem [#allocation3], 24
      %4282 = vst.msk [vmem:[%s4281 + $0x1] sm:$0xf] %vm4183, %v4277
      %4283 = vst.msk [vmem:[%s4281 + $0x31] sm:$0xf] %vm4183, %v4278
      %4284 = vst.msk [vmem:[%s4281 + $0x61] sm:$0xf] %vm4183, %v4279
      %4285 = vst.msk [vmem:[%s4281 + $0x91] sm:$0xf] %vm4183, %v4280
      %s4286 = scalar_lea.vmem [#allocation7], 48
      %v4287 = vld [vmem:[%s4286] ss:$2 sm:$0xf]
      %s4288 = scalar_lea.vmem [#allocation7], 112
      %v4289 = vld [vmem:[%s4288] ss:$2 sm:$0xf]
      %s4290 = scalar_lea.vmem [#allocation7], 176
      %v4291 = vld [vmem:[%s4290] ss:$2 sm:$0xf]
      %s4292 = scalar_lea.vmem [#allocation7], 240
      %v4293 = vld [vmem:[%s4292] ss:$2 sm:$0xf]
      %s4294 = scalar_lea.vmem [#allocation7], 49
      %v4295 = vld [vmem:[%s4294] ss:$2 sm:$0xf]
      %s4296 = scalar_lea.vmem [#allocation7], 113
      %v4297 = vld [vmem:[%s4296] ss:$2 sm:$0xf]
      %s4298 = scalar_lea.vmem [#allocation7], 177
      %v4299 = vld [vmem:[%s4298] ss:$2 sm:$0xf]
      %s4300 = scalar_lea.vmem [#allocation7], 241
      %v4301 = vld [vmem:[%s4300] ss:$2 sm:$0xf]
      %v4302 = vmax.f32 %v4287, %v4295
      %v4303 = vmax.f32 %v4289, %v4297
      %v4304 = vmax.f32 %v4291, %v4299
      %v4305 = vmax.f32 %v4293, %v4301
      %s4306 = scalar_lea.vmem [#allocation7], 56
      %v4307 = vld [vmem:[%s4306] ss:$2 sm:$0xf]
      %s4308 = scalar_lea.vmem [#allocation7], 120
      %v4309 = vld [vmem:[%s4308] ss:$2 sm:$0xf]
      %s4310 = scalar_lea.vmem [#allocation7], 184
      %v4311 = vld [vmem:[%s4310] ss:$2 sm:$0xf]
      %s4312 = scalar_lea.vmem [#allocation7], 248
      %v4313 = vld [vmem:[%s4312] ss:$2 sm:$0xf]
      %s4314 = scalar_lea.vmem [#allocation7], 57
      %v4315 = vld [vmem:[%s4314] ss:$2 sm:$0xf]
      %s4316 = scalar_lea.vmem [#allocation7], 121
      %v4317 = vld [vmem:[%s4316] ss:$2 sm:$0xf]
      %s4318 = scalar_lea.vmem [#allocation7], 185
      %v4319 = vld [vmem:[%s4318] ss:$2 sm:$0xf]
      %s4320 = scalar_lea.vmem [#allocation7], 249
      %v4321 = vld [vmem:[%s4320] ss:$2 sm:$0xf]
      %v4322 = vmax.f32 %v4307, %v4315
      %v4323 = vmax.f32 %v4309, %v4317
      %v4324 = vmax.f32 %v4311, %v4319
      %v4325 = vmax.f32 %v4313, %v4321
      %v4326 = vmax.f32 %v4302, %v4322
      %v4327 = vmax.f32 %v4303, %v4323
      %v4328 = vmax.f32 %v4304, %v4324
      %v4329 = vmax.f32 %v4305, %v4325
      %s4330 = scalar_lea.vmem [#allocation3], 32
      %4331 = vst.msk [vmem:[%s4330 + $0x1] sm:$0xf] %vm4183, %v4326
      %4332 = vst.msk [vmem:[%s4330 + $0x31] sm:$0xf] %vm4183, %v4327
      %4333 = vst.msk [vmem:[%s4330 + $0x61] sm:$0xf] %vm4183, %v4328
      %4334 = vst.msk [vmem:[%s4330 + $0x91] sm:$0xf] %vm4183, %v4329
      %v4335 = vld [vmem:[#allocation3] sm:$0xf]
      %v4336 = vld [vmem:[#allocation3 + $0x8] sm:$0xf]
      %v4337 = vld [vmem:[#allocation3 + $0x10] sm:$0xf]
      %v4338 = vld [vmem:[#allocation3 + $0x18] sm:$0xf]
      %v4339 = vld [vmem:[#allocation3 + $0x30] sm:$0xf]
      %v4340 = vld [vmem:[#allocation3 + $0x38] sm:$0xf]
      %v4341 = vld [vmem:[#allocation3 + $0x40] sm:$0xf]
      %v4342 = vld [vmem:[#allocation3 + $0x48] sm:$0xf]
      %v4343 = vld [vmem:[#allocation3 + $0x60] sm:$0xf]
      %v4344 = vld [vmem:[#allocation3 + $0x68] sm:$0xf]
      %v4345 = vld [vmem:[#allocation3 + $0x70] sm:$0xf]
      %v4346 = vld [vmem:[#allocation3 + $0x78] sm:$0xf]
      %v4347 = vld [vmem:[#allocation3 + $0x90] sm:$0xf]
      %v4348 = vld [vmem:[#allocation3 + $0x98] sm:$0xf]
      %v4349 = vld [vmem:[#allocation3 + $0xa0] sm:$0xf]
      %v4350 = vld [vmem:[#allocation3 + $0xa8] sm:$0xf]
      %v4367 = vcombine.low %v4335, %v4336
      %v4368 = vcombine.low %v4337, %v4338
      %v4369 = vcombine.low %v4339, %v4340
      %v4370 = vcombine.low %v4341, %v4342
      %v4371 = vcombine.low %v4343, %v4344
      %v4372 = vcombine.low %v4345, %v4346
      %v4373 = vcombine.low %v4347, %v4348
      %v4374 = vcombine.low %v4349, %v4350
      %v4383 = vpack.c.bf16 %v4368, %v4367
      %v4384 = vpack.c.bf16 %v4370, %v4369
      %v4385 = vpack.c.bf16 %v4372, %v4371
      %v4386 = vpack.c.bf16 %v4374, %v4373
      %4387 = vst.msk [vmem:[#allocation5] sm:$0xff] %vm4047, %v4383
      %4388 = vst.msk [vmem:[#allocation5 + $0x28] sm:$0xff] %vm4047, %v4384
      %4389 = vst.msk [vmem:[#allocation5 + $0x50] sm:$0xff] %vm4047, %v4385
      %4390 = vst.msk [vmem:[#allocation5 + $0x78] sm:$0xff] %vm4047, %v4386
      %v4391 = vld [vmem:[#allocation3 + $0x1] sm:$0xf]
      %v4392 = vld [vmem:[#allocation3 + $0x9] sm:$0xf]
      %v4393 = vld [vmem:[#allocation3 + $0x11] sm:$0xf]
      %v4394 = vld [vmem:[#allocation3 + $0x19] sm:$0xf]
      %v4395 = vld [vmem:[#allocation3 + $0x31] sm:$0xf]
      %v4396 = vld [vmem:[#allocation3 + $0x39] sm:$0xf]
      %v4397 = vld [vmem:[#allocation3 + $0x41] sm:$0xf]
      %v4398 = vld [vmem:[#allocation3 + $0x49] sm:$0xf]
      %v4399 = vld [vmem:[#allocation3 + $0x61] sm:$0xf]
      %v4400 = vld [vmem:[#allocation3 + $0x69] sm:$0xf]
      %v4401 = vld [vmem:[#allocation3 + $0x71] sm:$0xf]
      %v4402 = vld [vmem:[#allocation3 + $0x79] sm:$0xf]
      %v4403 = vld [vmem:[#allocation3 + $0x91] sm:$0xf]
      %v4404 = vld [vmem:[#allocation3 + $0x99] sm:$0xf]
      %v4405 = vld [vmem:[#allocation3 + $0xa1] sm:$0xf]
      %v4406 = vld [vmem:[#allocation3 + $0xa9] sm:$0xf]
      %v4423 = vcombine.low %v4391, %v4392
      %v4424 = vcombine.low %v4393, %v4394
      %v4425 = vcombine.low %v4395, %v4396
      %v4426 = vcombine.low %v4397, %v4398
      %v4427 = vcombine.low %v4399, %v4400
      %v4428 = vcombine.low %v4401, %v4402
      %v4429 = vcombine.low %v4403, %v4404
      %v4430 = vcombine.low %v4405, %v4406
      %v4439 = vpack.c.bf16 %v4424, %v4423
      %v4440 = vpack.c.bf16 %v4426, %v4425
      %v4441 = vpack.c.bf16 %v4428, %v4427
      %v4442 = vpack.c.bf16 %v4430, %v4429
      %4447 = vrot.lane.b32.xlu0 %v4439, 64
      %v4448 = vpop.permute.xlu0 %4447
      %4449 = vrot.lane.b32.xlu0 %v4440, 64
      %v4450 = vpop.permute.xlu0 %4449
      %4451 = vrot.lane.b32.xlu0 %v4441, 64
      %v4452 = vpop.permute.xlu0 %4451
      %4453 = vrot.lane.b32.xlu0 %v4442, 64
      %v4454 = vpop.permute.xlu0 %4453
      %vm4459 = vcmask 1048064
      %4460 = vst.msk [vmem:[#allocation5] sm:$0xff] %vm4459, %v4448
      %4461 = vst.msk [vmem:[#allocation5 + $0x28] sm:$0xff] %vm4459, %v4450
      %4462 = vst.msk [vmem:[#allocation5 + $0x50] sm:$0xff] %vm4459, %v4452
      %4463 = vst.msk [vmem:[#allocation5 + $0x78] sm:$0xff] %vm4459, %v4454
      %v4464 = vld [vmem:[#allocation3 + $0x2] sm:$0xf]
      %v4465 = vld [vmem:[#allocation3 + $0xa] sm:$0xf]
      %v4466 = vld [vmem:[#allocation3 + $0x12] sm:$0xf]
      %v4467 = vld [vmem:[#allocation3 + $0x1a] sm:$0xf]
      %v4468 = vld [vmem:[#allocation3 + $0x32] sm:$0xf]
      %v4469 = vld [vmem:[#allocation3 + $0x3a] sm:$0xf]
      %v4470 = vld [vmem:[#allocation3 + $0x42] sm:$0xf]
      %v4471 = vld [vmem:[#allocation3 + $0x4a] sm:$0xf]
      %v4472 = vld [vmem:[#allocation3 + $0x62] sm:$0xf]
      %v4473 = vld [vmem:[#allocation3 + $0x6a] sm:$0xf]
      %v4474 = vld [vmem:[#allocation3 + $0x72] sm:$0xf]
      %v4475 = vld [vmem:[#allocation3 + $0x7a] sm:$0xf]
      %v4476 = vld [vmem:[#allocation3 + $0x92] sm:$0xf]
      %v4477 = vld [vmem:[#allocation3 + $0x9a] sm:$0xf]
      %v4478 = vld [vmem:[#allocation3 + $0xa2] sm:$0xf]
      %v4479 = vld [vmem:[#allocation3 + $0xaa] sm:$0xf]
      %v4496 = vcombine.low %v4464, %v4465
      %v4497 = vcombine.low %v4466, %v4467
      %v4498 = vcombine.low %v4468, %v4469
      %v4499 = vcombine.low %v4470, %v4471
      %v4500 = vcombine.low %v4472, %v4473
      %v4501 = vcombine.low %v4474, %v4475
      %v4502 = vcombine.low %v4476, %v4477
      %v4503 = vcombine.low %v4478, %v4479
      %v4512 = vpack.c.bf16 %v4497, %v4496
      %v4513 = vpack.c.bf16 %v4499, %v4498
      %v4514 = vpack.c.bf16 %v4501, %v4500
      %v4515 = vpack.c.bf16 %v4503, %v4502
      %4516 = vst.msk [vmem:[#allocation5 + $0x8] sm:$0xff] %vm4047, %v4512
      %4517 = vst.msk [vmem:[#allocation5 + $0x30] sm:$0xff] %vm4047, %v4513
      %4518 = vst.msk [vmem:[#allocation5 + $0x58] sm:$0xff] %vm4047, %v4514
      %4519 = vst.msk [vmem:[#allocation5 + $0x80] sm:$0xff] %vm4047, %v4515
      %v4520 = vld [vmem:[%s4182] sm:$0xf]
      %v4521 = vld [vmem:[%s4182 + $0x8] sm:$0xf]
      %v4522 = vld [vmem:[%s4182 + $0x10] sm:$0xf]
      %v4523 = vld [vmem:[%s4182 + $0x18] sm:$0xf]
      %v4524 = vld [vmem:[%s4182 + $0x30] sm:$0xf]
      %v4525 = vld [vmem:[%s4182 + $0x38] sm:$0xf]
      %v4526 = vld [vmem:[%s4182 + $0x40] sm:$0xf]
      %v4527 = vld [vmem:[%s4182 + $0x48] sm:$0xf]
      %v4528 = vld [vmem:[%s4182 + $0x60] sm:$0xf]
      %v4529 = vld [vmem:[%s4182 + $0x68] sm:$0xf]
      %v4530 = vld [vmem:[%s4182 + $0x70] sm:$0xf]
      %v4531 = vld [vmem:[%s4182 + $0x78] sm:$0xf]
      %v4532 = vld [vmem:[%s4182 + $0x90] sm:$0xf]
      %v4533 = vld [vmem:[%s4182 + $0x98] sm:$0xf]
      %v4534 = vld [vmem:[%s4182 + $0xa0] sm:$0xf]
      %v4535 = vld [vmem:[%s4182 + $0xa8] sm:$0xf]
      %v4552 = vcombine.low %v4520, %v4521
      %v4553 = vcombine.low %v4522, %v4523
      %v4554 = vcombine.low %v4524, %v4525
      %v4555 = vcombine.low %v4526, %v4527
      %v4556 = vcombine.low %v4528, %v4529
      %v4557 = vcombine.low %v4530, %v4531
      %v4558 = vcombine.low %v4532, %v4533
      %v4559 = vcombine.low %v4534, %v4535
      %v4568 = vpack.c.bf16 %v4553, %v4552
      %v4569 = vpack.c.bf16 %v4555, %v4554
      %v4570 = vpack.c.bf16 %v4557, %v4556
      %v4571 = vpack.c.bf16 %v4559, %v4558
      %4576 = vrot.lane.b32.xlu0 %v4568, 64
      %v4577 = vpop.permute.xlu0 %4576
      %4578 = vrot.lane.b32.xlu0 %v4569, 64
      %v4579 = vpop.permute.xlu0 %4578
      %4580 = vrot.lane.b32.xlu0 %v4570, 64
      %v4581 = vpop.permute.xlu0 %4580
      %4582 = vrot.lane.b32.xlu0 %v4571, 64
      %v4583 = vpop.permute.xlu0 %4582
      %4588 = vst.msk [vmem:[#allocation5 + $0x8] sm:$0xff] %vm4459, %v4577
      %4589 = vst.msk [vmem:[#allocation5 + $0x30] sm:$0xff] %vm4459, %v4579
      %4590 = vst.msk [vmem:[#allocation5 + $0x58] sm:$0xff] %vm4459, %v4581
      %4591 = vst.msk [vmem:[#allocation5 + $0x80] sm:$0xff] %vm4459, %v4583
      %v4592 = vld [vmem:[%s4182 + $0x1] sm:$0xf]
      %v4593 = vld [vmem:[%s4182 + $0x9] sm:$0xf]
      %v4594 = vld [vmem:[%s4182 + $0x11] sm:$0xf]
      %v4595 = vld [vmem:[%s4182 + $0x19] sm:$0xf]
      %v4596 = vld [vmem:[%s4182 + $0x31] sm:$0xf]
      %v4597 = vld [vmem:[%s4182 + $0x39] sm:$0xf]
      %v4598 = vld [vmem:[%s4182 + $0x41] sm:$0xf]
      %v4599 = vld [vmem:[%s4182 + $0x49] sm:$0xf]
      %v4600 = vld [vmem:[%s4182 + $0x61] sm:$0xf]
      %v4601 = vld [vmem:[%s4182 + $0x69] sm:$0xf]
      %v4602 = vld [vmem:[%s4182 + $0x71] sm:$0xf]
      %v4603 = vld [vmem:[%s4182 + $0x79] sm:$0xf]
      %v4604 = vld [vmem:[%s4182 + $0x91] sm:$0xf]
      %v4605 = vld [vmem:[%s4182 + $0x99] sm:$0xf]
      %v4606 = vld [vmem:[%s4182 + $0xa1] sm:$0xf]
      %v4607 = vld [vmem:[%s4182 + $0xa9] sm:$0xf]
      %v4624 = vcombine.low %v4592, %v4593
      %v4625 = vcombine.low %v4594, %v4595
      %v4626 = vcombine.low %v4596, %v4597
      %v4627 = vcombine.low %v4598, %v4599
      %v4628 = vcombine.low %v4600, %v4601
      %v4629 = vcombine.low %v4602, %v4603
      %v4630 = vcombine.low %v4604, %v4605
      %v4631 = vcombine.low %v4606, %v4607
      %v4640 = vpack.c.bf16 %v4625, %v4624
      %v4641 = vpack.c.bf16 %v4627, %v4626
      %v4642 = vpack.c.bf16 %v4629, %v4628
      %v4643 = vpack.c.bf16 %v4631, %v4630
      %4644 = vst.msk [vmem:[#allocation5 + $0x10] sm:$0xff] %vm4047, %v4640
      %4645 = vst.msk [vmem:[#allocation5 + $0x38] sm:$0xff] %vm4047, %v4641
      %4646 = vst.msk [vmem:[#allocation5 + $0x60] sm:$0xff] %vm4047, %v4642
      %4647 = vst.msk [vmem:[#allocation5 + $0x88] sm:$0xff] %vm4047, %v4643
      %v4648 = vld [vmem:[%s4182 + $0x2] sm:$0xf]
      %v4649 = vld [vmem:[%s4182 + $0xa] sm:$0xf]
      %v4650 = vld [vmem:[%s4182 + $0x12] sm:$0xf]
      %v4651 = vld [vmem:[%s4182 + $0x1a] sm:$0xf]
      %v4652 = vld [vmem:[%s4182 + $0x32] sm:$0xf]
      %v4653 = vld [vmem:[%s4182 + $0x3a] sm:$0xf]
      %v4654 = vld [vmem:[%s4182 + $0x42] sm:$0xf]
      %v4655 = vld [vmem:[%s4182 + $0x4a] sm:$0xf]
      %v4656 = vld [vmem:[%s4182 + $0x62] sm:$0xf]
      %v4657 = vld [vmem:[%s4182 + $0x6a] sm:$0xf]
      %v4658 = vld [vmem:[%s4182 + $0x72] sm:$0xf]
      %v4659 = vld [vmem:[%s4182 + $0x7a] sm:$0xf]
      %v4660 = vld [vmem:[%s4182 + $0x92] sm:$0xf]
      %v4661 = vld [vmem:[%s4182 + $0x9a] sm:$0xf]
      %v4662 = vld [vmem:[%s4182 + $0xa2] sm:$0xf]
      %v4663 = vld [vmem:[%s4182 + $0xaa] sm:$0xf]
      %v4680 = vcombine.low %v4648, %v4649
      %v4681 = vcombine.low %v4650, %v4651
      %v4682 = vcombine.low %v4652, %v4653
      %v4683 = vcombine.low %v4654, %v4655
      %v4684 = vcombine.low %v4656, %v4657
      %v4685 = vcombine.low %v4658, %v4659
      %v4686 = vcombine.low %v4660, %v4661
      %v4687 = vcombine.low %v4662, %v4663
      %v4696 = vpack.c.bf16 %v4681, %v4680
      %v4697 = vpack.c.bf16 %v4683, %v4682
      %v4698 = vpack.c.bf16 %v4685, %v4684
      %v4699 = vpack.c.bf16 %v4687, %v4686
      %4704 = vrot.lane.b32.xlu0 %v4696, 64
      %v4705 = vpop.permute.xlu0 %4704
      %4706 = vrot.lane.b32.xlu0 %v4697, 64
      %v4707 = vpop.permute.xlu0 %4706
      %4708 = vrot.lane.b32.xlu0 %v4698, 64
      %v4709 = vpop.permute.xlu0 %4708
      %4710 = vrot.lane.b32.xlu0 %v4699, 64
      %v4711 = vpop.permute.xlu0 %4710
      %4716 = vst.msk [vmem:[#allocation5 + $0x10] sm:$0xff] %vm4459, %v4705
      %4717 = vst.msk [vmem:[#allocation5 + $0x38] sm:$0xff] %vm4459, %v4707
      %4718 = vst.msk [vmem:[#allocation5 + $0x60] sm:$0xff] %vm4459, %v4709
      %4719 = vst.msk [vmem:[#allocation5 + $0x88] sm:$0xff] %vm4459, %v4711
      %v4720 = vld [vmem:[%s4232] sm:$0xf]
      %v4721 = vld [vmem:[%s4232 + $0x8] sm:$0xf]
      %v4722 = vld [vmem:[%s4232 + $0x10] sm:$0xf]
      %v4723 = vld [vmem:[%s4232 + $0x18] sm:$0xf]
      %v4724 = vld [vmem:[%s4232 + $0x30] sm:$0xf]
      %v4725 = vld [vmem:[%s4232 + $0x38] sm:$0xf]
      %v4726 = vld [vmem:[%s4232 + $0x40] sm:$0xf]
      %v4727 = vld [vmem:[%s4232 + $0x48] sm:$0xf]
      %v4728 = vld [vmem:[%s4232 + $0x60] sm:$0xf]
      %v4729 = vld [vmem:[%s4232 + $0x68] sm:$0xf]
      %v4730 = vld [vmem:[%s4232 + $0x70] sm:$0xf]
      %v4731 = vld [vmem:[%s4232 + $0x78] sm:$0xf]
      %v4732 = vld [vmem:[%s4232 + $0x90] sm:$0xf]
      %v4733 = vld [vmem:[%s4232 + $0x98] sm:$0xf]
      %v4734 = vld [vmem:[%s4232 + $0xa0] sm:$0xf]
      %v4735 = vld [vmem:[%s4232 + $0xa8] sm:$0xf]
      %v4752 = vcombine.low %v4720, %v4721
      %v4753 = vcombine.low %v4722, %v4723
      %v4754 = vcombine.low %v4724, %v4725
      %v4755 = vcombine.low %v4726, %v4727
      %v4756 = vcombine.low %v4728, %v4729
      %v4757 = vcombine.low %v4730, %v4731
      %v4758 = vcombine.low %v4732, %v4733
      %v4759 = vcombine.low %v4734, %v4735
      %v4768 = vpack.c.bf16 %v4753, %v4752
      %v4769 = vpack.c.bf16 %v4755, %v4754
      %v4770 = vpack.c.bf16 %v4757, %v4756
      %v4771 = vpack.c.bf16 %v4759, %v4758
      %4772 = vst.msk [vmem:[#allocation5 + $0x18] sm:$0xff] %vm4047, %v4768
      %4773 = vst.msk [vmem:[#allocation5 + $0x40] sm:$0xff] %vm4047, %v4769
      %4774 = vst.msk [vmem:[#allocation5 + $0x68] sm:$0xff] %vm4047, %v4770
      %4775 = vst.msk [vmem:[#allocation5 + $0x90] sm:$0xff] %vm4047, %v4771
      %v4776 = vld [vmem:[%s4232 + $0x1] sm:$0xf]
      %v4777 = vld [vmem:[%s4232 + $0x9] sm:$0xf]
      %v4778 = vld [vmem:[%s4232 + $0x11] sm:$0xf]
      %v4779 = vld [vmem:[%s4232 + $0x19] sm:$0xf]
      %v4780 = vld [vmem:[%s4232 + $0x31] sm:$0xf]
      %v4781 = vld [vmem:[%s4232 + $0x39] sm:$0xf]
      %v4782 = vld [vmem:[%s4232 + $0x41] sm:$0xf]
      %v4783 = vld [vmem:[%s4232 + $0x49] sm:$0xf]
      %v4784 = vld [vmem:[%s4232 + $0x61] sm:$0xf]
      %v4785 = vld [vmem:[%s4232 + $0x69] sm:$0xf]
      %v4786 = vld [vmem:[%s4232 + $0x71] sm:$0xf]
      %v4787 = vld [vmem:[%s4232 + $0x79] sm:$0xf]
      %v4788 = vld [vmem:[%s4232 + $0x91] sm:$0xf]
      %v4789 = vld [vmem:[%s4232 + $0x99] sm:$0xf]
      %v4790 = vld [vmem:[%s4232 + $0xa1] sm:$0xf]
      %v4791 = vld [vmem:[%s4232 + $0xa9] sm:$0xf]
      %v4808 = vcombine.low %v4776, %v4777
      %v4809 = vcombine.low %v4778, %v4779
      %v4810 = vcombine.low %v4780, %v4781
      %v4811 = vcombine.low %v4782, %v4783
      %v4812 = vcombine.low %v4784, %v4785
      %v4813 = vcombine.low %v4786, %v4787
      %v4814 = vcombine.low %v4788, %v4789
      %v4815 = vcombine.low %v4790, %v4791
      %v4824 = vpack.c.bf16 %v4809, %v4808
      %v4825 = vpack.c.bf16 %v4811, %v4810
      %v4826 = vpack.c.bf16 %v4813, %v4812
      %v4827 = vpack.c.bf16 %v4815, %v4814
      %4832 = vrot.lane.b32.xlu0 %v4824, 64
      %v4833 = vpop.permute.xlu0 %4832
      %4834 = vrot.lane.b32.xlu0 %v4825, 64
      %v4835 = vpop.permute.xlu0 %4834
      %4836 = vrot.lane.b32.xlu0 %v4826, 64
      %v4837 = vpop.permute.xlu0 %4836
      %4838 = vrot.lane.b32.xlu0 %v4827, 64
      %v4839 = vpop.permute.xlu0 %4838
      %4844 = vst.msk [vmem:[#allocation5 + $0x18] sm:$0xff] %vm4459, %v4833
      %4845 = vst.msk [vmem:[#allocation5 + $0x40] sm:$0xff] %vm4459, %v4835
      %4846 = vst.msk [vmem:[#allocation5 + $0x68] sm:$0xff] %vm4459, %v4837
      %4847 = vst.msk [vmem:[#allocation5 + $0x90] sm:$0xff] %vm4459, %v4839
      %v4848 = vld [vmem:[%s4232 + $0x2] sm:$0xf]
      %v4849 = vld [vmem:[%s4232 + $0xa] sm:$0xf]
      %v4850 = vld [vmem:[%s4232 + $0x12] sm:$0xf]
      %v4851 = vld [vmem:[%s4232 + $0x1a] sm:$0xf]
      %v4852 = vld [vmem:[%s4232 + $0x32] sm:$0xf]
      %v4853 = vld [vmem:[%s4232 + $0x3a] sm:$0xf]
      %v4854 = vld [vmem:[%s4232 + $0x42] sm:$0xf]
      %v4855 = vld [vmem:[%s4232 + $0x4a] sm:$0xf]
      %v4856 = vld [vmem:[%s4232 + $0x62] sm:$0xf]
      %v4857 = vld [vmem:[%s4232 + $0x6a] sm:$0xf]
      %v4858 = vld [vmem:[%s4232 + $0x72] sm:$0xf]
      %v4859 = vld [vmem:[%s4232 + $0x7a] sm:$0xf]
      %v4860 = vld [vmem:[%s4232 + $0x92] sm:$0xf]
      %v4861 = vld [vmem:[%s4232 + $0x9a] sm:$0xf]
      %v4862 = vld [vmem:[%s4232 + $0xa2] sm:$0xf]
      %v4863 = vld [vmem:[%s4232 + $0xaa] sm:$0xf]
      %v4880 = vcombine.low %v4848, %v4849
      %v4881 = vcombine.low %v4850, %v4851
      %v4882 = vcombine.low %v4852, %v4853
      %v4883 = vcombine.low %v4854, %v4855
      %v4884 = vcombine.low %v4856, %v4857
      %v4885 = vcombine.low %v4858, %v4859
      %v4886 = vcombine.low %v4860, %v4861
      %v4887 = vcombine.low %v4862, %v4863
      %v4896 = vpack.c.bf16 %v4881, %v4880
      %v4897 = vpack.c.bf16 %v4883, %v4882
      %v4898 = vpack.c.bf16 %v4885, %v4884
      %v4899 = vpack.c.bf16 %v4887, %v4886
      %4900 = vst.msk [vmem:[#allocation5 + $0x20] sm:$0xff] %vm4047, %v4896
      %4901 = vst.msk [vmem:[#allocation5 + $0x48] sm:$0xff] %vm4047, %v4897
      %4902 = vst.msk [vmem:[#allocation5 + $0x70] sm:$0xff] %vm4047, %v4898
      %4903 = vst.msk [vmem:[#allocation5 + $0x98] sm:$0xff] %vm4047, %v4899
      %v4904 = vld [vmem:[#allocation5] sm:$0xff]
      %v4905 = vld [vmem:[#allocation5 + $0x8] sm:$0xff]
      %v4906 = vld [vmem:[#allocation5 + $0x10] sm:$0xff]
      %v4907 = vld [vmem:[#allocation5 + $0x18] sm:$0xff]
      %v4908 = vld [vmem:[#allocation5 + $0x20] sm:$0xff]
      %v4909 = vld [vmem:[#allocation5 + $0x28] sm:$0xff]
      %v4910 = vld [vmem:[#allocation5 + $0x30] sm:$0xff]
      %v4911 = vld [vmem:[#allocation5 + $0x38] sm:$0xff]
      %v4912 = vld [vmem:[#allocation5 + $0x40] sm:$0xff]
      %v4913 = vld [vmem:[#allocation5 + $0x48] sm:$0xff]
      %v4914 = vld [vmem:[#allocation5 + $0x50] sm:$0xff]
      %v4915 = vld [vmem:[#allocation5 + $0x58] sm:$0xff]
      %v4916 = vld [vmem:[#allocation5 + $0x60] sm:$0xff]
      %v4917 = vld [vmem:[#allocation5 + $0x68] sm:$0xff]
      %v4918 = vld [vmem:[#allocation5 + $0x70] sm:$0xff]
      %v4919 = vld [vmem:[#allocation5 + $0x78] sm:$0xff]
      %v4920 = vld [vmem:[#allocation5 + $0x80] sm:$0xff]
      %v4921 = vld [vmem:[#allocation5 + $0x88] sm:$0xff]
      %v4922 = vld [vmem:[#allocation5 + $0x90] sm:$0xff]
      %v4923 = vld [vmem:[#allocation5 + $0x98] sm:$0xff]
      %v4924 = vld [vmem:[%s6] sm:$0xf]
      %v4925 = vld [vmem:[%s6 + $0x4] sm:$0xf]
      %v4926 = vld [vmem:[%s6 + $0x8] sm:$0xf]
      %v4927 = vld [vmem:[%s6 + $0xc] sm:$0xf]
      %v4928 = vld [vmem:[%s6 + $0x10] sm:$0xf]
      %v4929 = vld [vmem:[%s6 + $0x14] sm:$0xf]
      %v4930 = vld [vmem:[%s6 + $0x18] sm:$0xf]
      %v4931 = vld [vmem:[%s6 + $0x1c] sm:$0xf]
      %v4932 = vld [vmem:[%s6 + $0x20] sm:$0xf]
      %v4933 = vld [vmem:[%s6 + $0x24] sm:$0xf]
      %v4934 = vld [vmem:[%s6 + $0x28] sm:$0xf]
      %v4935 = vld [vmem:[%s6 + $0x2c] sm:$0xf]
      %v4936 = vld [vmem:[%s6 + $0x30] sm:$0xf]
      %v4937 = vld [vmem:[%s6 + $0x34] sm:$0xf]
      %v4938 = vld [vmem:[%s6 + $0x38] sm:$0xf]
      %v4939 = vld [vmem:[%s6 + $0x3c] sm:$0xf]
      %v4940 = vld [vmem:[%s6 + $0x40] sm:$0xf]
      %v4941 = vld [vmem:[%s6 + $0x44] sm:$0xf]
      %v4942 = vld [vmem:[%s6 + $0x48] sm:$0xf]
      %v4943 = vld [vmem:[%s6 + $0x4c] sm:$0xf]
      %v4944 = vld [vmem:[%s6 + $0x50] sm:$0xf]
      %v4945 = vld [vmem:[%s6 + $0x54] sm:$0xf]
      %v4946 = vld [vmem:[%s6 + $0x58] sm:$0xf]
      %v4947 = vld [vmem:[%s6 + $0x5c] sm:$0xf]
      %v4948 = vld [vmem:[%s6 + $0x60] sm:$0xf]
      %v4949 = vld [vmem:[%s6 + $0x64] sm:$0xf]
      %v4950 = vld [vmem:[%s6 + $0x68] sm:$0xf]
      %v4951 = vld [vmem:[%s6 + $0x6c] sm:$0xf]
      %v4952 = vld [vmem:[%s6 + $0x70] sm:$0xf]
      %v4953 = vld [vmem:[%s6 + $0x74] sm:$0xf]
      %v4954 = vld [vmem:[%s6 + $0x78] sm:$0xf]
      %v4955 = vld [vmem:[%s6 + $0x7c] sm:$0xf]
      %v4956 = vld [vmem:[%s6 + $0x80] sm:$0xf]
      %v4957 = vld [vmem:[%s6 + $0x84] sm:$0xf]
      %v4958 = vld [vmem:[%s6 + $0x88] sm:$0xf]
      %v4959 = vld [vmem:[%s6 + $0x8c] sm:$0xf]
      %v4960 = vld [vmem:[%s6 + $0x90] sm:$0xf]
      %v4961 = vld [vmem:[%s6 + $0x94] sm:$0xf]
      %v4962 = vld [vmem:[%s6 + $0x98] sm:$0xf]
      %v4963 = vld [vmem:[%s6 + $0x9c] sm:$0xf]
      %v4964 = vld [vmem:[%s6 + $0xa0] sm:$0xf]
      %v4965 = vld [vmem:[%s6 + $0xa4] sm:$0xf]
      %v4966 = vld [vmem:[%s6 + $0xa8] sm:$0xf]
      %v4967 = vld [vmem:[%s6 + $0xac] sm:$0xf]
      %v4968 = vld [vmem:[%s6 + $0xb0] sm:$0xf]
      %v4969 = vld [vmem:[%s6 + $0xb4] sm:$0xf]
      %v4970 = vld [vmem:[%s6 + $0xb8] sm:$0xf]
      %v4971 = vld [vmem:[%s6 + $0xbc] sm:$0xf]
      %v4972 = vld [vmem:[%s6 + $0xc0] sm:$0xf]
      %v4973 = vld [vmem:[%s6 + $0xc4] sm:$0xf]
      %v4974 = vld [vmem:[%s6 + $0xc8] sm:$0xf]
      %v4975 = vld [vmem:[%s6 + $0xcc] sm:$0xf]
      %v4976 = vld [vmem:[%s6 + $0xd0] sm:$0xf]
      %v4977 = vld [vmem:[%s6 + $0xd4] sm:$0xf]
      %v4978 = vld [vmem:[%s6 + $0xd8] sm:$0xf]
      %v4979 = vld [vmem:[%s6 + $0xdc] sm:$0xf]
      %v4980 = vld [vmem:[%s6 + $0xe0] sm:$0xf]
      %v4981 = vld [vmem:[%s6 + $0xe4] sm:$0xf]
      %v4982 = vld [vmem:[%s6 + $0xe8] sm:$0xf]
      %v4983 = vld [vmem:[%s6 + $0xec] sm:$0xf]
      %v4984 = vld [vmem:[%s6 + $0xf0] sm:$0xf]
      %v4985 = vld [vmem:[%s6 + $0xf4] sm:$0xf]
      %v4986 = vld [vmem:[%s6 + $0xf8] sm:$0xf]
      %v4987 = vld [vmem:[%s6 + $0xfc] sm:$0xf]
      %v4988 = vld [vmem:[%s6 + $0x100] sm:$0xf]
      %v4989 = vld [vmem:[%s6 + $0x104] sm:$0xf]
      %v4990 = vld [vmem:[%s6 + $0x108] sm:$0xf]
      %v4991 = vld [vmem:[%s6 + $0x10c] sm:$0xf]
      %v4992 = vld [vmem:[%s6 + $0x110] sm:$0xf]
      %v4993 = vld [vmem:[%s6 + $0x114] sm:$0xf]
      %v4994 = vld [vmem:[%s6 + $0x118] sm:$0xf]
      %v4995 = vld [vmem:[%s6 + $0x11c] sm:$0xf]
      %v4996 = vld [vmem:[%s7] sm:$0x1]
      %v4998 = vlaneseq
      %v4999 = vshrl.u32 %v4998, 7
      %v5000 = vsub.s32 0, %v4999
      %v5001 = vrot.slane %v4996, %v5000
      %v5075 = vunpack.c.l.b16 %v4924
      %v5076 = vunpack.c.l.b16 %v4925
      %v5077 = vunpack.c.l.b16 %v4926
      %v5078 = vunpack.c.l.b16 %v4927
      %v5079 = vunpack.c.l.b16 %v4928
      %v5080 = vunpack.c.l.b16 %v4929
      %v5081 = vunpack.c.l.b16 %v4930
      %v5082 = vunpack.c.l.b16 %v4931
      %v5083 = vunpack.c.l.b16 %v4932
      %v5084 = vunpack.c.l.b16 %v4933
      %v5085 = vunpack.c.l.b16 %v4934
      %v5086 = vunpack.c.l.b16 %v4935
      %v5087 = vunpack.c.l.b16 %v4936
      %v5088 = vunpack.c.l.b16 %v4937
      %v5089 = vunpack.c.l.b16 %v4938
      %v5090 = vunpack.c.l.b16 %v4939
      %v5091 = vunpack.c.l.b16 %v4940
      %v5092 = vunpack.c.l.b16 %v4941
      %v5093 = vunpack.c.l.b16 %v4942
      %v5094 = vunpack.c.l.b16 %v4943
      %v5095 = vunpack.c.l.b16 %v4944
      %v5096 = vunpack.c.l.b16 %v4945
      %v5097 = vunpack.c.l.b16 %v4946
      %v5098 = vunpack.c.l.b16 %v4947
      %v5099 = vunpack.c.l.b16 %v4948
      %v5100 = vunpack.c.l.b16 %v4949
      %v5101 = vunpack.c.l.b16 %v4950
      %v5102 = vunpack.c.l.b16 %v4951
      %v5103 = vunpack.c.l.b16 %v4952
      %v5104 = vunpack.c.l.b16 %v4953
      %v5105 = vunpack.c.l.b16 %v4954
      %v5106 = vunpack.c.l.b16 %v4955
      %v5107 = vunpack.c.l.b16 %v4956
      %v5108 = vunpack.c.l.b16 %v4957
      %v5109 = vunpack.c.l.b16 %v4958
      %v5110 = vunpack.c.l.b16 %v4959
      %v5111 = vunpack.c.l.b16 %v4960
      %v5112 = vunpack.c.l.b16 %v4961
      %v5113 = vunpack.c.l.b16 %v4962
      %v5114 = vunpack.c.l.b16 %v4963
      %v5115 = vunpack.c.l.b16 %v4964
      %v5116 = vunpack.c.l.b16 %v4965
      %v5117 = vunpack.c.l.b16 %v4966
      %v5118 = vunpack.c.l.b16 %v4967
      %v5119 = vunpack.c.l.b16 %v4968
      %v5120 = vunpack.c.l.b16 %v4969
      %v5121 = vunpack.c.l.b16 %v4970
      %v5122 = vunpack.c.l.b16 %v4971
      %v5123 = vunpack.c.l.b16 %v4972
      %v5124 = vunpack.c.l.b16 %v4973
      %v5125 = vunpack.c.l.b16 %v4974
      %v5126 = vunpack.c.l.b16 %v4975
      %v5127 = vunpack.c.l.b16 %v4976
      %v5128 = vunpack.c.l.b16 %v4977
      %v5129 = vunpack.c.l.b16 %v4978
      %v5130 = vunpack.c.l.b16 %v4979
      %v5131 = vunpack.c.l.b16 %v4980
      %v5132 = vunpack.c.l.b16 %v4981
      %v5133 = vunpack.c.l.b16 %v4982
      %v5134 = vunpack.c.l.b16 %v4983
      %v5135 = vunpack.c.l.b16 %v4984
      %v5136 = vunpack.c.l.b16 %v4985
      %v5137 = vunpack.c.l.b16 %v4986
      %v5138 = vunpack.c.l.b16 %v4987
      %v5139 = vunpack.c.l.b16 %v4988
      %v5140 = vunpack.c.l.b16 %v4989
      %v5141 = vunpack.c.l.b16 %v4990
      %v5142 = vunpack.c.l.b16 %v4991
      %v5143 = vunpack.c.l.b16 %v4992
      %v5144 = vunpack.c.l.b16 %v4993
      %v5145 = vunpack.c.l.b16 %v4994
      %v5146 = vunpack.c.l.b16 %v4995
      %v5147 = vpack.c.b16 %v5076, %v5075
      %v5148 = vpack.c.b16 %v5078, %v5077
      %v5149 = vpack.c.b16 %v5080, %v5079
      %v5150 = vpack.c.b16 %v5082, %v5081
      %v5151 = vpack.c.b16 %v5084, %v5083
      %v5152 = vpack.c.b16 %v5086, %v5085
      %v5153 = vpack.c.b16 %v5088, %v5087
      %v5154 = vpack.c.b16 %v5090, %v5089
      %v5155 = vpack.c.b16 %v5092, %v5091
      %v5156 = vpack.c.b16 %v5094, %v5093
      %v5157 = vpack.c.b16 %v5096, %v5095
      %v5158 = vpack.c.b16 %v5098, %v5097
      %v5159 = vpack.c.b16 %v5100, %v5099
      %v5160 = vpack.c.b16 %v5102, %v5101
      %v5161 = vpack.c.b16 %v5104, %v5103
      %v5162 = vpack.c.b16 %v5106, %v5105
      %v5163 = vpack.c.b16 %v5108, %v5107
      %v5164 = vpack.c.b16 %v5110, %v5109
      %v5165 = vpack.c.b16 %v5112, %v5111
      %v5166 = vpack.c.b16 %v5114, %v5113
      %v5167 = vpack.c.b16 %v5116, %v5115
      %v5168 = vpack.c.b16 %v5118, %v5117
      %v5169 = vpack.c.b16 %v5120, %v5119
      %v5170 = vpack.c.b16 %v5122, %v5121
      %v5171 = vpack.c.b16 %v5124, %v5123
      %v5172 = vpack.c.b16 %v5126, %v5125
      %v5173 = vpack.c.b16 %v5128, %v5127
      %v5174 = vpack.c.b16 %v5130, %v5129
      %v5175 = vpack.c.b16 %v5132, %v5131
      %v5176 = vpack.c.b16 %v5134, %v5133
      %v5177 = vpack.c.b16 %v5136, %v5135
      %v5178 = vpack.c.b16 %v5138, %v5137
      %v5179 = vpack.c.b16 %v5140, %v5139
      %v5180 = vpack.c.b16 %v5142, %v5141
      %v5181 = vpack.c.b16 %v5144, %v5143
      %v5182 = vpack.c.b16 %v5146, %v5145
      %v5220 = vsel %vm4047, %v4908, 0
      %v5223 = vsel %vm4047, %v4913, 0
      %v5226 = vsel %vm4047, %v4918, 0
      %v5229 = vsel %vm4047, %v4923, 0
      %5231 = vmatprep.subr.bf16.mxu0 0
      %5232 = vmatpush1.bf16.msra.mxu0 %v5147
      %5233 = vmatprep.subr.bf16.mxu0 0
      %5234 = vmatpush1.bf16.msra.mxu0 %v5148
      %5235 = vmatprep.subr.bf16.mxu0 0
      %5236 = vmatpush1.bf16.msra.mxu0 %v5149
      %5237 = vmatprep.subr.bf16.mxu0 0
      %5238 = vmatpush1.bf16.msra.mxu0 %v5150
      %5239 = vmatprep.subr.bf16.mxu0 0
      %5240 = vmatpush1.bf16.msra.mxu0 %v5151
      %5241 = vmatprep.subr.bf16.mxu0 0
      %5242 = vmatpush1.bf16.msra.mxu0 %v5152
      %5243 = vmatprep.subr.bf16.mxu0 0
      %5244 = vmatpush1.bf16.msra.mxu0 %v5153
      %5245 = vmatprep.subr.bf16.mxu0 0
      %5246 = vmatpush1.bf16.msra.mxu0 %v5154
      %5247 = vmatprep.subr.bf16.mxu0 0
      %5248 = vmatpush1.bf16.msra.mxu0 %v5155
      %5249 = vmatprep.subr.bf16.mxu0 0
      %5250 = vmatpush1.bf16.msra.mxu0 %v5156
      %5251 = vmatprep.subr.bf16.mxu0 0
      %5252 = vmatpush1.bf16.msra.mxu0 %v5157
      %5253 = vmatprep.subr.bf16.mxu0 0
      %5254 = vmatpush1.bf16.msra.mxu0 %v5158
      %5255 = vmatprep.subr.bf16.mxu0 0
      %5256 = vmatpush1.bf16.msra.mxu0 %v5159
      %5257 = vmatprep.subr.bf16.mxu0 0
      %5258 = vmatpush1.bf16.msra.mxu0 %v5160
      %5259 = vmatprep.subr.bf16.mxu0 0
      %5260 = vmatpush1.bf16.msra.mxu0 %v5161
      %5261 = vmatprep.subr.bf16.mxu0 0
      %5262 = vmatpush1.bf16.msra.mxu0 %v5162
      %5263 = vmatprep.mubr.bf16.mxu0 %v4905
      %5264 = vmatmul.mubr.bf16.gmra.mrb[0].mxu0 %v4904
      %v5265 = vpop.f32.mrb[0].mxu0
      %v5266 = vadd.f32 %v5001, %v5265
      %v5267 = vpop.f32.mrb[0].mxu0
      %v5268 = vpop.f32.mrb[0].mxu0
      %v5269 = vadd.f32 %v5001, %v5268
      %v5270 = vpop.f32.mrb[0].mxu0
      %5271 = vmatprep.mubr.bf16.mxu0 %v4910
      %5272 = vmatmul.mubr.bf16.gmra.mrb[0].mxu0 %v4909
      %v5273 = vpop.f32.mrb[0].mxu0
      %v5274 = vadd.f32 %v5001, %v5273
      %v5275 = vpop.f32.mrb[0].mxu0
      %v5276 = vpop.f32.mrb[0].mxu0
      %v5277 = vadd.f32 %v5001, %v5276
      %v5278 = vpop.f32.mrb[0].mxu0
      %5279 = vmatprep.mubr.bf16.mxu0 %v4915
      %5280 = vmatmul.mubr.bf16.gmra.mrb[0].mxu0 %v4914
      %v5281 = vpop.f32.mrb[0].mxu0
      %v5282 = vadd.f32 %v5001, %v5281
      %v5283 = vpop.f32.mrb[0].mxu0
      %v5284 = vpop.f32.mrb[0].mxu0
      %v5285 = vadd.f32 %v5001, %v5284
      %v5286 = vpop.f32.mrb[0].mxu0
      %5287 = vmatprep.mubr.bf16.mxu0 %v4920
      %5288 = vmatmul.mubr.bf16.gmra.mrb[0].mxu0 %v4919
      %v5289 = vpop.f32.mrb[0].mxu0
      %v5290 = vadd.f32 %v5001, %v5289
      %v5291 = vpop.f32.mrb[0].mxu0
      %v5292 = vpop.f32.mrb[0].mxu0
      %v5293 = vadd.f32 %v5001, %v5292
      %v5294 = vpop.f32.mrb[0].mxu0
      %5295 = vdwg.mxu0
      %5296 = vmatprep.subr.bf16.mxu0 0
      %5297 = vmatpush1.bf16.msra.mxu0 %v5163
      %5298 = vmatprep.subr.bf16.mxu0 0
      %5299 = vmatpush1.bf16.msra.mxu0 %v5164
      %5300 = vmatprep.subr.bf16.mxu0 0
      %5301 = vmatpush1.bf16.msra.mxu0 %v5165
      %5302 = vmatprep.subr.bf16.mxu0 0
      %5303 = vmatpush1.bf16.msra.mxu0 %v5166
      %5304 = vmatprep.subr.bf16.mxu0 0
      %5305 = vmatpush1.bf16.msra.mxu0 %v5167
      %5306 = vmatprep.subr.bf16.mxu0 0
      %5307 = vmatpush1.bf16.msra.mxu0 %v5168
      %5308 = vmatprep.subr.bf16.mxu0 0
      %5309 = vmatpush1.bf16.msra.mxu0 %v5169
      %5310 = vmatprep.subr.bf16.mxu0 0
      %5311 = vmatpush1.bf16.msra.mxu0 %v5170
      %5312 = vmatprep.subr.bf16.mxu0 0
      %5313 = vmatpush1.bf16.msra.mxu0 %v5171
      %5314 = vmatprep.subr.bf16.mxu0 0
      %5315 = vmatpush1.bf16.msra.mxu0 %v5172
      %5316 = vmatprep.subr.bf16.mxu0 0
      %5317 = vmatpush1.bf16.msra.mxu0 %v5173
      %5318 = vmatprep.subr.bf16.mxu0 0
      %5319 = vmatpush1.bf16.msra.mxu0 %v5174
      %5320 = vmatprep.subr.bf16.mxu0 0
      %5321 = vmatpush1.bf16.msra.mxu0 %v5175
      %5322 = vmatprep.subr.bf16.mxu0 0
      %5323 = vmatpush1.bf16.msra.mxu0 %v5176
      %5324 = vmatprep.subr.bf16.mxu0 0
      %5325 = vmatpush1.bf16.msra.mxu0 %v5177
      %5326 = vmatprep.subr.bf16.mxu0 0
      %5327 = vmatpush1.bf16.msra.mxu0 %v5178
      %5328 = vmatprep.mubr.bf16.mxu0 %v4907
      %5329 = vmatmul.mubr.bf16.gmra.mrb[0].mxu0 %v4906
      %v5330 = vpop.f32.mrb[0].mxu0
      %v5331 = vadd.f32 %v5266, %v5330
      %v5332 = vpop.f32.mrb[0].mxu0
      %v5333 = vpop.f32.mrb[0].mxu0
      %v5334 = vadd.f32 %v5269, %v5333
      %v5335 = vpop.f32.mrb[0].mxu0
      %5336 = vmatprep.mubr.bf16.mxu0 %v4912
      %5337 = vmatmul.mubr.bf16.gmra.mrb[0].mxu0 %v4911
      %v5338 = vpop.f32.mrb[0].mxu0
      %v5339 = vadd.f32 %v5274, %v5338
      %v5340 = vpop.f32.mrb[0].mxu0
      %v5341 = vpop.f32.mrb[0].mxu0
      %v5342 = vadd.f32 %v5277, %v5341
      %v5343 = vpop.f32.mrb[0].mxu0
      %5344 = vmatprep.mubr.bf16.mxu0 %v4917
      %5345 = vmatmul.mubr.bf16.gmra.mrb[0].mxu0 %v4916
      %v5346 = vpop.f32.mrb[0].mxu0
      %v5347 = vadd.f32 %v5282, %v5346
      %v5348 = vpop.f32.mrb[0].mxu0
      %v5349 = vpop.f32.mrb[0].mxu0
      %v5350 = vadd.f32 %v5285, %v5349
      %v5351 = vpop.f32.mrb[0].mxu0
      %5352 = vmatprep.mubr.bf16.mxu0 %v4922
      %5353 = vmatmul.mubr.bf16.gmra.mrb[0].mxu0 %v4921
      %v5354 = vpop.f32.mrb[0].mxu0
      %v5355 = vadd.f32 %v5290, %v5354
      %v5356 = vpop.f32.mrb[0].mxu0
      %v5357 = vpop.f32.mrb[0].mxu0
      %v5358 = vadd.f32 %v5293, %v5357
      %v5359 = vpop.f32.mrb[0].mxu0
      %5360 = vdwg.mxu0
      %5361 = vmatprep.subr.bf16.mxu0 0
      %5362 = vmatpush1.bf16.msra.mxu0 %v5179
      %5363 = vmatprep.subr.bf16.mxu0 0
      %5364 = vmatpush1.bf16.msra.mxu0 %v5180
      %5365 = vmatprep.subr.bf16.mxu0 0
      %5366 = vmatpush1.bf16.msra.mxu0 %v5181
      %5367 = vmatprep.subr.bf16.mxu0 0
      %5368 = vmatpush1.bf16.msra.mxu0 %v5182
      %5369 = vmatprep.subr.bf16.mxu0 0
      %5370 = vmatpush1.bf16.msra.mxu0 0
      %5371 = vmatprep.subr.bf16.mxu0 0
      %5372 = vmatpush1.bf16.msra.mxu0 0
      %5373 = vmatprep.subr.bf16.mxu0 0
      %5374 = vmatpush1.bf16.msra.mxu0 0
      %5375 = vmatprep.subr.bf16.mxu0 0
      %5376 = vmatpush1.bf16.msra.mxu0 0
      %5377 = vmatprep.subr.bf16.mxu0 0
      %5378 = vmatpush1.bf16.msra.mxu0 0
      %5379 = vmatprep.subr.bf16.mxu0 0
      %5380 = vmatpush1.bf16.msra.mxu0 0
      %5381 = vmatprep.subr.bf16.mxu0 0
      %5382 = vmatpush1.bf16.msra.mxu0 0
      %5383 = vmatprep.subr.bf16.mxu0 0
      %5384 = vmatpush1.bf16.msra.mxu0 0
      %5385 = vmatprep.subr.bf16.mxu0 0
      %5386 = vmatpush1.bf16.msra.mxu0 0
      %5387 = vmatprep.subr.bf16.mxu0 0
      %5388 = vmatpush1.bf16.msra.mxu0 0
      %5389 = vmatprep.subr.bf16.mxu0 0
      %5390 = vmatpush1.bf16.msra.mxu0 0
      %5391 = vmatprep.subr.bf16.mxu0 0
      %5392 = vmatpush1.bf16.msra.mxu0 0
      %5393 = vmatprep.mubr.bf16.mxu0 0
      %5394 = vmatmul.mubr.bf16.gmra.mrb[0].mxu0 %v5220
      %v5395 = vpop.f32.mrb[0].mxu0
      %v5396 = vadd.f32 %v5331, %v5395
      %v5397 = vpop.f32.mrb[0].mxu0
      %v5398 = vpop.f32.mrb[0].mxu0
      %v5399 = vadd.f32 %v5334, %v5398
      %v5400 = vpop.f32.mrb[0].mxu0
      %5401 = vmatprep.mubr.bf16.mxu0 0
      %5402 = vmatmul.mubr.bf16.gmra.mrb[0].mxu0 %v5223
      %v5403 = vpop.f32.mrb[0].mxu0
      %v5404 = vadd.f32 %v5339, %v5403
      %v5405 = vpop.f32.mrb[0].mxu0
      %v5406 = vpop.f32.mrb[0].mxu0
      %v5407 = vadd.f32 %v5342, %v5406
      %v5408 = vpop.f32.mrb[0].mxu0
      %5409 = vmatprep.mubr.bf16.mxu0 0
      %5410 = vmatmul.mubr.bf16.gmra.mrb[0].mxu0 %v5226
      %v5411 = vpop.f32.mrb[0].mxu0
      %v5412 = vadd.f32 %v5347, %v5411
      %v5413 = vpop.f32.mrb[0].mxu0
      %v5414 = vpop.f32.mrb[0].mxu0
      %v5415 = vadd.f32 %v5350, %v5414
      %v5416 = vpop.f32.mrb[0].mxu0
      %5417 = vmatprep.mubr.bf16.mxu0 0
      %5418 = vmatmul.mubr.bf16.gmra.mrb[0].mxu0 %v5229
      %v5419 = vpop.f32.mrb[0].mxu0
      %v5420 = vadd.f32 %v5355, %v5419
      %v5421 = vpop.f32.mrb[0].mxu0
      %v5422 = vpop.f32.mrb[0].mxu0
      %v5423 = vadd.f32 %v5358, %v5422
      %v5424 = vpop.f32.mrb[0].mxu0
      %5425 = vdwg.mxu0
      %v5426 = vmax.f32 %v5396, 0.0
      %v5427 = vmax.f32 %v5399, 0.0
      %v5428 = vmax.f32 %v5404, 0.0
      %v5429 = vmax.f32 %v5407, 0.0
      %v5430 = vmax.f32 %v5412, 0.0
      %v5431 = vmax.f32 %v5415, 0.0
      %v5432 = vmax.f32 %v5420, 0.0
      %v5433 = vmax.f32 %v5423, 0.0
      %5434 = vst [vmem:[#allocation8] sm:$0xff] %v5426
      %5435 = vst [vmem:[#allocation8 + $0x8] sm:$0xff] %v5427
      %5436 = vst [vmem:[#allocation8 + $0x10] sm:$0xff] %v5428
      %5437 = vst [vmem:[#allocation8 + $0x18] sm:$0xff] %v5429
      %5438 = vst [vmem:[#allocation8 + $0x20] sm:$0xff] %v5430
      %5439 = vst [vmem:[#allocation8 + $0x28] sm:$0xff] %v5431
      %5440 = vst [vmem:[#allocation8 + $0x30] sm:$0xff] %v5432
      %5441 = vst [vmem:[#allocation8 + $0x38] sm:$0xff] %v5433
      %v5442 = vld [vmem:[#allocation8] ss:$2 sm:$0x3]
      %s5443 = scalar_lea.vmem [#allocation8], 16
      %v5444 = vld [vmem:[%s5443] ss:$2 sm:$0x3]
      %s5445 = scalar_lea.vmem [#allocation8], 32
      %v5446 = vld [vmem:[%s5445] ss:$2 sm:$0x3]
      %s5447 = scalar_lea.vmem [#allocation8], 48
      %v5448 = vld [vmem:[%s5447] ss:$2 sm:$0x3]
      %s5449 = scalar_lea.vmem [#allocation8], 1
      %v5450 = vld [vmem:[%s5449] ss:$2 sm:$0x3]
      %s5451 = scalar_lea.vmem [#allocation8], 17
      %v5452 = vld [vmem:[%s5451] ss:$2 sm:$0x3]
      %s5453 = scalar_lea.vmem [#allocation8], 33
      %v5454 = vld [vmem:[%s5453] ss:$2 sm:$0x3]
      %s5455 = scalar_lea.vmem [#allocation8], 49
      %v5456 = vld [vmem:[%s5455] ss:$2 sm:$0x3]
      %v5457 = vmax.f32 %v5442, %v5450
      %v5458 = vmax.f32 %v5444, %v5452
      %v5459 = vmax.f32 %v5446, %v5454
      %v5460 = vmax.f32 %v5448, %v5456
      %s5461 = scalar_lea.vmem [#allocation8], 4
      %v5462 = vld [vmem:[%s5461] ss:$2 sm:$0x3]
      %s5463 = scalar_lea.vmem [#allocation8], 20
      %v5464 = vld [vmem:[%s5463] ss:$2 sm:$0x3]
      %s5465 = scalar_lea.vmem [#allocation8], 36
      %v5466 = vld [vmem:[%s5465] ss:$2 sm:$0x3]
      %s5467 = scalar_lea.vmem [#allocation8], 52
      %v5468 = vld [vmem:[%s5467] ss:$2 sm:$0x3]
      %s5469 = scalar_lea.vmem [#allocation8], 5
      %v5470 = vld [vmem:[%s5469] ss:$2 sm:$0x3]
      %s5471 = scalar_lea.vmem [#allocation8], 21
      %v5472 = vld [vmem:[%s5471] ss:$2 sm:$0x3]
      %s5473 = scalar_lea.vmem [#allocation8], 37
      %v5474 = vld [vmem:[%s5473] ss:$2 sm:$0x3]
      %s5475 = scalar_lea.vmem [#allocation8], 53
      %v5476 = vld [vmem:[%s5475] ss:$2 sm:$0x3]
      %v5477 = vmax.f32 %v5462, %v5470
      %v5478 = vmax.f32 %v5464, %v5472
      %v5479 = vmax.f32 %v5466, %v5474
      %v5480 = vmax.f32 %v5468, %v5476
      %v5481 = vmax.f32 %v5457, %v5477
      %v5482 = vmax.f32 %v5458, %v5478
      %v5483 = vmax.f32 %v5459, %v5479
      %v5484 = vmax.f32 %v5460, %v5480
      %v5485 = vcombine.low %v5481, %v5483
      %v5487 = vunpack.c.l.s4 1983009808
      %v5488 = vunpack.c.0.s8 %v5487
      %v5489 = vlaneseq
      %v5490 = vshrl.u32 %v5489, 7
      %v5491 = vsub.s32 %v5488, %v5490
      %v5492 = vrot.slane %v5485, %v5491
      %v5493 = vcombine.low %v5482, %v5484
      %v5495 = vunpack.c.l.s4 1983009808
      %v5496 = vunpack.c.0.s8 %v5495
      %v5497 = vlaneseq
      %v5498 = vshrl.u32 %v5497, 7
      %v5499 = vsub.s32 %v5496, %v5498
      %v5500 = vrot.slane %v5493, %v5499
      %v5501 = vcombine.low %v5492, %v5500
      %v5503 = vunpack.c.l.s4 1934713408
      %v5504 = vunpack.c.0.s8 %v5503
      %v5505 = vlaneseq
      %v5506 = vshrl.u32 %v5505, 7
      %v5507 = vsub.s32 %v5504, %v5506
      %v5508 = vrot.slane %v5501, %v5507
      %v5509 = vcombine.high %v5508, 0.0
      %v5512 = vcombine.low %v5508, %v5509
      %5514 = vst [vmem:[#allocation9] sm:$0xff] %v5512
      %s5515 = scalar_lea.vmem [#allocation8], 8
      %v5516 = vld [vmem:[%s5515] ss:$2 sm:$0x3]
      %s5517 = scalar_lea.vmem [#allocation8], 24
      %v5518 = vld [vmem:[%s5517] ss:$2 sm:$0x3]
      %s5519 = scalar_lea.vmem [#allocation8], 40
      %v5520 = vld [vmem:[%s5519] ss:$2 sm:$0x3]
      %s5521 = scalar_lea.vmem [#allocation8], 56
      %v5522 = vld [vmem:[%s5521] ss:$2 sm:$0x3]
      %s5523 = scalar_lea.vmem [#allocation8], 9
      %v5524 = vld [vmem:[%s5523] ss:$2 sm:$0x3]
      %s5525 = scalar_lea.vmem [#allocation8], 25
      %v5526 = vld [vmem:[%s5525] ss:$2 sm:$0x3]
      %s5527 = scalar_lea.vmem [#allocation8], 41
      %v5528 = vld [vmem:[%s5527] ss:$2 sm:$0x3]
      %s5529 = scalar_lea.vmem [#allocation8], 57
      %v5530 = vld [vmem:[%s5529] ss:$2 sm:$0x3]
      %v5531 = vmax.f32 %v5516, %v5524
      %v5532 = vmax.f32 %v5518, %v5526
      %v5533 = vmax.f32 %v5520, %v5528
      %v5534 = vmax.f32 %v5522, %v5530
      %s5535 = scalar_lea.vmem [#allocation8], 12
      %v5536 = vld [vmem:[%s5535] ss:$2 sm:$0x3]
      %s5537 = scalar_lea.vmem [#allocation8], 28
      %v5538 = vld [vmem:[%s5537] ss:$2 sm:$0x3]
      %s5539 = scalar_lea.vmem [#allocation8], 44
      %v5540 = vld [vmem:[%s5539] ss:$2 sm:$0x3]
      %s5541 = scalar_lea.vmem [#allocation8], 60
      %v5542 = vld [vmem:[%s5541] ss:$2 sm:$0x3]
      %s5543 = scalar_lea.vmem [#allocation8], 13
      %v5544 = vld [vmem:[%s5543] ss:$2 sm:$0x3]
      %s5545 = scalar_lea.vmem [#allocation8], 29
      %v5546 = vld [vmem:[%s5545] ss:$2 sm:$0x3]
      %s5547 = scalar_lea.vmem [#allocation8], 45
      %v5548 = vld [vmem:[%s5547] ss:$2 sm:$0x3]
      %s5549 = scalar_lea.vmem [#allocation8], 61
      %v5550 = vld [vmem:[%s5549] ss:$2 sm:$0x3]
      %v5551 = vmax.f32 %v5536, %v5544
      %v5552 = vmax.f32 %v5538, %v5546
      %v5553 = vmax.f32 %v5540, %v5548
      %v5554 = vmax.f32 %v5542, %v5550
      %v5555 = vmax.f32 %v5531, %v5551
      %v5556 = vmax.f32 %v5532, %v5552
      %v5557 = vmax.f32 %v5533, %v5553
      %v5558 = vmax.f32 %v5534, %v5554
      %v5559 = vcombine.low %v5555, %v5557
      %v5561 = vunpack.c.l.s4 1983009808
      %v5562 = vunpack.c.0.s8 %v5561
      %v5563 = vlaneseq
      %v5564 = vshrl.u32 %v5563, 7
      %v5565 = vsub.s32 %v5562, %v5564
      %v5566 = vrot.slane %v5559, %v5565
      %v5567 = vcombine.low %v5556, %v5558
      %v5569 = vunpack.c.l.s4 1983009808
      %v5570 = vunpack.c.0.s8 %v5569
      %v5571 = vlaneseq
      %v5572 = vshrl.u32 %v5571, 7
      %v5573 = vsub.s32 %v5570, %v5572
      %v5574 = vrot.slane %v5567, %v5573
      %v5575 = vcombine.low %v5566, %v5574
      %v5577 = vunpack.c.l.s4 1934713408
      %v5578 = vunpack.c.0.s8 %v5577
      %v5579 = vlaneseq
      %v5580 = vshrl.u32 %v5579, 7
      %v5581 = vsub.s32 %v5578, %v5580
      %v5582 = vrot.slane %v5575, %v5581
      %v5583 = vcombine.high %v5582, 0.0
      %v5586 = vcombine.low %v5582, %v5583
      %5588 = vst [vmem:[#allocation9 + $0x8] sm:$0xff] %v5586
      %v5589 = vld [vmem:[#allocation9] sm:$0xff]
      %v5590 = vld [vmem:[#allocation9 + $0x8] sm:$0xff]
      %v5593 = vcombine.high %v5589, %v5589
      %v5594 = vcombine.high %v5590, %v5590
      %v5597 = vpack.c.bf16 %v5589, %v5589
      %v5598 = vpack.c.bf16 %v5593, %v5593
      %v5599 = vpack.c.bf16 %v5590, %v5590
      %v5600 = vpack.c.bf16 %v5594, %v5594
      %v5601 = vld [vmem:[%s8] sm:$0xf]
      %v5602 = vld [vmem:[%s8 + $0x4] sm:$0xf]
      %v5603 = vld [vmem:[%s8 + $0x8] sm:$0xf]
      %v5604 = vld [vmem:[%s8 + $0xc] sm:$0xf]
      %v5605 = vld [vmem:[%s8 + $0x10] sm:$0xf]
      %v5606 = vld [vmem:[%s8 + $0x14] sm:$0xf]
      %v5607 = vld [vmem:[%s8 + $0x18] sm:$0xf]
      %v5608 = vld [vmem:[%s8 + $0x1c] sm:$0xf]
      %v5609 = vld [vmem:[%s8 + $0x20] sm:$0xf]
      %v5610 = vld [vmem:[%s8 + $0x24] sm:$0xf]
      %v5611 = vld [vmem:[%s8 + $0x28] sm:$0xf]
      %v5612 = vld [vmem:[%s8 + $0x2c] sm:$0xf]
      %v5613 = vld [vmem:[%s8 + $0x30] sm:$0xf]
      %v5614 = vld [vmem:[%s8 + $0x34] sm:$0xf]
      %v5615 = vld [vmem:[%s8 + $0x38] sm:$0xf]
      %v5616 = vld [vmem:[%s8 + $0x3c] sm:$0xf]
      %v5617 = vld [vmem:[%s8 + $0x40] sm:$0xf]
      %v5618 = vld [vmem:[%s8 + $0x44] sm:$0xf]
      %v5619 = vld [vmem:[%s8 + $0x48] sm:$0xf]
      %v5620 = vld [vmem:[%s8 + $0x4c] sm:$0xf]
      %v5621 = vld [vmem:[%s8 + $0x50] sm:$0xf]
      %v5622 = vld [vmem:[%s8 + $0x54] sm:$0xf]
      %v5623 = vld [vmem:[%s8 + $0x58] sm:$0xf]
      %v5624 = vld [vmem:[%s8 + $0x5c] sm:$0xf]
      %v5625 = vld [vmem:[%s8 + $0x60] sm:$0xf]
      %v5626 = vld [vmem:[%s8 + $0x64] sm:$0xf]
      %v5627 = vld [vmem:[%s8 + $0x68] sm:$0xf]
      %v5628 = vld [vmem:[%s8 + $0x6c] sm:$0xf]
      %v5629 = vld [vmem:[%s8 + $0x70] sm:$0xf]
      %v5630 = vld [vmem:[%s8 + $0x74] sm:$0xf]
      %v5631 = vld [vmem:[%s8 + $0x78] sm:$0xf]
      %v5632 = vld [vmem:[%s8 + $0x7c] sm:$0xf]
      %v5633 = vld [vmem:[%s8 + $0x80] sm:$0xf]
      %v5634 = vld [vmem:[%s8 + $0x84] sm:$0xf]
      %v5635 = vld [vmem:[%s8 + $0x88] sm:$0xf]
      %v5636 = vld [vmem:[%s8 + $0x8c] sm:$0xf]
      %v5637 = vld [vmem:[%s8 + $0x90] sm:$0xf]
      %v5638 = vld [vmem:[%s8 + $0x94] sm:$0xf]
      %v5639 = vld [vmem:[%s8 + $0x98] sm:$0xf]
      %v5640 = vld [vmem:[%s8 + $0x9c] sm:$0xf]
      %v5641 = vld [vmem:[%s8 + $0xa0] sm:$0xf]
      %v5642 = vld [vmem:[%s8 + $0xa4] sm:$0xf]
      %v5643 = vld [vmem:[%s8 + $0xa8] sm:$0xf]
      %v5644 = vld [vmem:[%s8 + $0xac] sm:$0xf]
      %v5645 = vld [vmem:[%s8 + $0xb0] sm:$0xf]
      %v5646 = vld [vmem:[%s8 + $0xb4] sm:$0xf]
      %v5647 = vld [vmem:[%s8 + $0xb8] sm:$0xf]
      %v5648 = vld [vmem:[%s8 + $0xbc] sm:$0xf]
      %v5649 = vld [vmem:[%s8 + $0xc0] sm:$0xf]
      %v5650 = vld [vmem:[%s8 + $0xc4] sm:$0xf]
      %v5651 = vld [vmem:[%s8 + $0xc8] sm:$0xf]
      %v5652 = vld [vmem:[%s8 + $0xcc] sm:$0xf]
      %v5653 = vld [vmem:[%s8 + $0xd0] sm:$0xf]
      %v5654 = vld [vmem:[%s8 + $0xd4] sm:$0xf]
      %v5655 = vld [vmem:[%s8 + $0xd8] sm:$0xf]
      %v5656 = vld [vmem:[%s8 + $0xdc] sm:$0xf]
      %v5657 = vld [vmem:[%s8 + $0xe0] sm:$0xf]
      %v5658 = vld [vmem:[%s8 + $0xe4] sm:$0xf]
      %v5659 = vld [vmem:[%s8 + $0xe8] sm:$0xf]
      %v5660 = vld [vmem:[%s8 + $0xec] sm:$0xf]
      %v5661 = vld [vmem:[%s8 + $0xf0] sm:$0xf]
      %v5662 = vld [vmem:[%s8 + $0xf4] sm:$0xf]
      %v5663 = vld [vmem:[%s8 + $0xf8] sm:$0xf]
      %v5664 = vld [vmem:[%s8 + $0xfc] sm:$0xf]
      %v5665 = vld [vmem:[%s9] sm:$0x1]
      %v5667 = vlaneseq
      %v5668 = vshrl.u32 %v5667, 7
      %v5669 = vsub.s32 0, %v5668
      %v5670 = vrot.slane %v5665, %v5669
      %v5736 = vunpack.c.l.b16 %v5601
      %v5737 = vunpack.c.l.b16 %v5602
      %v5738 = vunpack.c.l.b16 %v5603
      %v5739 = vunpack.c.l.b16 %v5604
      %v5740 = vunpack.c.l.b16 %v5605
      %v5741 = vunpack.c.l.b16 %v5606
      %v5742 = vunpack.c.l.b16 %v5607
      %v5743 = vunpack.c.l.b16 %v5608
      %v5744 = vunpack.c.l.b16 %v5609
      %v5745 = vunpack.c.l.b16 %v5610
      %v5746 = vunpack.c.l.b16 %v5611
      %v5747 = vunpack.c.l.b16 %v5612
      %v5748 = vunpack.c.l.b16 %v5613
      %v5749 = vunpack.c.l.b16 %v5614
      %v5750 = vunpack.c.l.b16 %v5615
      %v5751 = vunpack.c.l.b16 %v5616
      %v5752 = vunpack.c.l.b16 %v5617
      %v5753 = vunpack.c.l.b16 %v5618
      %v5754 = vunpack.c.l.b16 %v5619
      %v5755 = vunpack.c.l.b16 %v5620
      %v5756 = vunpack.c.l.b16 %v5621
      %v5757 = vunpack.c.l.b16 %v5622
      %v5758 = vunpack.c.l.b16 %v5623
      %v5759 = vunpack.c.l.b16 %v5624
      %v5760 = vunpack.c.l.b16 %v5625
      %v5761 = vunpack.c.l.b16 %v5626
      %v5762 = vunpack.c.l.b16 %v5627
      %v5763 = vunpack.c.l.b16 %v5628
      %v5764 = vunpack.c.l.b16 %v5629
      %v5765 = vunpack.c.l.b16 %v5630
      %v5766 = vunpack.c.l.b16 %v5631
      %v5767 = vunpack.c.l.b16 %v5632
      %v5768 = vunpack.c.l.b16 %v5633
      %v5769 = vunpack.c.l.b16 %v5634
      %v5770 = vunpack.c.l.b16 %v5635
      %v5771 = vunpack.c.l.b16 %v5636
      %v5772 = vunpack.c.l.b16 %v5637
      %v5773 = vunpack.c.l.b16 %v5638
      %v5774 = vunpack.c.l.b16 %v5639
      %v5775 = vunpack.c.l.b16 %v5640
      %v5776 = vunpack.c.l.b16 %v5641
      %v5777 = vunpack.c.l.b16 %v5642
      %v5778 = vunpack.c.l.b16 %v5643
      %v5779 = vunpack.c.l.b16 %v5644
      %v5780 = vunpack.c.l.b16 %v5645
      %v5781 = vunpack.c.l.b16 %v5646
      %v5782 = vunpack.c.l.b16 %v5647
      %v5783 = vunpack.c.l.b16 %v5648
      %v5784 = vunpack.c.l.b16 %v5649
      %v5785 = vunpack.c.l.b16 %v5650
      %v5786 = vunpack.c.l.b16 %v5651
      %v5787 = vunpack.c.l.b16 %v5652
      %v5788 = vunpack.c.l.b16 %v5653
      %v5789 = vunpack.c.l.b16 %v5654
      %v5790 = vunpack.c.l.b16 %v5655
      %v5791 = vunpack.c.l.b16 %v5656
      %v5792 = vunpack.c.l.b16 %v5657
      %v5793 = vunpack.c.l.b16 %v5658
      %v5794 = vunpack.c.l.b16 %v5659
      %v5795 = vunpack.c.l.b16 %v5660
      %v5796 = vunpack.c.l.b16 %v5661
      %v5797 = vunpack.c.l.b16 %v5662
      %v5798 = vunpack.c.l.b16 %v5663
      %v5799 = vunpack.c.l.b16 %v5664
      %v5800 = vpack.c.b16 %v5737, %v5736
      %v5801 = vpack.c.b16 %v5739, %v5738
      %v5802 = vpack.c.b16 %v5741, %v5740
      %v5803 = vpack.c.b16 %v5743, %v5742
      %v5804 = vpack.c.b16 %v5745, %v5744
      %v5805 = vpack.c.b16 %v5747, %v5746
      %v5806 = vpack.c.b16 %v5749, %v5748
      %v5807 = vpack.c.b16 %v5751, %v5750
      %v5808 = vpack.c.b16 %v5753, %v5752
      %v5809 = vpack.c.b16 %v5755, %v5754
      %v5810 = vpack.c.b16 %v5757, %v5756
      %v5811 = vpack.c.b16 %v5759, %v5758
      %v5812 = vpack.c.b16 %v5761, %v5760
      %v5813 = vpack.c.b16 %v5763, %v5762
      %v5814 = vpack.c.b16 %v5765, %v5764
      %v5815 = vpack.c.b16 %v5767, %v5766
      %v5816 = vpack.c.b16 %v5769, %v5768
      %v5817 = vpack.c.b16 %v5771, %v5770
      %v5818 = vpack.c.b16 %v5773, %v5772
      %v5819 = vpack.c.b16 %v5775, %v5774
      %v5820 = vpack.c.b16 %v5777, %v5776
      %v5821 = vpack.c.b16 %v5779, %v5778
      %v5822 = vpack.c.b16 %v5781, %v5780
      %v5823 = vpack.c.b16 %v5783, %v5782
      %v5824 = vpack.c.b16 %v5785, %v5784
      %v5825 = vpack.c.b16 %v5787, %v5786
      %v5826 = vpack.c.b16 %v5789, %v5788
      %v5827 = vpack.c.b16 %v5791, %v5790
      %v5828 = vpack.c.b16 %v5793, %v5792
      %v5829 = vpack.c.b16 %v5795, %v5794
      %v5830 = vpack.c.b16 %v5797, %v5796
      %v5831 = vpack.c.b16 %v5799, %v5798
      %5864 = vmatprep.subr.bf16.mxu0 0
      %5865 = vmatpush1.bf16.msra.mxu0 %v5800
      %5866 = vmatprep.subr.bf16.mxu0 0
      %5867 = vmatpush1.bf16.msra.mxu0 %v5801
      %5868 = vmatprep.subr.bf16.mxu0 0
      %5869 = vmatpush1.bf16.msra.mxu0 %v5802
      %5870 = vmatprep.subr.bf16.mxu0 0
      %5871 = vmatpush1.bf16.msra.mxu0 %v5803
      %5872 = vmatprep.subr.bf16.mxu0 0
      %5873 = vmatpush1.bf16.msra.mxu0 %v5804
      %5874 = vmatprep.subr.bf16.mxu0 0
      %5875 = vmatpush1.bf16.msra.mxu0 %v5805
      %5876 = vmatprep.subr.bf16.mxu0 0
      %5877 = vmatpush1.bf16.msra.mxu0 %v5806
      %5878 = vmatprep.subr.bf16.mxu0 0
      %5879 = vmatpush1.bf16.msra.mxu0 %v5807
      %5880 = vmatprep.subr.bf16.mxu0 0
      %5881 = vmatpush1.bf16.msra.mxu0 %v5808
      %5882 = vmatprep.subr.bf16.mxu0 0
      %5883 = vmatpush1.bf16.msra.mxu0 %v5809
      %5884 = vmatprep.subr.bf16.mxu0 0
      %5885 = vmatpush1.bf16.msra.mxu0 %v5810
      %5886 = vmatprep.subr.bf16.mxu0 0
      %5887 = vmatpush1.bf16.msra.mxu0 %v5811
      %5888 = vmatprep.subr.bf16.mxu0 0
      %5889 = vmatpush1.bf16.msra.mxu0 %v5812
      %5890 = vmatprep.subr.bf16.mxu0 0
      %5891 = vmatpush1.bf16.msra.mxu0 %v5813
      %5892 = vmatprep.subr.bf16.mxu0 0
      %5893 = vmatpush1.bf16.msra.mxu0 %v5814
      %5894 = vmatprep.subr.bf16.mxu0 0
      %5895 = vmatpush1.bf16.msra.mxu0 %v5815
      %5896 = vmatprep.mubr.bf16.mxu0 %v5598
      %5897 = vmatmul.mubr.bf16.gmra.mrb[0].mxu0 %v5597
      %v5898 = vpop.f32.mrb[0].mxu0
      %v5899 = vadd.f32 %v5670, %v5898
      %v5900 = vpop.f32.mrb[0].mxu0
      %v5901 = vpop.f32.mrb[0].mxu0
      %v5902 = vpop.f32.mrb[0].mxu0
      %5903 = vdwg.mxu0
      %5904 = vmatprep.subr.bf16.mxu0 0
      %5905 = vmatpush1.bf16.msra.mxu0 %v5816
      %5906 = vmatprep.subr.bf16.mxu0 0
      %5907 = vmatpush1.bf16.msra.mxu0 %v5817
      %5908 = vmatprep.subr.bf16.mxu0 0
      %5909 = vmatpush1.bf16.msra.mxu0 %v5818
      %5910 = vmatprep.subr.bf16.mxu0 0
      %5911 = vmatpush1.bf16.msra.mxu0 %v5819
      %5912 = vmatprep.subr.bf16.mxu0 0
      %5913 = vmatpush1.bf16.msra.mxu0 %v5820
      %5914 = vmatprep.subr.bf16.mxu0 0
      %5915 = vmatpush1.bf16.msra.mxu0 %v5821
      %5916 = vmatprep.subr.bf16.mxu0 0
      %5917 = vmatpush1.bf16.msra.mxu0 %v5822
      %5918 = vmatprep.subr.bf16.mxu0 0
      %5919 = vmatpush1.bf16.msra.mxu0 %v5823
      %5920 = vmatprep.subr.bf16.mxu0 0
      %5921 = vmatpush1.bf16.msra.mxu0 %v5824
      %5922 = vmatprep.subr.bf16.mxu0 0
      %5923 = vmatpush1.bf16.msra.mxu0 %v5825
      %5924 = vmatprep.subr.bf16.mxu0 0
      %5925 = vmatpush1.bf16.msra.mxu0 %v5826
      %5926 = vmatprep.subr.bf16.mxu0 0
      %5927 = vmatpush1.bf16.msra.mxu0 %v5827
      %5928 = vmatprep.subr.bf16.mxu0 0
      %5929 = vmatpush1.bf16.msra.mxu0 %v5828
      %5930 = vmatprep.subr.bf16.mxu0 0
      %5931 = vmatpush1.bf16.msra.mxu0 %v5829
      %5932 = vmatprep.subr.bf16.mxu0 0
      %5933 = vmatpush1.bf16.msra.mxu0 %v5830
      %5934 = vmatprep.subr.bf16.mxu0 0
      %5935 = vmatpush1.bf16.msra.mxu0 %v5831
      %5936 = vmatprep.mubr.bf16.mxu0 %v5600
      %5937 = vmatmul.mubr.bf16.gmra.mrb[0].mxu0 %v5599
      %v5938 = vpop.f32.mrb[0].mxu0
      %v5939 = vadd.f32 %v5899, %v5938
      %v5940 = vpop.f32.mrb[0].mxu0
      %v5941 = vpop.f32.mrb[0].mxu0
      %v5942 = vpop.f32.mrb[0].mxu0
      %5943 = vdwg.mxu0
      %v5944 = vmax.f32 %v5939, 0.0
      %v5945 = vld [vmem:[%s511] sm:$0x1]
      %v5946 = vld [vmem:[%s511 + $0x1] sm:$0x1]
      %v5947 = vld [vmem:[%s511 + $0x2] sm:$0x1]
      %v5948 = vld [vmem:[%s511 + $0x3] sm:$0x1]
      %v5949 = vld [vmem:[%s10] sm:$0xff]
      %v5950 = vld [vmem:[%s11] sm:$0x1]
      %v5952 = vlaneseq
      %v5953 = vshrl.u32 %v5952, 7
      %v5954 = vsub.s32 0, %v5953
      %v5955 = vrot.slane %v5950, %v5954
      %v5961 = vcombine.low %v5945, %v5946
      %v5962 = vcombine.low %v5947, %v5948
      %v5964 = vunpack.c.l.s4 1966171168
      %v5965 = vunpack.c.0.s8 %v5964
      %v5966 = vlaneseq
      %v5967 = vshrl.u32 %v5966, 7
      %v5968 = vsub.s32 %v5965, %v5967
      %v5969 = vrot.slane %v5961, %v5968
      %v5971 = vunpack.c.l.s4 1966171168
      %v5972 = vunpack.c.0.s8 %v5971
      %v5973 = vlaneseq
      %v5974 = vshrl.u32 %v5973, 7
      %v5975 = vsub.s32 %v5972, %v5974
      %v5976 = vrot.slane %v5962, %v5975
      %v5977 = vcombine.low %v5969, %v5976
      %v5979 = vunpack.c.l.s4 1966171168
      %v5980 = vunpack.c.0.s8 %v5979
      %v5981 = vlaneseq
      %v5982 = vshrl.u32 %v5981, 7
      %v5983 = vsub.s32 %v5980, %v5982
      %v5984 = vrot.slane %v5977, %v5983
      %vm5985 = vcmask 64512
      %v5986 = vsel %vm5985, %v5984, 0
      %5988 = vmatprep.subr.mxu0 0.0
      %5989 = vmatpush1.msra.mxu0 %v5949
      %5990 = vmatprep.subr.mxu0 0.0
      %5991 = vmatpush1.msra.mxu0 0.0
      %5992 = vmatprep.subr.mxu0 0.0
      %5993 = vmatpush1.msra.mxu0 0.0
      %5994 = vmatprep.subr.mxu0 0.0
      %5995 = vmatpush1.msra.mxu0 0.0
      %5996 = vmatprep.subr.mxu0 0.0
      %5997 = vmatpush1.msra.mxu0 0.0
      %5998 = vmatprep.subr.mxu0 0.0
      %5999 = vmatpush1.msra.mxu0 0.0
      %6000 = vmatprep.subr.mxu0 0.0
      %6001 = vmatpush1.msra.mxu0 0.0
      %6002 = vmatprep.subr.mxu0 0.0
      %6003 = vmatpush1.msra.mxu0 0.0
      %6004 = vmatprep.subr.mxu0 0.0
      %6005 = vmatpush1.msra.mxu0 0.0
      %6006 = vmatprep.subr.mxu0 0.0
      %6007 = vmatpush1.msra.mxu0 0.0
      %6008 = vmatprep.subr.mxu0 0.0
      %6009 = vmatpush1.msra.mxu0 0.0
      %6010 = vmatprep.subr.mxu0 0.0
      %6011 = vmatpush1.msra.mxu0 0.0
      %6012 = vmatprep.subr.mxu0 0.0
      %6013 = vmatpush1.msra.mxu0 0.0
      %6014 = vmatprep.subr.mxu0 0.0
      %6015 = vmatpush1.msra.mxu0 0.0
      %6016 = vmatprep.subr.mxu0 0.0
      %6017 = vmatpush1.msra.mxu0 0.0
      %6018 = vmatprep.subr.mxu0 0.0
      %6019 = vmatpush1.msra.mxu0 0.0
      %6020 = vmatprep.subr.mxu0 0.0
      %6021 = vmatpush1.msra.mxu0 0.0
      %6022 = vmatprep.subr.mxu0 0.0
      %6023 = vmatpush1.msra.mxu0 0.0
      %6024 = vmatprep.subr.mxu0 0.0
      %6025 = vmatpush1.msra.mxu0 0.0
      %6026 = vmatprep.subr.mxu0 0.0
      %6027 = vmatpush1.msra.mxu0 0.0
      %6028 = vmatprep.subr.mxu0 0.0
      %6029 = vmatpush1.msra.mxu0 0.0
      %6030 = vmatprep.subr.mxu0 0.0
      %6031 = vmatpush1.msra.mxu0 0.0
      %6032 = vmatprep.subr.mxu0 0.0
      %6033 = vmatpush1.msra.mxu0 0.0
      %6034 = vmatprep.subr.mxu0 0.0
      %6035 = vmatpush1.msra.mxu0 0.0
      %6036 = vmatprep.subr.mxu0 0.0
      %6037 = vmatpush1.msra.mxu0 0.0
      %6038 = vmatprep.subr.mxu0 0.0
      %6039 = vmatpush1.msra.mxu0 0.0
      %6040 = vmatprep.subr.mxu0 0.0
      %6041 = vmatpush1.msra.mxu0 0.0
      %6042 = vmatprep.subr.mxu0 0.0
      %6043 = vmatpush1.msra.mxu0 0.0
      %6044 = vmatprep.subr.mxu0 0.0
      %6045 = vmatpush1.msra.mxu0 0.0
      %6046 = vmatprep.subr.mxu0 0.0
      %6047 = vmatpush1.msra.mxu0 0.0
      %6048 = vmatprep.subr.mxu0 0.0
      %6049 = vmatpush1.msra.mxu0 0.0
      %6050 = vmatprep.subr.mxu0 0.0
      %6051 = vmatpush1.msra.mxu0 0.0
      %6052 = vmatprep.mubr.f32.mxu0 0.0
      %6053 = vmatmul.mubr.f32.gmra.mrb[0].mxu0 %v5986
      %v6054 = vpop.f32.mrb[0].mxu0
      %v6055 = vadd.f32 %v5955, %v6054
      %v6056 = vpop.f32.mrb[0].mxu0
      %6057 = vdwg.mxu0
      %v6058 = vmax.f32 %v6055, 0.0
      %v6059 = vld [vmem:[%s12] sm:$0xff]
      %v6060 = vld [vmem:[%s12 + $0x8] sm:$0xff]
      %v6061 = vld [vmem:[%s12 + $0x10] sm:$0xff]
      %v6062 = vld [vmem:[%s12 + $0x18] sm:$0xff]
      %v6063 = vld [vmem:[%s12 + $0x20] sm:$0xff]
      %v6064 = vld [vmem:[%s12 + $0x28] sm:$0xff]
      %v6065 = vld [vmem:[%s12 + $0x30] sm:$0xff]
      %v6066 = vld [vmem:[%s12 + $0x38] sm:$0xff]
      %v6067 = vld [vmem:[%s12 + $0x40] sm:$0xff]
      %v6068 = vld [vmem:[%s12 + $0x48] sm:$0xff]
      %v6069 = vld [vmem:[%s12 + $0x50] sm:$0xff]
      %v6070 = vld [vmem:[%s12 + $0x58] sm:$0xff]
      %v6071 = vld [vmem:[%s12 + $0x60] sm:$0xff]
      %v6072 = vld [vmem:[%s12 + $0x68] sm:$0xff]
      %v6073 = vld [vmem:[%s12 + $0x70] sm:$0xff]
      %v6074 = vld [vmem:[%s12 + $0x78] sm:$0xff]
      %v6075 = vld [vmem:[%s13] sm:$0xff]
      %v6076 = vld [vmem:[%s13 + $0x8] sm:$0xff]
      %v6077 = vld [vmem:[%s13 + $0x10] sm:$0xff]
      %v6078 = vld [vmem:[%s13 + $0x18] sm:$0xff]
      %v6079 = vld [vmem:[%s13 + $0x20] sm:$0xff]
      %v6080 = vld [vmem:[%s13 + $0x28] sm:$0xff]
      %v6081 = vld [vmem:[%s13 + $0x30] sm:$0xff]
      %v6082 = vld [vmem:[%s13 + $0x38] sm:$0xff]
      %v6084 = vsel %vm4047, %v6058, 0
      %6086 = vmatprep.subr.mxu0 0.0
      %6087 = vmatpush1.msra.mxu0 %v6075
      %6088 = vmatprep.subr.mxu0 0.0
      %6089 = vmatpush1.msra.mxu0 %v6076
      %6090 = vmatprep.subr.mxu0 0.0
      %6091 = vmatpush1.msra.mxu0 %v6077
      %6092 = vmatprep.subr.mxu0 0.0
      %6093 = vmatpush1.msra.mxu0 %v6078
      %6094 = vmatprep.subr.mxu0 0.0
      %6095 = vmatpush1.msra.mxu0 %v6079
      %6096 = vmatprep.subr.mxu0 0.0
      %6097 = vmatpush1.msra.mxu0 %v6080
      %6098 = vmatprep.subr.mxu0 0.0
      %6099 = vmatpush1.msra.mxu0 %v6081
      %6100 = vmatprep.subr.mxu0 0.0
      %6101 = vmatpush1.msra.mxu0 %v6082
      %6102 = vmatprep.subr.mxu0 0.0
      %6103 = vmatpush1.msra.mxu0 0.0
      %6104 = vmatprep.subr.mxu0 0.0
      %6105 = vmatpush1.msra.mxu0 0.0
      %6106 = vmatprep.subr.mxu0 0.0
      %6107 = vmatpush1.msra.mxu0 0.0
      %6108 = vmatprep.subr.mxu0 0.0
      %6109 = vmatpush1.msra.mxu0 0.0
      %6110 = vmatprep.subr.mxu0 0.0
      %6111 = vmatpush1.msra.mxu0 0.0
      %6112 = vmatprep.subr.mxu0 0.0
      %6113 = vmatpush1.msra.mxu0 0.0
      %6114 = vmatprep.subr.mxu0 0.0
      %6115 = vmatpush1.msra.mxu0 0.0
      %6116 = vmatprep.subr.mxu0 0.0
      %6117 = vmatpush1.msra.mxu0 0.0
      %6118 = vmatprep.subr.mxu0 0.0
      %6119 = vmatpush1.msra.mxu0 0.0
      %6120 = vmatprep.subr.mxu0 0.0
      %6121 = vmatpush1.msra.mxu0 0.0
      %6122 = vmatprep.subr.mxu0 0.0
      %6123 = vmatpush1.msra.mxu0 0.0
      %6124 = vmatprep.subr.mxu0 0.0
      %6125 = vmatpush1.msra.mxu0 0.0
      %6126 = vmatprep.subr.mxu0 0.0
      %6127 = vmatpush1.msra.mxu0 0.0
      %6128 = vmatprep.subr.mxu0 0.0
      %6129 = vmatpush1.msra.mxu0 0.0
      %6130 = vmatprep.subr.mxu0 0.0
      %6131 = vmatpush1.msra.mxu0 0.0
      %6132 = vmatprep.subr.mxu0 0.0
      %6133 = vmatpush1.msra.mxu0 0.0
      %6134 = vmatprep.subr.mxu0 0.0
      %6135 = vmatpush1.msra.mxu0 0.0
      %6136 = vmatprep.subr.mxu0 0.0
      %6137 = vmatpush1.msra.mxu0 0.0
      %6138 = vmatprep.subr.mxu0 0.0
      %6139 = vmatpush1.msra.mxu0 0.0
      %6140 = vmatprep.subr.mxu0 0.0
      %6141 = vmatpush1.msra.mxu0 0.0
      %6142 = vmatprep.subr.mxu0 0.0
      %6143 = vmatpush1.msra.mxu0 0.0
      %6144 = vmatprep.subr.mxu0 0.0
      %6145 = vmatpush1.msra.mxu0 0.0
      %6146 = vmatprep.subr.mxu0 0.0
      %6147 = vmatpush1.msra.mxu0 0.0
      %6148 = vmatprep.subr.mxu0 0.0
      %6149 = vmatpush1.msra.mxu0 0.0
      %6150 = vmatprep.mubr.f32.mxu0 0.0
      %6151 = vmatmul.mubr.f32.gmra.mrb[0].mxu0 %v6084
      %v6152 = vpop.f32.mrb[0].mxu0
      %v6153 = vadd.f32 0.0, %v6152
      %v6154 = vpop.f32.mrb[0].mxu0
      %6155 = vdwg.mxu0
      %6156 = vmatprep.subr.mxu0 0.0
      %6157 = vmatpush1.msra.mxu0 %v6059
      %6158 = vmatprep.subr.mxu0 0.0
      %6159 = vmatpush1.msra.mxu0 %v6060
      %6160 = vmatprep.subr.mxu0 0.0
      %6161 = vmatpush1.msra.mxu0 %v6061
      %6162 = vmatprep.subr.mxu0 0.0
      %6163 = vmatpush1.msra.mxu0 %v6062
      %6164 = vmatprep.subr.mxu0 0.0
      %6165 = vmatpush1.msra.mxu0 %v6063
      %6166 = vmatprep.subr.mxu0 0.0
      %6167 = vmatpush1.msra.mxu0 %v6064
      %6168 = vmatprep.subr.mxu0 0.0
      %6169 = vmatpush1.msra.mxu0 %v6065
      %6170 = vmatprep.subr.mxu0 0.0
      %6171 = vmatpush1.msra.mxu0 %v6066
      %6172 = vmatprep.subr.mxu0 0.0
      %6173 = vmatpush1.msra.mxu0 %v6067
      %6174 = vmatprep.subr.mxu0 0.0
      %6175 = vmatpush1.msra.mxu0 %v6068
      %6176 = vmatprep.subr.mxu0 0.0
      %6177 = vmatpush1.msra.mxu0 %v6069
      %6178 = vmatprep.subr.mxu0 0.0
      %6179 = vmatpush1.msra.mxu0 %v6070
      %6180 = vmatprep.subr.mxu0 0.0
      %6181 = vmatpush1.msra.mxu0 %v6071
      %6182 = vmatprep.subr.mxu0 0.0
      %6183 = vmatpush1.msra.mxu0 %v6072
      %6184 = vmatprep.subr.mxu0 0.0
      %6185 = vmatpush1.msra.mxu0 %v6073
      %6186 = vmatprep.subr.mxu0 0.0
      %6187 = vmatpush1.msra.mxu0 %v6074
      %6188 = vmatprep.subr.mxu0 0.0
      %6189 = vmatpush1.msra.mxu0 0.0
      %6190 = vmatprep.subr.mxu0 0.0
      %6191 = vmatpush1.msra.mxu0 0.0
      %6192 = vmatprep.subr.mxu0 0.0
      %6193 = vmatpush1.msra.mxu0 0.0
      %6194 = vmatprep.subr.mxu0 0.0
      %6195 = vmatpush1.msra.mxu0 0.0
      %6196 = vmatprep.subr.mxu0 0.0
      %6197 = vmatpush1.msra.mxu0 0.0
      %6198 = vmatprep.subr.mxu0 0.0
      %6199 = vmatpush1.msra.mxu0 0.0
      %6200 = vmatprep.subr.mxu0 0.0
      %6201 = vmatpush1.msra.mxu0 0.0
      %6202 = vmatprep.subr.mxu0 0.0
      %6203 = vmatpush1.msra.mxu0 0.0
      %6204 = vmatprep.subr.mxu0 0.0
      %6205 = vmatpush1.msra.mxu0 0.0
      %6206 = vmatprep.subr.mxu0 0.0
      %6207 = vmatpush1.msra.mxu0 0.0
      %6208 = vmatprep.subr.mxu0 0.0
      %6209 = vmatpush1.msra.mxu0 0.0
      %6210 = vmatprep.subr.mxu0 0.0
      %6211 = vmatpush1.msra.mxu0 0.0
      %6212 = vmatprep.subr.mxu0 0.0
      %6213 = vmatpush1.msra.mxu0 0.0
      %6214 = vmatprep.subr.mxu0 0.0
      %6215 = vmatpush1.msra.mxu0 0.0
      %6216 = vmatprep.subr.mxu0 0.0
      %6217 = vmatpush1.msra.mxu0 0.0
      %6218 = vmatprep.subr.mxu0 0.0
      %6219 = vmatpush1.msra.mxu0 0.0
      %6220 = vmatprep.mubr.f32.mxu0 0.0
      %6221 = vmatmul.mubr.f32.gmra.mrb[0].mxu0 %v5944
      %v6222 = vpop.f32.mrb[0].mxu0
      %v6223 = vadd.f32 %v6153, %v6222
      %v6224 = vpop.f32.mrb[0].mxu0
      %6225 = vdwg.mxu0
      %v6226 = vld [vmem:[%s14] sm:$0x1]
      %v6228 = vlaneseq
      %v6229 = vshrl.u32 %v6228, 7
      %v6230 = vsub.s32 0, %v6229
      %v6231 = vrot.slane %v6226, %v6230
      %v6233 = vadd.f32 %v6223, %v6231
      %v6236 = vunpack.c.l.s4 1966171168
      %v6237 = vunpack.c.0.s8 %v6236
      %v6238 = vlaneseq
      %v6239 = vshrl.u32 %v6238, 7
      %v6240 = vsub.s32 %v6237, %v6239
      %v6241 = vrot.slane %v6233, %v6240
      %v6242 = vcombine.high %v6241, %v6241
      %v6244 = vunpack.c.l.s4 1966171168
      %v6245 = vunpack.c.0.s8 %v6244
      %v6246 = vlaneseq
      %v6247 = vshrl.u32 %v6246, 7
      %v6248 = vsub.s32 %v6245, %v6247
      %v6249 = vrot.slane %v6241, %v6248
      %v6251 = vunpack.c.l.s4 1966171168
      %v6252 = vunpack.c.0.s8 %v6251
      %v6253 = vlaneseq
      %v6254 = vshrl.u32 %v6253, 7
      %v6255 = vsub.s32 %v6252, %v6254
      %v6256 = vrot.slane %v6242, %v6255
      %v6257 = vcombine.high %v6249, %v6249
      %v6258 = vcombine.high %v6256, %v6256
      %6263 = vst [vmem:[%s516] sm:$0x1] %v6249
      %6264 = vst [vmem:[%s516 + $0x1] sm:$0x1] %v6256
      %6265 = vst [vmem:[%s516 + $0x2] sm:$0x1] %v6257
      %6266 = vst [vmem:[%s516 + $0x3] sm:$0x1] %v6258
      %s6267 = smul.u32 4, %s26
      %p6268 = scmp.lt.s32.totalorder %s6267, 7
      %s6269 = scalar_select %p6268, %s6267, 7
      %s6270 = scalar_lea.vmem %s15, %s6269
      // Predicated region
      $region81: #{model_forward.1} parent=79 // pred_check
        %p6271 = pneg %p369
      $region82: #{model_forward.1} parent=79 // pred_check_branch
        %6273 = sbr.rel (%p6271) target = $region84
      $region83: #{model_forward.1} parent=79 // pred_region
        %s6274 = smul.u32 4, %s26
      $region84: #{model_forward.1} parent=79 // pred_fallthru
        _
    $region80: #{model_forward.1} parent=5 // pred_fallthru
      _
    %p6275 = scmp.le.s32.totalorder 2, %s21
    // Predicated region
    $region85: #{model_forward.1} parent=5 // pred_check
      %p6276 = pneg %p6275
    $region86: #{model_forward.1} parent=5 // pred_check_branch
      %6278 = sbr.rel (%p6276) target = $region88
    $region87: #{model_forward.1} parent=5 // pred_region
      %s6279 = ssub.s32 %s21, 2
      // Predicated region
      $region89: #{model_forward.1} parent=87 // pred_check
        %p6280 = pneg %p375
      $region90: #{model_forward.1} parent=87 // pred_check_branch
        %6282 = sbr.rel (%p6280) target = $region92
      $region91: #{model_forward.1} parent=87 // pred_region
        %s6283 = smul.u32 4, %s27
        %p6284 = scmp.lt.s32.totalorder %s6283, 7
        %s6285 = scalar_select %p6284, %s6283, 7
        %s6286 = scalar_lea.vmem %s15, %s6285
      $region92: #{model_forward.1} parent=87 // pred_fallthru
        _
    $region88: #{model_forward.1} parent=5 // pred_fallthru
      _
  $region6: #{model_forward.1} parent=0 // loop_footer
    %s25 = sadd.s32 1, %s21
  $region7: #{model_forward.1} parent=0 // loop_footer_branch
    %20 = sbr.rel target = $region3
  $region8: #{model_forward.1} parent=0 // loop_exit
    _

</llo_original>
